<compile_context>
chip_gen: v6e
topology: v6e:2x2x1
jax: 0.10.0
libtpu: 0.0.40
codegen_flags: <defaults>
</compile_context>

<pallas_src>
import jax
import jax.numpy as jnp
from jax.experimental import pallas as pl
from jax.experimental.pallas import tpu as pltpu


def _iwt_kernel(x_ref, o_ref):
    """x_ref: (1, 4, bc, H, W) subbands; o_ref: (1, bc, 2H, 2W) float32."""
    _, _, bc, H, W = x_ref.shape
    f32 = jnp.float32
    hp = jax.lax.Precision.HIGHEST  # exact f32 copy semantics through the MXU

    # One-hot scatter matrices implementing the 2x polyphase interleave.
    col_k = jax.lax.broadcasted_iota(jnp.int32, (W, 2 * W), 1)
    col_j = jax.lax.broadcasted_iota(jnp.int32, (W, 2 * W), 0)
    c_even = (col_k == 2 * col_j).astype(f32)      # input col j -> output col 2j
    c_odd = (col_k == 2 * col_j + 1).astype(f32)   # input col j -> output col 2j+1

    row_r = jax.lax.broadcasted_iota(jnp.int32, (2 * H, H), 0)
    row_i = jax.lax.broadcasted_iota(jnp.int32, (2 * H, H), 1)
    r_even = (row_r == 2 * row_i).astype(f32)      # input row i -> output row 2i
    r_odd = (row_r == 2 * row_i + 1).astype(f32)   # input row i -> output row 2i+1

    def mm(a, b):
        return jnp.dot(a, b, precision=hp, preferred_element_type=f32)

    for c in range(bc):  # bc is a small compile-time constant (<= 8), unrolled
        x1 = x_ref[0, 0, c].astype(f32) * 0.5
        x2 = x_ref[0, 1, c].astype(f32) * 0.5
        x3 = x_ref[0, 2, c].astype(f32) * 0.5
        x4 = x_ref[0, 3, c].astype(f32) * 0.5

        a = x1 - x2 - x3 + x4      # -> h[0::2, 0::2]
        b = x1 - x2 + x3 - x4      # -> h[1::2, 0::2]
        cdiag = x1 + x2 - x3 - x4  # -> h[0::2, 1::2]
        d = x1 + x2 + x3 + x4      # -> h[1::2, 1::2]

        even_rows = mm(a, c_even) + mm(cdiag, c_odd)      # (H, 2W)
        odd_rows = mm(b, c_even) + mm(d, c_odd)           # (H, 2W)
        h = mm(r_even, even_rows) + mm(r_odd, odd_rows)   # (2H, 2W)

        o_ref[0, c] = h


def iwt(x, *, max_channels_per_step=8, max_step_bytes=2 * 1024 * 1024):
    """Inverse wavelet transform: (B, 4*OC, H, W) -> (B, OC, 2H, 2W) float32."""
    B, C, H, W = x.shape
    if C % 4 != 0:
        raise ValueError("IWT input channel count must be divisible by 4")
    oc = C // 4

    # Free contiguous view: split channel axis into (subband, out_channel).
    x5 = x.reshape(B, 4, oc, H, W)

    # Channels per grid step: largest divisor of oc keeping the per-step
    # (input + output) data <= ~2 MiB so double-buffered blocks fit default
    # scoped VMEM on every TPU generation (v5e 16 MiB, v6e 32 MiB, v7x 64 MiB phys).
    in_bytes = 4 * H * W * x.dtype.itemsize
    out_bytes = 4 * H * W * jnp.dtype(jnp.float32).itemsize
    per_chan_bytes = in_bytes + out_bytes
    bc = 1
    for dvs in range(1, oc + 1):
        if (oc % dvs == 0 and dvs <= max_channels_per_step
                and dvs * per_chan_bytes <= max_step_bytes):
            bc = dvs

    grid = (B, oc // bc)

    return pl.pallas_call(
        _iwt_kernel,
        out_shape=jax.ShapeDtypeStruct((B, oc, 2 * H, 2 * W), jnp.float32),
        grid_spec=pltpu.PrefetchScalarGridSpec(
            num_scalar_prefetch=0,
            grid=grid,
            in_specs=[
                pl.BlockSpec((1, 4, bc, H, W), lambda b, c: (b, 0, c, 0, 0)),
            ],
            out_specs=pl.BlockSpec((1, bc, 2 * H, 2 * W), lambda b, c: (b, c, 0, 0)),
        ),
        compiler_params=pltpu.CompilerParams(
            dimension_semantics=("parallel", "parallel"),
        ),
    )(x5)


if __name__ == "__main__":
    key = jax.random.PRNGKey(0)
    # B=2, C=8 (=4 subbands x 2 output channels), 16x16 spatial -> output (2, 2, 32, 32)
    x = jax.random.normal(key, (2, 8, 16, 16), dtype=jnp.float32)

    iwt_fn = jax.jit(iwt)
    y = jax.block_until_ready(iwt_fn(x))

    # Pure-JAX reference mirroring the PyTorch iwt_init.
    def iwt_ref(xr):
        Br, Cr, Hr, Wr = xr.shape
        ocr = Cr // 4
        x1 = xr[:, 0:ocr] / 2
        x2 = xr[:, ocr:2 * ocr] / 2
        x3 = xr[:, 2 * ocr:3 * ocr] / 2
        x4 = xr[:, 3 * ocr:4 * ocr] / 2
        h = jnp.zeros((Br, ocr, 2 * Hr, 2 * Wr), jnp.float32)
        h = h.at[:, :, 0::2, 0::2].set(x1 - x2 - x3 + x4)
        h = h.at[:, :, 1::2, 0::2].set(x1 - x2 + x3 - x4)
        h = h.at[:, :, 0::2, 1::2].set(x1 + x2 - x3 - x4)
        h = h.at[:, :, 1::2, 1::2].set(x1 + x2 + x3 + x4)
        return h

    y_ref = iwt_ref(x)
    assert y.shape == (2, 2, 32, 32) and y.dtype == jnp.float32
    assert jnp.allclose(y, y_ref, atol=1e-5, rtol=1e-5), "mismatch vs reference"
    print("KERNEL_OK")
</pallas_src>

<mosaic_0001>
module attributes {stable_mosaic.version = 11 : i64} {
  func.func @_iwt_kernel(%arg0: i32, %arg1: i32, %arg2: memref<1x4x2x16x16xf32, #tpu.memory_space<vmem>>, %arg3: memref<1x2x32x32xf32, #tpu.memory_space<vmem>>) attributes {dimension_semantics = [#tpu.dimension_semantics<parallel>, #tpu.dimension_semantics<parallel>], iteration_bounds = array<i64: 2, 1>, scalar_prefetch = 0 : i64, scratch_operands = 0 : i64, tpu.core_type = #tpu.core_type<tc>, window_params = [{transform_indices = @transform_0, window_bounds = array<i64: 1, 4, 2, 16, 16>}, {transform_indices = @transform_1, window_bounds = array<i64: 1, 2, 32, 32>}]} {
    %0 = tpu.iota {dimensions = array<i32: 1>} : vector<16x32xi32>
    %1 = tpu.iota {dimensions = array<i32: 0>} : vector<16x32xi32>
    %c2_i32 = arith.constant 2 : i32
    %2 = vector.broadcast %c2_i32 : i32 to vector<16x32xi32>
    %3 = arith.muli %2, %1 : vector<16x32xi32>
    %4 = arith.cmpi eq, %0, %3 : vector<16x32xi32>
    %5 = arith.extui %4 : vector<16x32xi1> to vector<16x32xi32>
    %6 = arith.sitofp %5 : vector<16x32xi32> to vector<16x32xf32>
    %c2_i32_0 = arith.constant 2 : i32
    %7 = vector.broadcast %c2_i32_0 : i32 to vector<16x32xi32>
    %8 = arith.muli %7, %1 : vector<16x32xi32>
    %c1_i32 = arith.constant 1 : i32
    %9 = vector.broadcast %c1_i32 : i32 to vector<16x32xi32>
    %10 = arith.addi %8, %9 : vector<16x32xi32>
    %11 = arith.cmpi eq, %0, %10 : vector<16x32xi32>
    %12 = arith.extui %11 : vector<16x32xi1> to vector<16x32xi32>
    %13 = arith.sitofp %12 : vector<16x32xi32> to vector<16x32xf32>
    %14 = tpu.iota {dimensions = array<i32: 0>} : vector<32x16xi32>
    %15 = tpu.iota {dimensions = array<i32: 1>} : vector<32x16xi32>
    %c2_i32_1 = arith.constant 2 : i32
    %16 = vector.broadcast %c2_i32_1 : i32 to vector<32x16xi32>
    %17 = arith.muli %16, %15 : vector<32x16xi32>
    %18 = arith.cmpi eq, %14, %17 : vector<32x16xi32>
    %19 = arith.extui %18 : vector<32x16xi1> to vector<32x16xi32>
    %20 = arith.sitofp %19 : vector<32x16xi32> to vector<32x16xf32>
    %c2_i32_2 = arith.constant 2 : i32
    %21 = vector.broadcast %c2_i32_2 : i32 to vector<32x16xi32>
    %22 = arith.muli %21, %15 : vector<32x16xi32>
    %c1_i32_3 = arith.constant 1 : i32
    %23 = vector.broadcast %c1_i32_3 : i32 to vector<32x16xi32>
    %24 = arith.addi %22, %23 : vector<32x16xi32>
    %25 = arith.cmpi eq, %14, %24 : vector<32x16xi32>
    %26 = arith.extui %25 : vector<32x16xi1> to vector<32x16xi32>
    %27 = arith.sitofp %26 : vector<32x16xi32> to vector<32x16xf32>
    %c0 = arith.constant 0 : index
    %c0_4 = arith.constant 0 : index
    %c0_5 = arith.constant 0 : index
    %c0_6 = arith.constant 0 : index
    %c0_7 = arith.constant 0 : index
    %28 = vector.load %arg2[%c0, %c0_4, %c0_5, %c0_6, %c0_7] : memref<1x4x2x16x16xf32, #tpu.memory_space<vmem>>, vector<1x1x1x16x16xf32>
    %29 = vector.shape_cast %28 : vector<1x1x1x16x16xf32> to vector<16x16xf32>
    %cst = arith.constant 5.000000e-01 : f32
    %30 = vector.broadcast %cst : f32 to vector<16x16xf32>
    %31 = arith.mulf %29, %30 : vector<16x16xf32>
    %c0_8 = arith.constant 0 : index
    %c1 = arith.constant 1 : index
    %c0_9 = arith.constant 0 : index
    %c0_10 = arith.constant 0 : index
    %c0_11 = arith.constant 0 : index
    %32 = vector.load %arg2[%c0_8, %c1, %c0_9, %c0_10, %c0_11] : memref<1x4x2x16x16xf32, #tpu.memory_space<vmem>>, vector<1x1x1x16x16xf32>
    %33 = vector.shape_cast %32 : vector<1x1x1x16x16xf32> to vector<16x16xf32>
    %cst_12 = arith.constant 5.000000e-01 : f32
    %34 = vector.broadcast %cst_12 : f32 to vector<16x16xf32>
    %35 = arith.mulf %33, %34 : vector<16x16xf32>
    %c0_13 = arith.constant 0 : index
    %c2 = arith.constant 2 : index
    %c0_14 = arith.constant 0 : index
    %c0_15 = arith.constant 0 : index
    %c0_16 = arith.constant 0 : index
    %36 = vector.load %arg2[%c0_13, %c2, %c0_14, %c0_15, %c0_16] : memref<1x4x2x16x16xf32, #tpu.memory_space<vmem>>, vector<1x1x1x16x16xf32>
    %37 = vector.shape_cast %36 : vector<1x1x1x16x16xf32> to vector<16x16xf32>
    %cst_17 = arith.constant 5.000000e-01 : f32
    %38 = vector.broadcast %cst_17 : f32 to vector<16x16xf32>
    %39 = arith.mulf %37, %38 : vector<16x16xf32>
    %c0_18 = arith.constant 0 : index
    %c3 = arith.constant 3 : index
    %c0_19 = arith.constant 0 : index
    %c0_20 = arith.constant 0 : index
    %c0_21 = arith.constant 0 : index
    %40 = vector.load %arg2[%c0_18, %c3, %c0_19, %c0_20, %c0_21] : memref<1x4x2x16x16xf32, #tpu.memory_space<vmem>>, vector<1x1x1x16x16xf32>
    %41 = vector.shape_cast %40 : vector<1x1x1x16x16xf32> to vector<16x16xf32>
    %cst_22 = arith.constant 5.000000e-01 : f32
    %42 = vector.broadcast %cst_22 : f32 to vector<16x16xf32>
    %43 = arith.mulf %41, %42 : vector<16x16xf32>
    %44 = arith.subf %31, %35 : vector<16x16xf32>
    %45 = arith.subf %44, %39 : vector<16x16xf32>
    %46 = arith.addf %45, %43 : vector<16x16xf32>
    %47 = arith.subf %31, %35 : vector<16x16xf32>
    %48 = arith.addf %47, %39 : vector<16x16xf32>
    %49 = arith.subf %48, %43 : vector<16x16xf32>
    %50 = arith.addf %31, %35 : vector<16x16xf32>
    %51 = arith.subf %50, %39 : vector<16x16xf32>
    %52 = arith.subf %51, %43 : vector<16x16xf32>
    %53 = arith.addf %31, %35 : vector<16x16xf32>
    %54 = arith.addf %53, %39 : vector<16x16xf32>
    %55 = arith.addf %54, %43 : vector<16x16xf32>
    %cst_23 = arith.constant dense<0.000000e+00> : vector<16x32xf32>
    %56 = tpu.matmul %46, %6, %cst_23 {dimension_numbers = #tpu.dot_dimension_numbers<[1], [0], [0], [1], [0, 0, 1, 1], [], []>, precision = #tpu.contract_precision<fp32>} : vector<16x16xf32>, vector<16x32xf32>, vector<16x32xf32> -> vector<16x32xf32>
    %cst_24 = arith.constant dense<0.000000e+00> : vector<16x32xf32>
    %57 = tpu.matmul %52, %13, %cst_24 {dimension_numbers = #tpu.dot_dimension_numbers<[1], [0], [0], [1], [0, 0, 1, 1], [], []>, precision = #tpu.contract_precision<fp32>} : vector<16x16xf32>, vector<16x32xf32>, vector<16x32xf32> -> vector<16x32xf32>
    %58 = arith.addf %56, %57 : vector<16x32xf32>
    %cst_25 = arith.constant dense<0.000000e+00> : vector<16x32xf32>
    %59 = tpu.matmul %49, %6, %cst_25 {dimension_numbers = #tpu.dot_dimension_numbers<[1], [0], [0], [1], [0, 0, 1, 1], [], []>, precision = #tpu.contract_precision<fp32>} : vector<16x16xf32>, vector<16x32xf32>, vector<16x32xf32> -> vector<16x32xf32>
    %cst_26 = arith.constant dense<0.000000e+00> : vector<16x32xf32>
    %60 = tpu.matmul %55, %13, %cst_26 {dimension_numbers = #tpu.dot_dimension_numbers<[1], [0], [0], [1], [0, 0, 1, 1], [], []>, precision = #tpu.contract_precision<fp32>} : vector<16x16xf32>, vector<16x32xf32>, vector<16x32xf32> -> vector<16x32xf32>
    %61 = arith.addf %59, %60 : vector<16x32xf32>
    %cst_27 = arith.constant dense<0.000000e+00> : vector<32x32xf32>
    %62 = tpu.matmul %20, %58, %cst_27 {dimension_numbers = #tpu.dot_dimension_numbers<[1], [0], [0], [1], [0, 0, 1, 1], [], []>, precision = #tpu.contract_precision<fp32>} : vector<32x16xf32>, vector<16x32xf32>, vector<32x32xf32> -> vector<32x32xf32>
    %cst_28 = arith.constant dense<0.000000e+00> : vector<32x32xf32>
    %63 = tpu.matmul %27, %61, %cst_28 {dimension_numbers = #tpu.dot_dimension_numbers<[1], [0], [0], [1], [0, 0, 1, 1], [], []>, precision = #tpu.contract_precision<fp32>} : vector<32x16xf32>, vector<16x32xf32>, vector<32x32xf32> -> vector<32x32xf32>
    %64 = arith.addf %62, %63 : vector<32x32xf32>
    %c0_29 = arith.constant 0 : index
    %c0_30 = arith.constant 0 : index
    %c0_31 = arith.constant 0 : index
    %c0_32 = arith.constant 0 : index
    %65 = vector.load %arg3[%c0_29, %c0_30, %c0_31, %c0_32] : memref<1x2x32x32xf32, #tpu.memory_space<vmem>>, vector<1x1x32x32xf32>
    %66 = vector.shape_cast %65 : vector<1x1x32x32xf32> to vector<32x32xf32>
    %67 = vector.shape_cast %64 : vector<32x32xf32> to vector<1x1x32x32xf32>
    tpu.vector_store %arg3[%c0_29, %c0_30, %c0_31, %c0_32], %67 {strides = array<i32>} : memref<1x2x32x32xf32, #tpu.memory_space<vmem>>, vector<1x1x32x32xf32>,
    %c0_33 = arith.constant 0 : index
    %c0_34 = arith.constant 0 : index
    %c1_35 = arith.constant 1 : index
    %c0_36 = arith.constant 0 : index
    %c0_37 = arith.constant 0 : index
    %68 = vector.load %arg2[%c0_33, %c0_34, %c1_35, %c0_36, %c0_37] : memref<1x4x2x16x16xf32, #tpu.memory_space<vmem>>, vector<1x1x1x16x16xf32>
    %69 = vector.shape_cast %68 : vector<1x1x1x16x16xf32> to vector<16x16xf32>
    %cst_38 = arith.constant 5.000000e-01 : f32
    %70 = vector.broadcast %cst_38 : f32 to vector<16x16xf32>
    %71 = arith.mulf %69, %70 : vector<16x16xf32>
    %c0_39 = arith.constant 0 : index
    %c1_40 = arith.constant 1 : index
    %c1_41 = arith.constant 1 : index
    %c0_42 = arith.constant 0 : index
    %c0_43 = arith.constant 0 : index
    %72 = vector.load %arg2[%c0_39, %c1_40, %c1_41, %c0_42, %c0_43] : memref<1x4x2x16x16xf32, #tpu.memory_space<vmem>>, vector<1x1x1x16x16xf32>
    %73 = vector.shape_cast %72 : vector<1x1x1x16x16xf32> to vector<16x16xf32>
    %cst_44 = arith.constant 5.000000e-01 : f32
    %74 = vector.broadcast %cst_44 : f32 to vector<16x16xf32>
    %75 = arith.mulf %73, %74 : vector<16x16xf32>
    %c0_45 = arith.constant 0 : index
    %c2_46 = arith.constant 2 : index
    %c1_47 = arith.constant 1 : index
    %c0_48 = arith.constant 0 : index
    %c0_49 = arith.constant 0 : index
    %76 = vector.load %arg2[%c0_45, %c2_46, %c1_47, %c0_48, %c0_49] : memref<1x4x2x16x16xf32, #tpu.memory_space<vmem>>, vector<1x1x1x16x16xf32>
    %77 = vector.shape_cast %76 : vector<1x1x1x16x16xf32> to vector<16x16xf32>
    %cst_50 = arith.constant 5.000000e-01 : f32
    %78 = vector.broadcast %cst_50 : f32 to vector<16x16xf32>
    %79 = arith.mulf %77, %78 : vector<16x16xf32>
    %c0_51 = arith.constant 0 : index
    %c3_52 = arith.constant 3 : index
    %c1_53 = arith.constant 1 : index
    %c0_54 = arith.constant 0 : index
    %c0_55 = arith.constant 0 : index
    %80 = vector.load %arg2[%c0_51, %c3_52, %c1_53, %c0_54, %c0_55] : memref<1x4x2x16x16xf32, #tpu.memory_space<vmem>>, vector<1x1x1x16x16xf32>
    %81 = vector.shape_cast %80 : vector<1x1x1x16x16xf32> to vector<16x16xf32>
    %cst_56 = arith.constant 5.000000e-01 : f32
    %82 = vector.broadcast %cst_56 : f32 to vector<16x16xf32>
    %83 = arith.mulf %81, %82 : vector<16x16xf32>
    %84 = arith.subf %71, %75 : vector<16x16xf32>
    %85 = arith.subf %84, %79 : vector<16x16xf32>
    %86 = arith.addf %85, %83 : vector<16x16xf32>
    %87 = arith.subf %71, %75 : vector<16x16xf32>
    %88 = arith.addf %87, %79 : vector<16x16xf32>
    %89 = arith.subf %88, %83 : vector<16x16xf32>
    %90 = arith.addf %71, %75 : vector<16x16xf32>
    %91 = arith.subf %90, %79 : vector<16x16xf32>
    %92 = arith.subf %91, %83 : vector<16x16xf32>
    %93 = arith.addf %71, %75 : vector<16x16xf32>
    %94 = arith.addf %93, %79 : vector<16x16xf32>
    %95 = arith.addf %94, %83 : vector<16x16xf32>
    %cst_57 = arith.constant dense<0.000000e+00> : vector<16x32xf32>
    %96 = tpu.matmul %86, %6, %cst_57 {dimension_numbers = #tpu.dot_dimension_numbers<[1], [0], [0], [1], [0, 0, 1, 1], [], []>, precision = #tpu.contract_precision<fp32>} : vector<16x16xf32>, vector<16x32xf32>, vector<16x32xf32> -> vector<16x32xf32>
    %cst_58 = arith.constant dense<0.000000e+00> : vector<16x32xf32>
    %97 = tpu.matmul %92, %13, %cst_58 {dimension_numbers = #tpu.dot_dimension_numbers<[1], [0], [0], [1], [0, 0, 1, 1], [], []>, precision = #tpu.contract_precision<fp32>} : vector<16x16xf32>, vector<16x32xf32>, vector<16x32xf32> -> vector<16x32xf32>
    %98 = arith.addf %96, %97 : vector<16x32xf32>
    %cst_59 = arith.constant dense<0.000000e+00> : vector<16x32xf32>
    %99 = tpu.matmul %89, %6, %cst_59 {dimension_numbers = #tpu.dot_dimension_numbers<[1], [0], [0], [1], [0, 0, 1, 1], [], []>, precision = #tpu.contract_precision<fp32>} : vector<16x16xf32>, vector<16x32xf32>, vector<16x32xf32> -> vector<16x32xf32>
    %cst_60 = arith.constant dense<0.000000e+00> : vector<16x32xf32>
    %100 = tpu.matmul %95, %13, %cst_60 {dimension_numbers = #tpu.dot_dimension_numbers<[1], [0], [0], [1], [0, 0, 1, 1], [], []>, precision = #tpu.contract_precision<fp32>} : vector<16x16xf32>, vector<16x32xf32>, vector<16x32xf32> -> vector<16x32xf32>
    %101 = arith.addf %99, %100 : vector<16x32xf32>
    %cst_61 = arith.constant dense<0.000000e+00> : vector<32x32xf32>
    %102 = tpu.matmul %20, %98, %cst_61 {dimension_numbers = #tpu.dot_dimension_numbers<[1], [0], [0], [1], [0, 0, 1, 1], [], []>, precision = #tpu.contract_precision<fp32>} : vector<32x16xf32>, vector<16x32xf32>, vector<32x32xf32> -> vector<32x32xf32>
    %cst_62 = arith.constant dense<0.000000e+00> : vector<32x32xf32>
    %103 = tpu.matmul %27, %101, %cst_62 {dimension_numbers = #tpu.dot_dimension_numbers<[1], [0], [0], [1], [0, 0, 1, 1], [], []>, precision = #tpu.contract_precision<fp32>} : vector<32x16xf32>, vector<16x32xf32>, vector<32x32xf32> -> vector<32x32xf32>
    %104 = arith.addf %102, %103 : vector<32x32xf32>
    %c0_63 = arith.constant 0 : index
    %c1_64 = arith.constant 1 : index
    %c0_65 = arith.constant 0 : index
    %c0_66 = arith.constant 0 : index
    %105 = vector.load %arg3[%c0_63, %c1_64, %c0_65, %c0_66] : memref<1x2x32x32xf32, #tpu.memory_space<vmem>>, vector<1x1x32x32xf32>
    %106 = vector.shape_cast %105 : vector<1x1x32x32xf32> to vector<32x32xf32>
    %107 = vector.shape_cast %104 : vector<32x32xf32> to vector<1x1x32x32xf32>
    tpu.vector_store %arg3[%c0_63, %c1_64, %c0_65, %c0_66], %107 {strides = array<i32>} : memref<1x2x32x32xf32, #tpu.memory_space<vmem>>, vector<1x1x32x32xf32>,
    return
  }
  func.func @transform_0(%arg0: i32, %arg1: i32) -> (i32, i32, i32, i32, i32) {
    %c0_i32 = arith.constant 0 : i32
    %c0_i32_0 = arith.constant 0 : i32
    %c0_i32_1 = arith.constant 0 : i32
    %c0_i32_2 = arith.constant 0 : i32
    return %arg0, %c0_i32, %arg1, %c0_i32_0, %c0_i32_1 : i32, i32, i32, i32, i32
  }
  func.func @transform_1(%arg0: i32, %arg1: i32) -> (i32, i32, i32, i32) {
    %c0_i32 = arith.constant 0 : i32
    %c0_i32_0 = arith.constant 0 : i32
    %c0_i32_1 = arith.constant 0 : i32
    return %arg0, %arg1, %c0_i32, %c0_i32_0 : i32, i32, i32, i32
  }
}

</mosaic_0001>

<llo_original>
// kernel: iwt.1
$region0: #{iwt.1}
  #allocation0 [shape = 'u32[]', space=smem, size = 0x4, offset = 0x4, fixed_abs, tag = 'smem constant byte address 0x4 - core index']
  #allocation1 [shape = 'u32[144,128]{1,0:T(1,128)}', space=vmem, size = 0x12000, scoped, tag = 'internal scratch']
  %s0 = inlined_call_operand.hbm [shape: f32[2,4,2,16,16], index: 0, kind: input, shape index: {}]
  %s1 = inlined_call_operand.hbm [shape: f32[2,2,32,32], index: 1, kind: output, shape index: {}]
  %s2 = sld [smem:[#allocation0]]
  $region41: #{iwt.1} parent=0
    _
  %s4 = ssub.s32 1, %s2
  %s5 = scalar_select 0, %s4, %s2
  $region1: #{iwt.1} parent=0
    #allocation2 [shape = 'u8[131072]{0}', space=vmem, size = 0x20000, scoped, tag = 'input window, operand 0']
    #allocation3 [shape = 's32[2]{0}', space=sflag, size = 0x8, scoped, tag = 'scoped memory for iwt.1']
    #allocation4 [shape = 's32[2]{0}', space=sflag, size = 0x8, scoped, tag = 'scoped memory for iwt.1']
    #allocation5 [shape = 'u8[65536]{0}', space=vmem, size = 0x10000, scoped, tag = 'output window, operand 0']
    %6 = vsyncpa [#allocation3], 0
    %s7 = scalar_lea.sflag [#allocation3], 1
    %8 = vsyncpa %s7, 0
    %9 = vsyncpa [#allocation4], 0
    %s10 = scalar_lea.sflag [#allocation4], 1
    %11 = vsyncpa %s10, 0
    loop: start=0, step=1, limit=4
    $region2: #{iwt.1} parent=1 // loop_pre_header
      _
    $region3: #{iwt.1} parent=1 // loop_header
      %s13 = sphi 0, %s17
      %p14 = scmp.ge.s32.totalorder %s13, 4
      %s20 = sphi 0, %s32
      %s21 = sphi 0, %s28
      %s22 = sphi 0, %s20
      %s23 = sphi 0, %s21
      %s24 = sphi 0, %s22
      %s25 = sphi 0, %s23
      %s37 = sphi 0, %s39
      %s40 = sphi 0, %s37
      %s41 = sphi 0, %s40
      %s57 = sphi 0, %s41
      %s65 = sphi 0, %s67
      %s68 = sphi 0, %s65
      %s69 = sphi 0, %s68
      %s85 = sphi 0, %s69
    $region4: #{iwt.1} parent=1 // loop_header_branch
      %16 = sbr.rel (%p14) target = $region8
    $region5: #{iwt.1} parent=1 // loop_body
      %s18 = ssub.s32 %s13, 1
      %s19 = ssub.s32 %s13, 2
      %s26 = sadd.s32 1, %s21
      %p27 = scmp.ge.s32.totalorder %s26, 1
      %s28 = scalar_select %p27, 0, %s26
      %s29 = sadd.s32 1, %s20
      %s30 = scalar_select %p27, %s29, %s20
      %p31 = scmp.ge.s32.totalorder %s30, 2
      %s32 = scalar_select %p31, 0, %s30
      %s33 = ssub.s32 %s20, %s32
      %s34 = ssub.s32 %s21, %s28
      %s35 = sor.u32 %s33, %s34
      %p36 = scmp.eq.s32.totalorder %s35, 0
      %s38 = sadd.s32 %s37, 1
      %s39 = scalar_select %p36, %s37, %s38
      %p42 = pneg %p36
      %p43 = scmp.eq.s32.totalorder %s13, 1
      %p44 = por %p42, %p43
      %p45 = scmp.ne.s32.totalorder %s37, %s40
      %p46 = scmp.eq.s32.totalorder %s13, 0
      %p47 = por %p45, %p46
      %p48 = scmp.ne.s32.totalorder %s37, %s40
      %p49 = scmp.eq.s32.totalorder %s18, 1
      %p50 = por %p48, %p49
      %p51 = scmp.ne.s32.totalorder %s40, %s41
      %p52 = scmp.eq.s32.totalorder %s18, 0
      %p53 = por %p51, %p52
      %p54 = scmp.ne.s32.totalorder %s40, %s41
      %p55 = scmp.eq.s32.totalorder %s19, 1
      %p56 = por %p54, %p55
      %p58 = scmp.ne.s32.totalorder %s41, %s57
      %p59 = scmp.eq.s32.totalorder %s19, 0
      %p60 = por %p58, %p59
      %s61 = ssub.s32 %s20, %s32
      %s62 = ssub.s32 %s21, %s28
      %s63 = sor.u32 %s61, %s62
      %p64 = scmp.eq.s32.totalorder %s63, 0
      %s66 = sadd.s32 %s65, 1
      %s67 = scalar_select %p64, %s65, %s66
      %p70 = pneg %p64
      %p71 = scmp.eq.s32.totalorder %s13, 1
      %p72 = por %p70, %p71
      %p73 = scmp.ne.s32.totalorder %s65, %s68
      %p74 = scmp.eq.s32.totalorder %s13, 0
      %p75 = por %p73, %p74
      %p76 = scmp.ne.s32.totalorder %s65, %s68
      %p77 = scmp.eq.s32.totalorder %s18, 1
      %p78 = por %p76, %p77
      %p79 = scmp.ne.s32.totalorder %s68, %s69
      %p80 = scmp.eq.s32.totalorder %s18, 0
      %p81 = por %p79, %p80
      %p82 = scmp.ne.s32.totalorder %s68, %s69
      %p83 = scmp.eq.s32.totalorder %s19, 1
      %p84 = por %p82, %p83
      %p86 = scmp.ne.s32.totalorder %s69, %s85
      %p87 = scmp.eq.s32.totalorder %s19, 0
      %p88 = por %p86, %p87
      %p89 = scmp.le.s32.totalorder 1, %s13
      %p90 = scmp.lt.s32.totalorder %s13, 3
      %p91 = pnand %p89, %p90
      %p92 = pneg %p91
      // Predicated region
      $region9: #{iwt.1} parent=5 // pred_check
        _
      $region10: #{iwt.1} parent=5 // pred_check_branch
        %94 = sbr.rel (%p91) target = $region12
      $region11: #{iwt.1} parent=5 // pred_region
        %s95 = ssub.s32 %s13, 1
      $region12: #{iwt.1} parent=5 // pred_fallthru
        _
      %p96 = scmp.lt.s32.totalorder %s13, 2
      // Predicated region
      $region13: #{iwt.1} parent=5 // pred_check
        %p97 = pneg %p96
      $region14: #{iwt.1} parent=5 // pred_check_branch
        %99 = sbr.rel (%p97) target = $region16
      $region15: #{iwt.1} parent=5 // pred_region
        // Predicated region
        $region17: #{iwt.1} parent=15 // pred_check
          %p100 = pneg %p47
        $region18: #{iwt.1} parent=15 // pred_check_branch
          %102 = sbr.rel (%p100) target = $region20
        $region19: #{iwt.1} parent=15 // pred_region
          %s103 = sand.u32 %s37, 1
          %s104 = scalar_lea.sflag [#allocation3], %s103
          %s105 = sand.u32 %s37, 1
          %s106 = smul.addr %s105, 128
          %s107 = scalar_lea.vmem [#allocation2], %s106
          %s108 = smul.u32 2, %s21
          %s110 = ssub.s32 2048, 2048
          %111 = vsyncadd %s104, %s110
          %s112 = smul.addr %s108, 2
          %s113 = smul.addr %s20, 16
          %s114 = sadd.s32 %s112, %s113
          %s115 = smul.addr %s114, 128
          %s116 = scalar_lea.hbm %s0, %s115
          %s117 = sshll.u32 %s107, 4
          %s118 = int_to_ptr.vmem [resolvable:$true] %s117
          %123 = dma.hbm_to_vmem [thread:$0]  %s116, 2048, %s118, %s104, 128, 128, 8
        $region20: #{iwt.1} parent=15 // pred_fallthru
          _
      $region16: #{iwt.1} parent=5 // pred_fallthru
        _
      %p124 = scmp.le.s32.totalorder 1, %s13
      %p125 = scmp.lt.s32.totalorder %s13, 3
      %p126 = pnand %p124, %p125
      %p127 = pneg %p126
      // Predicated region
      $region21: #{iwt.1} parent=5 // pred_check
        _
      $region22: #{iwt.1} parent=5 // pred_check_branch
        %129 = sbr.rel (%p126) target = $region24
      $region23: #{iwt.1} parent=5 // pred_region
        %s130 = ssub.s32 %s13, 1
        %s131 = sand.u32 %s40, 1
        %s132 = scalar_lea.sflag [#allocation3], %s131
        %s133 = sand.u32 %s40, 1
        %s134 = smul.addr %s133, 128
        %s135 = scalar_lea.vmem [#allocation2], %s134
        // Predicated region
        $region25: #{iwt.1} parent=23 // pred_check
          %p136 = pneg %p53
        $region26: #{iwt.1} parent=23 // pred_check_branch
          %138 = sbr.rel (%p136) target = $region28
        $region27: #{iwt.1} parent=23 // pred_region
          %139 = dma.done %s132, 2048
        $region28: #{iwt.1} parent=23 // pred_fallthru
          _
        %s140 = sand.u32 %s40, 1
        %s141 = scalar_lea.sflag [#allocation3], %s140
        %s142 = sand.u32 %s40, 1
        %s143 = smul.addr %s142, 128
        %s144 = scalar_lea.vmem [#allocation2], %s143
        %p145 = pneg %p53
        %p146 = pneg %p50
        %p147 = pneg %p81
        %p148 = pneg %p78
        %s149 = sand.u32 %s68, 1
        %s150 = scalar_lea.sflag [#allocation4], %s149
        %s151 = sand.u32 %s68, 1
        %s152 = smul.addr %s151, 64
        %s153 = scalar_lea.vmem [#allocation5], %s152
        %s154 = smul.u32 2, %s23
        %s155 = smul.u32 2, %s23
        %v156 = vlaneseq
        %v157 = vand.u32 %v156, 127
        %v158 = vlaneseq
        %v159 = vshrl.u32 %v158, 7
        %v160 = vadd.s32 %v159, 8
        %v161 = vmul.u32 %v159, 2
        %v162 = vmul.u32 %v160, 2
        %vm163 = vcmp.eq.s32.totalorder %v157, %v161
        %vm164 = vcmp.eq.s32.totalorder %v157, %v162
        %v165 = vsel %vm163, 1, 0
        %v166 = vsel %vm164, 1, 0
        %v167 = vcvt.s32.f32 %v165
        %v168 = vcvt.s32.f32 %v166
        %v169 = vadd.s32 %v161, 1
        %v170 = vadd.s32 %v162, 1
        %vm171 = vcmp.eq.s32.totalorder %v157, %v169
        %vm172 = vcmp.eq.s32.totalorder %v157, %v170
        %v173 = vsel %vm171, 1, 0
        %v174 = vsel %vm172, 1, 0
        %v175 = vcvt.s32.f32 %v173
        %v176 = vcvt.s32.f32 %v174
        %v177 = vadd.s32 %v159, 16
        %v178 = vadd.s32 %v159, 24
        %v179 = vmul.u32 %v157, 2
        %vm180 = vcmp.eq.s32.totalorder %v159, %v179
        %vm181 = vcmp.eq.s32.totalorder %v160, %v179
        %vm182 = vcmp.eq.s32.totalorder %v177, %v179
        %vm183 = vcmp.eq.s32.totalorder %v178, %v179
        %v184 = vsel %vm180, 1, 0
        %v185 = vsel %vm181, 1, 0
        %v186 = vsel %vm182, 1, 0
        %v187 = vsel %vm183, 1, 0
        %v188 = vcvt.s32.f32 %v184
        %v189 = vcvt.s32.f32 %v185
        %v190 = vcvt.s32.f32 %v186
        %v191 = vcvt.s32.f32 %v187
        %v192 = vadd.s32 %v179, 1
        %vm193 = vcmp.eq.s32.totalorder %v159, %v192
        %vm194 = vcmp.eq.s32.totalorder %v160, %v192
        %vm195 = vcmp.eq.s32.totalorder %v177, %v192
        %vm196 = vcmp.eq.s32.totalorder %v178, %v192
        %v197 = vsel %vm193, 1, 0
        %v198 = vsel %vm194, 1, 0
        %v199 = vsel %vm195, 1, 0
        %v200 = vsel %vm196, 1, 0
        %v201 = vcvt.s32.f32 %v197
        %v202 = vcvt.s32.f32 %v198
        %v203 = vcvt.s32.f32 %v199
        %v204 = vcvt.s32.f32 %v200
        %v205 = vld [vmem:[%s135] sm:$0xff]
        %v206 = vld [vmem:[%s135 + $0x8] sm:$0xff]
        %v207 = vmul.f32 %v205, 0.5
        %v208 = vmul.f32 %v206, 0.5
        %s209 = scalar_lea.vmem %s135, 32 [#allocation2]
        %v210 = vld [vmem:[%s209] sm:$0xff]
        %v211 = vld [vmem:[%s209 + $0x8] sm:$0xff]
        %v212 = vmul.f32 %v210, 0.5
        %v213 = vmul.f32 %v211, 0.5
        %s214 = scalar_lea.vmem %s135, 64 [#allocation2]
        %v215 = vld [vmem:[%s214] sm:$0xff]
        %v216 = vld [vmem:[%s214 + $0x8] sm:$0xff]
        %v217 = vmul.f32 %v215, 0.5
        %v218 = vmul.f32 %v216, 0.5
        %s219 = scalar_lea.vmem %s135, 96 [#allocation2]
        %v220 = vld [vmem:[%s219] sm:$0xff]
        %v221 = vld [vmem:[%s219 + $0x8] sm:$0xff]
        %v222 = vmul.f32 %v220, 0.5
        %v223 = vmul.f32 %v221, 0.5
        %v224 = vsub.f32 %v207, %v212
        %v225 = vsub.f32 %v208, %v213
        %v226 = vsub.f32 %v224, %v217
        %v227 = vsub.f32 %v225, %v218
        %v228 = vadd.f32 %v226, %v222
        %v229 = vadd.f32 %v227, %v223
        %v230 = vadd.f32 %v224, %v217
        %v231 = vadd.f32 %v225, %v218
        %v232 = vsub.f32 %v230, %v222
        %v233 = vsub.f32 %v231, %v223
        %v234 = vadd.f32 %v207, %v212
        %v235 = vadd.f32 %v208, %v213
        %v236 = vsub.f32 %v234, %v217
        %v237 = vsub.f32 %v235, %v218
        %v238 = vsub.f32 %v236, %v222
        %v239 = vsub.f32 %v237, %v223
        %v240 = vadd.f32 %v234, %v217
        %v241 = vadd.f32 %v235, %v218
        %v242 = vadd.f32 %v240, %v222
        %v243 = vadd.f32 %v241, %v223
        %vm244 = vcmask 130048
        %v246 = vsel %vm244, %v238, 0
        %v249 = vsel %vm244, %v239, 0
        %251 = vmatprep.subr.mxu0 0.0
        %252 = vmatpush1.msra.mxu0 0.0
        %253 = vmatprep.subr.mxu0 0.0
        %254 = vmatpush1.msra.mxu0 0.0
        %255 = vmatprep.subr.mxu0 0.0
        %256 = vmatpush1.msra.mxu0 0.0
        %257 = vmatprep.subr.mxu0 0.0
        %258 = vmatpush1.msra.mxu0 0.0
        %259 = vmatprep.subr.mxu0 0.0
        %260 = vmatpush1.msra.mxu0 0.0
        %261 = vmatprep.subr.mxu0 0.0
        %262 = vmatpush1.msra.mxu0 0.0
        %263 = vmatprep.subr.mxu0 0.0
        %264 = vmatpush1.msra.mxu0 0.0
        %265 = vmatprep.subr.mxu0 0.0
        %266 = vmatpush1.msra.mxu0 0.0
        %267 = vmatprep.subr.mxu0 0.0
        %268 = vmatpush1.msra.mxu0 0.0
        %269 = vmatprep.subr.mxu0 0.0
        %270 = vmatpush1.msra.mxu0 0.0
        %271 = vmatprep.subr.mxu0 0.0
        %272 = vmatpush1.msra.mxu0 0.0
        %273 = vmatprep.subr.mxu0 0.0
        %274 = vmatpush1.msra.mxu0 0.0
        %275 = vmatprep.subr.mxu0 0.0
        %276 = vmatpush1.msra.mxu0 0.0
        %277 = vmatprep.subr.mxu0 0.0
        %278 = vmatpush1.msra.mxu0 0.0
        %279 = vmatprep.subr.mxu0 0.0
        %v280 = vand.u32 %v176, 4294901760
        %281 = vmatpush1.msra.mxu0 %v280
        %282 = vmatprep.subr.mxu0 0.0
        %v283 = vand.u32 %v175, 4294901760
        %284 = vmatpush1.msra.mxu0 %v283
        %285 = vmatprep.subr.mxu0 0.0
        %286 = vmatpush2.msra.mxu0 0.0
        %287 = vmatprep.subr.mxu0 0.0
        %288 = vmatpush2.msra.mxu0 0.0
        %289 = vmatprep.subr.mxu0 0.0
        %290 = vmatpush2.msra.mxu0 0.0
        %291 = vmatprep.subr.mxu0 0.0
        %292 = vmatpush2.msra.mxu0 0.0
        %293 = vmatprep.subr.mxu0 0.0
        %294 = vmatpush2.msra.mxu0 0.0
        %295 = vmatprep.subr.mxu0 0.0
        %296 = vmatpush2.msra.mxu0 0.0
        %297 = vmatprep.subr.mxu0 0.0
        %298 = vmatpush2.msra.mxu0 0.0
        %299 = vmatprep.subr.mxu0 0.0
        %300 = vmatpush2.msra.mxu0 0.0
        %301 = vmatprep.subr.mxu0 0.0
        %302 = vmatpush2.msra.mxu0 0.0
        %303 = vmatprep.subr.mxu0 0.0
        %304 = vmatpush2.msra.mxu0 0.0
        %305 = vmatprep.subr.mxu0 0.0
        %306 = vmatpush2.msra.mxu0 0.0
        %307 = vmatprep.subr.mxu0 0.0
        %308 = vmatpush2.msra.mxu0 0.0
        %309 = vmatprep.subr.mxu0 0.0
        %310 = vmatpush2.msra.mxu0 0.0
        %311 = vmatprep.subr.mxu0 0.0
        %312 = vmatpush2.msra.mxu0 0.0
        %313 = vmatprep.subr.mxu0 0.0
        %314 = vmatpush2.msra.mxu0 0.0
        %315 = vmatprep.subr.mxu0 0.0
        %316 = vmatpush2.msra.mxu0 0.0
        %317 = vmatprep.mubr.f32.mxu0 0.0
        %v318 = vand.u32 %v246, 4294901760
        %v319 = vsub.f32 %v246, %v318
        %v320 = vand.u32 %v319, 4294901760
        %v321 = vsub.f32 %v319, %v320
        %v322 = vand.u32 %v321, 4294901760
        %323 = vmatmul.mubr.f32.gmra.mxu0 %v322
        %v324 = vpop.f32.mrf.mxu0
        %v325 = vadd.f32 0.0, %v324
        %v326 = vpop.f32.mrf.mxu0
        %327 = vmatprep.mubr.f32.mxu0 0.0
        %v328 = vand.u32 %v249, 4294901760
        %v329 = vsub.f32 %v249, %v328
        %v330 = vand.u32 %v329, 4294901760
        %v331 = vsub.f32 %v329, %v330
        %v332 = vand.u32 %v331, 4294901760
        %333 = vmatmul.mubr.f32.gmra.mxu0 %v332
        %v334 = vpop.f32.mrf.mxu0
        %v335 = vadd.f32 0.0, %v334
        %v336 = vpop.f32.mrf.mxu0
        %337 = vdwg.mxu0
        %338 = vmatprep.subr.mxu0 0.0
        %339 = vmatpush1.msra.mxu0 0.0
        %340 = vmatprep.subr.mxu0 0.0
        %341 = vmatpush1.msra.mxu0 0.0
        %342 = vmatprep.subr.mxu0 0.0
        %343 = vmatpush1.msra.mxu0 0.0
        %344 = vmatprep.subr.mxu0 0.0
        %345 = vmatpush1.msra.mxu0 0.0
        %346 = vmatprep.subr.mxu0 0.0
        %347 = vmatpush1.msra.mxu0 0.0
        %348 = vmatprep.subr.mxu0 0.0
        %349 = vmatpush1.msra.mxu0 0.0
        %350 = vmatprep.subr.mxu0 0.0
        %351 = vmatpush1.msra.mxu0 0.0
        %352 = vmatprep.subr.mxu0 0.0
        %353 = vmatpush1.msra.mxu0 0.0
        %354 = vmatprep.subr.mxu0 0.0
        %355 = vmatpush1.msra.mxu0 0.0
        %356 = vmatprep.subr.mxu0 0.0
        %357 = vmatpush1.msra.mxu0 0.0
        %358 = vmatprep.subr.mxu0 0.0
        %359 = vmatpush1.msra.mxu0 0.0
        %360 = vmatprep.subr.mxu0 0.0
        %361 = vmatpush1.msra.mxu0 0.0
        %362 = vmatprep.subr.mxu0 0.0
        %363 = vmatpush1.msra.mxu0 0.0
        %364 = vmatprep.subr.mxu0 0.0
        %365 = vmatpush1.msra.mxu0 0.0
        %366 = vmatprep.subr.mxu0 0.0
        %v367 = vand.u32 %v176, 4294901760
        %v368 = vsub.f32 %v176, %v367
        %v369 = vand.u32 %v368, 4294901760
        %v370 = vsub.f32 %v368, %v369
        %v371 = vand.u32 %v370, 4294901760
        %372 = vmatpush1.msra.mxu0 %v371
        %373 = vmatprep.subr.mxu0 0.0
        %v374 = vand.u32 %v175, 4294901760
        %v375 = vsub.f32 %v175, %v374
        %v376 = vand.u32 %v375, 4294901760
        %v377 = vsub.f32 %v375, %v376
        %v378 = vand.u32 %v377, 4294901760
        %379 = vmatpush1.msra.mxu0 %v378
        %380 = vmatprep.subr.mxu0 0.0
        %381 = vmatpush2.msra.mxu0 0.0
        %382 = vmatprep.subr.mxu0 0.0
        %383 = vmatpush2.msra.mxu0 0.0
        %384 = vmatprep.subr.mxu0 0.0
        %385 = vmatpush2.msra.mxu0 0.0
        %386 = vmatprep.subr.mxu0 0.0
        %387 = vmatpush2.msra.mxu0 0.0
        %388 = vmatprep.subr.mxu0 0.0
        %389 = vmatpush2.msra.mxu0 0.0
        %390 = vmatprep.subr.mxu0 0.0
        %391 = vmatpush2.msra.mxu0 0.0
        %392 = vmatprep.subr.mxu0 0.0
        %393 = vmatpush2.msra.mxu0 0.0
        %394 = vmatprep.subr.mxu0 0.0
        %395 = vmatpush2.msra.mxu0 0.0
        %396 = vmatprep.subr.mxu0 0.0
        %397 = vmatpush2.msra.mxu0 0.0
        %398 = vmatprep.subr.mxu0 0.0
        %399 = vmatpush2.msra.mxu0 0.0
        %400 = vmatprep.subr.mxu0 0.0
        %401 = vmatpush2.msra.mxu0 0.0
        %402 = vmatprep.subr.mxu0 0.0
        %403 = vmatpush2.msra.mxu0 0.0
        %404 = vmatprep.subr.mxu0 0.0
        %405 = vmatpush2.msra.mxu0 0.0
        %406 = vmatprep.subr.mxu0 0.0
        %407 = vmatpush2.msra.mxu0 0.0
        %408 = vmatprep.subr.mxu0 0.0
        %409 = vmatpush2.msra.mxu0 0.0
        %410 = vmatprep.subr.mxu0 0.0
        %411 = vmatpush2.msra.mxu0 0.0
        %412 = vmatprep.mubr.f32.mxu0 0.0
        %v413 = vand.u32 %v246, 4294901760
        %414 = vmatmul.mubr.f32.gmra.mxu0 %v413
        %v415 = vpop.f32.mrf.mxu0
        %v416 = vadd.f32 %v325, %v415
        %v417 = vpop.f32.mrf.mxu0
        %418 = vmatprep.mubr.f32.mxu0 0.0
        %v419 = vand.u32 %v249, 4294901760
        %420 = vmatmul.mubr.f32.gmra.mxu0 %v419
        %v421 = vpop.f32.mrf.mxu0
        %v422 = vadd.f32 %v335, %v421
        %v423 = vpop.f32.mrf.mxu0
        %424 = vdwg.mxu0
        %425 = vmatprep.subr.mxu0 0.0
        %426 = vmatpush1.msra.mxu0 0.0
        %427 = vmatprep.subr.mxu0 0.0
        %428 = vmatpush1.msra.mxu0 0.0
        %429 = vmatprep.subr.mxu0 0.0
        %430 = vmatpush1.msra.mxu0 0.0
        %431 = vmatprep.subr.mxu0 0.0
        %432 = vmatpush1.msra.mxu0 0.0
        %433 = vmatprep.subr.mxu0 0.0
        %434 = vmatpush1.msra.mxu0 0.0
        %435 = vmatprep.subr.mxu0 0.0
        %436 = vmatpush1.msra.mxu0 0.0
        %437 = vmatprep.subr.mxu0 0.0
        %438 = vmatpush1.msra.mxu0 0.0
        %439 = vmatprep.subr.mxu0 0.0
        %440 = vmatpush1.msra.mxu0 0.0
        %441 = vmatprep.subr.mxu0 0.0
        %442 = vmatpush1.msra.mxu0 0.0
        %443 = vmatprep.subr.mxu0 0.0
        %444 = vmatpush1.msra.mxu0 0.0
        %445 = vmatprep.subr.mxu0 0.0
        %446 = vmatpush1.msra.mxu0 0.0
        %447 = vmatprep.subr.mxu0 0.0
        %448 = vmatpush1.msra.mxu0 0.0
        %449 = vmatprep.subr.mxu0 0.0
        %450 = vmatpush1.msra.mxu0 0.0
        %451 = vmatprep.subr.mxu0 0.0
        %452 = vmatpush1.msra.mxu0 0.0
        %453 = vmatprep.subr.mxu0 0.0
        %v454 = vand.u32 %v176, 4294901760
        %v455 = vsub.f32 %v176, %v454
        %456 = vmatpush1.msra.mxu0 %v455
        %457 = vmatprep.subr.mxu0 0.0
        %v458 = vand.u32 %v175, 4294901760
        %v459 = vsub.f32 %v175, %v458
        %460 = vmatpush1.msra.mxu0 %v459
        %461 = vmatprep.subr.mxu0 0.0
        %462 = vmatpush2.msra.mxu0 0.0
        %463 = vmatprep.subr.mxu0 0.0
        %464 = vmatpush2.msra.mxu0 0.0
        %465 = vmatprep.subr.mxu0 0.0
        %466 = vmatpush2.msra.mxu0 0.0
        %467 = vmatprep.subr.mxu0 0.0
        %468 = vmatpush2.msra.mxu0 0.0
        %469 = vmatprep.subr.mxu0 0.0
        %470 = vmatpush2.msra.mxu0 0.0
        %471 = vmatprep.subr.mxu0 0.0
        %472 = vmatpush2.msra.mxu0 0.0
        %473 = vmatprep.subr.mxu0 0.0
        %474 = vmatpush2.msra.mxu0 0.0
        %475 = vmatprep.subr.mxu0 0.0
        %476 = vmatpush2.msra.mxu0 0.0
        %477 = vmatprep.subr.mxu0 0.0
        %478 = vmatpush2.msra.mxu0 0.0
        %479 = vmatprep.subr.mxu0 0.0
        %480 = vmatpush2.msra.mxu0 0.0
        %481 = vmatprep.subr.mxu0 0.0
        %482 = vmatpush2.msra.mxu0 0.0
        %483 = vmatprep.subr.mxu0 0.0
        %484 = vmatpush2.msra.mxu0 0.0
        %485 = vmatprep.subr.mxu0 0.0
        %486 = vmatpush2.msra.mxu0 0.0
        %487 = vmatprep.subr.mxu0 0.0
        %488 = vmatpush2.msra.mxu0 0.0
        %489 = vmatprep.subr.mxu0 0.0
        %490 = vmatpush2.msra.mxu0 0.0
        %491 = vmatprep.subr.mxu0 0.0
        %492 = vmatpush2.msra.mxu0 0.0
        %493 = vmatprep.mubr.f32.mxu0 0.0
        %v494 = vand.u32 %v246, 4294901760
        %v495 = vsub.f32 %v246, %v494
        %496 = vmatmul.mubr.f32.gmra.mxu0 %v495
        %v497 = vpop.f32.mrf.mxu0
        %v498 = vadd.f32 %v416, %v497
        %v499 = vpop.f32.mrf.mxu0
        %500 = vmatprep.mubr.f32.mxu0 0.0
        %v501 = vand.u32 %v249, 4294901760
        %v502 = vsub.f32 %v249, %v501
        %503 = vmatmul.mubr.f32.gmra.mxu0 %v502
        %v504 = vpop.f32.mrf.mxu0
        %v505 = vadd.f32 %v422, %v504
        %v506 = vpop.f32.mrf.mxu0
        %507 = vdwg.mxu0
        %508 = vmatprep.subr.mxu0 0.0
        %509 = vmatpush1.msra.mxu0 0.0
        %510 = vmatprep.subr.mxu0 0.0
        %511 = vmatpush1.msra.mxu0 0.0
        %512 = vmatprep.subr.mxu0 0.0
        %513 = vmatpush1.msra.mxu0 0.0
        %514 = vmatprep.subr.mxu0 0.0
        %515 = vmatpush1.msra.mxu0 0.0
        %516 = vmatprep.subr.mxu0 0.0
        %517 = vmatpush1.msra.mxu0 0.0
        %518 = vmatprep.subr.mxu0 0.0
        %519 = vmatpush1.msra.mxu0 0.0
        %520 = vmatprep.subr.mxu0 0.0
        %521 = vmatpush1.msra.mxu0 0.0
        %522 = vmatprep.subr.mxu0 0.0
        %523 = vmatpush1.msra.mxu0 0.0
        %524 = vmatprep.subr.mxu0 0.0
        %525 = vmatpush1.msra.mxu0 0.0
        %526 = vmatprep.subr.mxu0 0.0
        %527 = vmatpush1.msra.mxu0 0.0
        %528 = vmatprep.subr.mxu0 0.0
        %529 = vmatpush1.msra.mxu0 0.0
        %530 = vmatprep.subr.mxu0 0.0
        %531 = vmatpush1.msra.mxu0 0.0
        %532 = vmatprep.subr.mxu0 0.0
        %533 = vmatpush1.msra.mxu0 0.0
        %534 = vmatprep.subr.mxu0 0.0
        %535 = vmatpush1.msra.mxu0 0.0
        %536 = vmatprep.subr.mxu0 0.0
        %v537 = vand.u32 %v176, 4294901760
        %538 = vmatpush1.msra.mxu0 %v537
        %539 = vmatprep.subr.mxu0 0.0
        %v540 = vand.u32 %v175, 4294901760
        %541 = vmatpush1.msra.mxu0 %v540
        %542 = vmatprep.subr.mxu0 0.0
        %543 = vmatpush2.msra.mxu0 0.0
        %544 = vmatprep.subr.mxu0 0.0
        %545 = vmatpush2.msra.mxu0 0.0
        %546 = vmatprep.subr.mxu0 0.0
        %547 = vmatpush2.msra.mxu0 0.0
        %548 = vmatprep.subr.mxu0 0.0
        %549 = vmatpush2.msra.mxu0 0.0
        %550 = vmatprep.subr.mxu0 0.0
        %551 = vmatpush2.msra.mxu0 0.0
        %552 = vmatprep.subr.mxu0 0.0
        %553 = vmatpush2.msra.mxu0 0.0
        %554 = vmatprep.subr.mxu0 0.0
        %555 = vmatpush2.msra.mxu0 0.0
        %556 = vmatprep.subr.mxu0 0.0
        %557 = vmatpush2.msra.mxu0 0.0
        %558 = vmatprep.subr.mxu0 0.0
        %559 = vmatpush2.msra.mxu0 0.0
        %560 = vmatprep.subr.mxu0 0.0
        %561 = vmatpush2.msra.mxu0 0.0
        %562 = vmatprep.subr.mxu0 0.0
        %563 = vmatpush2.msra.mxu0 0.0
        %564 = vmatprep.subr.mxu0 0.0
        %565 = vmatpush2.msra.mxu0 0.0
        %566 = vmatprep.subr.mxu0 0.0
        %567 = vmatpush2.msra.mxu0 0.0
        %568 = vmatprep.subr.mxu0 0.0
        %569 = vmatpush2.msra.mxu0 0.0
        %570 = vmatprep.subr.mxu0 0.0
        %571 = vmatpush2.msra.mxu0 0.0
        %572 = vmatprep.subr.mxu0 0.0
        %573 = vmatpush2.msra.mxu0 0.0
        %574 = vmatprep.mubr.f32.mxu0 0.0
        %v575 = vand.u32 %v246, 4294901760
        %v576 = vsub.f32 %v246, %v575
        %v577 = vand.u32 %v576, 4294901760
        %578 = vmatmul.mubr.f32.gmra.mxu0 %v577
        %v579 = vpop.f32.mrf.mxu0
        %v580 = vadd.f32 %v498, %v579
        %v581 = vpop.f32.mrf.mxu0
        %582 = vmatprep.mubr.f32.mxu0 0.0
        %v583 = vand.u32 %v249, 4294901760
        %v584 = vsub.f32 %v249, %v583
        %v585 = vand.u32 %v584, 4294901760
        %586 = vmatmul.mubr.f32.gmra.mxu0 %v585
        %v587 = vpop.f32.mrf.mxu0
        %v588 = vadd.f32 %v505, %v587
        %v589 = vpop.f32.mrf.mxu0
        %590 = vdwg.mxu0
        %591 = vmatprep.subr.mxu0 0.0
        %592 = vmatpush1.msra.mxu0 0.0
        %593 = vmatprep.subr.mxu0 0.0
        %594 = vmatpush1.msra.mxu0 0.0
        %595 = vmatprep.subr.mxu0 0.0
        %596 = vmatpush1.msra.mxu0 0.0
        %597 = vmatprep.subr.mxu0 0.0
        %598 = vmatpush1.msra.mxu0 0.0
        %599 = vmatprep.subr.mxu0 0.0
        %600 = vmatpush1.msra.mxu0 0.0
        %601 = vmatprep.subr.mxu0 0.0
        %602 = vmatpush1.msra.mxu0 0.0
        %603 = vmatprep.subr.mxu0 0.0
        %604 = vmatpush1.msra.mxu0 0.0
        %605 = vmatprep.subr.mxu0 0.0
        %606 = vmatpush1.msra.mxu0 0.0
        %607 = vmatprep.subr.mxu0 0.0
        %608 = vmatpush1.msra.mxu0 0.0
        %609 = vmatprep.subr.mxu0 0.0
        %610 = vmatpush1.msra.mxu0 0.0
        %611 = vmatprep.subr.mxu0 0.0
        %612 = vmatpush1.msra.mxu0 0.0
        %613 = vmatprep.subr.mxu0 0.0
        %614 = vmatpush1.msra.mxu0 0.0
        %615 = vmatprep.subr.mxu0 0.0
        %616 = vmatpush1.msra.mxu0 0.0
        %617 = vmatprep.subr.mxu0 0.0
        %618 = vmatpush1.msra.mxu0 0.0
        %619 = vmatprep.subr.mxu0 0.0
        %v620 = vand.u32 %v176, 4294901760
        %v621 = vsub.f32 %v176, %v620
        %v622 = vand.u32 %v621, 4294901760
        %623 = vmatpush1.msra.mxu0 %v622
        %624 = vmatprep.subr.mxu0 0.0
        %v625 = vand.u32 %v175, 4294901760
        %v626 = vsub.f32 %v175, %v625
        %v627 = vand.u32 %v626, 4294901760
        %628 = vmatpush1.msra.mxu0 %v627
        %629 = vmatprep.subr.mxu0 0.0
        %630 = vmatpush2.msra.mxu0 0.0
        %631 = vmatprep.subr.mxu0 0.0
        %632 = vmatpush2.msra.mxu0 0.0
        %633 = vmatprep.subr.mxu0 0.0
        %634 = vmatpush2.msra.mxu0 0.0
        %635 = vmatprep.subr.mxu0 0.0
        %636 = vmatpush2.msra.mxu0 0.0
        %637 = vmatprep.subr.mxu0 0.0
        %638 = vmatpush2.msra.mxu0 0.0
        %639 = vmatprep.subr.mxu0 0.0
        %640 = vmatpush2.msra.mxu0 0.0
        %641 = vmatprep.subr.mxu0 0.0
        %642 = vmatpush2.msra.mxu0 0.0
        %643 = vmatprep.subr.mxu0 0.0
        %644 = vmatpush2.msra.mxu0 0.0
        %645 = vmatprep.subr.mxu0 0.0
        %646 = vmatpush2.msra.mxu0 0.0
        %647 = vmatprep.subr.mxu0 0.0
        %648 = vmatpush2.msra.mxu0 0.0
        %649 = vmatprep.subr.mxu0 0.0
        %650 = vmatpush2.msra.mxu0 0.0
        %651 = vmatprep.subr.mxu0 0.0
        %652 = vmatpush2.msra.mxu0 0.0
        %653 = vmatprep.subr.mxu0 0.0
        %654 = vmatpush2.msra.mxu0 0.0
        %655 = vmatprep.subr.mxu0 0.0
        %656 = vmatpush2.msra.mxu0 0.0
        %657 = vmatprep.subr.mxu0 0.0
        %658 = vmatpush2.msra.mxu0 0.0
        %659 = vmatprep.subr.mxu0 0.0
        %660 = vmatpush2.msra.mxu0 0.0
        %661 = vmatprep.mubr.f32.mxu0 0.0
        %v662 = vand.u32 %v246, 4294901760
        %663 = vmatmul.mubr.f32.gmra.mxu0 %v662
        %v664 = vpop.f32.mrf.mxu0
        %v665 = vadd.f32 %v580, %v664
        %v666 = vpop.f32.mrf.mxu0
        %667 = vmatprep.mubr.f32.mxu0 0.0
        %v668 = vand.u32 %v249, 4294901760
        %669 = vmatmul.mubr.f32.gmra.mxu0 %v668
        %v670 = vpop.f32.mrf.mxu0
        %v671 = vadd.f32 %v588, %v670
        %v672 = vpop.f32.mrf.mxu0
        %673 = vdwg.mxu0
        %674 = vmatprep.subr.mxu0 0.0
        %675 = vmatpush1.msra.mxu0 0.0
        %676 = vmatprep.subr.mxu0 0.0
        %677 = vmatpush1.msra.mxu0 0.0
        %678 = vmatprep.subr.mxu0 0.0
        %679 = vmatpush1.msra.mxu0 0.0
        %680 = vmatprep.subr.mxu0 0.0
        %681 = vmatpush1.msra.mxu0 0.0
        %682 = vmatprep.subr.mxu0 0.0
        %683 = vmatpush1.msra.mxu0 0.0
        %684 = vmatprep.subr.mxu0 0.0
        %685 = vmatpush1.msra.mxu0 0.0
        %686 = vmatprep.subr.mxu0 0.0
        %687 = vmatpush1.msra.mxu0 0.0
        %688 = vmatprep.subr.mxu0 0.0
        %689 = vmatpush1.msra.mxu0 0.0
        %690 = vmatprep.subr.mxu0 0.0
        %691 = vmatpush1.msra.mxu0 0.0
        %692 = vmatprep.subr.mxu0 0.0
        %693 = vmatpush1.msra.mxu0 0.0
        %694 = vmatprep.subr.mxu0 0.0
        %695 = vmatpush1.msra.mxu0 0.0
        %696 = vmatprep.subr.mxu0 0.0
        %697 = vmatpush1.msra.mxu0 0.0
        %698 = vmatprep.subr.mxu0 0.0
        %699 = vmatpush1.msra.mxu0 0.0
        %700 = vmatprep.subr.mxu0 0.0
        %701 = vmatpush1.msra.mxu0 0.0
        %702 = vmatprep.subr.mxu0 0.0
        %v703 = vand.u32 %v176, 4294901760
        %704 = vmatpush1.msra.mxu0 %v703
        %705 = vmatprep.subr.mxu0 0.0
        %v706 = vand.u32 %v175, 4294901760
        %707 = vmatpush1.msra.mxu0 %v706
        %708 = vmatprep.subr.mxu0 0.0
        %709 = vmatpush2.msra.mxu0 0.0
        %710 = vmatprep.subr.mxu0 0.0
        %711 = vmatpush2.msra.mxu0 0.0
        %712 = vmatprep.subr.mxu0 0.0
        %713 = vmatpush2.msra.mxu0 0.0
        %714 = vmatprep.subr.mxu0 0.0
        %715 = vmatpush2.msra.mxu0 0.0
        %716 = vmatprep.subr.mxu0 0.0
        %717 = vmatpush2.msra.mxu0 0.0
        %718 = vmatprep.subr.mxu0 0.0
        %719 = vmatpush2.msra.mxu0 0.0
        %720 = vmatprep.subr.mxu0 0.0
        %721 = vmatpush2.msra.mxu0 0.0
        %722 = vmatprep.subr.mxu0 0.0
        %723 = vmatpush2.msra.mxu0 0.0
        %724 = vmatprep.subr.mxu0 0.0
        %725 = vmatpush2.msra.mxu0 0.0
        %726 = vmatprep.subr.mxu0 0.0
        %727 = vmatpush2.msra.mxu0 0.0
        %728 = vmatprep.subr.mxu0 0.0
        %729 = vmatpush2.msra.mxu0 0.0
        %730 = vmatprep.subr.mxu0 0.0
        %731 = vmatpush2.msra.mxu0 0.0
        %732 = vmatprep.subr.mxu0 0.0
        %733 = vmatpush2.msra.mxu0 0.0
        %734 = vmatprep.subr.mxu0 0.0
        %735 = vmatpush2.msra.mxu0 0.0
        %736 = vmatprep.subr.mxu0 0.0
        %737 = vmatpush2.msra.mxu0 0.0
        %738 = vmatprep.subr.mxu0 0.0
        %739 = vmatpush2.msra.mxu0 0.0
        %740 = vmatprep.mubr.f32.mxu0 0.0
        %v741 = vand.u32 %v246, 4294901760
        %742 = vmatmul.mubr.f32.gmra.mxu0 %v741
        %v743 = vpop.f32.mrf.mxu0
        %v744 = vadd.f32 %v665, %v743
        %v745 = vpop.f32.mrf.mxu0
        %746 = vmatprep.mubr.f32.mxu0 0.0
        %v747 = vand.u32 %v249, 4294901760
        %748 = vmatmul.mubr.f32.gmra.mxu0 %v747
        %v749 = vpop.f32.mrf.mxu0
        %v750 = vadd.f32 %v671, %v749
        %v751 = vpop.f32.mrf.mxu0
        %752 = vdwg.mxu0
        %v754 = vsel %vm244, %v228, 0
        %v757 = vsel %vm244, %v229, 0
        %759 = vmatprep.subr.mxu0 0.0
        %760 = vmatpush1.msra.mxu0 0.0
        %761 = vmatprep.subr.mxu0 0.0
        %762 = vmatpush1.msra.mxu0 0.0
        %763 = vmatprep.subr.mxu0 0.0
        %764 = vmatpush1.msra.mxu0 0.0
        %765 = vmatprep.subr.mxu0 0.0
        %766 = vmatpush1.msra.mxu0 0.0
        %767 = vmatprep.subr.mxu0 0.0
        %768 = vmatpush1.msra.mxu0 0.0
        %769 = vmatprep.subr.mxu0 0.0
        %770 = vmatpush1.msra.mxu0 0.0
        %771 = vmatprep.subr.mxu0 0.0
        %772 = vmatpush1.msra.mxu0 0.0
        %773 = vmatprep.subr.mxu0 0.0
        %774 = vmatpush1.msra.mxu0 0.0
        %775 = vmatprep.subr.mxu0 0.0
        %776 = vmatpush1.msra.mxu0 0.0
        %777 = vmatprep.subr.mxu0 0.0
        %778 = vmatpush1.msra.mxu0 0.0
        %779 = vmatprep.subr.mxu0 0.0
        %780 = vmatpush1.msra.mxu0 0.0
        %781 = vmatprep.subr.mxu0 0.0
        %782 = vmatpush1.msra.mxu0 0.0
        %783 = vmatprep.subr.mxu0 0.0
        %784 = vmatpush1.msra.mxu0 0.0
        %785 = vmatprep.subr.mxu0 0.0
        %786 = vmatpush1.msra.mxu0 0.0
        %787 = vmatprep.subr.mxu0 0.0
        %v788 = vand.u32 %v168, 4294901760
        %789 = vmatpush1.msra.mxu0 %v788
        %790 = vmatprep.subr.mxu0 0.0
        %v791 = vand.u32 %v167, 4294901760
        %792 = vmatpush1.msra.mxu0 %v791
        %793 = vmatprep.subr.mxu0 0.0
        %794 = vmatpush2.msra.mxu0 0.0
        %795 = vmatprep.subr.mxu0 0.0
        %796 = vmatpush2.msra.mxu0 0.0
        %797 = vmatprep.subr.mxu0 0.0
        %798 = vmatpush2.msra.mxu0 0.0
        %799 = vmatprep.subr.mxu0 0.0
        %800 = vmatpush2.msra.mxu0 0.0
        %801 = vmatprep.subr.mxu0 0.0
        %802 = vmatpush2.msra.mxu0 0.0
        %803 = vmatprep.subr.mxu0 0.0
        %804 = vmatpush2.msra.mxu0 0.0
        %805 = vmatprep.subr.mxu0 0.0
        %806 = vmatpush2.msra.mxu0 0.0
        %807 = vmatprep.subr.mxu0 0.0
        %808 = vmatpush2.msra.mxu0 0.0
        %809 = vmatprep.subr.mxu0 0.0
        %810 = vmatpush2.msra.mxu0 0.0
        %811 = vmatprep.subr.mxu0 0.0
        %812 = vmatpush2.msra.mxu0 0.0
        %813 = vmatprep.subr.mxu0 0.0
        %814 = vmatpush2.msra.mxu0 0.0
        %815 = vmatprep.subr.mxu0 0.0
        %816 = vmatpush2.msra.mxu0 0.0
        %817 = vmatprep.subr.mxu0 0.0
        %818 = vmatpush2.msra.mxu0 0.0
        %819 = vmatprep.subr.mxu0 0.0
        %820 = vmatpush2.msra.mxu0 0.0
        %821 = vmatprep.subr.mxu0 0.0
        %822 = vmatpush2.msra.mxu0 0.0
        %823 = vmatprep.subr.mxu0 0.0
        %824 = vmatpush2.msra.mxu0 0.0
        %825 = vmatprep.mubr.f32.mxu0 0.0
        %v826 = vand.u32 %v754, 4294901760
        %v827 = vsub.f32 %v754, %v826
        %v828 = vand.u32 %v827, 4294901760
        %v829 = vsub.f32 %v827, %v828
        %v830 = vand.u32 %v829, 4294901760
        %831 = vmatmul.mubr.f32.gmra.mxu0 %v830
        %v832 = vpop.f32.mrf.mxu0
        %v833 = vadd.f32 %v744, %v832
        %v834 = vpop.f32.mrf.mxu0
        %835 = vmatprep.mubr.f32.mxu0 0.0
        %v836 = vand.u32 %v757, 4294901760
        %v837 = vsub.f32 %v757, %v836
        %v838 = vand.u32 %v837, 4294901760
        %v839 = vsub.f32 %v837, %v838
        %v840 = vand.u32 %v839, 4294901760
        %841 = vmatmul.mubr.f32.gmra.mxu0 %v840
        %v842 = vpop.f32.mrf.mxu0
        %v843 = vadd.f32 %v750, %v842
        %v844 = vpop.f32.mrf.mxu0
        %845 = vdwg.mxu0
        %846 = vmatprep.subr.mxu0 0.0
        %847 = vmatpush1.msra.mxu0 0.0
        %848 = vmatprep.subr.mxu0 0.0
        %849 = vmatpush1.msra.mxu0 0.0
        %850 = vmatprep.subr.mxu0 0.0
        %851 = vmatpush1.msra.mxu0 0.0
        %852 = vmatprep.subr.mxu0 0.0
        %853 = vmatpush1.msra.mxu0 0.0
        %854 = vmatprep.subr.mxu0 0.0
        %855 = vmatpush1.msra.mxu0 0.0
        %856 = vmatprep.subr.mxu0 0.0
        %857 = vmatpush1.msra.mxu0 0.0
        %858 = vmatprep.subr.mxu0 0.0
        %859 = vmatpush1.msra.mxu0 0.0
        %860 = vmatprep.subr.mxu0 0.0
        %861 = vmatpush1.msra.mxu0 0.0
        %862 = vmatprep.subr.mxu0 0.0
        %863 = vmatpush1.msra.mxu0 0.0
        %864 = vmatprep.subr.mxu0 0.0
        %865 = vmatpush1.msra.mxu0 0.0
        %866 = vmatprep.subr.mxu0 0.0
        %867 = vmatpush1.msra.mxu0 0.0
        %868 = vmatprep.subr.mxu0 0.0
        %869 = vmatpush1.msra.mxu0 0.0
        %870 = vmatprep.subr.mxu0 0.0
        %871 = vmatpush1.msra.mxu0 0.0
        %872 = vmatprep.subr.mxu0 0.0
        %873 = vmatpush1.msra.mxu0 0.0
        %874 = vmatprep.subr.mxu0 0.0
        %v875 = vand.u32 %v168, 4294901760
        %v876 = vsub.f32 %v168, %v875
        %v877 = vand.u32 %v876, 4294901760
        %v878 = vsub.f32 %v876, %v877
        %v879 = vand.u32 %v878, 4294901760
        %880 = vmatpush1.msra.mxu0 %v879
        %881 = vmatprep.subr.mxu0 0.0
        %v882 = vand.u32 %v167, 4294901760
        %v883 = vsub.f32 %v167, %v882
        %v884 = vand.u32 %v883, 4294901760
        %v885 = vsub.f32 %v883, %v884
        %v886 = vand.u32 %v885, 4294901760
        %887 = vmatpush1.msra.mxu0 %v886
        %888 = vmatprep.subr.mxu0 0.0
        %889 = vmatpush2.msra.mxu0 0.0
        %890 = vmatprep.subr.mxu0 0.0
        %891 = vmatpush2.msra.mxu0 0.0
        %892 = vmatprep.subr.mxu0 0.0
        %893 = vmatpush2.msra.mxu0 0.0
        %894 = vmatprep.subr.mxu0 0.0
        %895 = vmatpush2.msra.mxu0 0.0
        %896 = vmatprep.subr.mxu0 0.0
        %897 = vmatpush2.msra.mxu0 0.0
        %898 = vmatprep.subr.mxu0 0.0
        %899 = vmatpush2.msra.mxu0 0.0
        %900 = vmatprep.subr.mxu0 0.0
        %901 = vmatpush2.msra.mxu0 0.0
        %902 = vmatprep.subr.mxu0 0.0
        %903 = vmatpush2.msra.mxu0 0.0
        %904 = vmatprep.subr.mxu0 0.0
        %905 = vmatpush2.msra.mxu0 0.0
        %906 = vmatprep.subr.mxu0 0.0
        %907 = vmatpush2.msra.mxu0 0.0
        %908 = vmatprep.subr.mxu0 0.0
        %909 = vmatpush2.msra.mxu0 0.0
        %910 = vmatprep.subr.mxu0 0.0
        %911 = vmatpush2.msra.mxu0 0.0
        %912 = vmatprep.subr.mxu0 0.0
        %913 = vmatpush2.msra.mxu0 0.0
        %914 = vmatprep.subr.mxu0 0.0
        %915 = vmatpush2.msra.mxu0 0.0
        %916 = vmatprep.subr.mxu0 0.0
        %917 = vmatpush2.msra.mxu0 0.0
        %918 = vmatprep.subr.mxu0 0.0
        %919 = vmatpush2.msra.mxu0 0.0
        %920 = vmatprep.mubr.f32.mxu0 0.0
        %v921 = vand.u32 %v754, 4294901760
        %922 = vmatmul.mubr.f32.gmra.mxu0 %v921
        %v923 = vpop.f32.mrf.mxu0
        %v924 = vadd.f32 %v833, %v923
        %v925 = vpop.f32.mrf.mxu0
        %926 = vmatprep.mubr.f32.mxu0 0.0
        %v927 = vand.u32 %v757, 4294901760
        %928 = vmatmul.mubr.f32.gmra.mxu0 %v927
        %v929 = vpop.f32.mrf.mxu0
        %v930 = vadd.f32 %v843, %v929
        %v931 = vpop.f32.mrf.mxu0
        %932 = vdwg.mxu0
        %933 = vmatprep.subr.mxu0 0.0
        %934 = vmatpush1.msra.mxu0 0.0
        %935 = vmatprep.subr.mxu0 0.0
        %936 = vmatpush1.msra.mxu0 0.0
        %937 = vmatprep.subr.mxu0 0.0
        %938 = vmatpush1.msra.mxu0 0.0
        %939 = vmatprep.subr.mxu0 0.0
        %940 = vmatpush1.msra.mxu0 0.0
        %941 = vmatprep.subr.mxu0 0.0
        %942 = vmatpush1.msra.mxu0 0.0
        %943 = vmatprep.subr.mxu0 0.0
        %944 = vmatpush1.msra.mxu0 0.0
        %945 = vmatprep.subr.mxu0 0.0
        %946 = vmatpush1.msra.mxu0 0.0
        %947 = vmatprep.subr.mxu0 0.0
        %948 = vmatpush1.msra.mxu0 0.0
        %949 = vmatprep.subr.mxu0 0.0
        %950 = vmatpush1.msra.mxu0 0.0
        %951 = vmatprep.subr.mxu0 0.0
        %952 = vmatpush1.msra.mxu0 0.0
        %953 = vmatprep.subr.mxu0 0.0
        %954 = vmatpush1.msra.mxu0 0.0
        %955 = vmatprep.subr.mxu0 0.0
        %956 = vmatpush1.msra.mxu0 0.0
        %957 = vmatprep.subr.mxu0 0.0
        %958 = vmatpush1.msra.mxu0 0.0
        %959 = vmatprep.subr.mxu0 0.0
        %960 = vmatpush1.msra.mxu0 0.0
        %961 = vmatprep.subr.mxu0 0.0
        %v962 = vand.u32 %v168, 4294901760
        %v963 = vsub.f32 %v168, %v962
        %964 = vmatpush1.msra.mxu0 %v963
        %965 = vmatprep.subr.mxu0 0.0
        %v966 = vand.u32 %v167, 4294901760
        %v967 = vsub.f32 %v167, %v966
        %968 = vmatpush1.msra.mxu0 %v967
        %969 = vmatprep.subr.mxu0 0.0
        %970 = vmatpush2.msra.mxu0 0.0
        %971 = vmatprep.subr.mxu0 0.0
        %972 = vmatpush2.msra.mxu0 0.0
        %973 = vmatprep.subr.mxu0 0.0
        %974 = vmatpush2.msra.mxu0 0.0
        %975 = vmatprep.subr.mxu0 0.0
        %976 = vmatpush2.msra.mxu0 0.0
        %977 = vmatprep.subr.mxu0 0.0
        %978 = vmatpush2.msra.mxu0 0.0
        %979 = vmatprep.subr.mxu0 0.0
        %980 = vmatpush2.msra.mxu0 0.0
        %981 = vmatprep.subr.mxu0 0.0
        %982 = vmatpush2.msra.mxu0 0.0
        %983 = vmatprep.subr.mxu0 0.0
        %984 = vmatpush2.msra.mxu0 0.0
        %985 = vmatprep.subr.mxu0 0.0
        %986 = vmatpush2.msra.mxu0 0.0
        %987 = vmatprep.subr.mxu0 0.0
        %988 = vmatpush2.msra.mxu0 0.0
        %989 = vmatprep.subr.mxu0 0.0
        %990 = vmatpush2.msra.mxu0 0.0
        %991 = vmatprep.subr.mxu0 0.0
        %992 = vmatpush2.msra.mxu0 0.0
        %993 = vmatprep.subr.mxu0 0.0
        %994 = vmatpush2.msra.mxu0 0.0
        %995 = vmatprep.subr.mxu0 0.0
        %996 = vmatpush2.msra.mxu0 0.0
        %997 = vmatprep.subr.mxu0 0.0
        %998 = vmatpush2.msra.mxu0 0.0
        %999 = vmatprep.subr.mxu0 0.0
        %1000 = vmatpush2.msra.mxu0 0.0
        %1001 = vmatprep.mubr.f32.mxu0 0.0
        %v1002 = vand.u32 %v754, 4294901760
        %v1003 = vsub.f32 %v754, %v1002
        %1004 = vmatmul.mubr.f32.gmra.mxu0 %v1003
        %v1005 = vpop.f32.mrf.mxu0
        %v1006 = vadd.f32 %v924, %v1005
        %v1007 = vpop.f32.mrf.mxu0
        %1008 = vmatprep.mubr.f32.mxu0 0.0
        %v1009 = vand.u32 %v757, 4294901760
        %v1010 = vsub.f32 %v757, %v1009
        %1011 = vmatmul.mubr.f32.gmra.mxu0 %v1010
        %v1012 = vpop.f32.mrf.mxu0
        %v1013 = vadd.f32 %v930, %v1012
        %v1014 = vpop.f32.mrf.mxu0
        %1015 = vdwg.mxu0
        %1016 = vmatprep.subr.mxu0 0.0
        %1017 = vmatpush1.msra.mxu0 0.0
        %1018 = vmatprep.subr.mxu0 0.0
        %1019 = vmatpush1.msra.mxu0 0.0
        %1020 = vmatprep.subr.mxu0 0.0
        %1021 = vmatpush1.msra.mxu0 0.0
        %1022 = vmatprep.subr.mxu0 0.0
        %1023 = vmatpush1.msra.mxu0 0.0
        %1024 = vmatprep.subr.mxu0 0.0
        %1025 = vmatpush1.msra.mxu0 0.0
        %1026 = vmatprep.subr.mxu0 0.0
        %1027 = vmatpush1.msra.mxu0 0.0
        %1028 = vmatprep.subr.mxu0 0.0
        %1029 = vmatpush1.msra.mxu0 0.0
        %1030 = vmatprep.subr.mxu0 0.0
        %1031 = vmatpush1.msra.mxu0 0.0
        %1032 = vmatprep.subr.mxu0 0.0
        %1033 = vmatpush1.msra.mxu0 0.0
        %1034 = vmatprep.subr.mxu0 0.0
        %1035 = vmatpush1.msra.mxu0 0.0
        %1036 = vmatprep.subr.mxu0 0.0
        %1037 = vmatpush1.msra.mxu0 0.0
        %1038 = vmatprep.subr.mxu0 0.0
        %1039 = vmatpush1.msra.mxu0 0.0
        %1040 = vmatprep.subr.mxu0 0.0
        %1041 = vmatpush1.msra.mxu0 0.0
        %1042 = vmatprep.subr.mxu0 0.0
        %1043 = vmatpush1.msra.mxu0 0.0
        %1044 = vmatprep.subr.mxu0 0.0
        %v1045 = vand.u32 %v168, 4294901760
        %1046 = vmatpush1.msra.mxu0 %v1045
        %1047 = vmatprep.subr.mxu0 0.0
        %v1048 = vand.u32 %v167, 4294901760
        %1049 = vmatpush1.msra.mxu0 %v1048
        %1050 = vmatprep.subr.mxu0 0.0
        %1051 = vmatpush2.msra.mxu0 0.0
        %1052 = vmatprep.subr.mxu0 0.0
        %1053 = vmatpush2.msra.mxu0 0.0
        %1054 = vmatprep.subr.mxu0 0.0
        %1055 = vmatpush2.msra.mxu0 0.0
        %1056 = vmatprep.subr.mxu0 0.0
        %1057 = vmatpush2.msra.mxu0 0.0
        %1058 = vmatprep.subr.mxu0 0.0
        %1059 = vmatpush2.msra.mxu0 0.0
        %1060 = vmatprep.subr.mxu0 0.0
        %1061 = vmatpush2.msra.mxu0 0.0
        %1062 = vmatprep.subr.mxu0 0.0
        %1063 = vmatpush2.msra.mxu0 0.0
        %1064 = vmatprep.subr.mxu0 0.0
        %1065 = vmatpush2.msra.mxu0 0.0
        %1066 = vmatprep.subr.mxu0 0.0
        %1067 = vmatpush2.msra.mxu0 0.0
        %1068 = vmatprep.subr.mxu0 0.0
        %1069 = vmatpush2.msra.mxu0 0.0
        %1070 = vmatprep.subr.mxu0 0.0
        %1071 = vmatpush2.msra.mxu0 0.0
        %1072 = vmatprep.subr.mxu0 0.0
        %1073 = vmatpush2.msra.mxu0 0.0
        %1074 = vmatprep.subr.mxu0 0.0
        %1075 = vmatpush2.msra.mxu0 0.0
        %1076 = vmatprep.subr.mxu0 0.0
        %1077 = vmatpush2.msra.mxu0 0.0
        %1078 = vmatprep.subr.mxu0 0.0
        %1079 = vmatpush2.msra.mxu0 0.0
        %1080 = vmatprep.subr.mxu0 0.0
        %1081 = vmatpush2.msra.mxu0 0.0
        %1082 = vmatprep.mubr.f32.mxu0 0.0
        %v1083 = vand.u32 %v754, 4294901760
        %v1084 = vsub.f32 %v754, %v1083
        %v1085 = vand.u32 %v1084, 4294901760
        %1086 = vmatmul.mubr.f32.gmra.mxu0 %v1085
        %v1087 = vpop.f32.mrf.mxu0
        %v1088 = vadd.f32 %v1006, %v1087
        %v1089 = vpop.f32.mrf.mxu0
        %1090 = vmatprep.mubr.f32.mxu0 0.0
        %v1091 = vand.u32 %v757, 4294901760
        %v1092 = vsub.f32 %v757, %v1091
        %v1093 = vand.u32 %v1092, 4294901760
        %1094 = vmatmul.mubr.f32.gmra.mxu0 %v1093
        %v1095 = vpop.f32.mrf.mxu0
        %v1096 = vadd.f32 %v1013, %v1095
        %v1097 = vpop.f32.mrf.mxu0
        %1098 = vdwg.mxu0
        %1099 = vmatprep.subr.mxu0 0.0
        %1100 = vmatpush1.msra.mxu0 0.0
        %1101 = vmatprep.subr.mxu0 0.0
        %1102 = vmatpush1.msra.mxu0 0.0
        %1103 = vmatprep.subr.mxu0 0.0
        %1104 = vmatpush1.msra.mxu0 0.0
        %1105 = vmatprep.subr.mxu0 0.0
        %1106 = vmatpush1.msra.mxu0 0.0
        %1107 = vmatprep.subr.mxu0 0.0
        %1108 = vmatpush1.msra.mxu0 0.0
        %1109 = vmatprep.subr.mxu0 0.0
        %1110 = vmatpush1.msra.mxu0 0.0
        %1111 = vmatprep.subr.mxu0 0.0
        %1112 = vmatpush1.msra.mxu0 0.0
        %1113 = vmatprep.subr.mxu0 0.0
        %1114 = vmatpush1.msra.mxu0 0.0
        %1115 = vmatprep.subr.mxu0 0.0
        %1116 = vmatpush1.msra.mxu0 0.0
        %1117 = vmatprep.subr.mxu0 0.0
        %1118 = vmatpush1.msra.mxu0 0.0
        %1119 = vmatprep.subr.mxu0 0.0
        %1120 = vmatpush1.msra.mxu0 0.0
        %1121 = vmatprep.subr.mxu0 0.0
        %1122 = vmatpush1.msra.mxu0 0.0
        %1123 = vmatprep.subr.mxu0 0.0
        %1124 = vmatpush1.msra.mxu0 0.0
        %1125 = vmatprep.subr.mxu0 0.0
        %1126 = vmatpush1.msra.mxu0 0.0
        %1127 = vmatprep.subr.mxu0 0.0
        %v1128 = vand.u32 %v168, 4294901760
        %v1129 = vsub.f32 %v168, %v1128
        %v1130 = vand.u32 %v1129, 4294901760
        %1131 = vmatpush1.msra.mxu0 %v1130
        %1132 = vmatprep.subr.mxu0 0.0
        %v1133 = vand.u32 %v167, 4294901760
        %v1134 = vsub.f32 %v167, %v1133
        %v1135 = vand.u32 %v1134, 4294901760
        %1136 = vmatpush1.msra.mxu0 %v1135
        %1137 = vmatprep.subr.mxu0 0.0
        %1138 = vmatpush2.msra.mxu0 0.0
        %1139 = vmatprep.subr.mxu0 0.0
        %1140 = vmatpush2.msra.mxu0 0.0
        %1141 = vmatprep.subr.mxu0 0.0
        %1142 = vmatpush2.msra.mxu0 0.0
        %1143 = vmatprep.subr.mxu0 0.0
        %1144 = vmatpush2.msra.mxu0 0.0
        %1145 = vmatprep.subr.mxu0 0.0
        %1146 = vmatpush2.msra.mxu0 0.0
        %1147 = vmatprep.subr.mxu0 0.0
        %1148 = vmatpush2.msra.mxu0 0.0
        %1149 = vmatprep.subr.mxu0 0.0
        %1150 = vmatpush2.msra.mxu0 0.0
        %1151 = vmatprep.subr.mxu0 0.0
        %1152 = vmatpush2.msra.mxu0 0.0
        %1153 = vmatprep.subr.mxu0 0.0
        %1154 = vmatpush2.msra.mxu0 0.0
        %1155 = vmatprep.subr.mxu0 0.0
        %1156 = vmatpush2.msra.mxu0 0.0
        %1157 = vmatprep.subr.mxu0 0.0
        %1158 = vmatpush2.msra.mxu0 0.0
        %1159 = vmatprep.subr.mxu0 0.0
        %1160 = vmatpush2.msra.mxu0 0.0
        %1161 = vmatprep.subr.mxu0 0.0
        %1162 = vmatpush2.msra.mxu0 0.0
        %1163 = vmatprep.subr.mxu0 0.0
        %1164 = vmatpush2.msra.mxu0 0.0
        %1165 = vmatprep.subr.mxu0 0.0
        %1166 = vmatpush2.msra.mxu0 0.0
        %1167 = vmatprep.subr.mxu0 0.0
        %1168 = vmatpush2.msra.mxu0 0.0
        %1169 = vmatprep.mubr.f32.mxu0 0.0
        %v1170 = vand.u32 %v754, 4294901760
        %1171 = vmatmul.mubr.f32.gmra.mxu0 %v1170
        %v1172 = vpop.f32.mrf.mxu0
        %v1173 = vadd.f32 %v1088, %v1172
        %v1174 = vpop.f32.mrf.mxu0
        %1175 = vmatprep.mubr.f32.mxu0 0.0
        %v1176 = vand.u32 %v757, 4294901760
        %1177 = vmatmul.mubr.f32.gmra.mxu0 %v1176
        %v1178 = vpop.f32.mrf.mxu0
        %v1179 = vadd.f32 %v1096, %v1178
        %v1180 = vpop.f32.mrf.mxu0
        %1181 = vdwg.mxu0
        %1182 = vmatprep.subr.mxu0 0.0
        %1183 = vmatpush1.msra.mxu0 0.0
        %1184 = vmatprep.subr.mxu0 0.0
        %1185 = vmatpush1.msra.mxu0 0.0
        %1186 = vmatprep.subr.mxu0 0.0
        %1187 = vmatpush1.msra.mxu0 0.0
        %1188 = vmatprep.subr.mxu0 0.0
        %1189 = vmatpush1.msra.mxu0 0.0
        %1190 = vmatprep.subr.mxu0 0.0
        %1191 = vmatpush1.msra.mxu0 0.0
        %1192 = vmatprep.subr.mxu0 0.0
        %1193 = vmatpush1.msra.mxu0 0.0
        %1194 = vmatprep.subr.mxu0 0.0
        %1195 = vmatpush1.msra.mxu0 0.0
        %1196 = vmatprep.subr.mxu0 0.0
        %1197 = vmatpush1.msra.mxu0 0.0
        %1198 = vmatprep.subr.mxu0 0.0
        %1199 = vmatpush1.msra.mxu0 0.0
        %1200 = vmatprep.subr.mxu0 0.0
        %1201 = vmatpush1.msra.mxu0 0.0
        %1202 = vmatprep.subr.mxu0 0.0
        %1203 = vmatpush1.msra.mxu0 0.0
        %1204 = vmatprep.subr.mxu0 0.0
        %1205 = vmatpush1.msra.mxu0 0.0
        %1206 = vmatprep.subr.mxu0 0.0
        %1207 = vmatpush1.msra.mxu0 0.0
        %1208 = vmatprep.subr.mxu0 0.0
        %1209 = vmatpush1.msra.mxu0 0.0
        %1210 = vmatprep.subr.mxu0 0.0
        %v1211 = vand.u32 %v168, 4294901760
        %1212 = vmatpush1.msra.mxu0 %v1211
        %1213 = vmatprep.subr.mxu0 0.0
        %v1214 = vand.u32 %v167, 4294901760
        %1215 = vmatpush1.msra.mxu0 %v1214
        %1216 = vmatprep.subr.mxu0 0.0
        %1217 = vmatpush2.msra.mxu0 0.0
        %1218 = vmatprep.subr.mxu0 0.0
        %1219 = vmatpush2.msra.mxu0 0.0
        %1220 = vmatprep.subr.mxu0 0.0
        %1221 = vmatpush2.msra.mxu0 0.0
        %1222 = vmatprep.subr.mxu0 0.0
        %1223 = vmatpush2.msra.mxu0 0.0
        %1224 = vmatprep.subr.mxu0 0.0
        %1225 = vmatpush2.msra.mxu0 0.0
        %1226 = vmatprep.subr.mxu0 0.0
        %1227 = vmatpush2.msra.mxu0 0.0
        %1228 = vmatprep.subr.mxu0 0.0
        %1229 = vmatpush2.msra.mxu0 0.0
        %1230 = vmatprep.subr.mxu0 0.0
        %1231 = vmatpush2.msra.mxu0 0.0
        %1232 = vmatprep.subr.mxu0 0.0
        %1233 = vmatpush2.msra.mxu0 0.0
        %1234 = vmatprep.subr.mxu0 0.0
        %1235 = vmatpush2.msra.mxu0 0.0
        %1236 = vmatprep.subr.mxu0 0.0
        %1237 = vmatpush2.msra.mxu0 0.0
        %1238 = vmatprep.subr.mxu0 0.0
        %1239 = vmatpush2.msra.mxu0 0.0
        %1240 = vmatprep.subr.mxu0 0.0
        %1241 = vmatpush2.msra.mxu0 0.0
        %1242 = vmatprep.subr.mxu0 0.0
        %1243 = vmatpush2.msra.mxu0 0.0
        %1244 = vmatprep.subr.mxu0 0.0
        %1245 = vmatpush2.msra.mxu0 0.0
        %1246 = vmatprep.subr.mxu0 0.0
        %1247 = vmatpush2.msra.mxu0 0.0
        %1248 = vmatprep.mubr.f32.mxu0 0.0
        %v1249 = vand.u32 %v754, 4294901760
        %1250 = vmatmul.mubr.f32.gmra.mxu0 %v1249
        %v1251 = vpop.f32.mrf.mxu0
        %v1252 = vadd.f32 %v1173, %v1251
        %v1253 = vpop.f32.mrf.mxu0
        %1254 = vmatprep.mubr.f32.mxu0 0.0
        %v1255 = vand.u32 %v757, 4294901760
        %1256 = vmatmul.mubr.f32.gmra.mxu0 %v1255
        %v1257 = vpop.f32.mrf.mxu0
        %v1258 = vadd.f32 %v1179, %v1257
        %v1259 = vpop.f32.mrf.mxu0
        %1260 = vdwg.mxu0
        %v1262 = vsel %vm244, %v242, 0
        %v1265 = vsel %vm244, %v243, 0
        %1267 = vmatprep.subr.mxu0 0.0
        %1268 = vmatpush1.msra.mxu0 0.0
        %1269 = vmatprep.subr.mxu0 0.0
        %1270 = vmatpush1.msra.mxu0 0.0
        %1271 = vmatprep.subr.mxu0 0.0
        %1272 = vmatpush1.msra.mxu0 0.0
        %1273 = vmatprep.subr.mxu0 0.0
        %1274 = vmatpush1.msra.mxu0 0.0
        %1275 = vmatprep.subr.mxu0 0.0
        %1276 = vmatpush1.msra.mxu0 0.0
        %1277 = vmatprep.subr.mxu0 0.0
        %1278 = vmatpush1.msra.mxu0 0.0
        %1279 = vmatprep.subr.mxu0 0.0
        %1280 = vmatpush1.msra.mxu0 0.0
        %1281 = vmatprep.subr.mxu0 0.0
        %1282 = vmatpush1.msra.mxu0 0.0
        %1283 = vmatprep.subr.mxu0 0.0
        %1284 = vmatpush1.msra.mxu0 0.0
        %1285 = vmatprep.subr.mxu0 0.0
        %1286 = vmatpush1.msra.mxu0 0.0
        %1287 = vmatprep.subr.mxu0 0.0
        %1288 = vmatpush1.msra.mxu0 0.0
        %1289 = vmatprep.subr.mxu0 0.0
        %1290 = vmatpush1.msra.mxu0 0.0
        %1291 = vmatprep.subr.mxu0 0.0
        %1292 = vmatpush1.msra.mxu0 0.0
        %1293 = vmatprep.subr.mxu0 0.0
        %1294 = vmatpush1.msra.mxu0 0.0
        %1295 = vmatprep.subr.mxu0 0.0
        %v1296 = vand.u32 %v176, 4294901760
        %1297 = vmatpush1.msra.mxu0 %v1296
        %1298 = vmatprep.subr.mxu0 0.0
        %v1299 = vand.u32 %v175, 4294901760
        %1300 = vmatpush1.msra.mxu0 %v1299
        %1301 = vmatprep.subr.mxu0 0.0
        %1302 = vmatpush2.msra.mxu0 0.0
        %1303 = vmatprep.subr.mxu0 0.0
        %1304 = vmatpush2.msra.mxu0 0.0
        %1305 = vmatprep.subr.mxu0 0.0
        %1306 = vmatpush2.msra.mxu0 0.0
        %1307 = vmatprep.subr.mxu0 0.0
        %1308 = vmatpush2.msra.mxu0 0.0
        %1309 = vmatprep.subr.mxu0 0.0
        %1310 = vmatpush2.msra.mxu0 0.0
        %1311 = vmatprep.subr.mxu0 0.0
        %1312 = vmatpush2.msra.mxu0 0.0
        %1313 = vmatprep.subr.mxu0 0.0
        %1314 = vmatpush2.msra.mxu0 0.0
        %1315 = vmatprep.subr.mxu0 0.0
        %1316 = vmatpush2.msra.mxu0 0.0
        %1317 = vmatprep.subr.mxu0 0.0
        %1318 = vmatpush2.msra.mxu0 0.0
        %1319 = vmatprep.subr.mxu0 0.0
        %1320 = vmatpush2.msra.mxu0 0.0
        %1321 = vmatprep.subr.mxu0 0.0
        %1322 = vmatpush2.msra.mxu0 0.0
        %1323 = vmatprep.subr.mxu0 0.0
        %1324 = vmatpush2.msra.mxu0 0.0
        %1325 = vmatprep.subr.mxu0 0.0
        %1326 = vmatpush2.msra.mxu0 0.0
        %1327 = vmatprep.subr.mxu0 0.0
        %1328 = vmatpush2.msra.mxu0 0.0
        %1329 = vmatprep.subr.mxu0 0.0
        %1330 = vmatpush2.msra.mxu0 0.0
        %1331 = vmatprep.subr.mxu0 0.0
        %1332 = vmatpush2.msra.mxu0 0.0
        %1333 = vmatprep.mubr.f32.mxu0 0.0
        %v1334 = vand.u32 %v1262, 4294901760
        %v1335 = vsub.f32 %v1262, %v1334
        %v1336 = vand.u32 %v1335, 4294901760
        %v1337 = vsub.f32 %v1335, %v1336
        %v1338 = vand.u32 %v1337, 4294901760
        %1339 = vmatmul.mubr.f32.gmra.mxu0 %v1338
        %v1340 = vpop.f32.mrf.mxu0
        %v1341 = vadd.f32 0.0, %v1340
        %v1342 = vpop.f32.mrf.mxu0
        %1343 = vmatprep.mubr.f32.mxu0 0.0
        %v1344 = vand.u32 %v1265, 4294901760
        %v1345 = vsub.f32 %v1265, %v1344
        %v1346 = vand.u32 %v1345, 4294901760
        %v1347 = vsub.f32 %v1345, %v1346
        %v1348 = vand.u32 %v1347, 4294901760
        %1349 = vmatmul.mubr.f32.gmra.mxu0 %v1348
        %v1350 = vpop.f32.mrf.mxu0
        %v1351 = vadd.f32 0.0, %v1350
        %v1352 = vpop.f32.mrf.mxu0
        %1353 = vdwg.mxu0
        %1354 = vmatprep.subr.mxu0 0.0
        %1355 = vmatpush1.msra.mxu0 0.0
        %1356 = vmatprep.subr.mxu0 0.0
        %1357 = vmatpush1.msra.mxu0 0.0
        %1358 = vmatprep.subr.mxu0 0.0
        %1359 = vmatpush1.msra.mxu0 0.0
        %1360 = vmatprep.subr.mxu0 0.0
        %1361 = vmatpush1.msra.mxu0 0.0
        %1362 = vmatprep.subr.mxu0 0.0
        %1363 = vmatpush1.msra.mxu0 0.0
        %1364 = vmatprep.subr.mxu0 0.0
        %1365 = vmatpush1.msra.mxu0 0.0
        %1366 = vmatprep.subr.mxu0 0.0
        %1367 = vmatpush1.msra.mxu0 0.0
        %1368 = vmatprep.subr.mxu0 0.0
        %1369 = vmatpush1.msra.mxu0 0.0
        %1370 = vmatprep.subr.mxu0 0.0
        %1371 = vmatpush1.msra.mxu0 0.0
        %1372 = vmatprep.subr.mxu0 0.0
        %1373 = vmatpush1.msra.mxu0 0.0
        %1374 = vmatprep.subr.mxu0 0.0
        %1375 = vmatpush1.msra.mxu0 0.0
        %1376 = vmatprep.subr.mxu0 0.0
        %1377 = vmatpush1.msra.mxu0 0.0
        %1378 = vmatprep.subr.mxu0 0.0
        %1379 = vmatpush1.msra.mxu0 0.0
        %1380 = vmatprep.subr.mxu0 0.0
        %1381 = vmatpush1.msra.mxu0 0.0
        %1382 = vmatprep.subr.mxu0 0.0
        %v1383 = vand.u32 %v176, 4294901760
        %v1384 = vsub.f32 %v176, %v1383
        %v1385 = vand.u32 %v1384, 4294901760
        %v1386 = vsub.f32 %v1384, %v1385
        %v1387 = vand.u32 %v1386, 4294901760
        %1388 = vmatpush1.msra.mxu0 %v1387
        %1389 = vmatprep.subr.mxu0 0.0
        %v1390 = vand.u32 %v175, 4294901760
        %v1391 = vsub.f32 %v175, %v1390
        %v1392 = vand.u32 %v1391, 4294901760
        %v1393 = vsub.f32 %v1391, %v1392
        %v1394 = vand.u32 %v1393, 4294901760
        %1395 = vmatpush1.msra.mxu0 %v1394
        %1396 = vmatprep.subr.mxu0 0.0
        %1397 = vmatpush2.msra.mxu0 0.0
        %1398 = vmatprep.subr.mxu0 0.0
        %1399 = vmatpush2.msra.mxu0 0.0
        %1400 = vmatprep.subr.mxu0 0.0
        %1401 = vmatpush2.msra.mxu0 0.0
        %1402 = vmatprep.subr.mxu0 0.0
        %1403 = vmatpush2.msra.mxu0 0.0
        %1404 = vmatprep.subr.mxu0 0.0
        %1405 = vmatpush2.msra.mxu0 0.0
        %1406 = vmatprep.subr.mxu0 0.0
        %1407 = vmatpush2.msra.mxu0 0.0
        %1408 = vmatprep.subr.mxu0 0.0
        %1409 = vmatpush2.msra.mxu0 0.0
        %1410 = vmatprep.subr.mxu0 0.0
        %1411 = vmatpush2.msra.mxu0 0.0
        %1412 = vmatprep.subr.mxu0 0.0
        %1413 = vmatpush2.msra.mxu0 0.0
        %1414 = vmatprep.subr.mxu0 0.0
        %1415 = vmatpush2.msra.mxu0 0.0
        %1416 = vmatprep.subr.mxu0 0.0
        %1417 = vmatpush2.msra.mxu0 0.0
        %1418 = vmatprep.subr.mxu0 0.0
        %1419 = vmatpush2.msra.mxu0 0.0
        %1420 = vmatprep.subr.mxu0 0.0
        %1421 = vmatpush2.msra.mxu0 0.0
        %1422 = vmatprep.subr.mxu0 0.0
        %1423 = vmatpush2.msra.mxu0 0.0
        %1424 = vmatprep.subr.mxu0 0.0
        %1425 = vmatpush2.msra.mxu0 0.0
        %1426 = vmatprep.subr.mxu0 0.0
        %1427 = vmatpush2.msra.mxu0 0.0
        %1428 = vmatprep.mubr.f32.mxu0 0.0
        %v1429 = vand.u32 %v1262, 4294901760
        %1430 = vmatmul.mubr.f32.gmra.mxu0 %v1429
        %v1431 = vpop.f32.mrf.mxu0
        %v1432 = vadd.f32 %v1341, %v1431
        %v1433 = vpop.f32.mrf.mxu0
        %1434 = vmatprep.mubr.f32.mxu0 0.0
        %v1435 = vand.u32 %v1265, 4294901760
        %1436 = vmatmul.mubr.f32.gmra.mxu0 %v1435
        %v1437 = vpop.f32.mrf.mxu0
        %v1438 = vadd.f32 %v1351, %v1437
        %v1439 = vpop.f32.mrf.mxu0
        %1440 = vdwg.mxu0
        %1441 = vmatprep.subr.mxu0 0.0
        %1442 = vmatpush1.msra.mxu0 0.0
        %1443 = vmatprep.subr.mxu0 0.0
        %1444 = vmatpush1.msra.mxu0 0.0
        %1445 = vmatprep.subr.mxu0 0.0
        %1446 = vmatpush1.msra.mxu0 0.0
        %1447 = vmatprep.subr.mxu0 0.0
        %1448 = vmatpush1.msra.mxu0 0.0
        %1449 = vmatprep.subr.mxu0 0.0
        %1450 = vmatpush1.msra.mxu0 0.0
        %1451 = vmatprep.subr.mxu0 0.0
        %1452 = vmatpush1.msra.mxu0 0.0
        %1453 = vmatprep.subr.mxu0 0.0
        %1454 = vmatpush1.msra.mxu0 0.0
        %1455 = vmatprep.subr.mxu0 0.0
        %1456 = vmatpush1.msra.mxu0 0.0
        %1457 = vmatprep.subr.mxu0 0.0
        %1458 = vmatpush1.msra.mxu0 0.0
        %1459 = vmatprep.subr.mxu0 0.0
        %1460 = vmatpush1.msra.mxu0 0.0
        %1461 = vmatprep.subr.mxu0 0.0
        %1462 = vmatpush1.msra.mxu0 0.0
        %1463 = vmatprep.subr.mxu0 0.0
        %1464 = vmatpush1.msra.mxu0 0.0
        %1465 = vmatprep.subr.mxu0 0.0
        %1466 = vmatpush1.msra.mxu0 0.0
        %1467 = vmatprep.subr.mxu0 0.0
        %1468 = vmatpush1.msra.mxu0 0.0
        %1469 = vmatprep.subr.mxu0 0.0
        %v1470 = vand.u32 %v176, 4294901760
        %v1471 = vsub.f32 %v176, %v1470
        %1472 = vmatpush1.msra.mxu0 %v1471
        %1473 = vmatprep.subr.mxu0 0.0
        %v1474 = vand.u32 %v175, 4294901760
        %v1475 = vsub.f32 %v175, %v1474
        %1476 = vmatpush1.msra.mxu0 %v1475
        %1477 = vmatprep.subr.mxu0 0.0
        %1478 = vmatpush2.msra.mxu0 0.0
        %1479 = vmatprep.subr.mxu0 0.0
        %1480 = vmatpush2.msra.mxu0 0.0
        %1481 = vmatprep.subr.mxu0 0.0
        %1482 = vmatpush2.msra.mxu0 0.0
        %1483 = vmatprep.subr.mxu0 0.0
        %1484 = vmatpush2.msra.mxu0 0.0
        %1485 = vmatprep.subr.mxu0 0.0
        %1486 = vmatpush2.msra.mxu0 0.0
        %1487 = vmatprep.subr.mxu0 0.0
        %1488 = vmatpush2.msra.mxu0 0.0
        %1489 = vmatprep.subr.mxu0 0.0
        %1490 = vmatpush2.msra.mxu0 0.0
        %1491 = vmatprep.subr.mxu0 0.0
        %1492 = vmatpush2.msra.mxu0 0.0
        %1493 = vmatprep.subr.mxu0 0.0
        %1494 = vmatpush2.msra.mxu0 0.0
        %1495 = vmatprep.subr.mxu0 0.0
        %1496 = vmatpush2.msra.mxu0 0.0
        %1497 = vmatprep.subr.mxu0 0.0
        %1498 = vmatpush2.msra.mxu0 0.0
        %1499 = vmatprep.subr.mxu0 0.0
        %1500 = vmatpush2.msra.mxu0 0.0
        %1501 = vmatprep.subr.mxu0 0.0
        %1502 = vmatpush2.msra.mxu0 0.0
        %1503 = vmatprep.subr.mxu0 0.0
        %1504 = vmatpush2.msra.mxu0 0.0
        %1505 = vmatprep.subr.mxu0 0.0
        %1506 = vmatpush2.msra.mxu0 0.0
        %1507 = vmatprep.subr.mxu0 0.0
        %1508 = vmatpush2.msra.mxu0 0.0
        %1509 = vmatprep.mubr.f32.mxu0 0.0
        %v1510 = vand.u32 %v1262, 4294901760
        %v1511 = vsub.f32 %v1262, %v1510
        %1512 = vmatmul.mubr.f32.gmra.mxu0 %v1511
        %v1513 = vpop.f32.mrf.mxu0
        %v1514 = vadd.f32 %v1432, %v1513
        %v1515 = vpop.f32.mrf.mxu0
        %1516 = vmatprep.mubr.f32.mxu0 0.0
        %v1517 = vand.u32 %v1265, 4294901760
        %v1518 = vsub.f32 %v1265, %v1517
        %1519 = vmatmul.mubr.f32.gmra.mxu0 %v1518
        %v1520 = vpop.f32.mrf.mxu0
        %v1521 = vadd.f32 %v1438, %v1520
        %v1522 = vpop.f32.mrf.mxu0
        %1523 = vdwg.mxu0
        %1524 = vmatprep.subr.mxu0 0.0
        %1525 = vmatpush1.msra.mxu0 0.0
        %1526 = vmatprep.subr.mxu0 0.0
        %1527 = vmatpush1.msra.mxu0 0.0
        %1528 = vmatprep.subr.mxu0 0.0
        %1529 = vmatpush1.msra.mxu0 0.0
        %1530 = vmatprep.subr.mxu0 0.0
        %1531 = vmatpush1.msra.mxu0 0.0
        %1532 = vmatprep.subr.mxu0 0.0
        %1533 = vmatpush1.msra.mxu0 0.0
        %1534 = vmatprep.subr.mxu0 0.0
        %1535 = vmatpush1.msra.mxu0 0.0
        %1536 = vmatprep.subr.mxu0 0.0
        %1537 = vmatpush1.msra.mxu0 0.0
        %1538 = vmatprep.subr.mxu0 0.0
        %1539 = vmatpush1.msra.mxu0 0.0
        %1540 = vmatprep.subr.mxu0 0.0
        %1541 = vmatpush1.msra.mxu0 0.0
        %1542 = vmatprep.subr.mxu0 0.0
        %1543 = vmatpush1.msra.mxu0 0.0
        %1544 = vmatprep.subr.mxu0 0.0
        %1545 = vmatpush1.msra.mxu0 0.0
        %1546 = vmatprep.subr.mxu0 0.0
        %1547 = vmatpush1.msra.mxu0 0.0
        %1548 = vmatprep.subr.mxu0 0.0
        %1549 = vmatpush1.msra.mxu0 0.0
        %1550 = vmatprep.subr.mxu0 0.0
        %1551 = vmatpush1.msra.mxu0 0.0
        %1552 = vmatprep.subr.mxu0 0.0
        %v1553 = vand.u32 %v176, 4294901760
        %1554 = vmatpush1.msra.mxu0 %v1553
        %1555 = vmatprep.subr.mxu0 0.0
        %v1556 = vand.u32 %v175, 4294901760
        %1557 = vmatpush1.msra.mxu0 %v1556
        %1558 = vmatprep.subr.mxu0 0.0
        %1559 = vmatpush2.msra.mxu0 0.0
        %1560 = vmatprep.subr.mxu0 0.0
        %1561 = vmatpush2.msra.mxu0 0.0
        %1562 = vmatprep.subr.mxu0 0.0
        %1563 = vmatpush2.msra.mxu0 0.0
        %1564 = vmatprep.subr.mxu0 0.0
        %1565 = vmatpush2.msra.mxu0 0.0
        %1566 = vmatprep.subr.mxu0 0.0
        %1567 = vmatpush2.msra.mxu0 0.0
        %1568 = vmatprep.subr.mxu0 0.0
        %1569 = vmatpush2.msra.mxu0 0.0
        %1570 = vmatprep.subr.mxu0 0.0
        %1571 = vmatpush2.msra.mxu0 0.0
        %1572 = vmatprep.subr.mxu0 0.0
        %1573 = vmatpush2.msra.mxu0 0.0
        %1574 = vmatprep.subr.mxu0 0.0
        %1575 = vmatpush2.msra.mxu0 0.0
        %1576 = vmatprep.subr.mxu0 0.0
        %1577 = vmatpush2.msra.mxu0 0.0
        %1578 = vmatprep.subr.mxu0 0.0
        %1579 = vmatpush2.msra.mxu0 0.0
        %1580 = vmatprep.subr.mxu0 0.0
        %1581 = vmatpush2.msra.mxu0 0.0
        %1582 = vmatprep.subr.mxu0 0.0
        %1583 = vmatpush2.msra.mxu0 0.0
        %1584 = vmatprep.subr.mxu0 0.0
        %1585 = vmatpush2.msra.mxu0 0.0
        %1586 = vmatprep.subr.mxu0 0.0
        %1587 = vmatpush2.msra.mxu0 0.0
        %1588 = vmatprep.subr.mxu0 0.0
        %1589 = vmatpush2.msra.mxu0 0.0
        %1590 = vmatprep.mubr.f32.mxu0 0.0
        %v1591 = vand.u32 %v1262, 4294901760
        %v1592 = vsub.f32 %v1262, %v1591
        %v1593 = vand.u32 %v1592, 4294901760
        %1594 = vmatmul.mubr.f32.gmra.mxu0 %v1593
        %v1595 = vpop.f32.mrf.mxu0
        %v1596 = vadd.f32 %v1514, %v1595
        %v1597 = vpop.f32.mrf.mxu0
        %1598 = vmatprep.mubr.f32.mxu0 0.0
        %v1599 = vand.u32 %v1265, 4294901760
        %v1600 = vsub.f32 %v1265, %v1599
        %v1601 = vand.u32 %v1600, 4294901760
        %1602 = vmatmul.mubr.f32.gmra.mxu0 %v1601
        %v1603 = vpop.f32.mrf.mxu0
        %v1604 = vadd.f32 %v1521, %v1603
        %v1605 = vpop.f32.mrf.mxu0
        %1606 = vdwg.mxu0
        %1607 = vmatprep.subr.mxu0 0.0
        %1608 = vmatpush1.msra.mxu0 0.0
        %1609 = vmatprep.subr.mxu0 0.0
        %1610 = vmatpush1.msra.mxu0 0.0
        %1611 = vmatprep.subr.mxu0 0.0
        %1612 = vmatpush1.msra.mxu0 0.0
        %1613 = vmatprep.subr.mxu0 0.0
        %1614 = vmatpush1.msra.mxu0 0.0
        %1615 = vmatprep.subr.mxu0 0.0
        %1616 = vmatpush1.msra.mxu0 0.0
        %1617 = vmatprep.subr.mxu0 0.0
        %1618 = vmatpush1.msra.mxu0 0.0
        %1619 = vmatprep.subr.mxu0 0.0
        %1620 = vmatpush1.msra.mxu0 0.0
        %1621 = vmatprep.subr.mxu0 0.0
        %1622 = vmatpush1.msra.mxu0 0.0
        %1623 = vmatprep.subr.mxu0 0.0
        %1624 = vmatpush1.msra.mxu0 0.0
        %1625 = vmatprep.subr.mxu0 0.0
        %1626 = vmatpush1.msra.mxu0 0.0
        %1627 = vmatprep.subr.mxu0 0.0
        %1628 = vmatpush1.msra.mxu0 0.0
        %1629 = vmatprep.subr.mxu0 0.0
        %1630 = vmatpush1.msra.mxu0 0.0
        %1631 = vmatprep.subr.mxu0 0.0
        %1632 = vmatpush1.msra.mxu0 0.0
        %1633 = vmatprep.subr.mxu0 0.0
        %1634 = vmatpush1.msra.mxu0 0.0
        %1635 = vmatprep.subr.mxu0 0.0
        %v1636 = vand.u32 %v176, 4294901760
        %v1637 = vsub.f32 %v176, %v1636
        %v1638 = vand.u32 %v1637, 4294901760
        %1639 = vmatpush1.msra.mxu0 %v1638
        %1640 = vmatprep.subr.mxu0 0.0
        %v1641 = vand.u32 %v175, 4294901760
        %v1642 = vsub.f32 %v175, %v1641
        %v1643 = vand.u32 %v1642, 4294901760
        %1644 = vmatpush1.msra.mxu0 %v1643
        %1645 = vmatprep.subr.mxu0 0.0
        %1646 = vmatpush2.msra.mxu0 0.0
        %1647 = vmatprep.subr.mxu0 0.0
        %1648 = vmatpush2.msra.mxu0 0.0
        %1649 = vmatprep.subr.mxu0 0.0
        %1650 = vmatpush2.msra.mxu0 0.0
        %1651 = vmatprep.subr.mxu0 0.0
        %1652 = vmatpush2.msra.mxu0 0.0
        %1653 = vmatprep.subr.mxu0 0.0
        %1654 = vmatpush2.msra.mxu0 0.0
        %1655 = vmatprep.subr.mxu0 0.0
        %1656 = vmatpush2.msra.mxu0 0.0
        %1657 = vmatprep.subr.mxu0 0.0
        %1658 = vmatpush2.msra.mxu0 0.0
        %1659 = vmatprep.subr.mxu0 0.0
        %1660 = vmatpush2.msra.mxu0 0.0
        %1661 = vmatprep.subr.mxu0 0.0
        %1662 = vmatpush2.msra.mxu0 0.0
        %1663 = vmatprep.subr.mxu0 0.0
        %1664 = vmatpush2.msra.mxu0 0.0
        %1665 = vmatprep.subr.mxu0 0.0
        %1666 = vmatpush2.msra.mxu0 0.0
        %1667 = vmatprep.subr.mxu0 0.0
        %1668 = vmatpush2.msra.mxu0 0.0
        %1669 = vmatprep.subr.mxu0 0.0
        %1670 = vmatpush2.msra.mxu0 0.0
        %1671 = vmatprep.subr.mxu0 0.0
        %1672 = vmatpush2.msra.mxu0 0.0
        %1673 = vmatprep.subr.mxu0 0.0
        %1674 = vmatpush2.msra.mxu0 0.0
        %1675 = vmatprep.subr.mxu0 0.0
        %1676 = vmatpush2.msra.mxu0 0.0
        %1677 = vmatprep.mubr.f32.mxu0 0.0
        %v1678 = vand.u32 %v1262, 4294901760
        %1679 = vmatmul.mubr.f32.gmra.mxu0 %v1678
        %v1680 = vpop.f32.mrf.mxu0
        %v1681 = vadd.f32 %v1596, %v1680
        %v1682 = vpop.f32.mrf.mxu0
        %1683 = vmatprep.mubr.f32.mxu0 0.0
        %v1684 = vand.u32 %v1265, 4294901760
        %1685 = vmatmul.mubr.f32.gmra.mxu0 %v1684
        %v1686 = vpop.f32.mrf.mxu0
        %v1687 = vadd.f32 %v1604, %v1686
        %v1688 = vpop.f32.mrf.mxu0
        %1689 = vdwg.mxu0
        %1690 = vmatprep.subr.mxu0 0.0
        %1691 = vmatpush1.msra.mxu0 0.0
        %1692 = vmatprep.subr.mxu0 0.0
        %1693 = vmatpush1.msra.mxu0 0.0
        %1694 = vmatprep.subr.mxu0 0.0
        %1695 = vmatpush1.msra.mxu0 0.0
        %1696 = vmatprep.subr.mxu0 0.0
        %1697 = vmatpush1.msra.mxu0 0.0
        %1698 = vmatprep.subr.mxu0 0.0
        %1699 = vmatpush1.msra.mxu0 0.0
        %1700 = vmatprep.subr.mxu0 0.0
        %1701 = vmatpush1.msra.mxu0 0.0
        %1702 = vmatprep.subr.mxu0 0.0
        %1703 = vmatpush1.msra.mxu0 0.0
        %1704 = vmatprep.subr.mxu0 0.0
        %1705 = vmatpush1.msra.mxu0 0.0
        %1706 = vmatprep.subr.mxu0 0.0
        %1707 = vmatpush1.msra.mxu0 0.0
        %1708 = vmatprep.subr.mxu0 0.0
        %1709 = vmatpush1.msra.mxu0 0.0
        %1710 = vmatprep.subr.mxu0 0.0
        %1711 = vmatpush1.msra.mxu0 0.0
        %1712 = vmatprep.subr.mxu0 0.0
        %1713 = vmatpush1.msra.mxu0 0.0
        %1714 = vmatprep.subr.mxu0 0.0
        %1715 = vmatpush1.msra.mxu0 0.0
        %1716 = vmatprep.subr.mxu0 0.0
        %1717 = vmatpush1.msra.mxu0 0.0
        %1718 = vmatprep.subr.mxu0 0.0
        %v1719 = vand.u32 %v176, 4294901760
        %1720 = vmatpush1.msra.mxu0 %v1719
        %1721 = vmatprep.subr.mxu0 0.0
        %v1722 = vand.u32 %v175, 4294901760
        %1723 = vmatpush1.msra.mxu0 %v1722
        %1724 = vmatprep.subr.mxu0 0.0
        %1725 = vmatpush2.msra.mxu0 0.0
        %1726 = vmatprep.subr.mxu0 0.0
        %1727 = vmatpush2.msra.mxu0 0.0
        %1728 = vmatprep.subr.mxu0 0.0
        %1729 = vmatpush2.msra.mxu0 0.0
        %1730 = vmatprep.subr.mxu0 0.0
        %1731 = vmatpush2.msra.mxu0 0.0
        %1732 = vmatprep.subr.mxu0 0.0
        %1733 = vmatpush2.msra.mxu0 0.0
        %1734 = vmatprep.subr.mxu0 0.0
        %1735 = vmatpush2.msra.mxu0 0.0
        %1736 = vmatprep.subr.mxu0 0.0
        %1737 = vmatpush2.msra.mxu0 0.0
        %1738 = vmatprep.subr.mxu0 0.0
        %1739 = vmatpush2.msra.mxu0 0.0
        %1740 = vmatprep.subr.mxu0 0.0
        %1741 = vmatpush2.msra.mxu0 0.0
        %1742 = vmatprep.subr.mxu0 0.0
        %1743 = vmatpush2.msra.mxu0 0.0
        %1744 = vmatprep.subr.mxu0 0.0
        %1745 = vmatpush2.msra.mxu0 0.0
        %1746 = vmatprep.subr.mxu0 0.0
        %1747 = vmatpush2.msra.mxu0 0.0
        %1748 = vmatprep.subr.mxu0 0.0
        %1749 = vmatpush2.msra.mxu0 0.0
        %1750 = vmatprep.subr.mxu0 0.0
        %1751 = vmatpush2.msra.mxu0 0.0
        %1752 = vmatprep.subr.mxu0 0.0
        %1753 = vmatpush2.msra.mxu0 0.0
        %1754 = vmatprep.subr.mxu0 0.0
        %1755 = vmatpush2.msra.mxu0 0.0
        %1756 = vmatprep.mubr.f32.mxu0 0.0
        %v1757 = vand.u32 %v1262, 4294901760
        %1758 = vmatmul.mubr.f32.gmra.mxu0 %v1757
        %v1759 = vpop.f32.mrf.mxu0
        %v1760 = vadd.f32 %v1681, %v1759
        %v1761 = vpop.f32.mrf.mxu0
        %1762 = vmatprep.mubr.f32.mxu0 0.0
        %v1763 = vand.u32 %v1265, 4294901760
        %1764 = vmatmul.mubr.f32.gmra.mxu0 %v1763
        %v1765 = vpop.f32.mrf.mxu0
        %v1766 = vadd.f32 %v1687, %v1765
        %v1767 = vpop.f32.mrf.mxu0
        %1768 = vdwg.mxu0
        %v1770 = vsel %vm244, %v232, 0
        %v1773 = vsel %vm244, %v233, 0
        %1775 = vmatprep.subr.mxu0 0.0
        %1776 = vmatpush1.msra.mxu0 0.0
        %1777 = vmatprep.subr.mxu0 0.0
        %1778 = vmatpush1.msra.mxu0 0.0
        %1779 = vmatprep.subr.mxu0 0.0
        %1780 = vmatpush1.msra.mxu0 0.0
        %1781 = vmatprep.subr.mxu0 0.0
        %1782 = vmatpush1.msra.mxu0 0.0
        %1783 = vmatprep.subr.mxu0 0.0
        %1784 = vmatpush1.msra.mxu0 0.0
        %1785 = vmatprep.subr.mxu0 0.0
        %1786 = vmatpush1.msra.mxu0 0.0
        %1787 = vmatprep.subr.mxu0 0.0
        %1788 = vmatpush1.msra.mxu0 0.0
        %1789 = vmatprep.subr.mxu0 0.0
        %1790 = vmatpush1.msra.mxu0 0.0
        %1791 = vmatprep.subr.mxu0 0.0
        %1792 = vmatpush1.msra.mxu0 0.0
        %1793 = vmatprep.subr.mxu0 0.0
        %1794 = vmatpush1.msra.mxu0 0.0
        %1795 = vmatprep.subr.mxu0 0.0
        %1796 = vmatpush1.msra.mxu0 0.0
        %1797 = vmatprep.subr.mxu0 0.0
        %1798 = vmatpush1.msra.mxu0 0.0
        %1799 = vmatprep.subr.mxu0 0.0
        %1800 = vmatpush1.msra.mxu0 0.0
        %1801 = vmatprep.subr.mxu0 0.0
        %1802 = vmatpush1.msra.mxu0 0.0
        %1803 = vmatprep.subr.mxu0 0.0
        %v1804 = vand.u32 %v168, 4294901760
        %1805 = vmatpush1.msra.mxu0 %v1804
        %1806 = vmatprep.subr.mxu0 0.0
        %v1807 = vand.u32 %v167, 4294901760
        %1808 = vmatpush1.msra.mxu0 %v1807
        %1809 = vmatprep.subr.mxu0 0.0
        %1810 = vmatpush2.msra.mxu0 0.0
        %1811 = vmatprep.subr.mxu0 0.0
        %1812 = vmatpush2.msra.mxu0 0.0
        %1813 = vmatprep.subr.mxu0 0.0
        %1814 = vmatpush2.msra.mxu0 0.0
        %1815 = vmatprep.subr.mxu0 0.0
        %1816 = vmatpush2.msra.mxu0 0.0
        %1817 = vmatprep.subr.mxu0 0.0
        %1818 = vmatpush2.msra.mxu0 0.0
        %1819 = vmatprep.subr.mxu0 0.0
        %1820 = vmatpush2.msra.mxu0 0.0
        %1821 = vmatprep.subr.mxu0 0.0
        %1822 = vmatpush2.msra.mxu0 0.0
        %1823 = vmatprep.subr.mxu0 0.0
        %1824 = vmatpush2.msra.mxu0 0.0
        %1825 = vmatprep.subr.mxu0 0.0
        %1826 = vmatpush2.msra.mxu0 0.0
        %1827 = vmatprep.subr.mxu0 0.0
        %1828 = vmatpush2.msra.mxu0 0.0
        %1829 = vmatprep.subr.mxu0 0.0
        %1830 = vmatpush2.msra.mxu0 0.0
        %1831 = vmatprep.subr.mxu0 0.0
        %1832 = vmatpush2.msra.mxu0 0.0
        %1833 = vmatprep.subr.mxu0 0.0
        %1834 = vmatpush2.msra.mxu0 0.0
        %1835 = vmatprep.subr.mxu0 0.0
        %1836 = vmatpush2.msra.mxu0 0.0
        %1837 = vmatprep.subr.mxu0 0.0
        %1838 = vmatpush2.msra.mxu0 0.0
        %1839 = vmatprep.subr.mxu0 0.0
        %1840 = vmatpush2.msra.mxu0 0.0
        %1841 = vmatprep.mubr.f32.mxu0 0.0
        %v1842 = vand.u32 %v1770, 4294901760
        %v1843 = vsub.f32 %v1770, %v1842
        %v1844 = vand.u32 %v1843, 4294901760
        %v1845 = vsub.f32 %v1843, %v1844
        %v1846 = vand.u32 %v1845, 4294901760
        %1847 = vmatmul.mubr.f32.gmra.mxu0 %v1846
        %v1848 = vpop.f32.mrf.mxu0
        %v1849 = vadd.f32 %v1760, %v1848
        %v1850 = vpop.f32.mrf.mxu0
        %1851 = vmatprep.mubr.f32.mxu0 0.0
        %v1852 = vand.u32 %v1773, 4294901760
        %v1853 = vsub.f32 %v1773, %v1852
        %v1854 = vand.u32 %v1853, 4294901760
        %v1855 = vsub.f32 %v1853, %v1854
        %v1856 = vand.u32 %v1855, 4294901760
        %1857 = vmatmul.mubr.f32.gmra.mxu0 %v1856
        %v1858 = vpop.f32.mrf.mxu0
        %v1859 = vadd.f32 %v1766, %v1858
        %v1860 = vpop.f32.mrf.mxu0
        %1861 = vdwg.mxu0
        %1862 = vmatprep.subr.mxu0 0.0
        %1863 = vmatpush1.msra.mxu0 0.0
        %1864 = vmatprep.subr.mxu0 0.0
        %1865 = vmatpush1.msra.mxu0 0.0
        %1866 = vmatprep.subr.mxu0 0.0
        %1867 = vmatpush1.msra.mxu0 0.0
        %1868 = vmatprep.subr.mxu0 0.0
        %1869 = vmatpush1.msra.mxu0 0.0
        %1870 = vmatprep.subr.mxu0 0.0
        %1871 = vmatpush1.msra.mxu0 0.0
        %1872 = vmatprep.subr.mxu0 0.0
        %1873 = vmatpush1.msra.mxu0 0.0
        %1874 = vmatprep.subr.mxu0 0.0
        %1875 = vmatpush1.msra.mxu0 0.0
        %1876 = vmatprep.subr.mxu0 0.0
        %1877 = vmatpush1.msra.mxu0 0.0
        %1878 = vmatprep.subr.mxu0 0.0
        %1879 = vmatpush1.msra.mxu0 0.0
        %1880 = vmatprep.subr.mxu0 0.0
        %1881 = vmatpush1.msra.mxu0 0.0
        %1882 = vmatprep.subr.mxu0 0.0
        %1883 = vmatpush1.msra.mxu0 0.0
        %1884 = vmatprep.subr.mxu0 0.0
        %1885 = vmatpush1.msra.mxu0 0.0
        %1886 = vmatprep.subr.mxu0 0.0
        %1887 = vmatpush1.msra.mxu0 0.0
        %1888 = vmatprep.subr.mxu0 0.0
        %1889 = vmatpush1.msra.mxu0 0.0
        %1890 = vmatprep.subr.mxu0 0.0
        %v1891 = vand.u32 %v168, 4294901760
        %v1892 = vsub.f32 %v168, %v1891
        %v1893 = vand.u32 %v1892, 4294901760
        %v1894 = vsub.f32 %v1892, %v1893
        %v1895 = vand.u32 %v1894, 4294901760
        %1896 = vmatpush1.msra.mxu0 %v1895
        %1897 = vmatprep.subr.mxu0 0.0
        %v1898 = vand.u32 %v167, 4294901760
        %v1899 = vsub.f32 %v167, %v1898
        %v1900 = vand.u32 %v1899, 4294901760
        %v1901 = vsub.f32 %v1899, %v1900
        %v1902 = vand.u32 %v1901, 4294901760
        %1903 = vmatpush1.msra.mxu0 %v1902
        %1904 = vmatprep.subr.mxu0 0.0
        %1905 = vmatpush2.msra.mxu0 0.0
        %1906 = vmatprep.subr.mxu0 0.0
        %1907 = vmatpush2.msra.mxu0 0.0
        %1908 = vmatprep.subr.mxu0 0.0
        %1909 = vmatpush2.msra.mxu0 0.0
        %1910 = vmatprep.subr.mxu0 0.0
        %1911 = vmatpush2.msra.mxu0 0.0
        %1912 = vmatprep.subr.mxu0 0.0
        %1913 = vmatpush2.msra.mxu0 0.0
        %1914 = vmatprep.subr.mxu0 0.0
        %1915 = vmatpush2.msra.mxu0 0.0
        %1916 = vmatprep.subr.mxu0 0.0
        %1917 = vmatpush2.msra.mxu0 0.0
        %1918 = vmatprep.subr.mxu0 0.0
        %1919 = vmatpush2.msra.mxu0 0.0
        %1920 = vmatprep.subr.mxu0 0.0
        %1921 = vmatpush2.msra.mxu0 0.0
        %1922 = vmatprep.subr.mxu0 0.0
        %1923 = vmatpush2.msra.mxu0 0.0
        %1924 = vmatprep.subr.mxu0 0.0
        %1925 = vmatpush2.msra.mxu0 0.0
        %1926 = vmatprep.subr.mxu0 0.0
        %1927 = vmatpush2.msra.mxu0 0.0
        %1928 = vmatprep.subr.mxu0 0.0
        %1929 = vmatpush2.msra.mxu0 0.0
        %1930 = vmatprep.subr.mxu0 0.0
        %1931 = vmatpush2.msra.mxu0 0.0
        %1932 = vmatprep.subr.mxu0 0.0
        %1933 = vmatpush2.msra.mxu0 0.0
        %1934 = vmatprep.subr.mxu0 0.0
        %1935 = vmatpush2.msra.mxu0 0.0
        %1936 = vmatprep.mubr.f32.mxu0 0.0
        %v1937 = vand.u32 %v1770, 4294901760
        %1938 = vmatmul.mubr.f32.gmra.mxu0 %v1937
        %v1939 = vpop.f32.mrf.mxu0
        %v1940 = vadd.f32 %v1849, %v1939
        %v1941 = vpop.f32.mrf.mxu0
        %1942 = vmatprep.mubr.f32.mxu0 0.0
        %v1943 = vand.u32 %v1773, 4294901760
        %1944 = vmatmul.mubr.f32.gmra.mxu0 %v1943
        %v1945 = vpop.f32.mrf.mxu0
        %v1946 = vadd.f32 %v1859, %v1945
        %v1947 = vpop.f32.mrf.mxu0
        %1948 = vdwg.mxu0
        %1949 = vmatprep.subr.mxu0 0.0
        %1950 = vmatpush1.msra.mxu0 0.0
        %1951 = vmatprep.subr.mxu0 0.0
        %1952 = vmatpush1.msra.mxu0 0.0
        %1953 = vmatprep.subr.mxu0 0.0
        %1954 = vmatpush1.msra.mxu0 0.0
        %1955 = vmatprep.subr.mxu0 0.0
        %1956 = vmatpush1.msra.mxu0 0.0
        %1957 = vmatprep.subr.mxu0 0.0
        %1958 = vmatpush1.msra.mxu0 0.0
        %1959 = vmatprep.subr.mxu0 0.0
        %1960 = vmatpush1.msra.mxu0 0.0
        %1961 = vmatprep.subr.mxu0 0.0
        %1962 = vmatpush1.msra.mxu0 0.0
        %1963 = vmatprep.subr.mxu0 0.0
        %1964 = vmatpush1.msra.mxu0 0.0
        %1965 = vmatprep.subr.mxu0 0.0
        %1966 = vmatpush1.msra.mxu0 0.0
        %1967 = vmatprep.subr.mxu0 0.0
        %1968 = vmatpush1.msra.mxu0 0.0
        %1969 = vmatprep.subr.mxu0 0.0
        %1970 = vmatpush1.msra.mxu0 0.0
        %1971 = vmatprep.subr.mxu0 0.0
        %1972 = vmatpush1.msra.mxu0 0.0
        %1973 = vmatprep.subr.mxu0 0.0
        %1974 = vmatpush1.msra.mxu0 0.0
        %1975 = vmatprep.subr.mxu0 0.0
        %1976 = vmatpush1.msra.mxu0 0.0
        %1977 = vmatprep.subr.mxu0 0.0
        %v1978 = vand.u32 %v168, 4294901760
        %v1979 = vsub.f32 %v168, %v1978
        %1980 = vmatpush1.msra.mxu0 %v1979
        %1981 = vmatprep.subr.mxu0 0.0
        %v1982 = vand.u32 %v167, 4294901760
        %v1983 = vsub.f32 %v167, %v1982
        %1984 = vmatpush1.msra.mxu0 %v1983
        %1985 = vmatprep.subr.mxu0 0.0
        %1986 = vmatpush2.msra.mxu0 0.0
        %1987 = vmatprep.subr.mxu0 0.0
        %1988 = vmatpush2.msra.mxu0 0.0
        %1989 = vmatprep.subr.mxu0 0.0
        %1990 = vmatpush2.msra.mxu0 0.0
        %1991 = vmatprep.subr.mxu0 0.0
        %1992 = vmatpush2.msra.mxu0 0.0
        %1993 = vmatprep.subr.mxu0 0.0
        %1994 = vmatpush2.msra.mxu0 0.0
        %1995 = vmatprep.subr.mxu0 0.0
        %1996 = vmatpush2.msra.mxu0 0.0
        %1997 = vmatprep.subr.mxu0 0.0
        %1998 = vmatpush2.msra.mxu0 0.0
        %1999 = vmatprep.subr.mxu0 0.0
        %2000 = vmatpush2.msra.mxu0 0.0
        %2001 = vmatprep.subr.mxu0 0.0
        %2002 = vmatpush2.msra.mxu0 0.0
        %2003 = vmatprep.subr.mxu0 0.0
        %2004 = vmatpush2.msra.mxu0 0.0
        %2005 = vmatprep.subr.mxu0 0.0
        %2006 = vmatpush2.msra.mxu0 0.0
        %2007 = vmatprep.subr.mxu0 0.0
        %2008 = vmatpush2.msra.mxu0 0.0
        %2009 = vmatprep.subr.mxu0 0.0
        %2010 = vmatpush2.msra.mxu0 0.0
        %2011 = vmatprep.subr.mxu0 0.0
        %2012 = vmatpush2.msra.mxu0 0.0
        %2013 = vmatprep.subr.mxu0 0.0
        %2014 = vmatpush2.msra.mxu0 0.0
        %2015 = vmatprep.subr.mxu0 0.0
        %2016 = vmatpush2.msra.mxu0 0.0
        %2017 = vmatprep.mubr.f32.mxu0 0.0
        %v2018 = vand.u32 %v1770, 4294901760
        %v2019 = vsub.f32 %v1770, %v2018
        %2020 = vmatmul.mubr.f32.gmra.mxu0 %v2019
        %v2021 = vpop.f32.mrf.mxu0
        %v2022 = vadd.f32 %v1940, %v2021
        %v2023 = vpop.f32.mrf.mxu0
        %2024 = vmatprep.mubr.f32.mxu0 0.0
        %v2025 = vand.u32 %v1773, 4294901760
        %v2026 = vsub.f32 %v1773, %v2025
        %2027 = vmatmul.mubr.f32.gmra.mxu0 %v2026
        %v2028 = vpop.f32.mrf.mxu0
        %v2029 = vadd.f32 %v1946, %v2028
        %v2030 = vpop.f32.mrf.mxu0
        %2031 = vdwg.mxu0
        %2032 = vmatprep.subr.mxu0 0.0
        %2033 = vmatpush1.msra.mxu0 0.0
        %2034 = vmatprep.subr.mxu0 0.0
        %2035 = vmatpush1.msra.mxu0 0.0
        %2036 = vmatprep.subr.mxu0 0.0
        %2037 = vmatpush1.msra.mxu0 0.0
        %2038 = vmatprep.subr.mxu0 0.0
        %2039 = vmatpush1.msra.mxu0 0.0
        %2040 = vmatprep.subr.mxu0 0.0
        %2041 = vmatpush1.msra.mxu0 0.0
        %2042 = vmatprep.subr.mxu0 0.0
        %2043 = vmatpush1.msra.mxu0 0.0
        %2044 = vmatprep.subr.mxu0 0.0
        %2045 = vmatpush1.msra.mxu0 0.0
        %2046 = vmatprep.subr.mxu0 0.0
        %2047 = vmatpush1.msra.mxu0 0.0
        %2048 = vmatprep.subr.mxu0 0.0
        %2049 = vmatpush1.msra.mxu0 0.0
        %2050 = vmatprep.subr.mxu0 0.0
        %2051 = vmatpush1.msra.mxu0 0.0
        %2052 = vmatprep.subr.mxu0 0.0
        %2053 = vmatpush1.msra.mxu0 0.0
        %2054 = vmatprep.subr.mxu0 0.0
        %2055 = vmatpush1.msra.mxu0 0.0
        %2056 = vmatprep.subr.mxu0 0.0
        %2057 = vmatpush1.msra.mxu0 0.0
        %2058 = vmatprep.subr.mxu0 0.0
        %2059 = vmatpush1.msra.mxu0 0.0
        %2060 = vmatprep.subr.mxu0 0.0
        %v2061 = vand.u32 %v168, 4294901760
        %2062 = vmatpush1.msra.mxu0 %v2061
        %2063 = vmatprep.subr.mxu0 0.0
        %v2064 = vand.u32 %v167, 4294901760
        %2065 = vmatpush1.msra.mxu0 %v2064
        %2066 = vmatprep.subr.mxu0 0.0
        %2067 = vmatpush2.msra.mxu0 0.0
        %2068 = vmatprep.subr.mxu0 0.0
        %2069 = vmatpush2.msra.mxu0 0.0
        %2070 = vmatprep.subr.mxu0 0.0
        %2071 = vmatpush2.msra.mxu0 0.0
        %2072 = vmatprep.subr.mxu0 0.0
        %2073 = vmatpush2.msra.mxu0 0.0
        %2074 = vmatprep.subr.mxu0 0.0
        %2075 = vmatpush2.msra.mxu0 0.0
        %2076 = vmatprep.subr.mxu0 0.0
        %2077 = vmatpush2.msra.mxu0 0.0
        %2078 = vmatprep.subr.mxu0 0.0
        %2079 = vmatpush2.msra.mxu0 0.0
        %2080 = vmatprep.subr.mxu0 0.0
        %2081 = vmatpush2.msra.mxu0 0.0
        %2082 = vmatprep.subr.mxu0 0.0
        %2083 = vmatpush2.msra.mxu0 0.0
        %2084 = vmatprep.subr.mxu0 0.0
        %2085 = vmatpush2.msra.mxu0 0.0
        %2086 = vmatprep.subr.mxu0 0.0
        %2087 = vmatpush2.msra.mxu0 0.0
        %2088 = vmatprep.subr.mxu0 0.0
        %2089 = vmatpush2.msra.mxu0 0.0
        %2090 = vmatprep.subr.mxu0 0.0
        %2091 = vmatpush2.msra.mxu0 0.0
        %2092 = vmatprep.subr.mxu0 0.0
        %2093 = vmatpush2.msra.mxu0 0.0
        %2094 = vmatprep.subr.mxu0 0.0
        %2095 = vmatpush2.msra.mxu0 0.0
        %2096 = vmatprep.subr.mxu0 0.0
        %2097 = vmatpush2.msra.mxu0 0.0
        %2098 = vmatprep.mubr.f32.mxu0 0.0
        %v2099 = vand.u32 %v1770, 4294901760
        %v2100 = vsub.f32 %v1770, %v2099
        %v2101 = vand.u32 %v2100, 4294901760
        %2102 = vmatmul.mubr.f32.gmra.mxu0 %v2101
        %v2103 = vpop.f32.mrf.mxu0
        %v2104 = vadd.f32 %v2022, %v2103
        %v2105 = vpop.f32.mrf.mxu0
        %2106 = vmatprep.mubr.f32.mxu0 0.0
        %v2107 = vand.u32 %v1773, 4294901760
        %v2108 = vsub.f32 %v1773, %v2107
        %v2109 = vand.u32 %v2108, 4294901760
        %2110 = vmatmul.mubr.f32.gmra.mxu0 %v2109
        %v2111 = vpop.f32.mrf.mxu0
        %v2112 = vadd.f32 %v2029, %v2111
        %v2113 = vpop.f32.mrf.mxu0
        %2114 = vdwg.mxu0
        %2115 = vmatprep.subr.mxu0 0.0
        %2116 = vmatpush1.msra.mxu0 0.0
        %2117 = vmatprep.subr.mxu0 0.0
        %2118 = vmatpush1.msra.mxu0 0.0
        %2119 = vmatprep.subr.mxu0 0.0
        %2120 = vmatpush1.msra.mxu0 0.0
        %2121 = vmatprep.subr.mxu0 0.0
        %2122 = vmatpush1.msra.mxu0 0.0
        %2123 = vmatprep.subr.mxu0 0.0
        %2124 = vmatpush1.msra.mxu0 0.0
        %2125 = vmatprep.subr.mxu0 0.0
        %2126 = vmatpush1.msra.mxu0 0.0
        %2127 = vmatprep.subr.mxu0 0.0
        %2128 = vmatpush1.msra.mxu0 0.0
        %2129 = vmatprep.subr.mxu0 0.0
        %2130 = vmatpush1.msra.mxu0 0.0
        %2131 = vmatprep.subr.mxu0 0.0
        %2132 = vmatpush1.msra.mxu0 0.0
        %2133 = vmatprep.subr.mxu0 0.0
        %2134 = vmatpush1.msra.mxu0 0.0
        %2135 = vmatprep.subr.mxu0 0.0
        %2136 = vmatpush1.msra.mxu0 0.0
        %2137 = vmatprep.subr.mxu0 0.0
        %2138 = vmatpush1.msra.mxu0 0.0
        %2139 = vmatprep.subr.mxu0 0.0
        %2140 = vmatpush1.msra.mxu0 0.0
        %2141 = vmatprep.subr.mxu0 0.0
        %2142 = vmatpush1.msra.mxu0 0.0
        %2143 = vmatprep.subr.mxu0 0.0
        %v2144 = vand.u32 %v168, 4294901760
        %v2145 = vsub.f32 %v168, %v2144
        %v2146 = vand.u32 %v2145, 4294901760
        %2147 = vmatpush1.msra.mxu0 %v2146
        %2148 = vmatprep.subr.mxu0 0.0
        %v2149 = vand.u32 %v167, 4294901760
        %v2150 = vsub.f32 %v167, %v2149
        %v2151 = vand.u32 %v2150, 4294901760
        %2152 = vmatpush1.msra.mxu0 %v2151
        %2153 = vmatprep.subr.mxu0 0.0
        %2154 = vmatpush2.msra.mxu0 0.0
        %2155 = vmatprep.subr.mxu0 0.0
        %2156 = vmatpush2.msra.mxu0 0.0
        %2157 = vmatprep.subr.mxu0 0.0
        %2158 = vmatpush2.msra.mxu0 0.0
        %2159 = vmatprep.subr.mxu0 0.0
        %2160 = vmatpush2.msra.mxu0 0.0
        %2161 = vmatprep.subr.mxu0 0.0
        %2162 = vmatpush2.msra.mxu0 0.0
        %2163 = vmatprep.subr.mxu0 0.0
        %2164 = vmatpush2.msra.mxu0 0.0
        %2165 = vmatprep.subr.mxu0 0.0
        %2166 = vmatpush2.msra.mxu0 0.0
        %2167 = vmatprep.subr.mxu0 0.0
        %2168 = vmatpush2.msra.mxu0 0.0
        %2169 = vmatprep.subr.mxu0 0.0
        %2170 = vmatpush2.msra.mxu0 0.0
        %2171 = vmatprep.subr.mxu0 0.0
        %2172 = vmatpush2.msra.mxu0 0.0
        %2173 = vmatprep.subr.mxu0 0.0
        %2174 = vmatpush2.msra.mxu0 0.0
        %2175 = vmatprep.subr.mxu0 0.0
        %2176 = vmatpush2.msra.mxu0 0.0
        %2177 = vmatprep.subr.mxu0 0.0
        %2178 = vmatpush2.msra.mxu0 0.0
        %2179 = vmatprep.subr.mxu0 0.0
        %2180 = vmatpush2.msra.mxu0 0.0
        %2181 = vmatprep.subr.mxu0 0.0
        %2182 = vmatpush2.msra.mxu0 0.0
        %2183 = vmatprep.subr.mxu0 0.0
        %2184 = vmatpush2.msra.mxu0 0.0
        %2185 = vmatprep.mubr.f32.mxu0 0.0
        %v2186 = vand.u32 %v1770, 4294901760
        %2187 = vmatmul.mubr.f32.gmra.mxu0 %v2186
        %v2188 = vpop.f32.mrf.mxu0
        %v2189 = vadd.f32 %v2104, %v2188
        %v2190 = vpop.f32.mrf.mxu0
        %2191 = vmatprep.mubr.f32.mxu0 0.0
        %v2192 = vand.u32 %v1773, 4294901760
        %2193 = vmatmul.mubr.f32.gmra.mxu0 %v2192
        %v2194 = vpop.f32.mrf.mxu0
        %v2195 = vadd.f32 %v2112, %v2194
        %v2196 = vpop.f32.mrf.mxu0
        %2197 = vdwg.mxu0
        %2198 = vmatprep.subr.mxu0 0.0
        %2199 = vmatpush1.msra.mxu0 0.0
        %2200 = vmatprep.subr.mxu0 0.0
        %2201 = vmatpush1.msra.mxu0 0.0
        %2202 = vmatprep.subr.mxu0 0.0
        %2203 = vmatpush1.msra.mxu0 0.0
        %2204 = vmatprep.subr.mxu0 0.0
        %2205 = vmatpush1.msra.mxu0 0.0
        %2206 = vmatprep.subr.mxu0 0.0
        %2207 = vmatpush1.msra.mxu0 0.0
        %2208 = vmatprep.subr.mxu0 0.0
        %2209 = vmatpush1.msra.mxu0 0.0
        %2210 = vmatprep.subr.mxu0 0.0
        %2211 = vmatpush1.msra.mxu0 0.0
        %2212 = vmatprep.subr.mxu0 0.0
        %2213 = vmatpush1.msra.mxu0 0.0
        %2214 = vmatprep.subr.mxu0 0.0
        %2215 = vmatpush1.msra.mxu0 0.0
        %2216 = vmatprep.subr.mxu0 0.0
        %2217 = vmatpush1.msra.mxu0 0.0
        %2218 = vmatprep.subr.mxu0 0.0
        %2219 = vmatpush1.msra.mxu0 0.0
        %2220 = vmatprep.subr.mxu0 0.0
        %2221 = vmatpush1.msra.mxu0 0.0
        %2222 = vmatprep.subr.mxu0 0.0
        %2223 = vmatpush1.msra.mxu0 0.0
        %2224 = vmatprep.subr.mxu0 0.0
        %2225 = vmatpush1.msra.mxu0 0.0
        %2226 = vmatprep.subr.mxu0 0.0
        %v2227 = vand.u32 %v168, 4294901760
        %2228 = vmatpush1.msra.mxu0 %v2227
        %2229 = vmatprep.subr.mxu0 0.0
        %v2230 = vand.u32 %v167, 4294901760
        %2231 = vmatpush1.msra.mxu0 %v2230
        %2232 = vmatprep.subr.mxu0 0.0
        %2233 = vmatpush2.msra.mxu0 0.0
        %2234 = vmatprep.subr.mxu0 0.0
        %2235 = vmatpush2.msra.mxu0 0.0
        %2236 = vmatprep.subr.mxu0 0.0
        %2237 = vmatpush2.msra.mxu0 0.0
        %2238 = vmatprep.subr.mxu0 0.0
        %2239 = vmatpush2.msra.mxu0 0.0
        %2240 = vmatprep.subr.mxu0 0.0
        %2241 = vmatpush2.msra.mxu0 0.0
        %2242 = vmatprep.subr.mxu0 0.0
        %2243 = vmatpush2.msra.mxu0 0.0
        %2244 = vmatprep.subr.mxu0 0.0
        %2245 = vmatpush2.msra.mxu0 0.0
        %2246 = vmatprep.subr.mxu0 0.0
        %2247 = vmatpush2.msra.mxu0 0.0
        %2248 = vmatprep.subr.mxu0 0.0
        %2249 = vmatpush2.msra.mxu0 0.0
        %2250 = vmatprep.subr.mxu0 0.0
        %2251 = vmatpush2.msra.mxu0 0.0
        %2252 = vmatprep.subr.mxu0 0.0
        %2253 = vmatpush2.msra.mxu0 0.0
        %2254 = vmatprep.subr.mxu0 0.0
        %2255 = vmatpush2.msra.mxu0 0.0
        %2256 = vmatprep.subr.mxu0 0.0
        %2257 = vmatpush2.msra.mxu0 0.0
        %2258 = vmatprep.subr.mxu0 0.0
        %2259 = vmatpush2.msra.mxu0 0.0
        %2260 = vmatprep.subr.mxu0 0.0
        %2261 = vmatpush2.msra.mxu0 0.0
        %2262 = vmatprep.subr.mxu0 0.0
        %2263 = vmatpush2.msra.mxu0 0.0
        %2264 = vmatprep.mubr.f32.mxu0 0.0
        %v2265 = vand.u32 %v1770, 4294901760
        %2266 = vmatmul.mubr.f32.gmra.mxu0 %v2265
        %v2267 = vpop.f32.mrf.mxu0
        %v2268 = vadd.f32 %v2189, %v2267
        %v2269 = vpop.f32.mrf.mxu0
        %2270 = vmatprep.mubr.f32.mxu0 0.0
        %v2271 = vand.u32 %v1773, 4294901760
        %2272 = vmatmul.mubr.f32.gmra.mxu0 %v2271
        %v2273 = vpop.f32.mrf.mxu0
        %v2274 = vadd.f32 %v2195, %v2273
        %v2275 = vpop.f32.mrf.mxu0
        %2276 = vdwg.mxu0
        %v2278 = vsel %vm244, %v201, 0
        %v2281 = vsel %vm244, %v202, 0
        %v2284 = vsel %vm244, %v203, 0
        %v2287 = vsel %vm244, %v204, 0
        %2289 = vmatprep.subr.mxu0 0.0
        %2290 = vmatpush1.msra.mxu0 0.0
        %2291 = vmatprep.subr.mxu0 0.0
        %2292 = vmatpush1.msra.mxu0 0.0
        %2293 = vmatprep.subr.mxu0 0.0
        %2294 = vmatpush1.msra.mxu0 0.0
        %2295 = vmatprep.subr.mxu0 0.0
        %2296 = vmatpush1.msra.mxu0 0.0
        %2297 = vmatprep.subr.mxu0 0.0
        %2298 = vmatpush1.msra.mxu0 0.0
        %2299 = vmatprep.subr.mxu0 0.0
        %2300 = vmatpush1.msra.mxu0 0.0
        %2301 = vmatprep.subr.mxu0 0.0
        %2302 = vmatpush1.msra.mxu0 0.0
        %2303 = vmatprep.subr.mxu0 0.0
        %2304 = vmatpush1.msra.mxu0 0.0
        %2305 = vmatprep.subr.mxu0 0.0
        %2306 = vmatpush1.msra.mxu0 0.0
        %2307 = vmatprep.subr.mxu0 0.0
        %2308 = vmatpush1.msra.mxu0 0.0
        %2309 = vmatprep.subr.mxu0 0.0
        %2310 = vmatpush1.msra.mxu0 0.0
        %2311 = vmatprep.subr.mxu0 0.0
        %2312 = vmatpush1.msra.mxu0 0.0
        %2313 = vmatprep.subr.mxu0 0.0
        %2314 = vmatpush1.msra.mxu0 0.0
        %2315 = vmatprep.subr.mxu0 0.0
        %2316 = vmatpush1.msra.mxu0 0.0
        %2317 = vmatprep.subr.mxu0 0.0
        %v2318 = vand.u32 %v2274, 4294901760
        %2319 = vmatpush1.msra.mxu0 %v2318
        %2320 = vmatprep.subr.mxu0 0.0
        %v2321 = vand.u32 %v2268, 4294901760
        %2322 = vmatpush1.msra.mxu0 %v2321
        %2323 = vmatprep.subr.mxu0 0.0
        %2324 = vmatpush2.msra.mxu0 0.0
        %2325 = vmatprep.subr.mxu0 0.0
        %2326 = vmatpush2.msra.mxu0 0.0
        %2327 = vmatprep.subr.mxu0 0.0
        %2328 = vmatpush2.msra.mxu0 0.0
        %2329 = vmatprep.subr.mxu0 0.0
        %2330 = vmatpush2.msra.mxu0 0.0
        %2331 = vmatprep.subr.mxu0 0.0
        %2332 = vmatpush2.msra.mxu0 0.0
        %2333 = vmatprep.subr.mxu0 0.0
        %2334 = vmatpush2.msra.mxu0 0.0
        %2335 = vmatprep.subr.mxu0 0.0
        %2336 = vmatpush2.msra.mxu0 0.0
        %2337 = vmatprep.subr.mxu0 0.0
        %2338 = vmatpush2.msra.mxu0 0.0
        %2339 = vmatprep.subr.mxu0 0.0
        %2340 = vmatpush2.msra.mxu0 0.0
        %2341 = vmatprep.subr.mxu0 0.0
        %2342 = vmatpush2.msra.mxu0 0.0
        %2343 = vmatprep.subr.mxu0 0.0
        %2344 = vmatpush2.msra.mxu0 0.0
        %2345 = vmatprep.subr.mxu0 0.0
        %2346 = vmatpush2.msra.mxu0 0.0
        %2347 = vmatprep.subr.mxu0 0.0
        %2348 = vmatpush2.msra.mxu0 0.0
        %2349 = vmatprep.subr.mxu0 0.0
        %2350 = vmatpush2.msra.mxu0 0.0
        %2351 = vmatprep.subr.mxu0 0.0
        %2352 = vmatpush2.msra.mxu0 0.0
        %2353 = vmatprep.subr.mxu0 0.0
        %2354 = vmatpush2.msra.mxu0 0.0
        %2355 = vmatprep.mubr.f32.mxu0 0.0
        %v2356 = vand.u32 %v2278, 4294901760
        %v2357 = vsub.f32 %v2278, %v2356
        %v2358 = vand.u32 %v2357, 4294901760
        %v2359 = vsub.f32 %v2357, %v2358
        %v2360 = vand.u32 %v2359, 4294901760
        %2361 = vmatmul.mubr.f32.gmra.mxu0 %v2360
        %v2362 = vpop.f32.mrf.mxu0
        %v2363 = vadd.f32 0.0, %v2362
        %v2364 = vpop.f32.mrf.mxu0
        %2365 = vmatprep.mubr.f32.mxu0 0.0
        %v2366 = vand.u32 %v2281, 4294901760
        %v2367 = vsub.f32 %v2281, %v2366
        %v2368 = vand.u32 %v2367, 4294901760
        %v2369 = vsub.f32 %v2367, %v2368
        %v2370 = vand.u32 %v2369, 4294901760
        %2371 = vmatmul.mubr.f32.gmra.mxu0 %v2370
        %v2372 = vpop.f32.mrf.mxu0
        %v2373 = vadd.f32 0.0, %v2372
        %v2374 = vpop.f32.mrf.mxu0
        %2375 = vmatprep.mubr.f32.mxu0 0.0
        %v2376 = vand.u32 %v2284, 4294901760
        %v2377 = vsub.f32 %v2284, %v2376
        %v2378 = vand.u32 %v2377, 4294901760
        %v2379 = vsub.f32 %v2377, %v2378
        %v2380 = vand.u32 %v2379, 4294901760
        %2381 = vmatmul.mubr.f32.gmra.mxu0 %v2380
        %v2382 = vpop.f32.mrf.mxu0
        %v2383 = vadd.f32 0.0, %v2382
        %v2384 = vpop.f32.mrf.mxu0
        %2385 = vmatprep.mubr.f32.mxu0 0.0
        %v2386 = vand.u32 %v2287, 4294901760
        %v2387 = vsub.f32 %v2287, %v2386
        %v2388 = vand.u32 %v2387, 4294901760
        %v2389 = vsub.f32 %v2387, %v2388
        %v2390 = vand.u32 %v2389, 4294901760
        %2391 = vmatmul.mubr.f32.gmra.mxu0 %v2390
        %v2392 = vpop.f32.mrf.mxu0
        %v2393 = vadd.f32 0.0, %v2392
        %v2394 = vpop.f32.mrf.mxu0
        %2395 = vdwg.mxu0
        %2396 = vmatprep.subr.mxu0 0.0
        %2397 = vmatpush1.msra.mxu0 0.0
        %2398 = vmatprep.subr.mxu0 0.0
        %2399 = vmatpush1.msra.mxu0 0.0
        %2400 = vmatprep.subr.mxu0 0.0
        %2401 = vmatpush1.msra.mxu0 0.0
        %2402 = vmatprep.subr.mxu0 0.0
        %2403 = vmatpush1.msra.mxu0 0.0
        %2404 = vmatprep.subr.mxu0 0.0
        %2405 = vmatpush1.msra.mxu0 0.0
        %2406 = vmatprep.subr.mxu0 0.0
        %2407 = vmatpush1.msra.mxu0 0.0
        %2408 = vmatprep.subr.mxu0 0.0
        %2409 = vmatpush1.msra.mxu0 0.0
        %2410 = vmatprep.subr.mxu0 0.0
        %2411 = vmatpush1.msra.mxu0 0.0
        %2412 = vmatprep.subr.mxu0 0.0
        %2413 = vmatpush1.msra.mxu0 0.0
        %2414 = vmatprep.subr.mxu0 0.0
        %2415 = vmatpush1.msra.mxu0 0.0
        %2416 = vmatprep.subr.mxu0 0.0
        %2417 = vmatpush1.msra.mxu0 0.0
        %2418 = vmatprep.subr.mxu0 0.0
        %2419 = vmatpush1.msra.mxu0 0.0
        %2420 = vmatprep.subr.mxu0 0.0
        %2421 = vmatpush1.msra.mxu0 0.0
        %2422 = vmatprep.subr.mxu0 0.0
        %2423 = vmatpush1.msra.mxu0 0.0
        %2424 = vmatprep.subr.mxu0 0.0
        %v2425 = vand.u32 %v2274, 4294901760
        %v2426 = vsub.f32 %v2274, %v2425
        %v2427 = vand.u32 %v2426, 4294901760
        %v2428 = vsub.f32 %v2426, %v2427
        %v2429 = vand.u32 %v2428, 4294901760
        %2430 = vmatpush1.msra.mxu0 %v2429
        %2431 = vmatprep.subr.mxu0 0.0
        %v2432 = vand.u32 %v2268, 4294901760
        %v2433 = vsub.f32 %v2268, %v2432
        %v2434 = vand.u32 %v2433, 4294901760
        %v2435 = vsub.f32 %v2433, %v2434
        %v2436 = vand.u32 %v2435, 4294901760
        %2437 = vmatpush1.msra.mxu0 %v2436
        %2438 = vmatprep.subr.mxu0 0.0
        %2439 = vmatpush2.msra.mxu0 0.0
        %2440 = vmatprep.subr.mxu0 0.0
        %2441 = vmatpush2.msra.mxu0 0.0
        %2442 = vmatprep.subr.mxu0 0.0
        %2443 = vmatpush2.msra.mxu0 0.0
        %2444 = vmatprep.subr.mxu0 0.0
        %2445 = vmatpush2.msra.mxu0 0.0
        %2446 = vmatprep.subr.mxu0 0.0
        %2447 = vmatpush2.msra.mxu0 0.0
        %2448 = vmatprep.subr.mxu0 0.0
        %2449 = vmatpush2.msra.mxu0 0.0
        %2450 = vmatprep.subr.mxu0 0.0
        %2451 = vmatpush2.msra.mxu0 0.0
        %2452 = vmatprep.subr.mxu0 0.0
        %2453 = vmatpush2.msra.mxu0 0.0
        %2454 = vmatprep.subr.mxu0 0.0
        %2455 = vmatpush2.msra.mxu0 0.0
        %2456 = vmatprep.subr.mxu0 0.0
        %2457 = vmatpush2.msra.mxu0 0.0
        %2458 = vmatprep.subr.mxu0 0.0
        %2459 = vmatpush2.msra.mxu0 0.0
        %2460 = vmatprep.subr.mxu0 0.0
        %2461 = vmatpush2.msra.mxu0 0.0
        %2462 = vmatprep.subr.mxu0 0.0
        %2463 = vmatpush2.msra.mxu0 0.0
        %2464 = vmatprep.subr.mxu0 0.0
        %2465 = vmatpush2.msra.mxu0 0.0
        %2466 = vmatprep.subr.mxu0 0.0
        %2467 = vmatpush2.msra.mxu0 0.0
        %2468 = vmatprep.subr.mxu0 0.0
        %2469 = vmatpush2.msra.mxu0 0.0
        %2470 = vmatprep.mubr.f32.mxu0 0.0
        %v2471 = vand.u32 %v2278, 4294901760
        %2472 = vmatmul.mubr.f32.gmra.mxu0 %v2471
        %v2473 = vpop.f32.mrf.mxu0
        %v2474 = vadd.f32 %v2363, %v2473
        %v2475 = vpop.f32.mrf.mxu0
        %2476 = vmatprep.mubr.f32.mxu0 0.0
        %v2477 = vand.u32 %v2281, 4294901760
        %2478 = vmatmul.mubr.f32.gmra.mxu0 %v2477
        %v2479 = vpop.f32.mrf.mxu0
        %v2480 = vadd.f32 %v2373, %v2479
        %v2481 = vpop.f32.mrf.mxu0
        %2482 = vmatprep.mubr.f32.mxu0 0.0
        %v2483 = vand.u32 %v2284, 4294901760
        %2484 = vmatmul.mubr.f32.gmra.mxu0 %v2483
        %v2485 = vpop.f32.mrf.mxu0
        %v2486 = vadd.f32 %v2383, %v2485
        %v2487 = vpop.f32.mrf.mxu0
        %2488 = vmatprep.mubr.f32.mxu0 0.0
        %v2489 = vand.u32 %v2287, 4294901760
        %2490 = vmatmul.mubr.f32.gmra.mxu0 %v2489
        %v2491 = vpop.f32.mrf.mxu0
        %v2492 = vadd.f32 %v2393, %v2491
        %v2493 = vpop.f32.mrf.mxu0
        %2494 = vdwg.mxu0
        %2495 = vmatprep.subr.mxu0 0.0
        %2496 = vmatpush1.msra.mxu0 0.0
        %2497 = vmatprep.subr.mxu0 0.0
        %2498 = vmatpush1.msra.mxu0 0.0
        %2499 = vmatprep.subr.mxu0 0.0
        %2500 = vmatpush1.msra.mxu0 0.0
        %2501 = vmatprep.subr.mxu0 0.0
        %2502 = vmatpush1.msra.mxu0 0.0
        %2503 = vmatprep.subr.mxu0 0.0
        %2504 = vmatpush1.msra.mxu0 0.0
        %2505 = vmatprep.subr.mxu0 0.0
        %2506 = vmatpush1.msra.mxu0 0.0
        %2507 = vmatprep.subr.mxu0 0.0
        %2508 = vmatpush1.msra.mxu0 0.0
        %2509 = vmatprep.subr.mxu0 0.0
        %2510 = vmatpush1.msra.mxu0 0.0
        %2511 = vmatprep.subr.mxu0 0.0
        %2512 = vmatpush1.msra.mxu0 0.0
        %2513 = vmatprep.subr.mxu0 0.0
        %2514 = vmatpush1.msra.mxu0 0.0
        %2515 = vmatprep.subr.mxu0 0.0
        %2516 = vmatpush1.msra.mxu0 0.0
        %2517 = vmatprep.subr.mxu0 0.0
        %2518 = vmatpush1.msra.mxu0 0.0
        %2519 = vmatprep.subr.mxu0 0.0
        %2520 = vmatpush1.msra.mxu0 0.0
        %2521 = vmatprep.subr.mxu0 0.0
        %2522 = vmatpush1.msra.mxu0 0.0
        %2523 = vmatprep.subr.mxu0 0.0
        %v2524 = vand.u32 %v2274, 4294901760
        %v2525 = vsub.f32 %v2274, %v2524
        %2526 = vmatpush1.msra.mxu0 %v2525
        %2527 = vmatprep.subr.mxu0 0.0
        %v2528 = vand.u32 %v2268, 4294901760
        %v2529 = vsub.f32 %v2268, %v2528
        %2530 = vmatpush1.msra.mxu0 %v2529
        %2531 = vmatprep.subr.mxu0 0.0
        %2532 = vmatpush2.msra.mxu0 0.0
        %2533 = vmatprep.subr.mxu0 0.0
        %2534 = vmatpush2.msra.mxu0 0.0
        %2535 = vmatprep.subr.mxu0 0.0
        %2536 = vmatpush2.msra.mxu0 0.0
        %2537 = vmatprep.subr.mxu0 0.0
        %2538 = vmatpush2.msra.mxu0 0.0
        %2539 = vmatprep.subr.mxu0 0.0
        %2540 = vmatpush2.msra.mxu0 0.0
        %2541 = vmatprep.subr.mxu0 0.0
        %2542 = vmatpush2.msra.mxu0 0.0
        %2543 = vmatprep.subr.mxu0 0.0
        %2544 = vmatpush2.msra.mxu0 0.0
        %2545 = vmatprep.subr.mxu0 0.0
        %2546 = vmatpush2.msra.mxu0 0.0
        %2547 = vmatprep.subr.mxu0 0.0
        %2548 = vmatpush2.msra.mxu0 0.0
        %2549 = vmatprep.subr.mxu0 0.0
        %2550 = vmatpush2.msra.mxu0 0.0
        %2551 = vmatprep.subr.mxu0 0.0
        %2552 = vmatpush2.msra.mxu0 0.0
        %2553 = vmatprep.subr.mxu0 0.0
        %2554 = vmatpush2.msra.mxu0 0.0
        %2555 = vmatprep.subr.mxu0 0.0
        %2556 = vmatpush2.msra.mxu0 0.0
        %2557 = vmatprep.subr.mxu0 0.0
        %2558 = vmatpush2.msra.mxu0 0.0
        %2559 = vmatprep.subr.mxu0 0.0
        %2560 = vmatpush2.msra.mxu0 0.0
        %2561 = vmatprep.subr.mxu0 0.0
        %2562 = vmatpush2.msra.mxu0 0.0
        %2563 = vmatprep.mubr.f32.mxu0 0.0
        %v2564 = vand.u32 %v2278, 4294901760
        %v2565 = vsub.f32 %v2278, %v2564
        %2566 = vmatmul.mubr.f32.gmra.mxu0 %v2565
        %v2567 = vpop.f32.mrf.mxu0
        %v2568 = vadd.f32 %v2474, %v2567
        %v2569 = vpop.f32.mrf.mxu0
        %2570 = vmatprep.mubr.f32.mxu0 0.0
        %v2571 = vand.u32 %v2281, 4294901760
        %v2572 = vsub.f32 %v2281, %v2571
        %2573 = vmatmul.mubr.f32.gmra.mxu0 %v2572
        %v2574 = vpop.f32.mrf.mxu0
        %v2575 = vadd.f32 %v2480, %v2574
        %v2576 = vpop.f32.mrf.mxu0
        %2577 = vmatprep.mubr.f32.mxu0 0.0
        %v2578 = vand.u32 %v2284, 4294901760
        %v2579 = vsub.f32 %v2284, %v2578
        %2580 = vmatmul.mubr.f32.gmra.mxu0 %v2579
        %v2581 = vpop.f32.mrf.mxu0
        %v2582 = vadd.f32 %v2486, %v2581
        %v2583 = vpop.f32.mrf.mxu0
        %2584 = vmatprep.mubr.f32.mxu0 0.0
        %v2585 = vand.u32 %v2287, 4294901760
        %v2586 = vsub.f32 %v2287, %v2585
        %2587 = vmatmul.mubr.f32.gmra.mxu0 %v2586
        %v2588 = vpop.f32.mrf.mxu0
        %v2589 = vadd.f32 %v2492, %v2588
        %v2590 = vpop.f32.mrf.mxu0
        %2591 = vdwg.mxu0
        %2592 = vmatprep.subr.mxu0 0.0
        %2593 = vmatpush1.msra.mxu0 0.0
        %2594 = vmatprep.subr.mxu0 0.0
        %2595 = vmatpush1.msra.mxu0 0.0
        %2596 = vmatprep.subr.mxu0 0.0
        %2597 = vmatpush1.msra.mxu0 0.0
        %2598 = vmatprep.subr.mxu0 0.0
        %2599 = vmatpush1.msra.mxu0 0.0
        %2600 = vmatprep.subr.mxu0 0.0
        %2601 = vmatpush1.msra.mxu0 0.0
        %2602 = vmatprep.subr.mxu0 0.0
        %2603 = vmatpush1.msra.mxu0 0.0
        %2604 = vmatprep.subr.mxu0 0.0
        %2605 = vmatpush1.msra.mxu0 0.0
        %2606 = vmatprep.subr.mxu0 0.0
        %2607 = vmatpush1.msra.mxu0 0.0
        %2608 = vmatprep.subr.mxu0 0.0
        %2609 = vmatpush1.msra.mxu0 0.0
        %2610 = vmatprep.subr.mxu0 0.0
        %2611 = vmatpush1.msra.mxu0 0.0
        %2612 = vmatprep.subr.mxu0 0.0
        %2613 = vmatpush1.msra.mxu0 0.0
        %2614 = vmatprep.subr.mxu0 0.0
        %2615 = vmatpush1.msra.mxu0 0.0
        %2616 = vmatprep.subr.mxu0 0.0
        %2617 = vmatpush1.msra.mxu0 0.0
        %2618 = vmatprep.subr.mxu0 0.0
        %2619 = vmatpush1.msra.mxu0 0.0
        %2620 = vmatprep.subr.mxu0 0.0
        %v2621 = vand.u32 %v2274, 4294901760
        %2622 = vmatpush1.msra.mxu0 %v2621
        %2623 = vmatprep.subr.mxu0 0.0
        %v2624 = vand.u32 %v2268, 4294901760
        %2625 = vmatpush1.msra.mxu0 %v2624
        %2626 = vmatprep.subr.mxu0 0.0
        %2627 = vmatpush2.msra.mxu0 0.0
        %2628 = vmatprep.subr.mxu0 0.0
        %2629 = vmatpush2.msra.mxu0 0.0
        %2630 = vmatprep.subr.mxu0 0.0
        %2631 = vmatpush2.msra.mxu0 0.0
        %2632 = vmatprep.subr.mxu0 0.0
        %2633 = vmatpush2.msra.mxu0 0.0
        %2634 = vmatprep.subr.mxu0 0.0
        %2635 = vmatpush2.msra.mxu0 0.0
        %2636 = vmatprep.subr.mxu0 0.0
        %2637 = vmatpush2.msra.mxu0 0.0
        %2638 = vmatprep.subr.mxu0 0.0
        %2639 = vmatpush2.msra.mxu0 0.0
        %2640 = vmatprep.subr.mxu0 0.0
        %2641 = vmatpush2.msra.mxu0 0.0
        %2642 = vmatprep.subr.mxu0 0.0
        %2643 = vmatpush2.msra.mxu0 0.0
        %2644 = vmatprep.subr.mxu0 0.0
        %2645 = vmatpush2.msra.mxu0 0.0
        %2646 = vmatprep.subr.mxu0 0.0
        %2647 = vmatpush2.msra.mxu0 0.0
        %2648 = vmatprep.subr.mxu0 0.0
        %2649 = vmatpush2.msra.mxu0 0.0
        %2650 = vmatprep.subr.mxu0 0.0
        %2651 = vmatpush2.msra.mxu0 0.0
        %2652 = vmatprep.subr.mxu0 0.0
        %2653 = vmatpush2.msra.mxu0 0.0
        %2654 = vmatprep.subr.mxu0 0.0
        %2655 = vmatpush2.msra.mxu0 0.0
        %2656 = vmatprep.subr.mxu0 0.0
        %2657 = vmatpush2.msra.mxu0 0.0
        %2658 = vmatprep.mubr.f32.mxu0 0.0
        %v2659 = vand.u32 %v2278, 4294901760
        %v2660 = vsub.f32 %v2278, %v2659
        %v2661 = vand.u32 %v2660, 4294901760
        %2662 = vmatmul.mubr.f32.gmra.mxu0 %v2661
        %v2663 = vpop.f32.mrf.mxu0
        %v2664 = vadd.f32 %v2568, %v2663
        %v2665 = vpop.f32.mrf.mxu0
        %2666 = vmatprep.mubr.f32.mxu0 0.0
        %v2667 = vand.u32 %v2281, 4294901760
        %v2668 = vsub.f32 %v2281, %v2667
        %v2669 = vand.u32 %v2668, 4294901760
        %2670 = vmatmul.mubr.f32.gmra.mxu0 %v2669
        %v2671 = vpop.f32.mrf.mxu0
        %v2672 = vadd.f32 %v2575, %v2671
        %v2673 = vpop.f32.mrf.mxu0
        %2674 = vmatprep.mubr.f32.mxu0 0.0
        %v2675 = vand.u32 %v2284, 4294901760
        %v2676 = vsub.f32 %v2284, %v2675
        %v2677 = vand.u32 %v2676, 4294901760
        %2678 = vmatmul.mubr.f32.gmra.mxu0 %v2677
        %v2679 = vpop.f32.mrf.mxu0
        %v2680 = vadd.f32 %v2582, %v2679
        %v2681 = vpop.f32.mrf.mxu0
        %2682 = vmatprep.mubr.f32.mxu0 0.0
        %v2683 = vand.u32 %v2287, 4294901760
        %v2684 = vsub.f32 %v2287, %v2683
        %v2685 = vand.u32 %v2684, 4294901760
        %2686 = vmatmul.mubr.f32.gmra.mxu0 %v2685
        %v2687 = vpop.f32.mrf.mxu0
        %v2688 = vadd.f32 %v2589, %v2687
        %v2689 = vpop.f32.mrf.mxu0
        %2690 = vdwg.mxu0
        %2691 = vmatprep.subr.mxu0 0.0
        %2692 = vmatpush1.msra.mxu0 0.0
        %2693 = vmatprep.subr.mxu0 0.0
        %2694 = vmatpush1.msra.mxu0 0.0
        %2695 = vmatprep.subr.mxu0 0.0
        %2696 = vmatpush1.msra.mxu0 0.0
        %2697 = vmatprep.subr.mxu0 0.0
        %2698 = vmatpush1.msra.mxu0 0.0
        %2699 = vmatprep.subr.mxu0 0.0
        %2700 = vmatpush1.msra.mxu0 0.0
        %2701 = vmatprep.subr.mxu0 0.0
        %2702 = vmatpush1.msra.mxu0 0.0
        %2703 = vmatprep.subr.mxu0 0.0
        %2704 = vmatpush1.msra.mxu0 0.0
        %2705 = vmatprep.subr.mxu0 0.0
        %2706 = vmatpush1.msra.mxu0 0.0
        %2707 = vmatprep.subr.mxu0 0.0
        %2708 = vmatpush1.msra.mxu0 0.0
        %2709 = vmatprep.subr.mxu0 0.0
        %2710 = vmatpush1.msra.mxu0 0.0
        %2711 = vmatprep.subr.mxu0 0.0
        %2712 = vmatpush1.msra.mxu0 0.0
        %2713 = vmatprep.subr.mxu0 0.0
        %2714 = vmatpush1.msra.mxu0 0.0
        %2715 = vmatprep.subr.mxu0 0.0
        %2716 = vmatpush1.msra.mxu0 0.0
        %2717 = vmatprep.subr.mxu0 0.0
        %2718 = vmatpush1.msra.mxu0 0.0
        %2719 = vmatprep.subr.mxu0 0.0
        %v2720 = vand.u32 %v2274, 4294901760
        %v2721 = vsub.f32 %v2274, %v2720
        %v2722 = vand.u32 %v2721, 4294901760
        %2723 = vmatpush1.msra.mxu0 %v2722
        %2724 = vmatprep.subr.mxu0 0.0
        %v2725 = vand.u32 %v2268, 4294901760
        %v2726 = vsub.f32 %v2268, %v2725
        %v2727 = vand.u32 %v2726, 4294901760
        %2728 = vmatpush1.msra.mxu0 %v2727
        %2729 = vmatprep.subr.mxu0 0.0
        %2730 = vmatpush2.msra.mxu0 0.0
        %2731 = vmatprep.subr.mxu0 0.0
        %2732 = vmatpush2.msra.mxu0 0.0
        %2733 = vmatprep.subr.mxu0 0.0
        %2734 = vmatpush2.msra.mxu0 0.0
        %2735 = vmatprep.subr.mxu0 0.0
        %2736 = vmatpush2.msra.mxu0 0.0
        %2737 = vmatprep.subr.mxu0 0.0
        %2738 = vmatpush2.msra.mxu0 0.0
        %2739 = vmatprep.subr.mxu0 0.0
        %2740 = vmatpush2.msra.mxu0 0.0
        %2741 = vmatprep.subr.mxu0 0.0
        %2742 = vmatpush2.msra.mxu0 0.0
        %2743 = vmatprep.subr.mxu0 0.0
        %2744 = vmatpush2.msra.mxu0 0.0
        %2745 = vmatprep.subr.mxu0 0.0
        %2746 = vmatpush2.msra.mxu0 0.0
        %2747 = vmatprep.subr.mxu0 0.0
        %2748 = vmatpush2.msra.mxu0 0.0
        %2749 = vmatprep.subr.mxu0 0.0
        %2750 = vmatpush2.msra.mxu0 0.0
        %2751 = vmatprep.subr.mxu0 0.0
        %2752 = vmatpush2.msra.mxu0 0.0
        %2753 = vmatprep.subr.mxu0 0.0
        %2754 = vmatpush2.msra.mxu0 0.0
        %2755 = vmatprep.subr.mxu0 0.0
        %2756 = vmatpush2.msra.mxu0 0.0
        %2757 = vmatprep.subr.mxu0 0.0
        %2758 = vmatpush2.msra.mxu0 0.0
        %2759 = vmatprep.subr.mxu0 0.0
        %2760 = vmatpush2.msra.mxu0 0.0
        %2761 = vmatprep.mubr.f32.mxu0 0.0
        %v2762 = vand.u32 %v2278, 4294901760
        %2763 = vmatmul.mubr.f32.gmra.mxu0 %v2762
        %v2764 = vpop.f32.mrf.mxu0
        %v2765 = vadd.f32 %v2664, %v2764
        %v2766 = vpop.f32.mrf.mxu0
        %2767 = vmatprep.mubr.f32.mxu0 0.0
        %v2768 = vand.u32 %v2281, 4294901760
        %2769 = vmatmul.mubr.f32.gmra.mxu0 %v2768
        %v2770 = vpop.f32.mrf.mxu0
        %v2771 = vadd.f32 %v2672, %v2770
        %v2772 = vpop.f32.mrf.mxu0
        %2773 = vmatprep.mubr.f32.mxu0 0.0
        %v2774 = vand.u32 %v2284, 4294901760
        %2775 = vmatmul.mubr.f32.gmra.mxu0 %v2774
        %v2776 = vpop.f32.mrf.mxu0
        %v2777 = vadd.f32 %v2680, %v2776
        %v2778 = vpop.f32.mrf.mxu0
        %2779 = vmatprep.mubr.f32.mxu0 0.0
        %v2780 = vand.u32 %v2287, 4294901760
        %2781 = vmatmul.mubr.f32.gmra.mxu0 %v2780
        %v2782 = vpop.f32.mrf.mxu0
        %v2783 = vadd.f32 %v2688, %v2782
        %v2784 = vpop.f32.mrf.mxu0
        %2785 = vdwg.mxu0
        %2786 = vmatprep.subr.mxu0 0.0
        %2787 = vmatpush1.msra.mxu0 0.0
        %2788 = vmatprep.subr.mxu0 0.0
        %2789 = vmatpush1.msra.mxu0 0.0
        %2790 = vmatprep.subr.mxu0 0.0
        %2791 = vmatpush1.msra.mxu0 0.0
        %2792 = vmatprep.subr.mxu0 0.0
        %2793 = vmatpush1.msra.mxu0 0.0
        %2794 = vmatprep.subr.mxu0 0.0
        %2795 = vmatpush1.msra.mxu0 0.0
        %2796 = vmatprep.subr.mxu0 0.0
        %2797 = vmatpush1.msra.mxu0 0.0
        %2798 = vmatprep.subr.mxu0 0.0
        %2799 = vmatpush1.msra.mxu0 0.0
        %2800 = vmatprep.subr.mxu0 0.0
        %2801 = vmatpush1.msra.mxu0 0.0
        %2802 = vmatprep.subr.mxu0 0.0
        %2803 = vmatpush1.msra.mxu0 0.0
        %2804 = vmatprep.subr.mxu0 0.0
        %2805 = vmatpush1.msra.mxu0 0.0
        %2806 = vmatprep.subr.mxu0 0.0
        %2807 = vmatpush1.msra.mxu0 0.0
        %2808 = vmatprep.subr.mxu0 0.0
        %2809 = vmatpush1.msra.mxu0 0.0
        %2810 = vmatprep.subr.mxu0 0.0
        %2811 = vmatpush1.msra.mxu0 0.0
        %2812 = vmatprep.subr.mxu0 0.0
        %2813 = vmatpush1.msra.mxu0 0.0
        %2814 = vmatprep.subr.mxu0 0.0
        %v2815 = vand.u32 %v2274, 4294901760
        %2816 = vmatpush1.msra.mxu0 %v2815
        %2817 = vmatprep.subr.mxu0 0.0
        %v2818 = vand.u32 %v2268, 4294901760
        %2819 = vmatpush1.msra.mxu0 %v2818
        %2820 = vmatprep.subr.mxu0 0.0
        %2821 = vmatpush2.msra.mxu0 0.0
        %2822 = vmatprep.subr.mxu0 0.0
        %2823 = vmatpush2.msra.mxu0 0.0
        %2824 = vmatprep.subr.mxu0 0.0
        %2825 = vmatpush2.msra.mxu0 0.0
        %2826 = vmatprep.subr.mxu0 0.0
        %2827 = vmatpush2.msra.mxu0 0.0
        %2828 = vmatprep.subr.mxu0 0.0
        %2829 = vmatpush2.msra.mxu0 0.0
        %2830 = vmatprep.subr.mxu0 0.0
        %2831 = vmatpush2.msra.mxu0 0.0
        %2832 = vmatprep.subr.mxu0 0.0
        %2833 = vmatpush2.msra.mxu0 0.0
        %2834 = vmatprep.subr.mxu0 0.0
        %2835 = vmatpush2.msra.mxu0 0.0
        %2836 = vmatprep.subr.mxu0 0.0
        %2837 = vmatpush2.msra.mxu0 0.0
        %2838 = vmatprep.subr.mxu0 0.0
        %2839 = vmatpush2.msra.mxu0 0.0
        %2840 = vmatprep.subr.mxu0 0.0
        %2841 = vmatpush2.msra.mxu0 0.0
        %2842 = vmatprep.subr.mxu0 0.0
        %2843 = vmatpush2.msra.mxu0 0.0
        %2844 = vmatprep.subr.mxu0 0.0
        %2845 = vmatpush2.msra.mxu0 0.0
        %2846 = vmatprep.subr.mxu0 0.0
        %2847 = vmatpush2.msra.mxu0 0.0
        %2848 = vmatprep.subr.mxu0 0.0
        %2849 = vmatpush2.msra.mxu0 0.0
        %2850 = vmatprep.subr.mxu0 0.0
        %2851 = vmatpush2.msra.mxu0 0.0
        %2852 = vmatprep.mubr.f32.mxu0 0.0
        %v2853 = vand.u32 %v2278, 4294901760
        %2854 = vmatmul.mubr.f32.gmra.mxu0 %v2853
        %v2855 = vpop.f32.mrf.mxu0
        %v2856 = vadd.f32 %v2765, %v2855
        %v2857 = vpop.f32.mrf.mxu0
        %2858 = vmatprep.mubr.f32.mxu0 0.0
        %v2859 = vand.u32 %v2281, 4294901760
        %2860 = vmatmul.mubr.f32.gmra.mxu0 %v2859
        %v2861 = vpop.f32.mrf.mxu0
        %v2862 = vadd.f32 %v2771, %v2861
        %v2863 = vpop.f32.mrf.mxu0
        %2864 = vmatprep.mubr.f32.mxu0 0.0
        %v2865 = vand.u32 %v2284, 4294901760
        %2866 = vmatmul.mubr.f32.gmra.mxu0 %v2865
        %v2867 = vpop.f32.mrf.mxu0
        %v2868 = vadd.f32 %v2777, %v2867
        %v2869 = vpop.f32.mrf.mxu0
        %2870 = vmatprep.mubr.f32.mxu0 0.0
        %v2871 = vand.u32 %v2287, 4294901760
        %2872 = vmatmul.mubr.f32.gmra.mxu0 %v2871
        %v2873 = vpop.f32.mrf.mxu0
        %v2874 = vadd.f32 %v2783, %v2873
        %v2875 = vpop.f32.mrf.mxu0
        %2876 = vdwg.mxu0
        %v2878 = vsel %vm244, %v188, 0
        %v2881 = vsel %vm244, %v189, 0
        %v2884 = vsel %vm244, %v190, 0
        %v2887 = vsel %vm244, %v191, 0
        %2889 = vmatprep.subr.mxu0 0.0
        %2890 = vmatpush1.msra.mxu0 0.0
        %2891 = vmatprep.subr.mxu0 0.0
        %2892 = vmatpush1.msra.mxu0 0.0
        %2893 = vmatprep.subr.mxu0 0.0
        %2894 = vmatpush1.msra.mxu0 0.0
        %2895 = vmatprep.subr.mxu0 0.0
        %2896 = vmatpush1.msra.mxu0 0.0
        %2897 = vmatprep.subr.mxu0 0.0
        %2898 = vmatpush1.msra.mxu0 0.0
        %2899 = vmatprep.subr.mxu0 0.0
        %2900 = vmatpush1.msra.mxu0 0.0
        %2901 = vmatprep.subr.mxu0 0.0
        %2902 = vmatpush1.msra.mxu0 0.0
        %2903 = vmatprep.subr.mxu0 0.0
        %2904 = vmatpush1.msra.mxu0 0.0
        %2905 = vmatprep.subr.mxu0 0.0
        %2906 = vmatpush1.msra.mxu0 0.0
        %2907 = vmatprep.subr.mxu0 0.0
        %2908 = vmatpush1.msra.mxu0 0.0
        %2909 = vmatprep.subr.mxu0 0.0
        %2910 = vmatpush1.msra.mxu0 0.0
        %2911 = vmatprep.subr.mxu0 0.0
        %2912 = vmatpush1.msra.mxu0 0.0
        %2913 = vmatprep.subr.mxu0 0.0
        %2914 = vmatpush1.msra.mxu0 0.0
        %2915 = vmatprep.subr.mxu0 0.0
        %2916 = vmatpush1.msra.mxu0 0.0
        %2917 = vmatprep.subr.mxu0 0.0
        %v2918 = vand.u32 %v1258, 4294901760
        %2919 = vmatpush1.msra.mxu0 %v2918
        %2920 = vmatprep.subr.mxu0 0.0
        %v2921 = vand.u32 %v1252, 4294901760
        %2922 = vmatpush1.msra.mxu0 %v2921
        %2923 = vmatprep.subr.mxu0 0.0
        %2924 = vmatpush2.msra.mxu0 0.0
        %2925 = vmatprep.subr.mxu0 0.0
        %2926 = vmatpush2.msra.mxu0 0.0
        %2927 = vmatprep.subr.mxu0 0.0
        %2928 = vmatpush2.msra.mxu0 0.0
        %2929 = vmatprep.subr.mxu0 0.0
        %2930 = vmatpush2.msra.mxu0 0.0
        %2931 = vmatprep.subr.mxu0 0.0
        %2932 = vmatpush2.msra.mxu0 0.0
        %2933 = vmatprep.subr.mxu0 0.0
        %2934 = vmatpush2.msra.mxu0 0.0
        %2935 = vmatprep.subr.mxu0 0.0
        %2936 = vmatpush2.msra.mxu0 0.0
        %2937 = vmatprep.subr.mxu0 0.0
        %2938 = vmatpush2.msra.mxu0 0.0
        %2939 = vmatprep.subr.mxu0 0.0
        %2940 = vmatpush2.msra.mxu0 0.0
        %2941 = vmatprep.subr.mxu0 0.0
        %2942 = vmatpush2.msra.mxu0 0.0
        %2943 = vmatprep.subr.mxu0 0.0
        %2944 = vmatpush2.msra.mxu0 0.0
        %2945 = vmatprep.subr.mxu0 0.0
        %2946 = vmatpush2.msra.mxu0 0.0
        %2947 = vmatprep.subr.mxu0 0.0
        %2948 = vmatpush2.msra.mxu0 0.0
        %2949 = vmatprep.subr.mxu0 0.0
        %2950 = vmatpush2.msra.mxu0 0.0
        %2951 = vmatprep.subr.mxu0 0.0
        %2952 = vmatpush2.msra.mxu0 0.0
        %2953 = vmatprep.subr.mxu0 0.0
        %2954 = vmatpush2.msra.mxu0 0.0
        %2955 = vmatprep.mubr.f32.mxu0 0.0
        %v2956 = vand.u32 %v2878, 4294901760
        %v2957 = vsub.f32 %v2878, %v2956
        %v2958 = vand.u32 %v2957, 4294901760
        %v2959 = vsub.f32 %v2957, %v2958
        %v2960 = vand.u32 %v2959, 4294901760
        %2961 = vmatmul.mubr.f32.gmra.mxu0 %v2960
        %v2962 = vpop.f32.mrf.mxu0
        %v2963 = vadd.f32 %v2856, %v2962
        %v2964 = vpop.f32.mrf.mxu0
        %2965 = vmatprep.mubr.f32.mxu0 0.0
        %v2966 = vand.u32 %v2881, 4294901760
        %v2967 = vsub.f32 %v2881, %v2966
        %v2968 = vand.u32 %v2967, 4294901760
        %v2969 = vsub.f32 %v2967, %v2968
        %v2970 = vand.u32 %v2969, 4294901760
        %2971 = vmatmul.mubr.f32.gmra.mxu0 %v2970
        %v2972 = vpop.f32.mrf.mxu0
        %v2973 = vadd.f32 %v2862, %v2972
        %v2974 = vpop.f32.mrf.mxu0
        %2975 = vmatprep.mubr.f32.mxu0 0.0
        %v2976 = vand.u32 %v2884, 4294901760
        %v2977 = vsub.f32 %v2884, %v2976
        %v2978 = vand.u32 %v2977, 4294901760
        %v2979 = vsub.f32 %v2977, %v2978
        %v2980 = vand.u32 %v2979, 4294901760
        %2981 = vmatmul.mubr.f32.gmra.mxu0 %v2980
        %v2982 = vpop.f32.mrf.mxu0
        %v2983 = vadd.f32 %v2868, %v2982
        %v2984 = vpop.f32.mrf.mxu0
        %2985 = vmatprep.mubr.f32.mxu0 0.0
        %v2986 = vand.u32 %v2887, 4294901760
        %v2987 = vsub.f32 %v2887, %v2986
        %v2988 = vand.u32 %v2987, 4294901760
        %v2989 = vsub.f32 %v2987, %v2988
        %v2990 = vand.u32 %v2989, 4294901760
        %2991 = vmatmul.mubr.f32.gmra.mxu0 %v2990
        %v2992 = vpop.f32.mrf.mxu0
        %v2993 = vadd.f32 %v2874, %v2992
        %v2994 = vpop.f32.mrf.mxu0
        %2995 = vdwg.mxu0
        %2996 = vmatprep.subr.mxu0 0.0
        %2997 = vmatpush1.msra.mxu0 0.0
        %2998 = vmatprep.subr.mxu0 0.0
        %2999 = vmatpush1.msra.mxu0 0.0
        %3000 = vmatprep.subr.mxu0 0.0
        %3001 = vmatpush1.msra.mxu0 0.0
        %3002 = vmatprep.subr.mxu0 0.0
        %3003 = vmatpush1.msra.mxu0 0.0
        %3004 = vmatprep.subr.mxu0 0.0
        %3005 = vmatpush1.msra.mxu0 0.0
        %3006 = vmatprep.subr.mxu0 0.0
        %3007 = vmatpush1.msra.mxu0 0.0
        %3008 = vmatprep.subr.mxu0 0.0
        %3009 = vmatpush1.msra.mxu0 0.0
        %3010 = vmatprep.subr.mxu0 0.0
        %3011 = vmatpush1.msra.mxu0 0.0
        %3012 = vmatprep.subr.mxu0 0.0
        %3013 = vmatpush1.msra.mxu0 0.0
        %3014 = vmatprep.subr.mxu0 0.0
        %3015 = vmatpush1.msra.mxu0 0.0
        %3016 = vmatprep.subr.mxu0 0.0
        %3017 = vmatpush1.msra.mxu0 0.0
        %3018 = vmatprep.subr.mxu0 0.0
        %3019 = vmatpush1.msra.mxu0 0.0
        %3020 = vmatprep.subr.mxu0 0.0
        %3021 = vmatpush1.msra.mxu0 0.0
        %3022 = vmatprep.subr.mxu0 0.0
        %3023 = vmatpush1.msra.mxu0 0.0
        %3024 = vmatprep.subr.mxu0 0.0
        %v3025 = vand.u32 %v1258, 4294901760
        %v3026 = vsub.f32 %v1258, %v3025
        %v3027 = vand.u32 %v3026, 4294901760
        %v3028 = vsub.f32 %v3026, %v3027
        %v3029 = vand.u32 %v3028, 4294901760
        %3030 = vmatpush1.msra.mxu0 %v3029
        %3031 = vmatprep.subr.mxu0 0.0
        %v3032 = vand.u32 %v1252, 4294901760
        %v3033 = vsub.f32 %v1252, %v3032
        %v3034 = vand.u32 %v3033, 4294901760
        %v3035 = vsub.f32 %v3033, %v3034
        %v3036 = vand.u32 %v3035, 4294901760
        %3037 = vmatpush1.msra.mxu0 %v3036
        %3038 = vmatprep.subr.mxu0 0.0
        %3039 = vmatpush2.msra.mxu0 0.0
        %3040 = vmatprep.subr.mxu0 0.0
        %3041 = vmatpush2.msra.mxu0 0.0
        %3042 = vmatprep.subr.mxu0 0.0
        %3043 = vmatpush2.msra.mxu0 0.0
        %3044 = vmatprep.subr.mxu0 0.0
        %3045 = vmatpush2.msra.mxu0 0.0
        %3046 = vmatprep.subr.mxu0 0.0
        %3047 = vmatpush2.msra.mxu0 0.0
        %3048 = vmatprep.subr.mxu0 0.0
        %3049 = vmatpush2.msra.mxu0 0.0
        %3050 = vmatprep.subr.mxu0 0.0
        %3051 = vmatpush2.msra.mxu0 0.0
        %3052 = vmatprep.subr.mxu0 0.0
        %3053 = vmatpush2.msra.mxu0 0.0
        %3054 = vmatprep.subr.mxu0 0.0
        %3055 = vmatpush2.msra.mxu0 0.0
        %3056 = vmatprep.subr.mxu0 0.0
        %3057 = vmatpush2.msra.mxu0 0.0
        %3058 = vmatprep.subr.mxu0 0.0
        %3059 = vmatpush2.msra.mxu0 0.0
        %3060 = vmatprep.subr.mxu0 0.0
        %3061 = vmatpush2.msra.mxu0 0.0
        %3062 = vmatprep.subr.mxu0 0.0
        %3063 = vmatpush2.msra.mxu0 0.0
        %3064 = vmatprep.subr.mxu0 0.0
        %3065 = vmatpush2.msra.mxu0 0.0
        %3066 = vmatprep.subr.mxu0 0.0
        %3067 = vmatpush2.msra.mxu0 0.0
        %3068 = vmatprep.subr.mxu0 0.0
        %3069 = vmatpush2.msra.mxu0 0.0
        %3070 = vmatprep.mubr.f32.mxu0 0.0
        %v3071 = vand.u32 %v2878, 4294901760
        %3072 = vmatmul.mubr.f32.gmra.mxu0 %v3071
        %v3073 = vpop.f32.mrf.mxu0
        %v3074 = vadd.f32 %v2963, %v3073
        %v3075 = vpop.f32.mrf.mxu0
        %3076 = vmatprep.mubr.f32.mxu0 0.0
        %v3077 = vand.u32 %v2881, 4294901760
        %3078 = vmatmul.mubr.f32.gmra.mxu0 %v3077
        %v3079 = vpop.f32.mrf.mxu0
        %v3080 = vadd.f32 %v2973, %v3079
        %v3081 = vpop.f32.mrf.mxu0
        %3082 = vmatprep.mubr.f32.mxu0 0.0
        %v3083 = vand.u32 %v2884, 4294901760
        %3084 = vmatmul.mubr.f32.gmra.mxu0 %v3083
        %v3085 = vpop.f32.mrf.mxu0
        %v3086 = vadd.f32 %v2983, %v3085
        %v3087 = vpop.f32.mrf.mxu0
        %3088 = vmatprep.mubr.f32.mxu0 0.0
        %v3089 = vand.u32 %v2887, 4294901760
        %3090 = vmatmul.mubr.f32.gmra.mxu0 %v3089
        %v3091 = vpop.f32.mrf.mxu0
        %v3092 = vadd.f32 %v2993, %v3091
        %v3093 = vpop.f32.mrf.mxu0
        %3094 = vdwg.mxu0
        %3095 = vmatprep.subr.mxu0 0.0
        %3096 = vmatpush1.msra.mxu0 0.0
        %3097 = vmatprep.subr.mxu0 0.0
        %3098 = vmatpush1.msra.mxu0 0.0
        %3099 = vmatprep.subr.mxu0 0.0
        %3100 = vmatpush1.msra.mxu0 0.0
        %3101 = vmatprep.subr.mxu0 0.0
        %3102 = vmatpush1.msra.mxu0 0.0
        %3103 = vmatprep.subr.mxu0 0.0
        %3104 = vmatpush1.msra.mxu0 0.0
        %3105 = vmatprep.subr.mxu0 0.0
        %3106 = vmatpush1.msra.mxu0 0.0
        %3107 = vmatprep.subr.mxu0 0.0
        %3108 = vmatpush1.msra.mxu0 0.0
        %3109 = vmatprep.subr.mxu0 0.0
        %3110 = vmatpush1.msra.mxu0 0.0
        %3111 = vmatprep.subr.mxu0 0.0
        %3112 = vmatpush1.msra.mxu0 0.0
        %3113 = vmatprep.subr.mxu0 0.0
        %3114 = vmatpush1.msra.mxu0 0.0
        %3115 = vmatprep.subr.mxu0 0.0
        %3116 = vmatpush1.msra.mxu0 0.0
        %3117 = vmatprep.subr.mxu0 0.0
        %3118 = vmatpush1.msra.mxu0 0.0
        %3119 = vmatprep.subr.mxu0 0.0
        %3120 = vmatpush1.msra.mxu0 0.0
        %3121 = vmatprep.subr.mxu0 0.0
        %3122 = vmatpush1.msra.mxu0 0.0
        %3123 = vmatprep.subr.mxu0 0.0
        %v3124 = vand.u32 %v1258, 4294901760
        %v3125 = vsub.f32 %v1258, %v3124
        %3126 = vmatpush1.msra.mxu0 %v3125
        %3127 = vmatprep.subr.mxu0 0.0
        %v3128 = vand.u32 %v1252, 4294901760
        %v3129 = vsub.f32 %v1252, %v3128
        %3130 = vmatpush1.msra.mxu0 %v3129
        %3131 = vmatprep.subr.mxu0 0.0
        %3132 = vmatpush2.msra.mxu0 0.0
        %3133 = vmatprep.subr.mxu0 0.0
        %3134 = vmatpush2.msra.mxu0 0.0
        %3135 = vmatprep.subr.mxu0 0.0
        %3136 = vmatpush2.msra.mxu0 0.0
        %3137 = vmatprep.subr.mxu0 0.0
        %3138 = vmatpush2.msra.mxu0 0.0
        %3139 = vmatprep.subr.mxu0 0.0
        %3140 = vmatpush2.msra.mxu0 0.0
        %3141 = vmatprep.subr.mxu0 0.0
        %3142 = vmatpush2.msra.mxu0 0.0
        %3143 = vmatprep.subr.mxu0 0.0
        %3144 = vmatpush2.msra.mxu0 0.0
        %3145 = vmatprep.subr.mxu0 0.0
        %3146 = vmatpush2.msra.mxu0 0.0
        %3147 = vmatprep.subr.mxu0 0.0
        %3148 = vmatpush2.msra.mxu0 0.0
        %3149 = vmatprep.subr.mxu0 0.0
        %3150 = vmatpush2.msra.mxu0 0.0
        %3151 = vmatprep.subr.mxu0 0.0
        %3152 = vmatpush2.msra.mxu0 0.0
        %3153 = vmatprep.subr.mxu0 0.0
        %3154 = vmatpush2.msra.mxu0 0.0
        %3155 = vmatprep.subr.mxu0 0.0
        %3156 = vmatpush2.msra.mxu0 0.0
        %3157 = vmatprep.subr.mxu0 0.0
        %3158 = vmatpush2.msra.mxu0 0.0
        %3159 = vmatprep.subr.mxu0 0.0
        %3160 = vmatpush2.msra.mxu0 0.0
        %3161 = vmatprep.subr.mxu0 0.0
        %3162 = vmatpush2.msra.mxu0 0.0
        %3163 = vmatprep.mubr.f32.mxu0 0.0
        %v3164 = vand.u32 %v2878, 4294901760
        %v3165 = vsub.f32 %v2878, %v3164
        %3166 = vmatmul.mubr.f32.gmra.mxu0 %v3165
        %v3167 = vpop.f32.mrf.mxu0
        %v3168 = vadd.f32 %v3074, %v3167
        %v3169 = vpop.f32.mrf.mxu0
        %3170 = vmatprep.mubr.f32.mxu0 0.0
        %v3171 = vand.u32 %v2881, 4294901760
        %v3172 = vsub.f32 %v2881, %v3171
        %3173 = vmatmul.mubr.f32.gmra.mxu0 %v3172
        %v3174 = vpop.f32.mrf.mxu0
        %v3175 = vadd.f32 %v3080, %v3174
        %v3176 = vpop.f32.mrf.mxu0
        %3177 = vmatprep.mubr.f32.mxu0 0.0
        %v3178 = vand.u32 %v2884, 4294901760
        %v3179 = vsub.f32 %v2884, %v3178
        %3180 = vmatmul.mubr.f32.gmra.mxu0 %v3179
        %v3181 = vpop.f32.mrf.mxu0
        %v3182 = vadd.f32 %v3086, %v3181
        %v3183 = vpop.f32.mrf.mxu0
        %3184 = vmatprep.mubr.f32.mxu0 0.0
        %v3185 = vand.u32 %v2887, 4294901760
        %v3186 = vsub.f32 %v2887, %v3185
        %3187 = vmatmul.mubr.f32.gmra.mxu0 %v3186
        %v3188 = vpop.f32.mrf.mxu0
        %v3189 = vadd.f32 %v3092, %v3188
        %v3190 = vpop.f32.mrf.mxu0
        %3191 = vdwg.mxu0
        %3192 = vmatprep.subr.mxu0 0.0
        %3193 = vmatpush1.msra.mxu0 0.0
        %3194 = vmatprep.subr.mxu0 0.0
        %3195 = vmatpush1.msra.mxu0 0.0
        %3196 = vmatprep.subr.mxu0 0.0
        %3197 = vmatpush1.msra.mxu0 0.0
        %3198 = vmatprep.subr.mxu0 0.0
        %3199 = vmatpush1.msra.mxu0 0.0
        %3200 = vmatprep.subr.mxu0 0.0
        %3201 = vmatpush1.msra.mxu0 0.0
        %3202 = vmatprep.subr.mxu0 0.0
        %3203 = vmatpush1.msra.mxu0 0.0
        %3204 = vmatprep.subr.mxu0 0.0
        %3205 = vmatpush1.msra.mxu0 0.0
        %3206 = vmatprep.subr.mxu0 0.0
        %3207 = vmatpush1.msra.mxu0 0.0
        %3208 = vmatprep.subr.mxu0 0.0
        %3209 = vmatpush1.msra.mxu0 0.0
        %3210 = vmatprep.subr.mxu0 0.0
        %3211 = vmatpush1.msra.mxu0 0.0
        %3212 = vmatprep.subr.mxu0 0.0
        %3213 = vmatpush1.msra.mxu0 0.0
        %3214 = vmatprep.subr.mxu0 0.0
        %3215 = vmatpush1.msra.mxu0 0.0
        %3216 = vmatprep.subr.mxu0 0.0
        %3217 = vmatpush1.msra.mxu0 0.0
        %3218 = vmatprep.subr.mxu0 0.0
        %3219 = vmatpush1.msra.mxu0 0.0
        %3220 = vmatprep.subr.mxu0 0.0
        %v3221 = vand.u32 %v1258, 4294901760
        %3222 = vmatpush1.msra.mxu0 %v3221
        %3223 = vmatprep.subr.mxu0 0.0
        %v3224 = vand.u32 %v1252, 4294901760
        %3225 = vmatpush1.msra.mxu0 %v3224
        %3226 = vmatprep.subr.mxu0 0.0
        %3227 = vmatpush2.msra.mxu0 0.0
        %3228 = vmatprep.subr.mxu0 0.0
        %3229 = vmatpush2.msra.mxu0 0.0
        %3230 = vmatprep.subr.mxu0 0.0
        %3231 = vmatpush2.msra.mxu0 0.0
        %3232 = vmatprep.subr.mxu0 0.0
        %3233 = vmatpush2.msra.mxu0 0.0
        %3234 = vmatprep.subr.mxu0 0.0
        %3235 = vmatpush2.msra.mxu0 0.0
        %3236 = vmatprep.subr.mxu0 0.0
        %3237 = vmatpush2.msra.mxu0 0.0
        %3238 = vmatprep.subr.mxu0 0.0
        %3239 = vmatpush2.msra.mxu0 0.0
        %3240 = vmatprep.subr.mxu0 0.0
        %3241 = vmatpush2.msra.mxu0 0.0
        %3242 = vmatprep.subr.mxu0 0.0
        %3243 = vmatpush2.msra.mxu0 0.0
        %3244 = vmatprep.subr.mxu0 0.0
        %3245 = vmatpush2.msra.mxu0 0.0
        %3246 = vmatprep.subr.mxu0 0.0
        %3247 = vmatpush2.msra.mxu0 0.0
        %3248 = vmatprep.subr.mxu0 0.0
        %3249 = vmatpush2.msra.mxu0 0.0
        %3250 = vmatprep.subr.mxu0 0.0
        %3251 = vmatpush2.msra.mxu0 0.0
        %3252 = vmatprep.subr.mxu0 0.0
        %3253 = vmatpush2.msra.mxu0 0.0
        %3254 = vmatprep.subr.mxu0 0.0
        %3255 = vmatpush2.msra.mxu0 0.0
        %3256 = vmatprep.subr.mxu0 0.0
        %3257 = vmatpush2.msra.mxu0 0.0
        %3258 = vmatprep.mubr.f32.mxu0 0.0
        %v3259 = vand.u32 %v2878, 4294901760
        %v3260 = vsub.f32 %v2878, %v3259
        %v3261 = vand.u32 %v3260, 4294901760
        %3262 = vmatmul.mubr.f32.gmra.mxu0 %v3261
        %v3263 = vpop.f32.mrf.mxu0
        %v3264 = vadd.f32 %v3168, %v3263
        %v3265 = vpop.f32.mrf.mxu0
        %3266 = vmatprep.mubr.f32.mxu0 0.0
        %v3267 = vand.u32 %v2881, 4294901760
        %v3268 = vsub.f32 %v2881, %v3267
        %v3269 = vand.u32 %v3268, 4294901760
        %3270 = vmatmul.mubr.f32.gmra.mxu0 %v3269
        %v3271 = vpop.f32.mrf.mxu0
        %v3272 = vadd.f32 %v3175, %v3271
        %v3273 = vpop.f32.mrf.mxu0
        %3274 = vmatprep.mubr.f32.mxu0 0.0
        %v3275 = vand.u32 %v2884, 4294901760
        %v3276 = vsub.f32 %v2884, %v3275
        %v3277 = vand.u32 %v3276, 4294901760
        %3278 = vmatmul.mubr.f32.gmra.mxu0 %v3277
        %v3279 = vpop.f32.mrf.mxu0
        %v3280 = vadd.f32 %v3182, %v3279
        %v3281 = vpop.f32.mrf.mxu0
        %3282 = vmatprep.mubr.f32.mxu0 0.0
        %v3283 = vand.u32 %v2887, 4294901760
        %v3284 = vsub.f32 %v2887, %v3283
        %v3285 = vand.u32 %v3284, 4294901760
        %3286 = vmatmul.mubr.f32.gmra.mxu0 %v3285
        %v3287 = vpop.f32.mrf.mxu0
        %v3288 = vadd.f32 %v3189, %v3287
        %v3289 = vpop.f32.mrf.mxu0
        %3290 = vdwg.mxu0
        %3291 = vmatprep.subr.mxu0 0.0
        %3292 = vmatpush1.msra.mxu0 0.0
        %3293 = vmatprep.subr.mxu0 0.0
        %3294 = vmatpush1.msra.mxu0 0.0
        %3295 = vmatprep.subr.mxu0 0.0
        %3296 = vmatpush1.msra.mxu0 0.0
        %3297 = vmatprep.subr.mxu0 0.0
        %3298 = vmatpush1.msra.mxu0 0.0
        %3299 = vmatprep.subr.mxu0 0.0
        %3300 = vmatpush1.msra.mxu0 0.0
        %3301 = vmatprep.subr.mxu0 0.0
        %3302 = vmatpush1.msra.mxu0 0.0
        %3303 = vmatprep.subr.mxu0 0.0
        %3304 = vmatpush1.msra.mxu0 0.0
        %3305 = vmatprep.subr.mxu0 0.0
        %3306 = vmatpush1.msra.mxu0 0.0
        %3307 = vmatprep.subr.mxu0 0.0
        %3308 = vmatpush1.msra.mxu0 0.0
        %3309 = vmatprep.subr.mxu0 0.0
        %3310 = vmatpush1.msra.mxu0 0.0
        %3311 = vmatprep.subr.mxu0 0.0
        %3312 = vmatpush1.msra.mxu0 0.0
        %3313 = vmatprep.subr.mxu0 0.0
        %3314 = vmatpush1.msra.mxu0 0.0
        %3315 = vmatprep.subr.mxu0 0.0
        %3316 = vmatpush1.msra.mxu0 0.0
        %3317 = vmatprep.subr.mxu0 0.0
        %3318 = vmatpush1.msra.mxu0 0.0
        %3319 = vmatprep.subr.mxu0 0.0
        %v3320 = vand.u32 %v1258, 4294901760
        %v3321 = vsub.f32 %v1258, %v3320
        %v3322 = vand.u32 %v3321, 4294901760
        %3323 = vmatpush1.msra.mxu0 %v3322
        %3324 = vmatprep.subr.mxu0 0.0
        %v3325 = vand.u32 %v1252, 4294901760
        %v3326 = vsub.f32 %v1252, %v3325
        %v3327 = vand.u32 %v3326, 4294901760
        %3328 = vmatpush1.msra.mxu0 %v3327
        %3329 = vmatprep.subr.mxu0 0.0
        %3330 = vmatpush2.msra.mxu0 0.0
        %3331 = vmatprep.subr.mxu0 0.0
        %3332 = vmatpush2.msra.mxu0 0.0
        %3333 = vmatprep.subr.mxu0 0.0
        %3334 = vmatpush2.msra.mxu0 0.0
        %3335 = vmatprep.subr.mxu0 0.0
        %3336 = vmatpush2.msra.mxu0 0.0
        %3337 = vmatprep.subr.mxu0 0.0
        %3338 = vmatpush2.msra.mxu0 0.0
        %3339 = vmatprep.subr.mxu0 0.0
        %3340 = vmatpush2.msra.mxu0 0.0
        %3341 = vmatprep.subr.mxu0 0.0
        %3342 = vmatpush2.msra.mxu0 0.0
        %3343 = vmatprep.subr.mxu0 0.0
        %3344 = vmatpush2.msra.mxu0 0.0
        %3345 = vmatprep.subr.mxu0 0.0
        %3346 = vmatpush2.msra.mxu0 0.0
        %3347 = vmatprep.subr.mxu0 0.0
        %3348 = vmatpush2.msra.mxu0 0.0
        %3349 = vmatprep.subr.mxu0 0.0
        %3350 = vmatpush2.msra.mxu0 0.0
        %3351 = vmatprep.subr.mxu0 0.0
        %3352 = vmatpush2.msra.mxu0 0.0
        %3353 = vmatprep.subr.mxu0 0.0
        %3354 = vmatpush2.msra.mxu0 0.0
        %3355 = vmatprep.subr.mxu0 0.0
        %3356 = vmatpush2.msra.mxu0 0.0
        %3357 = vmatprep.subr.mxu0 0.0
        %3358 = vmatpush2.msra.mxu0 0.0
        %3359 = vmatprep.subr.mxu0 0.0
        %3360 = vmatpush2.msra.mxu0 0.0
        %3361 = vmatprep.mubr.f32.mxu0 0.0
        %v3362 = vand.u32 %v2878, 4294901760
        %3363 = vmatmul.mubr.f32.gmra.mxu0 %v3362
        %v3364 = vpop.f32.mrf.mxu0
        %v3365 = vadd.f32 %v3264, %v3364
        %v3366 = vpop.f32.mrf.mxu0
        %3367 = vmatprep.mubr.f32.mxu0 0.0
        %v3368 = vand.u32 %v2881, 4294901760
        %3369 = vmatmul.mubr.f32.gmra.mxu0 %v3368
        %v3370 = vpop.f32.mrf.mxu0
        %v3371 = vadd.f32 %v3272, %v3370
        %v3372 = vpop.f32.mrf.mxu0
        %3373 = vmatprep.mubr.f32.mxu0 0.0
        %v3374 = vand.u32 %v2884, 4294901760
        %3375 = vmatmul.mubr.f32.gmra.mxu0 %v3374
        %v3376 = vpop.f32.mrf.mxu0
        %v3377 = vadd.f32 %v3280, %v3376
        %v3378 = vpop.f32.mrf.mxu0
        %3379 = vmatprep.mubr.f32.mxu0 0.0
        %v3380 = vand.u32 %v2887, 4294901760
        %3381 = vmatmul.mubr.f32.gmra.mxu0 %v3380
        %v3382 = vpop.f32.mrf.mxu0
        %v3383 = vadd.f32 %v3288, %v3382
        %v3384 = vpop.f32.mrf.mxu0
        %3385 = vdwg.mxu0
        %3386 = vmatprep.subr.mxu0 0.0
        %3387 = vmatpush1.msra.mxu0 0.0
        %3388 = vmatprep.subr.mxu0 0.0
        %3389 = vmatpush1.msra.mxu0 0.0
        %3390 = vmatprep.subr.mxu0 0.0
        %3391 = vmatpush1.msra.mxu0 0.0
        %3392 = vmatprep.subr.mxu0 0.0
        %3393 = vmatpush1.msra.mxu0 0.0
        %3394 = vmatprep.subr.mxu0 0.0
        %3395 = vmatpush1.msra.mxu0 0.0
        %3396 = vmatprep.subr.mxu0 0.0
        %3397 = vmatpush1.msra.mxu0 0.0
        %3398 = vmatprep.subr.mxu0 0.0
        %3399 = vmatpush1.msra.mxu0 0.0
        %3400 = vmatprep.subr.mxu0 0.0
        %3401 = vmatpush1.msra.mxu0 0.0
        %3402 = vmatprep.subr.mxu0 0.0
        %3403 = vmatpush1.msra.mxu0 0.0
        %3404 = vmatprep.subr.mxu0 0.0
        %3405 = vmatpush1.msra.mxu0 0.0
        %3406 = vmatprep.subr.mxu0 0.0
        %3407 = vmatpush1.msra.mxu0 0.0
        %3408 = vmatprep.subr.mxu0 0.0
        %3409 = vmatpush1.msra.mxu0 0.0
        %3410 = vmatprep.subr.mxu0 0.0
        %3411 = vmatpush1.msra.mxu0 0.0
        %3412 = vmatprep.subr.mxu0 0.0
        %3413 = vmatpush1.msra.mxu0 0.0
        %3414 = vmatprep.subr.mxu0 0.0
        %v3415 = vand.u32 %v1258, 4294901760
        %3416 = vmatpush1.msra.mxu0 %v3415
        %3417 = vmatprep.subr.mxu0 0.0
        %v3418 = vand.u32 %v1252, 4294901760
        %3419 = vmatpush1.msra.mxu0 %v3418
        %3420 = vmatprep.subr.mxu0 0.0
        %3421 = vmatpush2.msra.mxu0 0.0
        %3422 = vmatprep.subr.mxu0 0.0
        %3423 = vmatpush2.msra.mxu0 0.0
        %3424 = vmatprep.subr.mxu0 0.0
        %3425 = vmatpush2.msra.mxu0 0.0
        %3426 = vmatprep.subr.mxu0 0.0
        %3427 = vmatpush2.msra.mxu0 0.0
        %3428 = vmatprep.subr.mxu0 0.0
        %3429 = vmatpush2.msra.mxu0 0.0
        %3430 = vmatprep.subr.mxu0 0.0
        %3431 = vmatpush2.msra.mxu0 0.0
        %3432 = vmatprep.subr.mxu0 0.0
        %3433 = vmatpush2.msra.mxu0 0.0
        %3434 = vmatprep.subr.mxu0 0.0
        %3435 = vmatpush2.msra.mxu0 0.0
        %3436 = vmatprep.subr.mxu0 0.0
        %3437 = vmatpush2.msra.mxu0 0.0
        %3438 = vmatprep.subr.mxu0 0.0
        %3439 = vmatpush2.msra.mxu0 0.0
        %3440 = vmatprep.subr.mxu0 0.0
        %3441 = vmatpush2.msra.mxu0 0.0
        %3442 = vmatprep.subr.mxu0 0.0
        %3443 = vmatpush2.msra.mxu0 0.0
        %3444 = vmatprep.subr.mxu0 0.0
        %3445 = vmatpush2.msra.mxu0 0.0
        %3446 = vmatprep.subr.mxu0 0.0
        %3447 = vmatpush2.msra.mxu0 0.0
        %3448 = vmatprep.subr.mxu0 0.0
        %3449 = vmatpush2.msra.mxu0 0.0
        %3450 = vmatprep.subr.mxu0 0.0
        %3451 = vmatpush2.msra.mxu0 0.0
        %3452 = vmatprep.mubr.f32.mxu0 0.0
        %v3453 = vand.u32 %v2878, 4294901760
        %3454 = vmatmul.mubr.f32.gmra.mxu0 %v3453
        %v3455 = vpop.f32.mrf.mxu0
        %v3456 = vadd.f32 %v3365, %v3455
        %v3457 = vpop.f32.mrf.mxu0
        %3458 = vmatprep.mubr.f32.mxu0 0.0
        %v3459 = vand.u32 %v2881, 4294901760
        %3460 = vmatmul.mubr.f32.gmra.mxu0 %v3459
        %v3461 = vpop.f32.mrf.mxu0
        %v3462 = vadd.f32 %v3371, %v3461
        %v3463 = vpop.f32.mrf.mxu0
        %3464 = vmatprep.mubr.f32.mxu0 0.0
        %v3465 = vand.u32 %v2884, 4294901760
        %3466 = vmatmul.mubr.f32.gmra.mxu0 %v3465
        %v3467 = vpop.f32.mrf.mxu0
        %v3468 = vadd.f32 %v3377, %v3467
        %v3469 = vpop.f32.mrf.mxu0
        %3470 = vmatprep.mubr.f32.mxu0 0.0
        %v3471 = vand.u32 %v2887, 4294901760
        %3472 = vmatmul.mubr.f32.gmra.mxu0 %v3471
        %v3473 = vpop.f32.mrf.mxu0
        %v3474 = vadd.f32 %v3383, %v3473
        %v3475 = vpop.f32.mrf.mxu0
        %3476 = vdwg.mxu0
        %vm3477 = vcmask 261120
        %3478 = vst.msk [vmem:[%s153] sm:$0xff] %vm3477, %v3456
        %3479 = vst.msk [vmem:[%s153 + $0x8] sm:$0xff] %vm3477, %v3462
        %3480 = vst.msk [vmem:[%s153 + $0x10] sm:$0xff] %vm3477, %v3468
        %3481 = vst.msk [vmem:[%s153 + $0x18] sm:$0xff] %vm3477, %v3474
        %s3482 = scalar_lea.vmem %s135, 16 [#allocation2]
        %v3483 = vld [vmem:[%s3482] sm:$0xff]
        %v3484 = vld [vmem:[%s3482 + $0x8] sm:$0xff]
        %v3485 = vmul.f32 %v3483, 0.5
        %v3486 = vmul.f32 %v3484, 0.5
        %s3487 = scalar_lea.vmem %s135, 48 [#allocation2]
        %v3488 = vld [vmem:[%s3487] sm:$0xff]
        %v3489 = vld [vmem:[%s3487 + $0x8] sm:$0xff]
        %v3490 = vmul.f32 %v3488, 0.5
        %v3491 = vmul.f32 %v3489, 0.5
        %s3492 = scalar_lea.vmem %s135, 80 [#allocation2]
        %v3493 = vld [vmem:[%s3492] sm:$0xff]
        %v3494 = vld [vmem:[%s3492 + $0x8] sm:$0xff]
        %v3495 = vmul.f32 %v3493, 0.5
        %v3496 = vmul.f32 %v3494, 0.5
        %s3497 = scalar_lea.vmem %s135, 112 [#allocation2]
        %v3498 = vld [vmem:[%s3497] sm:$0xff]
        %v3499 = vld [vmem:[%s3497 + $0x8] sm:$0xff]
        %v3500 = vmul.f32 %v3498, 0.5
        %v3501 = vmul.f32 %v3499, 0.5
        %v3502 = vsub.f32 %v3485, %v3490
        %v3503 = vsub.f32 %v3486, %v3491
        %v3504 = vsub.f32 %v3502, %v3495
        %v3505 = vsub.f32 %v3503, %v3496
        %v3506 = vadd.f32 %v3504, %v3500
        %v3507 = vadd.f32 %v3505, %v3501
        %v3508 = vadd.f32 %v3502, %v3495
        %v3509 = vadd.f32 %v3503, %v3496
        %v3510 = vsub.f32 %v3508, %v3500
        %v3511 = vsub.f32 %v3509, %v3501
        %v3512 = vadd.f32 %v3485, %v3490
        %v3513 = vadd.f32 %v3486, %v3491
        %v3514 = vsub.f32 %v3512, %v3495
        %v3515 = vsub.f32 %v3513, %v3496
        %v3516 = vsub.f32 %v3514, %v3500
        %v3517 = vsub.f32 %v3515, %v3501
        %v3518 = vadd.f32 %v3512, %v3495
        %v3519 = vadd.f32 %v3513, %v3496
        %v3520 = vadd.f32 %v3518, %v3500
        %v3521 = vadd.f32 %v3519, %v3501
        %v3523 = vsel %vm244, %v3516, 0
        %v3526 = vsel %vm244, %v3517, 0
        %3528 = vmatprep.subr.mxu0 0.0
        %3529 = vmatpush1.msra.mxu0 0.0
        %3530 = vmatprep.subr.mxu0 0.0
        %3531 = vmatpush1.msra.mxu0 0.0
        %3532 = vmatprep.subr.mxu0 0.0
        %3533 = vmatpush1.msra.mxu0 0.0
        %3534 = vmatprep.subr.mxu0 0.0
        %3535 = vmatpush1.msra.mxu0 0.0
        %3536 = vmatprep.subr.mxu0 0.0
        %3537 = vmatpush1.msra.mxu0 0.0
        %3538 = vmatprep.subr.mxu0 0.0
        %3539 = vmatpush1.msra.mxu0 0.0
        %3540 = vmatprep.subr.mxu0 0.0
        %3541 = vmatpush1.msra.mxu0 0.0
        %3542 = vmatprep.subr.mxu0 0.0
        %3543 = vmatpush1.msra.mxu0 0.0
        %3544 = vmatprep.subr.mxu0 0.0
        %3545 = vmatpush1.msra.mxu0 0.0
        %3546 = vmatprep.subr.mxu0 0.0
        %3547 = vmatpush1.msra.mxu0 0.0
        %3548 = vmatprep.subr.mxu0 0.0
        %3549 = vmatpush1.msra.mxu0 0.0
        %3550 = vmatprep.subr.mxu0 0.0
        %3551 = vmatpush1.msra.mxu0 0.0
        %3552 = vmatprep.subr.mxu0 0.0
        %3553 = vmatpush1.msra.mxu0 0.0
        %3554 = vmatprep.subr.mxu0 0.0
        %3555 = vmatpush1.msra.mxu0 0.0
        %3556 = vmatprep.subr.mxu0 0.0
        %v3557 = vand.u32 %v176, 4294901760
        %3558 = vmatpush1.msra.mxu0 %v3557
        %3559 = vmatprep.subr.mxu0 0.0
        %v3560 = vand.u32 %v175, 4294901760
        %3561 = vmatpush1.msra.mxu0 %v3560
        %3562 = vmatprep.subr.mxu0 0.0
        %3563 = vmatpush2.msra.mxu0 0.0
        %3564 = vmatprep.subr.mxu0 0.0
        %3565 = vmatpush2.msra.mxu0 0.0
        %3566 = vmatprep.subr.mxu0 0.0
        %3567 = vmatpush2.msra.mxu0 0.0
        %3568 = vmatprep.subr.mxu0 0.0
        %3569 = vmatpush2.msra.mxu0 0.0
        %3570 = vmatprep.subr.mxu0 0.0
        %3571 = vmatpush2.msra.mxu0 0.0
        %3572 = vmatprep.subr.mxu0 0.0
        %3573 = vmatpush2.msra.mxu0 0.0
        %3574 = vmatprep.subr.mxu0 0.0
        %3575 = vmatpush2.msra.mxu0 0.0
        %3576 = vmatprep.subr.mxu0 0.0
        %3577 = vmatpush2.msra.mxu0 0.0
        %3578 = vmatprep.subr.mxu0 0.0
        %3579 = vmatpush2.msra.mxu0 0.0
        %3580 = vmatprep.subr.mxu0 0.0
        %3581 = vmatpush2.msra.mxu0 0.0
        %3582 = vmatprep.subr.mxu0 0.0
        %3583 = vmatpush2.msra.mxu0 0.0
        %3584 = vmatprep.subr.mxu0 0.0
        %3585 = vmatpush2.msra.mxu0 0.0
        %3586 = vmatprep.subr.mxu0 0.0
        %3587 = vmatpush2.msra.mxu0 0.0
        %3588 = vmatprep.subr.mxu0 0.0
        %3589 = vmatpush2.msra.mxu0 0.0
        %3590 = vmatprep.subr.mxu0 0.0
        %3591 = vmatpush2.msra.mxu0 0.0
        %3592 = vmatprep.subr.mxu0 0.0
        %3593 = vmatpush2.msra.mxu0 0.0
        %3594 = vmatprep.mubr.f32.mxu0 0.0
        %v3595 = vand.u32 %v3523, 4294901760
        %v3596 = vsub.f32 %v3523, %v3595
        %v3597 = vand.u32 %v3596, 4294901760
        %v3598 = vsub.f32 %v3596, %v3597
        %v3599 = vand.u32 %v3598, 4294901760
        %3600 = vmatmul.mubr.f32.gmra.mxu0 %v3599
        %v3601 = vpop.f32.mrf.mxu0
        %v3602 = vadd.f32 0.0, %v3601
        %v3603 = vpop.f32.mrf.mxu0
        %3604 = vmatprep.mubr.f32.mxu0 0.0
        %v3605 = vand.u32 %v3526, 4294901760
        %v3606 = vsub.f32 %v3526, %v3605
        %v3607 = vand.u32 %v3606, 4294901760
        %v3608 = vsub.f32 %v3606, %v3607
        %v3609 = vand.u32 %v3608, 4294901760
        %3610 = vmatmul.mubr.f32.gmra.mxu0 %v3609
        %v3611 = vpop.f32.mrf.mxu0
        %v3612 = vadd.f32 0.0, %v3611
        %v3613 = vpop.f32.mrf.mxu0
        %3614 = vdwg.mxu0
        %3615 = vmatprep.subr.mxu0 0.0
        %3616 = vmatpush1.msra.mxu0 0.0
        %3617 = vmatprep.subr.mxu0 0.0
        %3618 = vmatpush1.msra.mxu0 0.0
        %3619 = vmatprep.subr.mxu0 0.0
        %3620 = vmatpush1.msra.mxu0 0.0
        %3621 = vmatprep.subr.mxu0 0.0
        %3622 = vmatpush1.msra.mxu0 0.0
        %3623 = vmatprep.subr.mxu0 0.0
        %3624 = vmatpush1.msra.mxu0 0.0
        %3625 = vmatprep.subr.mxu0 0.0
        %3626 = vmatpush1.msra.mxu0 0.0
        %3627 = vmatprep.subr.mxu0 0.0
        %3628 = vmatpush1.msra.mxu0 0.0
        %3629 = vmatprep.subr.mxu0 0.0
        %3630 = vmatpush1.msra.mxu0 0.0
        %3631 = vmatprep.subr.mxu0 0.0
        %3632 = vmatpush1.msra.mxu0 0.0
        %3633 = vmatprep.subr.mxu0 0.0
        %3634 = vmatpush1.msra.mxu0 0.0
        %3635 = vmatprep.subr.mxu0 0.0
        %3636 = vmatpush1.msra.mxu0 0.0
        %3637 = vmatprep.subr.mxu0 0.0
        %3638 = vmatpush1.msra.mxu0 0.0
        %3639 = vmatprep.subr.mxu0 0.0
        %3640 = vmatpush1.msra.mxu0 0.0
        %3641 = vmatprep.subr.mxu0 0.0
        %3642 = vmatpush1.msra.mxu0 0.0
        %3643 = vmatprep.subr.mxu0 0.0
        %v3644 = vand.u32 %v176, 4294901760
        %v3645 = vsub.f32 %v176, %v3644
        %v3646 = vand.u32 %v3645, 4294901760
        %v3647 = vsub.f32 %v3645, %v3646
        %v3648 = vand.u32 %v3647, 4294901760
        %3649 = vmatpush1.msra.mxu0 %v3648
        %3650 = vmatprep.subr.mxu0 0.0
        %v3651 = vand.u32 %v175, 4294901760
        %v3652 = vsub.f32 %v175, %v3651
        %v3653 = vand.u32 %v3652, 4294901760
        %v3654 = vsub.f32 %v3652, %v3653
        %v3655 = vand.u32 %v3654, 4294901760
        %3656 = vmatpush1.msra.mxu0 %v3655
        %3657 = vmatprep.subr.mxu0 0.0
        %3658 = vmatpush2.msra.mxu0 0.0
        %3659 = vmatprep.subr.mxu0 0.0
        %3660 = vmatpush2.msra.mxu0 0.0
        %3661 = vmatprep.subr.mxu0 0.0
        %3662 = vmatpush2.msra.mxu0 0.0
        %3663 = vmatprep.subr.mxu0 0.0
        %3664 = vmatpush2.msra.mxu0 0.0
        %3665 = vmatprep.subr.mxu0 0.0
        %3666 = vmatpush2.msra.mxu0 0.0
        %3667 = vmatprep.subr.mxu0 0.0
        %3668 = vmatpush2.msra.mxu0 0.0
        %3669 = vmatprep.subr.mxu0 0.0
        %3670 = vmatpush2.msra.mxu0 0.0
        %3671 = vmatprep.subr.mxu0 0.0
        %3672 = vmatpush2.msra.mxu0 0.0
        %3673 = vmatprep.subr.mxu0 0.0
        %3674 = vmatpush2.msra.mxu0 0.0
        %3675 = vmatprep.subr.mxu0 0.0
        %3676 = vmatpush2.msra.mxu0 0.0
        %3677 = vmatprep.subr.mxu0 0.0
        %3678 = vmatpush2.msra.mxu0 0.0
        %3679 = vmatprep.subr.mxu0 0.0
        %3680 = vmatpush2.msra.mxu0 0.0
        %3681 = vmatprep.subr.mxu0 0.0
        %3682 = vmatpush2.msra.mxu0 0.0
        %3683 = vmatprep.subr.mxu0 0.0
        %3684 = vmatpush2.msra.mxu0 0.0
        %3685 = vmatprep.subr.mxu0 0.0
        %3686 = vmatpush2.msra.mxu0 0.0
        %3687 = vmatprep.subr.mxu0 0.0
        %3688 = vmatpush2.msra.mxu0 0.0
        %3689 = vmatprep.mubr.f32.mxu0 0.0
        %v3690 = vand.u32 %v3523, 4294901760
        %3691 = vmatmul.mubr.f32.gmra.mxu0 %v3690
        %v3692 = vpop.f32.mrf.mxu0
        %v3693 = vadd.f32 %v3602, %v3692
        %v3694 = vpop.f32.mrf.mxu0
        %3695 = vmatprep.mubr.f32.mxu0 0.0
        %v3696 = vand.u32 %v3526, 4294901760
        %3697 = vmatmul.mubr.f32.gmra.mxu0 %v3696
        %v3698 = vpop.f32.mrf.mxu0
        %v3699 = vadd.f32 %v3612, %v3698
        %v3700 = vpop.f32.mrf.mxu0
        %3701 = vdwg.mxu0
        %3702 = vmatprep.subr.mxu0 0.0
        %3703 = vmatpush1.msra.mxu0 0.0
        %3704 = vmatprep.subr.mxu0 0.0
        %3705 = vmatpush1.msra.mxu0 0.0
        %3706 = vmatprep.subr.mxu0 0.0
        %3707 = vmatpush1.msra.mxu0 0.0
        %3708 = vmatprep.subr.mxu0 0.0
        %3709 = vmatpush1.msra.mxu0 0.0
        %3710 = vmatprep.subr.mxu0 0.0
        %3711 = vmatpush1.msra.mxu0 0.0
        %3712 = vmatprep.subr.mxu0 0.0
        %3713 = vmatpush1.msra.mxu0 0.0
        %3714 = vmatprep.subr.mxu0 0.0
        %3715 = vmatpush1.msra.mxu0 0.0
        %3716 = vmatprep.subr.mxu0 0.0
        %3717 = vmatpush1.msra.mxu0 0.0
        %3718 = vmatprep.subr.mxu0 0.0
        %3719 = vmatpush1.msra.mxu0 0.0
        %3720 = vmatprep.subr.mxu0 0.0
        %3721 = vmatpush1.msra.mxu0 0.0
        %3722 = vmatprep.subr.mxu0 0.0
        %3723 = vmatpush1.msra.mxu0 0.0
        %3724 = vmatprep.subr.mxu0 0.0
        %3725 = vmatpush1.msra.mxu0 0.0
        %3726 = vmatprep.subr.mxu0 0.0
        %3727 = vmatpush1.msra.mxu0 0.0
        %3728 = vmatprep.subr.mxu0 0.0
        %3729 = vmatpush1.msra.mxu0 0.0
        %3730 = vmatprep.subr.mxu0 0.0
        %v3731 = vand.u32 %v176, 4294901760
        %v3732 = vsub.f32 %v176, %v3731
        %3733 = vmatpush1.msra.mxu0 %v3732
        %3734 = vmatprep.subr.mxu0 0.0
        %v3735 = vand.u32 %v175, 4294901760
        %v3736 = vsub.f32 %v175, %v3735
        %3737 = vmatpush1.msra.mxu0 %v3736
        %3738 = vmatprep.subr.mxu0 0.0
        %3739 = vmatpush2.msra.mxu0 0.0
        %3740 = vmatprep.subr.mxu0 0.0
        %3741 = vmatpush2.msra.mxu0 0.0
        %3742 = vmatprep.subr.mxu0 0.0
        %3743 = vmatpush2.msra.mxu0 0.0
        %3744 = vmatprep.subr.mxu0 0.0
        %3745 = vmatpush2.msra.mxu0 0.0
        %3746 = vmatprep.subr.mxu0 0.0
        %3747 = vmatpush2.msra.mxu0 0.0
        %3748 = vmatprep.subr.mxu0 0.0
        %3749 = vmatpush2.msra.mxu0 0.0
        %3750 = vmatprep.subr.mxu0 0.0
        %3751 = vmatpush2.msra.mxu0 0.0
        %3752 = vmatprep.subr.mxu0 0.0
        %3753 = vmatpush2.msra.mxu0 0.0
        %3754 = vmatprep.subr.mxu0 0.0
        %3755 = vmatpush2.msra.mxu0 0.0
        %3756 = vmatprep.subr.mxu0 0.0
        %3757 = vmatpush2.msra.mxu0 0.0
        %3758 = vmatprep.subr.mxu0 0.0
        %3759 = vmatpush2.msra.mxu0 0.0
        %3760 = vmatprep.subr.mxu0 0.0
        %3761 = vmatpush2.msra.mxu0 0.0
        %3762 = vmatprep.subr.mxu0 0.0
        %3763 = vmatpush2.msra.mxu0 0.0
        %3764 = vmatprep.subr.mxu0 0.0
        %3765 = vmatpush2.msra.mxu0 0.0
        %3766 = vmatprep.subr.mxu0 0.0
        %3767 = vmatpush2.msra.mxu0 0.0
        %3768 = vmatprep.subr.mxu0 0.0
        %3769 = vmatpush2.msra.mxu0 0.0
        %3770 = vmatprep.mubr.f32.mxu0 0.0
        %v3771 = vand.u32 %v3523, 4294901760
        %v3772 = vsub.f32 %v3523, %v3771
        %3773 = vmatmul.mubr.f32.gmra.mxu0 %v3772
        %v3774 = vpop.f32.mrf.mxu0
        %v3775 = vadd.f32 %v3693, %v3774
        %v3776 = vpop.f32.mrf.mxu0
        %3777 = vmatprep.mubr.f32.mxu0 0.0
        %v3778 = vand.u32 %v3526, 4294901760
        %v3779 = vsub.f32 %v3526, %v3778
        %3780 = vmatmul.mubr.f32.gmra.mxu0 %v3779
        %v3781 = vpop.f32.mrf.mxu0
        %v3782 = vadd.f32 %v3699, %v3781
        %v3783 = vpop.f32.mrf.mxu0
        %3784 = vdwg.mxu0
        %3785 = vmatprep.subr.mxu0 0.0
        %3786 = vmatpush1.msra.mxu0 0.0
        %3787 = vmatprep.subr.mxu0 0.0
        %3788 = vmatpush1.msra.mxu0 0.0
        %3789 = vmatprep.subr.mxu0 0.0
        %3790 = vmatpush1.msra.mxu0 0.0
        %3791 = vmatprep.subr.mxu0 0.0
        %3792 = vmatpush1.msra.mxu0 0.0
        %3793 = vmatprep.subr.mxu0 0.0
        %3794 = vmatpush1.msra.mxu0 0.0
        %3795 = vmatprep.subr.mxu0 0.0
        %3796 = vmatpush1.msra.mxu0 0.0
        %3797 = vmatprep.subr.mxu0 0.0
        %3798 = vmatpush1.msra.mxu0 0.0
        %3799 = vmatprep.subr.mxu0 0.0
        %3800 = vmatpush1.msra.mxu0 0.0
        %3801 = vmatprep.subr.mxu0 0.0
        %3802 = vmatpush1.msra.mxu0 0.0
        %3803 = vmatprep.subr.mxu0 0.0
        %3804 = vmatpush1.msra.mxu0 0.0
        %3805 = vmatprep.subr.mxu0 0.0
        %3806 = vmatpush1.msra.mxu0 0.0
        %3807 = vmatprep.subr.mxu0 0.0
        %3808 = vmatpush1.msra.mxu0 0.0
        %3809 = vmatprep.subr.mxu0 0.0
        %3810 = vmatpush1.msra.mxu0 0.0
        %3811 = vmatprep.subr.mxu0 0.0
        %3812 = vmatpush1.msra.mxu0 0.0
        %3813 = vmatprep.subr.mxu0 0.0
        %v3814 = vand.u32 %v176, 4294901760
        %3815 = vmatpush1.msra.mxu0 %v3814
        %3816 = vmatprep.subr.mxu0 0.0
        %v3817 = vand.u32 %v175, 4294901760
        %3818 = vmatpush1.msra.mxu0 %v3817
        %3819 = vmatprep.subr.mxu0 0.0
        %3820 = vmatpush2.msra.mxu0 0.0
        %3821 = vmatprep.subr.mxu0 0.0
        %3822 = vmatpush2.msra.mxu0 0.0
        %3823 = vmatprep.subr.mxu0 0.0
        %3824 = vmatpush2.msra.mxu0 0.0
        %3825 = vmatprep.subr.mxu0 0.0
        %3826 = vmatpush2.msra.mxu0 0.0
        %3827 = vmatprep.subr.mxu0 0.0
        %3828 = vmatpush2.msra.mxu0 0.0
        %3829 = vmatprep.subr.mxu0 0.0
        %3830 = vmatpush2.msra.mxu0 0.0
        %3831 = vmatprep.subr.mxu0 0.0
        %3832 = vmatpush2.msra.mxu0 0.0
        %3833 = vmatprep.subr.mxu0 0.0
        %3834 = vmatpush2.msra.mxu0 0.0
        %3835 = vmatprep.subr.mxu0 0.0
        %3836 = vmatpush2.msra.mxu0 0.0
        %3837 = vmatprep.subr.mxu0 0.0
        %3838 = vmatpush2.msra.mxu0 0.0
        %3839 = vmatprep.subr.mxu0 0.0
        %3840 = vmatpush2.msra.mxu0 0.0
        %3841 = vmatprep.subr.mxu0 0.0
        %3842 = vmatpush2.msra.mxu0 0.0
        %3843 = vmatprep.subr.mxu0 0.0
        %3844 = vmatpush2.msra.mxu0 0.0
        %3845 = vmatprep.subr.mxu0 0.0
        %3846 = vmatpush2.msra.mxu0 0.0
        %3847 = vmatprep.subr.mxu0 0.0
        %3848 = vmatpush2.msra.mxu0 0.0
        %3849 = vmatprep.subr.mxu0 0.0
        %3850 = vmatpush2.msra.mxu0 0.0
        %3851 = vmatprep.mubr.f32.mxu0 0.0
        %v3852 = vand.u32 %v3523, 4294901760
        %v3853 = vsub.f32 %v3523, %v3852
        %v3854 = vand.u32 %v3853, 4294901760
        %3855 = vmatmul.mubr.f32.gmra.mxu0 %v3854
        %v3856 = vpop.f32.mrf.mxu0
        %v3857 = vadd.f32 %v3775, %v3856
        %v3858 = vpop.f32.mrf.mxu0
        %3859 = vmatprep.mubr.f32.mxu0 0.0
        %v3860 = vand.u32 %v3526, 4294901760
        %v3861 = vsub.f32 %v3526, %v3860
        %v3862 = vand.u32 %v3861, 4294901760
        %3863 = vmatmul.mubr.f32.gmra.mxu0 %v3862
        %v3864 = vpop.f32.mrf.mxu0
        %v3865 = vadd.f32 %v3782, %v3864
        %v3866 = vpop.f32.mrf.mxu0
        %3867 = vdwg.mxu0
        %3868 = vmatprep.subr.mxu0 0.0
        %3869 = vmatpush1.msra.mxu0 0.0
        %3870 = vmatprep.subr.mxu0 0.0
        %3871 = vmatpush1.msra.mxu0 0.0
        %3872 = vmatprep.subr.mxu0 0.0
        %3873 = vmatpush1.msra.mxu0 0.0
        %3874 = vmatprep.subr.mxu0 0.0
        %3875 = vmatpush1.msra.mxu0 0.0
        %3876 = vmatprep.subr.mxu0 0.0
        %3877 = vmatpush1.msra.mxu0 0.0
        %3878 = vmatprep.subr.mxu0 0.0
        %3879 = vmatpush1.msra.mxu0 0.0
        %3880 = vmatprep.subr.mxu0 0.0
        %3881 = vmatpush1.msra.mxu0 0.0
        %3882 = vmatprep.subr.mxu0 0.0
        %3883 = vmatpush1.msra.mxu0 0.0
        %3884 = vmatprep.subr.mxu0 0.0
        %3885 = vmatpush1.msra.mxu0 0.0
        %3886 = vmatprep.subr.mxu0 0.0
        %3887 = vmatpush1.msra.mxu0 0.0
        %3888 = vmatprep.subr.mxu0 0.0
        %3889 = vmatpush1.msra.mxu0 0.0
        %3890 = vmatprep.subr.mxu0 0.0
        %3891 = vmatpush1.msra.mxu0 0.0
        %3892 = vmatprep.subr.mxu0 0.0
        %3893 = vmatpush1.msra.mxu0 0.0
        %3894 = vmatprep.subr.mxu0 0.0
        %3895 = vmatpush1.msra.mxu0 0.0
        %3896 = vmatprep.subr.mxu0 0.0
        %v3897 = vand.u32 %v176, 4294901760
        %v3898 = vsub.f32 %v176, %v3897
        %v3899 = vand.u32 %v3898, 4294901760
        %3900 = vmatpush1.msra.mxu0 %v3899
        %3901 = vmatprep.subr.mxu0 0.0
        %v3902 = vand.u32 %v175, 4294901760
        %v3903 = vsub.f32 %v175, %v3902
        %v3904 = vand.u32 %v3903, 4294901760
        %3905 = vmatpush1.msra.mxu0 %v3904
        %3906 = vmatprep.subr.mxu0 0.0
        %3907 = vmatpush2.msra.mxu0 0.0
        %3908 = vmatprep.subr.mxu0 0.0
        %3909 = vmatpush2.msra.mxu0 0.0
        %3910 = vmatprep.subr.mxu0 0.0
        %3911 = vmatpush2.msra.mxu0 0.0
        %3912 = vmatprep.subr.mxu0 0.0
        %3913 = vmatpush2.msra.mxu0 0.0
        %3914 = vmatprep.subr.mxu0 0.0
        %3915 = vmatpush2.msra.mxu0 0.0
        %3916 = vmatprep.subr.mxu0 0.0
        %3917 = vmatpush2.msra.mxu0 0.0
        %3918 = vmatprep.subr.mxu0 0.0
        %3919 = vmatpush2.msra.mxu0 0.0
        %3920 = vmatprep.subr.mxu0 0.0
        %3921 = vmatpush2.msra.mxu0 0.0
        %3922 = vmatprep.subr.mxu0 0.0
        %3923 = vmatpush2.msra.mxu0 0.0
        %3924 = vmatprep.subr.mxu0 0.0
        %3925 = vmatpush2.msra.mxu0 0.0
        %3926 = vmatprep.subr.mxu0 0.0
        %3927 = vmatpush2.msra.mxu0 0.0
        %3928 = vmatprep.subr.mxu0 0.0
        %3929 = vmatpush2.msra.mxu0 0.0
        %3930 = vmatprep.subr.mxu0 0.0
        %3931 = vmatpush2.msra.mxu0 0.0
        %3932 = vmatprep.subr.mxu0 0.0
        %3933 = vmatpush2.msra.mxu0 0.0
        %3934 = vmatprep.subr.mxu0 0.0
        %3935 = vmatpush2.msra.mxu0 0.0
        %3936 = vmatprep.subr.mxu0 0.0
        %3937 = vmatpush2.msra.mxu0 0.0
        %3938 = vmatprep.mubr.f32.mxu0 0.0
        %v3939 = vand.u32 %v3523, 4294901760
        %3940 = vmatmul.mubr.f32.gmra.mxu0 %v3939
        %v3941 = vpop.f32.mrf.mxu0
        %v3942 = vadd.f32 %v3857, %v3941
        %v3943 = vpop.f32.mrf.mxu0
        %3944 = vmatprep.mubr.f32.mxu0 0.0
        %v3945 = vand.u32 %v3526, 4294901760
        %3946 = vmatmul.mubr.f32.gmra.mxu0 %v3945
        %v3947 = vpop.f32.mrf.mxu0
        %v3948 = vadd.f32 %v3865, %v3947
        %v3949 = vpop.f32.mrf.mxu0
        %3950 = vdwg.mxu0
        %3951 = vmatprep.subr.mxu0 0.0
        %3952 = vmatpush1.msra.mxu0 0.0
        %3953 = vmatprep.subr.mxu0 0.0
        %3954 = vmatpush1.msra.mxu0 0.0
        %3955 = vmatprep.subr.mxu0 0.0
        %3956 = vmatpush1.msra.mxu0 0.0
        %3957 = vmatprep.subr.mxu0 0.0
        %3958 = vmatpush1.msra.mxu0 0.0
        %3959 = vmatprep.subr.mxu0 0.0
        %3960 = vmatpush1.msra.mxu0 0.0
        %3961 = vmatprep.subr.mxu0 0.0
        %3962 = vmatpush1.msra.mxu0 0.0
        %3963 = vmatprep.subr.mxu0 0.0
        %3964 = vmatpush1.msra.mxu0 0.0
        %3965 = vmatprep.subr.mxu0 0.0
        %3966 = vmatpush1.msra.mxu0 0.0
        %3967 = vmatprep.subr.mxu0 0.0
        %3968 = vmatpush1.msra.mxu0 0.0
        %3969 = vmatprep.subr.mxu0 0.0
        %3970 = vmatpush1.msra.mxu0 0.0
        %3971 = vmatprep.subr.mxu0 0.0
        %3972 = vmatpush1.msra.mxu0 0.0
        %3973 = vmatprep.subr.mxu0 0.0
        %3974 = vmatpush1.msra.mxu0 0.0
        %3975 = vmatprep.subr.mxu0 0.0
        %3976 = vmatpush1.msra.mxu0 0.0
        %3977 = vmatprep.subr.mxu0 0.0
        %3978 = vmatpush1.msra.mxu0 0.0
        %3979 = vmatprep.subr.mxu0 0.0
        %v3980 = vand.u32 %v176, 4294901760
        %3981 = vmatpush1.msra.mxu0 %v3980
        %3982 = vmatprep.subr.mxu0 0.0
        %v3983 = vand.u32 %v175, 4294901760
        %3984 = vmatpush1.msra.mxu0 %v3983
        %3985 = vmatprep.subr.mxu0 0.0
        %3986 = vmatpush2.msra.mxu0 0.0
        %3987 = vmatprep.subr.mxu0 0.0
        %3988 = vmatpush2.msra.mxu0 0.0
        %3989 = vmatprep.subr.mxu0 0.0
        %3990 = vmatpush2.msra.mxu0 0.0
        %3991 = vmatprep.subr.mxu0 0.0
        %3992 = vmatpush2.msra.mxu0 0.0
        %3993 = vmatprep.subr.mxu0 0.0
        %3994 = vmatpush2.msra.mxu0 0.0
        %3995 = vmatprep.subr.mxu0 0.0
        %3996 = vmatpush2.msra.mxu0 0.0
        %3997 = vmatprep.subr.mxu0 0.0
        %3998 = vmatpush2.msra.mxu0 0.0
        %3999 = vmatprep.subr.mxu0 0.0
        %4000 = vmatpush2.msra.mxu0 0.0
        %4001 = vmatprep.subr.mxu0 0.0
        %4002 = vmatpush2.msra.mxu0 0.0
        %4003 = vmatprep.subr.mxu0 0.0
        %4004 = vmatpush2.msra.mxu0 0.0
        %4005 = vmatprep.subr.mxu0 0.0
        %4006 = vmatpush2.msra.mxu0 0.0
        %4007 = vmatprep.subr.mxu0 0.0
        %4008 = vmatpush2.msra.mxu0 0.0
        %4009 = vmatprep.subr.mxu0 0.0
        %4010 = vmatpush2.msra.mxu0 0.0
        %4011 = vmatprep.subr.mxu0 0.0
        %4012 = vmatpush2.msra.mxu0 0.0
        %4013 = vmatprep.subr.mxu0 0.0
        %4014 = vmatpush2.msra.mxu0 0.0
        %4015 = vmatprep.subr.mxu0 0.0
        %4016 = vmatpush2.msra.mxu0 0.0
        %4017 = vmatprep.mubr.f32.mxu0 0.0
        %v4018 = vand.u32 %v3523, 4294901760
        %4019 = vmatmul.mubr.f32.gmra.mxu0 %v4018
        %v4020 = vpop.f32.mrf.mxu0
        %v4021 = vadd.f32 %v3942, %v4020
        %v4022 = vpop.f32.mrf.mxu0
        %4023 = vmatprep.mubr.f32.mxu0 0.0
        %v4024 = vand.u32 %v3526, 4294901760
        %4025 = vmatmul.mubr.f32.gmra.mxu0 %v4024
        %v4026 = vpop.f32.mrf.mxu0
        %v4027 = vadd.f32 %v3948, %v4026
        %v4028 = vpop.f32.mrf.mxu0
        %4029 = vdwg.mxu0
        %v4031 = vsel %vm244, %v3506, 0
        %v4034 = vsel %vm244, %v3507, 0
        %4036 = vmatprep.subr.mxu0 0.0
        %4037 = vmatpush1.msra.mxu0 0.0
        %4038 = vmatprep.subr.mxu0 0.0
        %4039 = vmatpush1.msra.mxu0 0.0
        %4040 = vmatprep.subr.mxu0 0.0
        %4041 = vmatpush1.msra.mxu0 0.0
        %4042 = vmatprep.subr.mxu0 0.0
        %4043 = vmatpush1.msra.mxu0 0.0
        %4044 = vmatprep.subr.mxu0 0.0
        %4045 = vmatpush1.msra.mxu0 0.0
        %4046 = vmatprep.subr.mxu0 0.0
        %4047 = vmatpush1.msra.mxu0 0.0
        %4048 = vmatprep.subr.mxu0 0.0
        %4049 = vmatpush1.msra.mxu0 0.0
        %4050 = vmatprep.subr.mxu0 0.0
        %4051 = vmatpush1.msra.mxu0 0.0
        %4052 = vmatprep.subr.mxu0 0.0
        %4053 = vmatpush1.msra.mxu0 0.0
        %4054 = vmatprep.subr.mxu0 0.0
        %4055 = vmatpush1.msra.mxu0 0.0
        %4056 = vmatprep.subr.mxu0 0.0
        %4057 = vmatpush1.msra.mxu0 0.0
        %4058 = vmatprep.subr.mxu0 0.0
        %4059 = vmatpush1.msra.mxu0 0.0
        %4060 = vmatprep.subr.mxu0 0.0
        %4061 = vmatpush1.msra.mxu0 0.0
        %4062 = vmatprep.subr.mxu0 0.0
        %4063 = vmatpush1.msra.mxu0 0.0
        %4064 = vmatprep.subr.mxu0 0.0
        %v4065 = vand.u32 %v168, 4294901760
        %4066 = vmatpush1.msra.mxu0 %v4065
        %4067 = vmatprep.subr.mxu0 0.0
        %v4068 = vand.u32 %v167, 4294901760
        %4069 = vmatpush1.msra.mxu0 %v4068
        %4070 = vmatprep.subr.mxu0 0.0
        %4071 = vmatpush2.msra.mxu0 0.0
        %4072 = vmatprep.subr.mxu0 0.0
        %4073 = vmatpush2.msra.mxu0 0.0
        %4074 = vmatprep.subr.mxu0 0.0
        %4075 = vmatpush2.msra.mxu0 0.0
        %4076 = vmatprep.subr.mxu0 0.0
        %4077 = vmatpush2.msra.mxu0 0.0
        %4078 = vmatprep.subr.mxu0 0.0
        %4079 = vmatpush2.msra.mxu0 0.0
        %4080 = vmatprep.subr.mxu0 0.0
        %4081 = vmatpush2.msra.mxu0 0.0
        %4082 = vmatprep.subr.mxu0 0.0
        %4083 = vmatpush2.msra.mxu0 0.0
        %4084 = vmatprep.subr.mxu0 0.0
        %4085 = vmatpush2.msra.mxu0 0.0
        %4086 = vmatprep.subr.mxu0 0.0
        %4087 = vmatpush2.msra.mxu0 0.0
        %4088 = vmatprep.subr.mxu0 0.0
        %4089 = vmatpush2.msra.mxu0 0.0
        %4090 = vmatprep.subr.mxu0 0.0
        %4091 = vmatpush2.msra.mxu0 0.0
        %4092 = vmatprep.subr.mxu0 0.0
        %4093 = vmatpush2.msra.mxu0 0.0
        %4094 = vmatprep.subr.mxu0 0.0
        %4095 = vmatpush2.msra.mxu0 0.0
        %4096 = vmatprep.subr.mxu0 0.0
        %4097 = vmatpush2.msra.mxu0 0.0
        %4098 = vmatprep.subr.mxu0 0.0
        %4099 = vmatpush2.msra.mxu0 0.0
        %4100 = vmatprep.subr.mxu0 0.0
        %4101 = vmatpush2.msra.mxu0 0.0
        %4102 = vmatprep.mubr.f32.mxu0 0.0
        %v4103 = vand.u32 %v4031, 4294901760
        %v4104 = vsub.f32 %v4031, %v4103
        %v4105 = vand.u32 %v4104, 4294901760
        %v4106 = vsub.f32 %v4104, %v4105
        %v4107 = vand.u32 %v4106, 4294901760
        %4108 = vmatmul.mubr.f32.gmra.mxu0 %v4107
        %v4109 = vpop.f32.mrf.mxu0
        %v4110 = vadd.f32 %v4021, %v4109
        %v4111 = vpop.f32.mrf.mxu0
        %4112 = vmatprep.mubr.f32.mxu0 0.0
        %v4113 = vand.u32 %v4034, 4294901760
        %v4114 = vsub.f32 %v4034, %v4113
        %v4115 = vand.u32 %v4114, 4294901760
        %v4116 = vsub.f32 %v4114, %v4115
        %v4117 = vand.u32 %v4116, 4294901760
        %4118 = vmatmul.mubr.f32.gmra.mxu0 %v4117
        %v4119 = vpop.f32.mrf.mxu0
        %v4120 = vadd.f32 %v4027, %v4119
        %v4121 = vpop.f32.mrf.mxu0
        %4122 = vdwg.mxu0
        %4123 = vmatprep.subr.mxu0 0.0
        %4124 = vmatpush1.msra.mxu0 0.0
        %4125 = vmatprep.subr.mxu0 0.0
        %4126 = vmatpush1.msra.mxu0 0.0
        %4127 = vmatprep.subr.mxu0 0.0
        %4128 = vmatpush1.msra.mxu0 0.0
        %4129 = vmatprep.subr.mxu0 0.0
        %4130 = vmatpush1.msra.mxu0 0.0
        %4131 = vmatprep.subr.mxu0 0.0
        %4132 = vmatpush1.msra.mxu0 0.0
        %4133 = vmatprep.subr.mxu0 0.0
        %4134 = vmatpush1.msra.mxu0 0.0
        %4135 = vmatprep.subr.mxu0 0.0
        %4136 = vmatpush1.msra.mxu0 0.0
        %4137 = vmatprep.subr.mxu0 0.0
        %4138 = vmatpush1.msra.mxu0 0.0
        %4139 = vmatprep.subr.mxu0 0.0
        %4140 = vmatpush1.msra.mxu0 0.0
        %4141 = vmatprep.subr.mxu0 0.0
        %4142 = vmatpush1.msra.mxu0 0.0
        %4143 = vmatprep.subr.mxu0 0.0
        %4144 = vmatpush1.msra.mxu0 0.0
        %4145 = vmatprep.subr.mxu0 0.0
        %4146 = vmatpush1.msra.mxu0 0.0
        %4147 = vmatprep.subr.mxu0 0.0
        %4148 = vmatpush1.msra.mxu0 0.0
        %4149 = vmatprep.subr.mxu0 0.0
        %4150 = vmatpush1.msra.mxu0 0.0
        %4151 = vmatprep.subr.mxu0 0.0
        %v4152 = vand.u32 %v168, 4294901760
        %v4153 = vsub.f32 %v168, %v4152
        %v4154 = vand.u32 %v4153, 4294901760
        %v4155 = vsub.f32 %v4153, %v4154
        %v4156 = vand.u32 %v4155, 4294901760
        %4157 = vmatpush1.msra.mxu0 %v4156
        %4158 = vmatprep.subr.mxu0 0.0
        %v4159 = vand.u32 %v167, 4294901760
        %v4160 = vsub.f32 %v167, %v4159
        %v4161 = vand.u32 %v4160, 4294901760
        %v4162 = vsub.f32 %v4160, %v4161
        %v4163 = vand.u32 %v4162, 4294901760
        %4164 = vmatpush1.msra.mxu0 %v4163
        %4165 = vmatprep.subr.mxu0 0.0
        %4166 = vmatpush2.msra.mxu0 0.0
        %4167 = vmatprep.subr.mxu0 0.0
        %4168 = vmatpush2.msra.mxu0 0.0
        %4169 = vmatprep.subr.mxu0 0.0
        %4170 = vmatpush2.msra.mxu0 0.0
        %4171 = vmatprep.subr.mxu0 0.0
        %4172 = vmatpush2.msra.mxu0 0.0
        %4173 = vmatprep.subr.mxu0 0.0
        %4174 = vmatpush2.msra.mxu0 0.0
        %4175 = vmatprep.subr.mxu0 0.0
        %4176 = vmatpush2.msra.mxu0 0.0
        %4177 = vmatprep.subr.mxu0 0.0
        %4178 = vmatpush2.msra.mxu0 0.0
        %4179 = vmatprep.subr.mxu0 0.0
        %4180 = vmatpush2.msra.mxu0 0.0
        %4181 = vmatprep.subr.mxu0 0.0
        %4182 = vmatpush2.msra.mxu0 0.0
        %4183 = vmatprep.subr.mxu0 0.0
        %4184 = vmatpush2.msra.mxu0 0.0
        %4185 = vmatprep.subr.mxu0 0.0
        %4186 = vmatpush2.msra.mxu0 0.0
        %4187 = vmatprep.subr.mxu0 0.0
        %4188 = vmatpush2.msra.mxu0 0.0
        %4189 = vmatprep.subr.mxu0 0.0
        %4190 = vmatpush2.msra.mxu0 0.0
        %4191 = vmatprep.subr.mxu0 0.0
        %4192 = vmatpush2.msra.mxu0 0.0
        %4193 = vmatprep.subr.mxu0 0.0
        %4194 = vmatpush2.msra.mxu0 0.0
        %4195 = vmatprep.subr.mxu0 0.0
        %4196 = vmatpush2.msra.mxu0 0.0
        %4197 = vmatprep.mubr.f32.mxu0 0.0
        %v4198 = vand.u32 %v4031, 4294901760
        %4199 = vmatmul.mubr.f32.gmra.mxu0 %v4198
        %v4200 = vpop.f32.mrf.mxu0
        %v4201 = vadd.f32 %v4110, %v4200
        %v4202 = vpop.f32.mrf.mxu0
        %4203 = vmatprep.mubr.f32.mxu0 0.0
        %v4204 = vand.u32 %v4034, 4294901760
        %4205 = vmatmul.mubr.f32.gmra.mxu0 %v4204
        %v4206 = vpop.f32.mrf.mxu0
        %v4207 = vadd.f32 %v4120, %v4206
        %v4208 = vpop.f32.mrf.mxu0
        %4209 = vdwg.mxu0
        %4210 = vmatprep.subr.mxu0 0.0
        %4211 = vmatpush1.msra.mxu0 0.0
        %4212 = vmatprep.subr.mxu0 0.0
        %4213 = vmatpush1.msra.mxu0 0.0
        %4214 = vmatprep.subr.mxu0 0.0
        %4215 = vmatpush1.msra.mxu0 0.0
        %4216 = vmatprep.subr.mxu0 0.0
        %4217 = vmatpush1.msra.mxu0 0.0
        %4218 = vmatprep.subr.mxu0 0.0
        %4219 = vmatpush1.msra.mxu0 0.0
        %4220 = vmatprep.subr.mxu0 0.0
        %4221 = vmatpush1.msra.mxu0 0.0
        %4222 = vmatprep.subr.mxu0 0.0
        %4223 = vmatpush1.msra.mxu0 0.0
        %4224 = vmatprep.subr.mxu0 0.0
        %4225 = vmatpush1.msra.mxu0 0.0
        %4226 = vmatprep.subr.mxu0 0.0
        %4227 = vmatpush1.msra.mxu0 0.0
        %4228 = vmatprep.subr.mxu0 0.0
        %4229 = vmatpush1.msra.mxu0 0.0
        %4230 = vmatprep.subr.mxu0 0.0
        %4231 = vmatpush1.msra.mxu0 0.0
        %4232 = vmatprep.subr.mxu0 0.0
        %4233 = vmatpush1.msra.mxu0 0.0
        %4234 = vmatprep.subr.mxu0 0.0
        %4235 = vmatpush1.msra.mxu0 0.0
        %4236 = vmatprep.subr.mxu0 0.0
        %4237 = vmatpush1.msra.mxu0 0.0
        %4238 = vmatprep.subr.mxu0 0.0
        %v4239 = vand.u32 %v168, 4294901760
        %v4240 = vsub.f32 %v168, %v4239
        %4241 = vmatpush1.msra.mxu0 %v4240
        %4242 = vmatprep.subr.mxu0 0.0
        %v4243 = vand.u32 %v167, 4294901760
        %v4244 = vsub.f32 %v167, %v4243
        %4245 = vmatpush1.msra.mxu0 %v4244
        %4246 = vmatprep.subr.mxu0 0.0
        %4247 = vmatpush2.msra.mxu0 0.0
        %4248 = vmatprep.subr.mxu0 0.0
        %4249 = vmatpush2.msra.mxu0 0.0
        %4250 = vmatprep.subr.mxu0 0.0
        %4251 = vmatpush2.msra.mxu0 0.0
        %4252 = vmatprep.subr.mxu0 0.0
        %4253 = vmatpush2.msra.mxu0 0.0
        %4254 = vmatprep.subr.mxu0 0.0
        %4255 = vmatpush2.msra.mxu0 0.0
        %4256 = vmatprep.subr.mxu0 0.0
        %4257 = vmatpush2.msra.mxu0 0.0
        %4258 = vmatprep.subr.mxu0 0.0
        %4259 = vmatpush2.msra.mxu0 0.0
        %4260 = vmatprep.subr.mxu0 0.0
        %4261 = vmatpush2.msra.mxu0 0.0
        %4262 = vmatprep.subr.mxu0 0.0
        %4263 = vmatpush2.msra.mxu0 0.0
        %4264 = vmatprep.subr.mxu0 0.0
        %4265 = vmatpush2.msra.mxu0 0.0
        %4266 = vmatprep.subr.mxu0 0.0
        %4267 = vmatpush2.msra.mxu0 0.0
        %4268 = vmatprep.subr.mxu0 0.0
        %4269 = vmatpush2.msra.mxu0 0.0
        %4270 = vmatprep.subr.mxu0 0.0
        %4271 = vmatpush2.msra.mxu0 0.0
        %4272 = vmatprep.subr.mxu0 0.0
        %4273 = vmatpush2.msra.mxu0 0.0
        %4274 = vmatprep.subr.mxu0 0.0
        %4275 = vmatpush2.msra.mxu0 0.0
        %4276 = vmatprep.subr.mxu0 0.0
        %4277 = vmatpush2.msra.mxu0 0.0
        %4278 = vmatprep.mubr.f32.mxu0 0.0
        %v4279 = vand.u32 %v4031, 4294901760
        %v4280 = vsub.f32 %v4031, %v4279
        %4281 = vmatmul.mubr.f32.gmra.mxu0 %v4280
        %v4282 = vpop.f32.mrf.mxu0
        %v4283 = vadd.f32 %v4201, %v4282
        %v4284 = vpop.f32.mrf.mxu0
        %4285 = vmatprep.mubr.f32.mxu0 0.0
        %v4286 = vand.u32 %v4034, 4294901760
        %v4287 = vsub.f32 %v4034, %v4286
        %4288 = vmatmul.mubr.f32.gmra.mxu0 %v4287
        %v4289 = vpop.f32.mrf.mxu0
        %v4290 = vadd.f32 %v4207, %v4289
        %v4291 = vpop.f32.mrf.mxu0
        %4292 = vdwg.mxu0
        %4293 = vmatprep.subr.mxu0 0.0
        %4294 = vmatpush1.msra.mxu0 0.0
        %4295 = vmatprep.subr.mxu0 0.0
        %4296 = vmatpush1.msra.mxu0 0.0
        %4297 = vmatprep.subr.mxu0 0.0
        %4298 = vmatpush1.msra.mxu0 0.0
        %4299 = vmatprep.subr.mxu0 0.0
        %4300 = vmatpush1.msra.mxu0 0.0
        %4301 = vmatprep.subr.mxu0 0.0
        %4302 = vmatpush1.msra.mxu0 0.0
        %4303 = vmatprep.subr.mxu0 0.0
        %4304 = vmatpush1.msra.mxu0 0.0
        %4305 = vmatprep.subr.mxu0 0.0
        %4306 = vmatpush1.msra.mxu0 0.0
        %4307 = vmatprep.subr.mxu0 0.0
        %4308 = vmatpush1.msra.mxu0 0.0
        %4309 = vmatprep.subr.mxu0 0.0
        %4310 = vmatpush1.msra.mxu0 0.0
        %4311 = vmatprep.subr.mxu0 0.0
        %4312 = vmatpush1.msra.mxu0 0.0
        %4313 = vmatprep.subr.mxu0 0.0
        %4314 = vmatpush1.msra.mxu0 0.0
        %4315 = vmatprep.subr.mxu0 0.0
        %4316 = vmatpush1.msra.mxu0 0.0
        %4317 = vmatprep.subr.mxu0 0.0
        %4318 = vmatpush1.msra.mxu0 0.0
        %4319 = vmatprep.subr.mxu0 0.0
        %4320 = vmatpush1.msra.mxu0 0.0
        %4321 = vmatprep.subr.mxu0 0.0
        %v4322 = vand.u32 %v168, 4294901760
        %4323 = vmatpush1.msra.mxu0 %v4322
        %4324 = vmatprep.subr.mxu0 0.0
        %v4325 = vand.u32 %v167, 4294901760
        %4326 = vmatpush1.msra.mxu0 %v4325
        %4327 = vmatprep.subr.mxu0 0.0
        %4328 = vmatpush2.msra.mxu0 0.0
        %4329 = vmatprep.subr.mxu0 0.0
        %4330 = vmatpush2.msra.mxu0 0.0
        %4331 = vmatprep.subr.mxu0 0.0
        %4332 = vmatpush2.msra.mxu0 0.0
        %4333 = vmatprep.subr.mxu0 0.0
        %4334 = vmatpush2.msra.mxu0 0.0
        %4335 = vmatprep.subr.mxu0 0.0
        %4336 = vmatpush2.msra.mxu0 0.0
        %4337 = vmatprep.subr.mxu0 0.0
        %4338 = vmatpush2.msra.mxu0 0.0
        %4339 = vmatprep.subr.mxu0 0.0
        %4340 = vmatpush2.msra.mxu0 0.0
        %4341 = vmatprep.subr.mxu0 0.0
        %4342 = vmatpush2.msra.mxu0 0.0
        %4343 = vmatprep.subr.mxu0 0.0
        %4344 = vmatpush2.msra.mxu0 0.0
        %4345 = vmatprep.subr.mxu0 0.0
        %4346 = vmatpush2.msra.mxu0 0.0
        %4347 = vmatprep.subr.mxu0 0.0
        %4348 = vmatpush2.msra.mxu0 0.0
        %4349 = vmatprep.subr.mxu0 0.0
        %4350 = vmatpush2.msra.mxu0 0.0
        %4351 = vmatprep.subr.mxu0 0.0
        %4352 = vmatpush2.msra.mxu0 0.0
        %4353 = vmatprep.subr.mxu0 0.0
        %4354 = vmatpush2.msra.mxu0 0.0
        %4355 = vmatprep.subr.mxu0 0.0
        %4356 = vmatpush2.msra.mxu0 0.0
        %4357 = vmatprep.subr.mxu0 0.0
        %4358 = vmatpush2.msra.mxu0 0.0
        %4359 = vmatprep.mubr.f32.mxu0 0.0
        %v4360 = vand.u32 %v4031, 4294901760
        %v4361 = vsub.f32 %v4031, %v4360
        %v4362 = vand.u32 %v4361, 4294901760
        %4363 = vmatmul.mubr.f32.gmra.mxu0 %v4362
        %v4364 = vpop.f32.mrf.mxu0
        %v4365 = vadd.f32 %v4283, %v4364
        %v4366 = vpop.f32.mrf.mxu0
        %4367 = vmatprep.mubr.f32.mxu0 0.0
        %v4368 = vand.u32 %v4034, 4294901760
        %v4369 = vsub.f32 %v4034, %v4368
        %v4370 = vand.u32 %v4369, 4294901760
        %4371 = vmatmul.mubr.f32.gmra.mxu0 %v4370
        %v4372 = vpop.f32.mrf.mxu0
        %v4373 = vadd.f32 %v4290, %v4372
        %v4374 = vpop.f32.mrf.mxu0
        %4375 = vdwg.mxu0
        %4376 = vmatprep.subr.mxu0 0.0
        %4377 = vmatpush1.msra.mxu0 0.0
        %4378 = vmatprep.subr.mxu0 0.0
        %4379 = vmatpush1.msra.mxu0 0.0
        %4380 = vmatprep.subr.mxu0 0.0
        %4381 = vmatpush1.msra.mxu0 0.0
        %4382 = vmatprep.subr.mxu0 0.0
        %4383 = vmatpush1.msra.mxu0 0.0
        %4384 = vmatprep.subr.mxu0 0.0
        %4385 = vmatpush1.msra.mxu0 0.0
        %4386 = vmatprep.subr.mxu0 0.0
        %4387 = vmatpush1.msra.mxu0 0.0
        %4388 = vmatprep.subr.mxu0 0.0
        %4389 = vmatpush1.msra.mxu0 0.0
        %4390 = vmatprep.subr.mxu0 0.0
        %4391 = vmatpush1.msra.mxu0 0.0
        %4392 = vmatprep.subr.mxu0 0.0
        %4393 = vmatpush1.msra.mxu0 0.0
        %4394 = vmatprep.subr.mxu0 0.0
        %4395 = vmatpush1.msra.mxu0 0.0
        %4396 = vmatprep.subr.mxu0 0.0
        %4397 = vmatpush1.msra.mxu0 0.0
        %4398 = vmatprep.subr.mxu0 0.0
        %4399 = vmatpush1.msra.mxu0 0.0
        %4400 = vmatprep.subr.mxu0 0.0
        %4401 = vmatpush1.msra.mxu0 0.0
        %4402 = vmatprep.subr.mxu0 0.0
        %4403 = vmatpush1.msra.mxu0 0.0
        %4404 = vmatprep.subr.mxu0 0.0
        %v4405 = vand.u32 %v168, 4294901760
        %v4406 = vsub.f32 %v168, %v4405
        %v4407 = vand.u32 %v4406, 4294901760
        %4408 = vmatpush1.msra.mxu0 %v4407
        %4409 = vmatprep.subr.mxu0 0.0
        %v4410 = vand.u32 %v167, 4294901760
        %v4411 = vsub.f32 %v167, %v4410
        %v4412 = vand.u32 %v4411, 4294901760
        %4413 = vmatpush1.msra.mxu0 %v4412
        %4414 = vmatprep.subr.mxu0 0.0
        %4415 = vmatpush2.msra.mxu0 0.0
        %4416 = vmatprep.subr.mxu0 0.0
        %4417 = vmatpush2.msra.mxu0 0.0
        %4418 = vmatprep.subr.mxu0 0.0
        %4419 = vmatpush2.msra.mxu0 0.0
        %4420 = vmatprep.subr.mxu0 0.0
        %4421 = vmatpush2.msra.mxu0 0.0
        %4422 = vmatprep.subr.mxu0 0.0
        %4423 = vmatpush2.msra.mxu0 0.0
        %4424 = vmatprep.subr.mxu0 0.0
        %4425 = vmatpush2.msra.mxu0 0.0
        %4426 = vmatprep.subr.mxu0 0.0
        %4427 = vmatpush2.msra.mxu0 0.0
        %4428 = vmatprep.subr.mxu0 0.0
        %4429 = vmatpush2.msra.mxu0 0.0
        %4430 = vmatprep.subr.mxu0 0.0
        %4431 = vmatpush2.msra.mxu0 0.0
        %4432 = vmatprep.subr.mxu0 0.0
        %4433 = vmatpush2.msra.mxu0 0.0
        %4434 = vmatprep.subr.mxu0 0.0
        %4435 = vmatpush2.msra.mxu0 0.0
        %4436 = vmatprep.subr.mxu0 0.0
        %4437 = vmatpush2.msra.mxu0 0.0
        %4438 = vmatprep.subr.mxu0 0.0
        %4439 = vmatpush2.msra.mxu0 0.0
        %4440 = vmatprep.subr.mxu0 0.0
        %4441 = vmatpush2.msra.mxu0 0.0
        %4442 = vmatprep.subr.mxu0 0.0
        %4443 = vmatpush2.msra.mxu0 0.0
        %4444 = vmatprep.subr.mxu0 0.0
        %4445 = vmatpush2.msra.mxu0 0.0
        %4446 = vmatprep.mubr.f32.mxu0 0.0
        %v4447 = vand.u32 %v4031, 4294901760
        %4448 = vmatmul.mubr.f32.gmra.mxu0 %v4447
        %v4449 = vpop.f32.mrf.mxu0
        %v4450 = vadd.f32 %v4365, %v4449
        %v4451 = vpop.f32.mrf.mxu0
        %4452 = vmatprep.mubr.f32.mxu0 0.0
        %v4453 = vand.u32 %v4034, 4294901760
        %4454 = vmatmul.mubr.f32.gmra.mxu0 %v4453
        %v4455 = vpop.f32.mrf.mxu0
        %v4456 = vadd.f32 %v4373, %v4455
        %v4457 = vpop.f32.mrf.mxu0
        %4458 = vdwg.mxu0
        %4459 = vmatprep.subr.mxu0 0.0
        %4460 = vmatpush1.msra.mxu0 0.0
        %4461 = vmatprep.subr.mxu0 0.0
        %4462 = vmatpush1.msra.mxu0 0.0
        %4463 = vmatprep.subr.mxu0 0.0
        %4464 = vmatpush1.msra.mxu0 0.0
        %4465 = vmatprep.subr.mxu0 0.0
        %4466 = vmatpush1.msra.mxu0 0.0
        %4467 = vmatprep.subr.mxu0 0.0
        %4468 = vmatpush1.msra.mxu0 0.0
        %4469 = vmatprep.subr.mxu0 0.0
        %4470 = vmatpush1.msra.mxu0 0.0
        %4471 = vmatprep.subr.mxu0 0.0
        %4472 = vmatpush1.msra.mxu0 0.0
        %4473 = vmatprep.subr.mxu0 0.0
        %4474 = vmatpush1.msra.mxu0 0.0
        %4475 = vmatprep.subr.mxu0 0.0
        %4476 = vmatpush1.msra.mxu0 0.0
        %4477 = vmatprep.subr.mxu0 0.0
        %4478 = vmatpush1.msra.mxu0 0.0
        %4479 = vmatprep.subr.mxu0 0.0
        %4480 = vmatpush1.msra.mxu0 0.0
        %4481 = vmatprep.subr.mxu0 0.0
        %4482 = vmatpush1.msra.mxu0 0.0
        %4483 = vmatprep.subr.mxu0 0.0
        %4484 = vmatpush1.msra.mxu0 0.0
        %4485 = vmatprep.subr.mxu0 0.0
        %4486 = vmatpush1.msra.mxu0 0.0
        %4487 = vmatprep.subr.mxu0 0.0
        %v4488 = vand.u32 %v168, 4294901760
        %4489 = vmatpush1.msra.mxu0 %v4488
        %4490 = vmatprep.subr.mxu0 0.0
        %v4491 = vand.u32 %v167, 4294901760
        %4492 = vmatpush1.msra.mxu0 %v4491
        %4493 = vmatprep.subr.mxu0 0.0
        %4494 = vmatpush2.msra.mxu0 0.0
        %4495 = vmatprep.subr.mxu0 0.0
        %4496 = vmatpush2.msra.mxu0 0.0
        %4497 = vmatprep.subr.mxu0 0.0
        %4498 = vmatpush2.msra.mxu0 0.0
        %4499 = vmatprep.subr.mxu0 0.0
        %4500 = vmatpush2.msra.mxu0 0.0
        %4501 = vmatprep.subr.mxu0 0.0
        %4502 = vmatpush2.msra.mxu0 0.0
        %4503 = vmatprep.subr.mxu0 0.0
        %4504 = vmatpush2.msra.mxu0 0.0
        %4505 = vmatprep.subr.mxu0 0.0
        %4506 = vmatpush2.msra.mxu0 0.0
        %4507 = vmatprep.subr.mxu0 0.0
        %4508 = vmatpush2.msra.mxu0 0.0
        %4509 = vmatprep.subr.mxu0 0.0
        %4510 = vmatpush2.msra.mxu0 0.0
        %4511 = vmatprep.subr.mxu0 0.0
        %4512 = vmatpush2.msra.mxu0 0.0
        %4513 = vmatprep.subr.mxu0 0.0
        %4514 = vmatpush2.msra.mxu0 0.0
        %4515 = vmatprep.subr.mxu0 0.0
        %4516 = vmatpush2.msra.mxu0 0.0
        %4517 = vmatprep.subr.mxu0 0.0
        %4518 = vmatpush2.msra.mxu0 0.0
        %4519 = vmatprep.subr.mxu0 0.0
        %4520 = vmatpush2.msra.mxu0 0.0
        %4521 = vmatprep.subr.mxu0 0.0
        %4522 = vmatpush2.msra.mxu0 0.0
        %4523 = vmatprep.subr.mxu0 0.0
        %4524 = vmatpush2.msra.mxu0 0.0
        %4525 = vmatprep.mubr.f32.mxu0 0.0
        %v4526 = vand.u32 %v4031, 4294901760
        %4527 = vmatmul.mubr.f32.gmra.mxu0 %v4526
        %v4528 = vpop.f32.mrf.mxu0
        %v4529 = vadd.f32 %v4450, %v4528
        %v4530 = vpop.f32.mrf.mxu0
        %4531 = vmatprep.mubr.f32.mxu0 0.0
        %v4532 = vand.u32 %v4034, 4294901760
        %4533 = vmatmul.mubr.f32.gmra.mxu0 %v4532
        %v4534 = vpop.f32.mrf.mxu0
        %v4535 = vadd.f32 %v4456, %v4534
        %v4536 = vpop.f32.mrf.mxu0
        %4537 = vdwg.mxu0
        %v4539 = vsel %vm244, %v3520, 0
        %v4542 = vsel %vm244, %v3521, 0
        %4544 = vmatprep.subr.mxu0 0.0
        %4545 = vmatpush1.msra.mxu0 0.0
        %4546 = vmatprep.subr.mxu0 0.0
        %4547 = vmatpush1.msra.mxu0 0.0
        %4548 = vmatprep.subr.mxu0 0.0
        %4549 = vmatpush1.msra.mxu0 0.0
        %4550 = vmatprep.subr.mxu0 0.0
        %4551 = vmatpush1.msra.mxu0 0.0
        %4552 = vmatprep.subr.mxu0 0.0
        %4553 = vmatpush1.msra.mxu0 0.0
        %4554 = vmatprep.subr.mxu0 0.0
        %4555 = vmatpush1.msra.mxu0 0.0
        %4556 = vmatprep.subr.mxu0 0.0
        %4557 = vmatpush1.msra.mxu0 0.0
        %4558 = vmatprep.subr.mxu0 0.0
        %4559 = vmatpush1.msra.mxu0 0.0
        %4560 = vmatprep.subr.mxu0 0.0
        %4561 = vmatpush1.msra.mxu0 0.0
        %4562 = vmatprep.subr.mxu0 0.0
        %4563 = vmatpush1.msra.mxu0 0.0
        %4564 = vmatprep.subr.mxu0 0.0
        %4565 = vmatpush1.msra.mxu0 0.0
        %4566 = vmatprep.subr.mxu0 0.0
        %4567 = vmatpush1.msra.mxu0 0.0
        %4568 = vmatprep.subr.mxu0 0.0
        %4569 = vmatpush1.msra.mxu0 0.0
        %4570 = vmatprep.subr.mxu0 0.0
        %4571 = vmatpush1.msra.mxu0 0.0
        %4572 = vmatprep.subr.mxu0 0.0
        %v4573 = vand.u32 %v176, 4294901760
        %4574 = vmatpush1.msra.mxu0 %v4573
        %4575 = vmatprep.subr.mxu0 0.0
        %v4576 = vand.u32 %v175, 4294901760
        %4577 = vmatpush1.msra.mxu0 %v4576
        %4578 = vmatprep.subr.mxu0 0.0
        %4579 = vmatpush2.msra.mxu0 0.0
        %4580 = vmatprep.subr.mxu0 0.0
        %4581 = vmatpush2.msra.mxu0 0.0
        %4582 = vmatprep.subr.mxu0 0.0
        %4583 = vmatpush2.msra.mxu0 0.0
        %4584 = vmatprep.subr.mxu0 0.0
        %4585 = vmatpush2.msra.mxu0 0.0
        %4586 = vmatprep.subr.mxu0 0.0
        %4587 = vmatpush2.msra.mxu0 0.0
        %4588 = vmatprep.subr.mxu0 0.0
        %4589 = vmatpush2.msra.mxu0 0.0
        %4590 = vmatprep.subr.mxu0 0.0
        %4591 = vmatpush2.msra.mxu0 0.0
        %4592 = vmatprep.subr.mxu0 0.0
        %4593 = vmatpush2.msra.mxu0 0.0
        %4594 = vmatprep.subr.mxu0 0.0
        %4595 = vmatpush2.msra.mxu0 0.0
        %4596 = vmatprep.subr.mxu0 0.0
        %4597 = vmatpush2.msra.mxu0 0.0
        %4598 = vmatprep.subr.mxu0 0.0
        %4599 = vmatpush2.msra.mxu0 0.0
        %4600 = vmatprep.subr.mxu0 0.0
        %4601 = vmatpush2.msra.mxu0 0.0
        %4602 = vmatprep.subr.mxu0 0.0
        %4603 = vmatpush2.msra.mxu0 0.0
        %4604 = vmatprep.subr.mxu0 0.0
        %4605 = vmatpush2.msra.mxu0 0.0
        %4606 = vmatprep.subr.mxu0 0.0
        %4607 = vmatpush2.msra.mxu0 0.0
        %4608 = vmatprep.subr.mxu0 0.0
        %4609 = vmatpush2.msra.mxu0 0.0
        %4610 = vmatprep.mubr.f32.mxu0 0.0
        %v4611 = vand.u32 %v4539, 4294901760
        %v4612 = vsub.f32 %v4539, %v4611
        %v4613 = vand.u32 %v4612, 4294901760
        %v4614 = vsub.f32 %v4612, %v4613
        %v4615 = vand.u32 %v4614, 4294901760
        %4616 = vmatmul.mubr.f32.gmra.mxu0 %v4615
        %v4617 = vpop.f32.mrf.mxu0
        %v4618 = vadd.f32 0.0, %v4617
        %v4619 = vpop.f32.mrf.mxu0
        %4620 = vmatprep.mubr.f32.mxu0 0.0
        %v4621 = vand.u32 %v4542, 4294901760
        %v4622 = vsub.f32 %v4542, %v4621
        %v4623 = vand.u32 %v4622, 4294901760
        %v4624 = vsub.f32 %v4622, %v4623
        %v4625 = vand.u32 %v4624, 4294901760
        %4626 = vmatmul.mubr.f32.gmra.mxu0 %v4625
        %v4627 = vpop.f32.mrf.mxu0
        %v4628 = vadd.f32 0.0, %v4627
        %v4629 = vpop.f32.mrf.mxu0
        %4630 = vdwg.mxu0
        %4631 = vmatprep.subr.mxu0 0.0
        %4632 = vmatpush1.msra.mxu0 0.0
        %4633 = vmatprep.subr.mxu0 0.0
        %4634 = vmatpush1.msra.mxu0 0.0
        %4635 = vmatprep.subr.mxu0 0.0
        %4636 = vmatpush1.msra.mxu0 0.0
        %4637 = vmatprep.subr.mxu0 0.0
        %4638 = vmatpush1.msra.mxu0 0.0
        %4639 = vmatprep.subr.mxu0 0.0
        %4640 = vmatpush1.msra.mxu0 0.0
        %4641 = vmatprep.subr.mxu0 0.0
        %4642 = vmatpush1.msra.mxu0 0.0
        %4643 = vmatprep.subr.mxu0 0.0
        %4644 = vmatpush1.msra.mxu0 0.0
        %4645 = vmatprep.subr.mxu0 0.0
        %4646 = vmatpush1.msra.mxu0 0.0
        %4647 = vmatprep.subr.mxu0 0.0
        %4648 = vmatpush1.msra.mxu0 0.0
        %4649 = vmatprep.subr.mxu0 0.0
        %4650 = vmatpush1.msra.mxu0 0.0
        %4651 = vmatprep.subr.mxu0 0.0
        %4652 = vmatpush1.msra.mxu0 0.0
        %4653 = vmatprep.subr.mxu0 0.0
        %4654 = vmatpush1.msra.mxu0 0.0
        %4655 = vmatprep.subr.mxu0 0.0
        %4656 = vmatpush1.msra.mxu0 0.0
        %4657 = vmatprep.subr.mxu0 0.0
        %4658 = vmatpush1.msra.mxu0 0.0
        %4659 = vmatprep.subr.mxu0 0.0
        %v4660 = vand.u32 %v176, 4294901760
        %v4661 = vsub.f32 %v176, %v4660
        %v4662 = vand.u32 %v4661, 4294901760
        %v4663 = vsub.f32 %v4661, %v4662
        %v4664 = vand.u32 %v4663, 4294901760
        %4665 = vmatpush1.msra.mxu0 %v4664
        %4666 = vmatprep.subr.mxu0 0.0
        %v4667 = vand.u32 %v175, 4294901760
        %v4668 = vsub.f32 %v175, %v4667
        %v4669 = vand.u32 %v4668, 4294901760
        %v4670 = vsub.f32 %v4668, %v4669
        %v4671 = vand.u32 %v4670, 4294901760
        %4672 = vmatpush1.msra.mxu0 %v4671
        %4673 = vmatprep.subr.mxu0 0.0
        %4674 = vmatpush2.msra.mxu0 0.0
        %4675 = vmatprep.subr.mxu0 0.0
        %4676 = vmatpush2.msra.mxu0 0.0
        %4677 = vmatprep.subr.mxu0 0.0
        %4678 = vmatpush2.msra.mxu0 0.0
        %4679 = vmatprep.subr.mxu0 0.0
        %4680 = vmatpush2.msra.mxu0 0.0
        %4681 = vmatprep.subr.mxu0 0.0
        %4682 = vmatpush2.msra.mxu0 0.0
        %4683 = vmatprep.subr.mxu0 0.0
        %4684 = vmatpush2.msra.mxu0 0.0
        %4685 = vmatprep.subr.mxu0 0.0
        %4686 = vmatpush2.msra.mxu0 0.0
        %4687 = vmatprep.subr.mxu0 0.0
        %4688 = vmatpush2.msra.mxu0 0.0
        %4689 = vmatprep.subr.mxu0 0.0
        %4690 = vmatpush2.msra.mxu0 0.0
        %4691 = vmatprep.subr.mxu0 0.0
        %4692 = vmatpush2.msra.mxu0 0.0
        %4693 = vmatprep.subr.mxu0 0.0
        %4694 = vmatpush2.msra.mxu0 0.0
        %4695 = vmatprep.subr.mxu0 0.0
        %4696 = vmatpush2.msra.mxu0 0.0
        %4697 = vmatprep.subr.mxu0 0.0
        %4698 = vmatpush2.msra.mxu0 0.0
        %4699 = vmatprep.subr.mxu0 0.0
        %4700 = vmatpush2.msra.mxu0 0.0
        %4701 = vmatprep.subr.mxu0 0.0
        %4702 = vmatpush2.msra.mxu0 0.0
        %4703 = vmatprep.subr.mxu0 0.0
        %4704 = vmatpush2.msra.mxu0 0.0
        %4705 = vmatprep.mubr.f32.mxu0 0.0
        %v4706 = vand.u32 %v4539, 4294901760
        %4707 = vmatmul.mubr.f32.gmra.mxu0 %v4706
        %v4708 = vpop.f32.mrf.mxu0
        %v4709 = vadd.f32 %v4618, %v4708
        %v4710 = vpop.f32.mrf.mxu0
        %4711 = vmatprep.mubr.f32.mxu0 0.0
        %v4712 = vand.u32 %v4542, 4294901760
        %4713 = vmatmul.mubr.f32.gmra.mxu0 %v4712
        %v4714 = vpop.f32.mrf.mxu0
        %v4715 = vadd.f32 %v4628, %v4714
        %v4716 = vpop.f32.mrf.mxu0
        %4717 = vdwg.mxu0
        %4718 = vmatprep.subr.mxu0 0.0
        %4719 = vmatpush1.msra.mxu0 0.0
        %4720 = vmatprep.subr.mxu0 0.0
        %4721 = vmatpush1.msra.mxu0 0.0
        %4722 = vmatprep.subr.mxu0 0.0
        %4723 = vmatpush1.msra.mxu0 0.0
        %4724 = vmatprep.subr.mxu0 0.0
        %4725 = vmatpush1.msra.mxu0 0.0
        %4726 = vmatprep.subr.mxu0 0.0
        %4727 = vmatpush1.msra.mxu0 0.0
        %4728 = vmatprep.subr.mxu0 0.0
        %4729 = vmatpush1.msra.mxu0 0.0
        %4730 = vmatprep.subr.mxu0 0.0
        %4731 = vmatpush1.msra.mxu0 0.0
        %4732 = vmatprep.subr.mxu0 0.0
        %4733 = vmatpush1.msra.mxu0 0.0
        %4734 = vmatprep.subr.mxu0 0.0
        %4735 = vmatpush1.msra.mxu0 0.0
        %4736 = vmatprep.subr.mxu0 0.0
        %4737 = vmatpush1.msra.mxu0 0.0
        %4738 = vmatprep.subr.mxu0 0.0
        %4739 = vmatpush1.msra.mxu0 0.0
        %4740 = vmatprep.subr.mxu0 0.0
        %4741 = vmatpush1.msra.mxu0 0.0
        %4742 = vmatprep.subr.mxu0 0.0
        %4743 = vmatpush1.msra.mxu0 0.0
        %4744 = vmatprep.subr.mxu0 0.0
        %4745 = vmatpush1.msra.mxu0 0.0
        %4746 = vmatprep.subr.mxu0 0.0
        %v4747 = vand.u32 %v176, 4294901760
        %v4748 = vsub.f32 %v176, %v4747
        %4749 = vmatpush1.msra.mxu0 %v4748
        %4750 = vmatprep.subr.mxu0 0.0
        %v4751 = vand.u32 %v175, 4294901760
        %v4752 = vsub.f32 %v175, %v4751
        %4753 = vmatpush1.msra.mxu0 %v4752
        %4754 = vmatprep.subr.mxu0 0.0
        %4755 = vmatpush2.msra.mxu0 0.0
        %4756 = vmatprep.subr.mxu0 0.0
        %4757 = vmatpush2.msra.mxu0 0.0
        %4758 = vmatprep.subr.mxu0 0.0
        %4759 = vmatpush2.msra.mxu0 0.0
        %4760 = vmatprep.subr.mxu0 0.0
        %4761 = vmatpush2.msra.mxu0 0.0
        %4762 = vmatprep.subr.mxu0 0.0
        %4763 = vmatpush2.msra.mxu0 0.0
        %4764 = vmatprep.subr.mxu0 0.0
        %4765 = vmatpush2.msra.mxu0 0.0
        %4766 = vmatprep.subr.mxu0 0.0
        %4767 = vmatpush2.msra.mxu0 0.0
        %4768 = vmatprep.subr.mxu0 0.0
        %4769 = vmatpush2.msra.mxu0 0.0
        %4770 = vmatprep.subr.mxu0 0.0
        %4771 = vmatpush2.msra.mxu0 0.0
        %4772 = vmatprep.subr.mxu0 0.0
        %4773 = vmatpush2.msra.mxu0 0.0
        %4774 = vmatprep.subr.mxu0 0.0
        %4775 = vmatpush2.msra.mxu0 0.0
        %4776 = vmatprep.subr.mxu0 0.0
        %4777 = vmatpush2.msra.mxu0 0.0
        %4778 = vmatprep.subr.mxu0 0.0
        %4779 = vmatpush2.msra.mxu0 0.0
        %4780 = vmatprep.subr.mxu0 0.0
        %4781 = vmatpush2.msra.mxu0 0.0
        %4782 = vmatprep.subr.mxu0 0.0
        %4783 = vmatpush2.msra.mxu0 0.0
        %4784 = vmatprep.subr.mxu0 0.0
        %4785 = vmatpush2.msra.mxu0 0.0
        %4786 = vmatprep.mubr.f32.mxu0 0.0
        %v4787 = vand.u32 %v4539, 4294901760
        %v4788 = vsub.f32 %v4539, %v4787
        %4789 = vmatmul.mubr.f32.gmra.mxu0 %v4788
        %v4790 = vpop.f32.mrf.mxu0
        %v4791 = vadd.f32 %v4709, %v4790
        %v4792 = vpop.f32.mrf.mxu0
        %4793 = vmatprep.mubr.f32.mxu0 0.0
        %v4794 = vand.u32 %v4542, 4294901760
        %v4795 = vsub.f32 %v4542, %v4794
        %4796 = vmatmul.mubr.f32.gmra.mxu0 %v4795
        %v4797 = vpop.f32.mrf.mxu0
        %v4798 = vadd.f32 %v4715, %v4797
        %v4799 = vpop.f32.mrf.mxu0
        %4800 = vdwg.mxu0
        %4801 = vmatprep.subr.mxu0 0.0
        %4802 = vmatpush1.msra.mxu0 0.0
        %4803 = vmatprep.subr.mxu0 0.0
        %4804 = vmatpush1.msra.mxu0 0.0
        %4805 = vmatprep.subr.mxu0 0.0
        %4806 = vmatpush1.msra.mxu0 0.0
        %4807 = vmatprep.subr.mxu0 0.0
        %4808 = vmatpush1.msra.mxu0 0.0
        %4809 = vmatprep.subr.mxu0 0.0
        %4810 = vmatpush1.msra.mxu0 0.0
        %4811 = vmatprep.subr.mxu0 0.0
        %4812 = vmatpush1.msra.mxu0 0.0
        %4813 = vmatprep.subr.mxu0 0.0
        %4814 = vmatpush1.msra.mxu0 0.0
        %4815 = vmatprep.subr.mxu0 0.0
        %4816 = vmatpush1.msra.mxu0 0.0
        %4817 = vmatprep.subr.mxu0 0.0
        %4818 = vmatpush1.msra.mxu0 0.0
        %4819 = vmatprep.subr.mxu0 0.0
        %4820 = vmatpush1.msra.mxu0 0.0
        %4821 = vmatprep.subr.mxu0 0.0
        %4822 = vmatpush1.msra.mxu0 0.0
        %4823 = vmatprep.subr.mxu0 0.0
        %4824 = vmatpush1.msra.mxu0 0.0
        %4825 = vmatprep.subr.mxu0 0.0
        %4826 = vmatpush1.msra.mxu0 0.0
        %4827 = vmatprep.subr.mxu0 0.0
        %4828 = vmatpush1.msra.mxu0 0.0
        %4829 = vmatprep.subr.mxu0 0.0
        %v4830 = vand.u32 %v176, 4294901760
        %4831 = vmatpush1.msra.mxu0 %v4830
        %4832 = vmatprep.subr.mxu0 0.0
        %v4833 = vand.u32 %v175, 4294901760
        %4834 = vmatpush1.msra.mxu0 %v4833
        %4835 = vmatprep.subr.mxu0 0.0
        %4836 = vmatpush2.msra.mxu0 0.0
        %4837 = vmatprep.subr.mxu0 0.0
        %4838 = vmatpush2.msra.mxu0 0.0
        %4839 = vmatprep.subr.mxu0 0.0
        %4840 = vmatpush2.msra.mxu0 0.0
        %4841 = vmatprep.subr.mxu0 0.0
        %4842 = vmatpush2.msra.mxu0 0.0
        %4843 = vmatprep.subr.mxu0 0.0
        %4844 = vmatpush2.msra.mxu0 0.0
        %4845 = vmatprep.subr.mxu0 0.0
        %4846 = vmatpush2.msra.mxu0 0.0
        %4847 = vmatprep.subr.mxu0 0.0
        %4848 = vmatpush2.msra.mxu0 0.0
        %4849 = vmatprep.subr.mxu0 0.0
        %4850 = vmatpush2.msra.mxu0 0.0
        %4851 = vmatprep.subr.mxu0 0.0
        %4852 = vmatpush2.msra.mxu0 0.0
        %4853 = vmatprep.subr.mxu0 0.0
        %4854 = vmatpush2.msra.mxu0 0.0
        %4855 = vmatprep.subr.mxu0 0.0
        %4856 = vmatpush2.msra.mxu0 0.0
        %4857 = vmatprep.subr.mxu0 0.0
        %4858 = vmatpush2.msra.mxu0 0.0
        %4859 = vmatprep.subr.mxu0 0.0
        %4860 = vmatpush2.msra.mxu0 0.0
        %4861 = vmatprep.subr.mxu0 0.0
        %4862 = vmatpush2.msra.mxu0 0.0
        %4863 = vmatprep.subr.mxu0 0.0
        %4864 = vmatpush2.msra.mxu0 0.0
        %4865 = vmatprep.subr.mxu0 0.0
        %4866 = vmatpush2.msra.mxu0 0.0
        %4867 = vmatprep.mubr.f32.mxu0 0.0
        %v4868 = vand.u32 %v4539, 4294901760
        %v4869 = vsub.f32 %v4539, %v4868
        %v4870 = vand.u32 %v4869, 4294901760
        %4871 = vmatmul.mubr.f32.gmra.mxu0 %v4870
        %v4872 = vpop.f32.mrf.mxu0
        %v4873 = vadd.f32 %v4791, %v4872
        %v4874 = vpop.f32.mrf.mxu0
        %4875 = vmatprep.mubr.f32.mxu0 0.0
        %v4876 = vand.u32 %v4542, 4294901760
        %v4877 = vsub.f32 %v4542, %v4876
        %v4878 = vand.u32 %v4877, 4294901760
        %4879 = vmatmul.mubr.f32.gmra.mxu0 %v4878
        %v4880 = vpop.f32.mrf.mxu0
        %v4881 = vadd.f32 %v4798, %v4880
        %v4882 = vpop.f32.mrf.mxu0
        %4883 = vdwg.mxu0
        %4884 = vmatprep.subr.mxu0 0.0
        %4885 = vmatpush1.msra.mxu0 0.0
        %4886 = vmatprep.subr.mxu0 0.0
        %4887 = vmatpush1.msra.mxu0 0.0
        %4888 = vmatprep.subr.mxu0 0.0
        %4889 = vmatpush1.msra.mxu0 0.0
        %4890 = vmatprep.subr.mxu0 0.0
        %4891 = vmatpush1.msra.mxu0 0.0
        %4892 = vmatprep.subr.mxu0 0.0
        %4893 = vmatpush1.msra.mxu0 0.0
        %4894 = vmatprep.subr.mxu0 0.0
        %4895 = vmatpush1.msra.mxu0 0.0
        %4896 = vmatprep.subr.mxu0 0.0
        %4897 = vmatpush1.msra.mxu0 0.0
        %4898 = vmatprep.subr.mxu0 0.0
        %4899 = vmatpush1.msra.mxu0 0.0
        %4900 = vmatprep.subr.mxu0 0.0
        %4901 = vmatpush1.msra.mxu0 0.0
        %4902 = vmatprep.subr.mxu0 0.0
        %4903 = vmatpush1.msra.mxu0 0.0
        %4904 = vmatprep.subr.mxu0 0.0
        %4905 = vmatpush1.msra.mxu0 0.0
        %4906 = vmatprep.subr.mxu0 0.0
        %4907 = vmatpush1.msra.mxu0 0.0
        %4908 = vmatprep.subr.mxu0 0.0
        %4909 = vmatpush1.msra.mxu0 0.0
        %4910 = vmatprep.subr.mxu0 0.0
        %4911 = vmatpush1.msra.mxu0 0.0
        %4912 = vmatprep.subr.mxu0 0.0
        %v4913 = vand.u32 %v176, 4294901760
        %v4914 = vsub.f32 %v176, %v4913
        %v4915 = vand.u32 %v4914, 4294901760
        %4916 = vmatpush1.msra.mxu0 %v4915
        %4917 = vmatprep.subr.mxu0 0.0
        %v4918 = vand.u32 %v175, 4294901760
        %v4919 = vsub.f32 %v175, %v4918
        %v4920 = vand.u32 %v4919, 4294901760
        %4921 = vmatpush1.msra.mxu0 %v4920
        %4922 = vmatprep.subr.mxu0 0.0
        %4923 = vmatpush2.msra.mxu0 0.0
        %4924 = vmatprep.subr.mxu0 0.0
        %4925 = vmatpush2.msra.mxu0 0.0
        %4926 = vmatprep.subr.mxu0 0.0
        %4927 = vmatpush2.msra.mxu0 0.0
        %4928 = vmatprep.subr.mxu0 0.0
        %4929 = vmatpush2.msra.mxu0 0.0
        %4930 = vmatprep.subr.mxu0 0.0
        %4931 = vmatpush2.msra.mxu0 0.0
        %4932 = vmatprep.subr.mxu0 0.0
        %4933 = vmatpush2.msra.mxu0 0.0
        %4934 = vmatprep.subr.mxu0 0.0
        %4935 = vmatpush2.msra.mxu0 0.0
        %4936 = vmatprep.subr.mxu0 0.0
        %4937 = vmatpush2.msra.mxu0 0.0
        %4938 = vmatprep.subr.mxu0 0.0
        %4939 = vmatpush2.msra.mxu0 0.0
        %4940 = vmatprep.subr.mxu0 0.0
        %4941 = vmatpush2.msra.mxu0 0.0
        %4942 = vmatprep.subr.mxu0 0.0
        %4943 = vmatpush2.msra.mxu0 0.0
        %4944 = vmatprep.subr.mxu0 0.0
        %4945 = vmatpush2.msra.mxu0 0.0
        %4946 = vmatprep.subr.mxu0 0.0
        %4947 = vmatpush2.msra.mxu0 0.0
        %4948 = vmatprep.subr.mxu0 0.0
        %4949 = vmatpush2.msra.mxu0 0.0
        %4950 = vmatprep.subr.mxu0 0.0
        %4951 = vmatpush2.msra.mxu0 0.0
        %4952 = vmatprep.subr.mxu0 0.0
        %4953 = vmatpush2.msra.mxu0 0.0
        %4954 = vmatprep.mubr.f32.mxu0 0.0
        %v4955 = vand.u32 %v4539, 4294901760
        %4956 = vmatmul.mubr.f32.gmra.mxu0 %v4955
        %v4957 = vpop.f32.mrf.mxu0
        %v4958 = vadd.f32 %v4873, %v4957
        %v4959 = vpop.f32.mrf.mxu0
        %4960 = vmatprep.mubr.f32.mxu0 0.0
        %v4961 = vand.u32 %v4542, 4294901760
        %4962 = vmatmul.mubr.f32.gmra.mxu0 %v4961
        %v4963 = vpop.f32.mrf.mxu0
        %v4964 = vadd.f32 %v4881, %v4963
        %v4965 = vpop.f32.mrf.mxu0
        %4966 = vdwg.mxu0
        %4967 = vmatprep.subr.mxu0 0.0
        %4968 = vmatpush1.msra.mxu0 0.0
        %4969 = vmatprep.subr.mxu0 0.0
        %4970 = vmatpush1.msra.mxu0 0.0
        %4971 = vmatprep.subr.mxu0 0.0
        %4972 = vmatpush1.msra.mxu0 0.0
        %4973 = vmatprep.subr.mxu0 0.0
        %4974 = vmatpush1.msra.mxu0 0.0
        %4975 = vmatprep.subr.mxu0 0.0
        %4976 = vmatpush1.msra.mxu0 0.0
        %4977 = vmatprep.subr.mxu0 0.0
        %4978 = vmatpush1.msra.mxu0 0.0
        %4979 = vmatprep.subr.mxu0 0.0
        %4980 = vmatpush1.msra.mxu0 0.0
        %4981 = vmatprep.subr.mxu0 0.0
        %4982 = vmatpush1.msra.mxu0 0.0
        %4983 = vmatprep.subr.mxu0 0.0
        %4984 = vmatpush1.msra.mxu0 0.0
        %4985 = vmatprep.subr.mxu0 0.0
        %4986 = vmatpush1.msra.mxu0 0.0
        %4987 = vmatprep.subr.mxu0 0.0
        %4988 = vmatpush1.msra.mxu0 0.0
        %4989 = vmatprep.subr.mxu0 0.0
        %4990 = vmatpush1.msra.mxu0 0.0
        %4991 = vmatprep.subr.mxu0 0.0
        %4992 = vmatpush1.msra.mxu0 0.0
        %4993 = vmatprep.subr.mxu0 0.0
        %4994 = vmatpush1.msra.mxu0 0.0
        %4995 = vmatprep.subr.mxu0 0.0
        %v4996 = vand.u32 %v176, 4294901760
        %4997 = vmatpush1.msra.mxu0 %v4996
        %4998 = vmatprep.subr.mxu0 0.0
        %v4999 = vand.u32 %v175, 4294901760
        %5000 = vmatpush1.msra.mxu0 %v4999
        %5001 = vmatprep.subr.mxu0 0.0
        %5002 = vmatpush2.msra.mxu0 0.0
        %5003 = vmatprep.subr.mxu0 0.0
        %5004 = vmatpush2.msra.mxu0 0.0
        %5005 = vmatprep.subr.mxu0 0.0
        %5006 = vmatpush2.msra.mxu0 0.0
        %5007 = vmatprep.subr.mxu0 0.0
        %5008 = vmatpush2.msra.mxu0 0.0
        %5009 = vmatprep.subr.mxu0 0.0
        %5010 = vmatpush2.msra.mxu0 0.0
        %5011 = vmatprep.subr.mxu0 0.0
        %5012 = vmatpush2.msra.mxu0 0.0
        %5013 = vmatprep.subr.mxu0 0.0
        %5014 = vmatpush2.msra.mxu0 0.0
        %5015 = vmatprep.subr.mxu0 0.0
        %5016 = vmatpush2.msra.mxu0 0.0
        %5017 = vmatprep.subr.mxu0 0.0
        %5018 = vmatpush2.msra.mxu0 0.0
        %5019 = vmatprep.subr.mxu0 0.0
        %5020 = vmatpush2.msra.mxu0 0.0
        %5021 = vmatprep.subr.mxu0 0.0
        %5022 = vmatpush2.msra.mxu0 0.0
        %5023 = vmatprep.subr.mxu0 0.0
        %5024 = vmatpush2.msra.mxu0 0.0
        %5025 = vmatprep.subr.mxu0 0.0
        %5026 = vmatpush2.msra.mxu0 0.0
        %5027 = vmatprep.subr.mxu0 0.0
        %5028 = vmatpush2.msra.mxu0 0.0
        %5029 = vmatprep.subr.mxu0 0.0
        %5030 = vmatpush2.msra.mxu0 0.0
        %5031 = vmatprep.subr.mxu0 0.0
        %5032 = vmatpush2.msra.mxu0 0.0
        %5033 = vmatprep.mubr.f32.mxu0 0.0
        %v5034 = vand.u32 %v4539, 4294901760
        %5035 = vmatmul.mubr.f32.gmra.mxu0 %v5034
        %v5036 = vpop.f32.mrf.mxu0
        %v5037 = vadd.f32 %v4958, %v5036
        %v5038 = vpop.f32.mrf.mxu0
        %5039 = vmatprep.mubr.f32.mxu0 0.0
        %v5040 = vand.u32 %v4542, 4294901760
        %5041 = vmatmul.mubr.f32.gmra.mxu0 %v5040
        %v5042 = vpop.f32.mrf.mxu0
        %v5043 = vadd.f32 %v4964, %v5042
        %v5044 = vpop.f32.mrf.mxu0
        %5045 = vdwg.mxu0
        %v5047 = vsel %vm244, %v3510, 0
        %v5050 = vsel %vm244, %v3511, 0
        %5052 = vmatprep.subr.mxu0 0.0
        %5053 = vmatpush1.msra.mxu0 0.0
        %5054 = vmatprep.subr.mxu0 0.0
        %5055 = vmatpush1.msra.mxu0 0.0
        %5056 = vmatprep.subr.mxu0 0.0
        %5057 = vmatpush1.msra.mxu0 0.0
        %5058 = vmatprep.subr.mxu0 0.0
        %5059 = vmatpush1.msra.mxu0 0.0
        %5060 = vmatprep.subr.mxu0 0.0
        %5061 = vmatpush1.msra.mxu0 0.0
        %5062 = vmatprep.subr.mxu0 0.0
        %5063 = vmatpush1.msra.mxu0 0.0
        %5064 = vmatprep.subr.mxu0 0.0
        %5065 = vmatpush1.msra.mxu0 0.0
        %5066 = vmatprep.subr.mxu0 0.0
        %5067 = vmatpush1.msra.mxu0 0.0
        %5068 = vmatprep.subr.mxu0 0.0
        %5069 = vmatpush1.msra.mxu0 0.0
        %5070 = vmatprep.subr.mxu0 0.0
        %5071 = vmatpush1.msra.mxu0 0.0
        %5072 = vmatprep.subr.mxu0 0.0
        %5073 = vmatpush1.msra.mxu0 0.0
        %5074 = vmatprep.subr.mxu0 0.0
        %5075 = vmatpush1.msra.mxu0 0.0
        %5076 = vmatprep.subr.mxu0 0.0
        %5077 = vmatpush1.msra.mxu0 0.0
        %5078 = vmatprep.subr.mxu0 0.0
        %5079 = vmatpush1.msra.mxu0 0.0
        %5080 = vmatprep.subr.mxu0 0.0
        %v5081 = vand.u32 %v168, 4294901760
        %5082 = vmatpush1.msra.mxu0 %v5081
        %5083 = vmatprep.subr.mxu0 0.0
        %v5084 = vand.u32 %v167, 4294901760
        %5085 = vmatpush1.msra.mxu0 %v5084
        %5086 = vmatprep.subr.mxu0 0.0
        %5087 = vmatpush2.msra.mxu0 0.0
        %5088 = vmatprep.subr.mxu0 0.0
        %5089 = vmatpush2.msra.mxu0 0.0
        %5090 = vmatprep.subr.mxu0 0.0
        %5091 = vmatpush2.msra.mxu0 0.0
        %5092 = vmatprep.subr.mxu0 0.0
        %5093 = vmatpush2.msra.mxu0 0.0
        %5094 = vmatprep.subr.mxu0 0.0
        %5095 = vmatpush2.msra.mxu0 0.0
        %5096 = vmatprep.subr.mxu0 0.0
        %5097 = vmatpush2.msra.mxu0 0.0
        %5098 = vmatprep.subr.mxu0 0.0
        %5099 = vmatpush2.msra.mxu0 0.0
        %5100 = vmatprep.subr.mxu0 0.0
        %5101 = vmatpush2.msra.mxu0 0.0
        %5102 = vmatprep.subr.mxu0 0.0
        %5103 = vmatpush2.msra.mxu0 0.0
        %5104 = vmatprep.subr.mxu0 0.0
        %5105 = vmatpush2.msra.mxu0 0.0
        %5106 = vmatprep.subr.mxu0 0.0
        %5107 = vmatpush2.msra.mxu0 0.0
        %5108 = vmatprep.subr.mxu0 0.0
        %5109 = vmatpush2.msra.mxu0 0.0
        %5110 = vmatprep.subr.mxu0 0.0
        %5111 = vmatpush2.msra.mxu0 0.0
        %5112 = vmatprep.subr.mxu0 0.0
        %5113 = vmatpush2.msra.mxu0 0.0
        %5114 = vmatprep.subr.mxu0 0.0
        %5115 = vmatpush2.msra.mxu0 0.0
        %5116 = vmatprep.subr.mxu0 0.0
        %5117 = vmatpush2.msra.mxu0 0.0
        %5118 = vmatprep.mubr.f32.mxu0 0.0
        %v5119 = vand.u32 %v5047, 4294901760
        %v5120 = vsub.f32 %v5047, %v5119
        %v5121 = vand.u32 %v5120, 4294901760
        %v5122 = vsub.f32 %v5120, %v5121
        %v5123 = vand.u32 %v5122, 4294901760
        %5124 = vmatmul.mubr.f32.gmra.mxu0 %v5123
        %v5125 = vpop.f32.mrf.mxu0
        %v5126 = vadd.f32 %v5037, %v5125
        %v5127 = vpop.f32.mrf.mxu0
        %5128 = vmatprep.mubr.f32.mxu0 0.0
        %v5129 = vand.u32 %v5050, 4294901760
        %v5130 = vsub.f32 %v5050, %v5129
        %v5131 = vand.u32 %v5130, 4294901760
        %v5132 = vsub.f32 %v5130, %v5131
        %v5133 = vand.u32 %v5132, 4294901760
        %5134 = vmatmul.mubr.f32.gmra.mxu0 %v5133
        %v5135 = vpop.f32.mrf.mxu0
        %v5136 = vadd.f32 %v5043, %v5135
        %v5137 = vpop.f32.mrf.mxu0
        %5138 = vdwg.mxu0
        %5139 = vmatprep.subr.mxu0 0.0
        %5140 = vmatpush1.msra.mxu0 0.0
        %5141 = vmatprep.subr.mxu0 0.0
        %5142 = vmatpush1.msra.mxu0 0.0
        %5143 = vmatprep.subr.mxu0 0.0
        %5144 = vmatpush1.msra.mxu0 0.0
        %5145 = vmatprep.subr.mxu0 0.0
        %5146 = vmatpush1.msra.mxu0 0.0
        %5147 = vmatprep.subr.mxu0 0.0
        %5148 = vmatpush1.msra.mxu0 0.0
        %5149 = vmatprep.subr.mxu0 0.0
        %5150 = vmatpush1.msra.mxu0 0.0
        %5151 = vmatprep.subr.mxu0 0.0
        %5152 = vmatpush1.msra.mxu0 0.0
        %5153 = vmatprep.subr.mxu0 0.0
        %5154 = vmatpush1.msra.mxu0 0.0
        %5155 = vmatprep.subr.mxu0 0.0
        %5156 = vmatpush1.msra.mxu0 0.0
        %5157 = vmatprep.subr.mxu0 0.0
        %5158 = vmatpush1.msra.mxu0 0.0
        %5159 = vmatprep.subr.mxu0 0.0
        %5160 = vmatpush1.msra.mxu0 0.0
        %5161 = vmatprep.subr.mxu0 0.0
        %5162 = vmatpush1.msra.mxu0 0.0
        %5163 = vmatprep.subr.mxu0 0.0
        %5164 = vmatpush1.msra.mxu0 0.0
        %5165 = vmatprep.subr.mxu0 0.0
        %5166 = vmatpush1.msra.mxu0 0.0
        %5167 = vmatprep.subr.mxu0 0.0
        %v5168 = vand.u32 %v168, 4294901760
        %v5169 = vsub.f32 %v168, %v5168
        %v5170 = vand.u32 %v5169, 4294901760
        %v5171 = vsub.f32 %v5169, %v5170
        %v5172 = vand.u32 %v5171, 4294901760
        %5173 = vmatpush1.msra.mxu0 %v5172
        %5174 = vmatprep.subr.mxu0 0.0
        %v5175 = vand.u32 %v167, 4294901760
        %v5176 = vsub.f32 %v167, %v5175
        %v5177 = vand.u32 %v5176, 4294901760
        %v5178 = vsub.f32 %v5176, %v5177
        %v5179 = vand.u32 %v5178, 4294901760
        %5180 = vmatpush1.msra.mxu0 %v5179
        %5181 = vmatprep.subr.mxu0 0.0
        %5182 = vmatpush2.msra.mxu0 0.0
        %5183 = vmatprep.subr.mxu0 0.0
        %5184 = vmatpush2.msra.mxu0 0.0
        %5185 = vmatprep.subr.mxu0 0.0
        %5186 = vmatpush2.msra.mxu0 0.0
        %5187 = vmatprep.subr.mxu0 0.0
        %5188 = vmatpush2.msra.mxu0 0.0
        %5189 = vmatprep.subr.mxu0 0.0
        %5190 = vmatpush2.msra.mxu0 0.0
        %5191 = vmatprep.subr.mxu0 0.0
        %5192 = vmatpush2.msra.mxu0 0.0
        %5193 = vmatprep.subr.mxu0 0.0
        %5194 = vmatpush2.msra.mxu0 0.0
        %5195 = vmatprep.subr.mxu0 0.0
        %5196 = vmatpush2.msra.mxu0 0.0
        %5197 = vmatprep.subr.mxu0 0.0
        %5198 = vmatpush2.msra.mxu0 0.0
        %5199 = vmatprep.subr.mxu0 0.0
        %5200 = vmatpush2.msra.mxu0 0.0
        %5201 = vmatprep.subr.mxu0 0.0
        %5202 = vmatpush2.msra.mxu0 0.0
        %5203 = vmatprep.subr.mxu0 0.0
        %5204 = vmatpush2.msra.mxu0 0.0
        %5205 = vmatprep.subr.mxu0 0.0
        %5206 = vmatpush2.msra.mxu0 0.0
        %5207 = vmatprep.subr.mxu0 0.0
        %5208 = vmatpush2.msra.mxu0 0.0
        %5209 = vmatprep.subr.mxu0 0.0
        %5210 = vmatpush2.msra.mxu0 0.0
        %5211 = vmatprep.subr.mxu0 0.0
        %5212 = vmatpush2.msra.mxu0 0.0
        %5213 = vmatprep.mubr.f32.mxu0 0.0
        %v5214 = vand.u32 %v5047, 4294901760
        %5215 = vmatmul.mubr.f32.gmra.mxu0 %v5214
        %v5216 = vpop.f32.mrf.mxu0
        %v5217 = vadd.f32 %v5126, %v5216
        %v5218 = vpop.f32.mrf.mxu0
        %5219 = vmatprep.mubr.f32.mxu0 0.0
        %v5220 = vand.u32 %v5050, 4294901760
        %5221 = vmatmul.mubr.f32.gmra.mxu0 %v5220
        %v5222 = vpop.f32.mrf.mxu0
        %v5223 = vadd.f32 %v5136, %v5222
        %v5224 = vpop.f32.mrf.mxu0
        %5225 = vdwg.mxu0
        %5226 = vmatprep.subr.mxu0 0.0
        %5227 = vmatpush1.msra.mxu0 0.0
        %5228 = vmatprep.subr.mxu0 0.0
        %5229 = vmatpush1.msra.mxu0 0.0
        %5230 = vmatprep.subr.mxu0 0.0
        %5231 = vmatpush1.msra.mxu0 0.0
        %5232 = vmatprep.subr.mxu0 0.0
        %5233 = vmatpush1.msra.mxu0 0.0
        %5234 = vmatprep.subr.mxu0 0.0
        %5235 = vmatpush1.msra.mxu0 0.0
        %5236 = vmatprep.subr.mxu0 0.0
        %5237 = vmatpush1.msra.mxu0 0.0
        %5238 = vmatprep.subr.mxu0 0.0
        %5239 = vmatpush1.msra.mxu0 0.0
        %5240 = vmatprep.subr.mxu0 0.0
        %5241 = vmatpush1.msra.mxu0 0.0
        %5242 = vmatprep.subr.mxu0 0.0
        %5243 = vmatpush1.msra.mxu0 0.0
        %5244 = vmatprep.subr.mxu0 0.0
        %5245 = vmatpush1.msra.mxu0 0.0
        %5246 = vmatprep.subr.mxu0 0.0
        %5247 = vmatpush1.msra.mxu0 0.0
        %5248 = vmatprep.subr.mxu0 0.0
        %5249 = vmatpush1.msra.mxu0 0.0
        %5250 = vmatprep.subr.mxu0 0.0
        %5251 = vmatpush1.msra.mxu0 0.0
        %5252 = vmatprep.subr.mxu0 0.0
        %5253 = vmatpush1.msra.mxu0 0.0
        %5254 = vmatprep.subr.mxu0 0.0
        %v5255 = vand.u32 %v168, 4294901760
        %v5256 = vsub.f32 %v168, %v5255
        %5257 = vmatpush1.msra.mxu0 %v5256
        %5258 = vmatprep.subr.mxu0 0.0
        %v5259 = vand.u32 %v167, 4294901760
        %v5260 = vsub.f32 %v167, %v5259
        %5261 = vmatpush1.msra.mxu0 %v5260
        %5262 = vmatprep.subr.mxu0 0.0
        %5263 = vmatpush2.msra.mxu0 0.0
        %5264 = vmatprep.subr.mxu0 0.0
        %5265 = vmatpush2.msra.mxu0 0.0
        %5266 = vmatprep.subr.mxu0 0.0
        %5267 = vmatpush2.msra.mxu0 0.0
        %5268 = vmatprep.subr.mxu0 0.0
        %5269 = vmatpush2.msra.mxu0 0.0
        %5270 = vmatprep.subr.mxu0 0.0
        %5271 = vmatpush2.msra.mxu0 0.0
        %5272 = vmatprep.subr.mxu0 0.0
        %5273 = vmatpush2.msra.mxu0 0.0
        %5274 = vmatprep.subr.mxu0 0.0
        %5275 = vmatpush2.msra.mxu0 0.0
        %5276 = vmatprep.subr.mxu0 0.0
        %5277 = vmatpush2.msra.mxu0 0.0
        %5278 = vmatprep.subr.mxu0 0.0
        %5279 = vmatpush2.msra.mxu0 0.0
        %5280 = vmatprep.subr.mxu0 0.0
        %5281 = vmatpush2.msra.mxu0 0.0
        %5282 = vmatprep.subr.mxu0 0.0
        %5283 = vmatpush2.msra.mxu0 0.0
        %5284 = vmatprep.subr.mxu0 0.0
        %5285 = vmatpush2.msra.mxu0 0.0
        %5286 = vmatprep.subr.mxu0 0.0
        %5287 = vmatpush2.msra.mxu0 0.0
        %5288 = vmatprep.subr.mxu0 0.0
        %5289 = vmatpush2.msra.mxu0 0.0
        %5290 = vmatprep.subr.mxu0 0.0
        %5291 = vmatpush2.msra.mxu0 0.0
        %5292 = vmatprep.subr.mxu0 0.0
        %5293 = vmatpush2.msra.mxu0 0.0
        %5294 = vmatprep.mubr.f32.mxu0 0.0
        %v5295 = vand.u32 %v5047, 4294901760
        %v5296 = vsub.f32 %v5047, %v5295
        %5297 = vmatmul.mubr.f32.gmra.mxu0 %v5296
        %v5298 = vpop.f32.mrf.mxu0
        %v5299 = vadd.f32 %v5217, %v5298
        %v5300 = vpop.f32.mrf.mxu0
        %5301 = vmatprep.mubr.f32.mxu0 0.0
        %v5302 = vand.u32 %v5050, 4294901760
        %v5303 = vsub.f32 %v5050, %v5302
        %5304 = vmatmul.mubr.f32.gmra.mxu0 %v5303
        %v5305 = vpop.f32.mrf.mxu0
        %v5306 = vadd.f32 %v5223, %v5305
        %v5307 = vpop.f32.mrf.mxu0
        %5308 = vdwg.mxu0
        %5309 = vmatprep.subr.mxu0 0.0
        %5310 = vmatpush1.msra.mxu0 0.0
        %5311 = vmatprep.subr.mxu0 0.0
        %5312 = vmatpush1.msra.mxu0 0.0
        %5313 = vmatprep.subr.mxu0 0.0
        %5314 = vmatpush1.msra.mxu0 0.0
        %5315 = vmatprep.subr.mxu0 0.0
        %5316 = vmatpush1.msra.mxu0 0.0
        %5317 = vmatprep.subr.mxu0 0.0
        %5318 = vmatpush1.msra.mxu0 0.0
        %5319 = vmatprep.subr.mxu0 0.0
        %5320 = vmatpush1.msra.mxu0 0.0
        %5321 = vmatprep.subr.mxu0 0.0
        %5322 = vmatpush1.msra.mxu0 0.0
        %5323 = vmatprep.subr.mxu0 0.0
        %5324 = vmatpush1.msra.mxu0 0.0
        %5325 = vmatprep.subr.mxu0 0.0
        %5326 = vmatpush1.msra.mxu0 0.0
        %5327 = vmatprep.subr.mxu0 0.0
        %5328 = vmatpush1.msra.mxu0 0.0
        %5329 = vmatprep.subr.mxu0 0.0
        %5330 = vmatpush1.msra.mxu0 0.0
        %5331 = vmatprep.subr.mxu0 0.0
        %5332 = vmatpush1.msra.mxu0 0.0
        %5333 = vmatprep.subr.mxu0 0.0
        %5334 = vmatpush1.msra.mxu0 0.0
        %5335 = vmatprep.subr.mxu0 0.0
        %5336 = vmatpush1.msra.mxu0 0.0
        %5337 = vmatprep.subr.mxu0 0.0
        %v5338 = vand.u32 %v168, 4294901760
        %5339 = vmatpush1.msra.mxu0 %v5338
        %5340 = vmatprep.subr.mxu0 0.0
        %v5341 = vand.u32 %v167, 4294901760
        %5342 = vmatpush1.msra.mxu0 %v5341
        %5343 = vmatprep.subr.mxu0 0.0
        %5344 = vmatpush2.msra.mxu0 0.0
        %5345 = vmatprep.subr.mxu0 0.0
        %5346 = vmatpush2.msra.mxu0 0.0
        %5347 = vmatprep.subr.mxu0 0.0
        %5348 = vmatpush2.msra.mxu0 0.0
        %5349 = vmatprep.subr.mxu0 0.0
        %5350 = vmatpush2.msra.mxu0 0.0
        %5351 = vmatprep.subr.mxu0 0.0
        %5352 = vmatpush2.msra.mxu0 0.0
        %5353 = vmatprep.subr.mxu0 0.0
        %5354 = vmatpush2.msra.mxu0 0.0
        %5355 = vmatprep.subr.mxu0 0.0
        %5356 = vmatpush2.msra.mxu0 0.0
        %5357 = vmatprep.subr.mxu0 0.0
        %5358 = vmatpush2.msra.mxu0 0.0
        %5359 = vmatprep.subr.mxu0 0.0
        %5360 = vmatpush2.msra.mxu0 0.0
        %5361 = vmatprep.subr.mxu0 0.0
        %5362 = vmatpush2.msra.mxu0 0.0
        %5363 = vmatprep.subr.mxu0 0.0
        %5364 = vmatpush2.msra.mxu0 0.0
        %5365 = vmatprep.subr.mxu0 0.0
        %5366 = vmatpush2.msra.mxu0 0.0
        %5367 = vmatprep.subr.mxu0 0.0
        %5368 = vmatpush2.msra.mxu0 0.0
        %5369 = vmatprep.subr.mxu0 0.0
        %5370 = vmatpush2.msra.mxu0 0.0
        %5371 = vmatprep.subr.mxu0 0.0
        %5372 = vmatpush2.msra.mxu0 0.0
        %5373 = vmatprep.subr.mxu0 0.0
        %5374 = vmatpush2.msra.mxu0 0.0
        %5375 = vmatprep.mubr.f32.mxu0 0.0
        %v5376 = vand.u32 %v5047, 4294901760
        %v5377 = vsub.f32 %v5047, %v5376
        %v5378 = vand.u32 %v5377, 4294901760
        %5379 = vmatmul.mubr.f32.gmra.mxu0 %v5378
        %v5380 = vpop.f32.mrf.mxu0
        %v5381 = vadd.f32 %v5299, %v5380
        %v5382 = vpop.f32.mrf.mxu0
        %5383 = vmatprep.mubr.f32.mxu0 0.0
        %v5384 = vand.u32 %v5050, 4294901760
        %v5385 = vsub.f32 %v5050, %v5384
        %v5386 = vand.u32 %v5385, 4294901760
        %5387 = vmatmul.mubr.f32.gmra.mxu0 %v5386
        %v5388 = vpop.f32.mrf.mxu0
        %v5389 = vadd.f32 %v5306, %v5388
        %v5390 = vpop.f32.mrf.mxu0
        %5391 = vdwg.mxu0
        %5392 = vmatprep.subr.mxu0 0.0
        %5393 = vmatpush1.msra.mxu0 0.0
        %5394 = vmatprep.subr.mxu0 0.0
        %5395 = vmatpush1.msra.mxu0 0.0
        %5396 = vmatprep.subr.mxu0 0.0
        %5397 = vmatpush1.msra.mxu0 0.0
        %5398 = vmatprep.subr.mxu0 0.0
        %5399 = vmatpush1.msra.mxu0 0.0
        %5400 = vmatprep.subr.mxu0 0.0
        %5401 = vmatpush1.msra.mxu0 0.0
        %5402 = vmatprep.subr.mxu0 0.0
        %5403 = vmatpush1.msra.mxu0 0.0
        %5404 = vmatprep.subr.mxu0 0.0
        %5405 = vmatpush1.msra.mxu0 0.0
        %5406 = vmatprep.subr.mxu0 0.0
        %5407 = vmatpush1.msra.mxu0 0.0
        %5408 = vmatprep.subr.mxu0 0.0
        %5409 = vmatpush1.msra.mxu0 0.0
        %5410 = vmatprep.subr.mxu0 0.0
        %5411 = vmatpush1.msra.mxu0 0.0
        %5412 = vmatprep.subr.mxu0 0.0
        %5413 = vmatpush1.msra.mxu0 0.0
        %5414 = vmatprep.subr.mxu0 0.0
        %5415 = vmatpush1.msra.mxu0 0.0
        %5416 = vmatprep.subr.mxu0 0.0
        %5417 = vmatpush1.msra.mxu0 0.0
        %5418 = vmatprep.subr.mxu0 0.0
        %5419 = vmatpush1.msra.mxu0 0.0
        %5420 = vmatprep.subr.mxu0 0.0
        %v5421 = vand.u32 %v168, 4294901760
        %v5422 = vsub.f32 %v168, %v5421
        %v5423 = vand.u32 %v5422, 4294901760
        %5424 = vmatpush1.msra.mxu0 %v5423
        %5425 = vmatprep.subr.mxu0 0.0
        %v5426 = vand.u32 %v167, 4294901760
        %v5427 = vsub.f32 %v167, %v5426
        %v5428 = vand.u32 %v5427, 4294901760
        %5429 = vmatpush1.msra.mxu0 %v5428
        %5430 = vmatprep.subr.mxu0 0.0
        %5431 = vmatpush2.msra.mxu0 0.0
        %5432 = vmatprep.subr.mxu0 0.0
        %5433 = vmatpush2.msra.mxu0 0.0
        %5434 = vmatprep.subr.mxu0 0.0
        %5435 = vmatpush2.msra.mxu0 0.0
        %5436 = vmatprep.subr.mxu0 0.0
        %5437 = vmatpush2.msra.mxu0 0.0
        %5438 = vmatprep.subr.mxu0 0.0
        %5439 = vmatpush2.msra.mxu0 0.0
        %5440 = vmatprep.subr.mxu0 0.0
        %5441 = vmatpush2.msra.mxu0 0.0
        %5442 = vmatprep.subr.mxu0 0.0
        %5443 = vmatpush2.msra.mxu0 0.0
        %5444 = vmatprep.subr.mxu0 0.0
        %5445 = vmatpush2.msra.mxu0 0.0
        %5446 = vmatprep.subr.mxu0 0.0
        %5447 = vmatpush2.msra.mxu0 0.0
        %5448 = vmatprep.subr.mxu0 0.0
        %5449 = vmatpush2.msra.mxu0 0.0
        %5450 = vmatprep.subr.mxu0 0.0
        %5451 = vmatpush2.msra.mxu0 0.0
        %5452 = vmatprep.subr.mxu0 0.0
        %5453 = vmatpush2.msra.mxu0 0.0
        %5454 = vmatprep.subr.mxu0 0.0
        %5455 = vmatpush2.msra.mxu0 0.0
        %5456 = vmatprep.subr.mxu0 0.0
        %5457 = vmatpush2.msra.mxu0 0.0
        %5458 = vmatprep.subr.mxu0 0.0
        %5459 = vmatpush2.msra.mxu0 0.0
        %5460 = vmatprep.subr.mxu0 0.0
        %5461 = vmatpush2.msra.mxu0 0.0
        %5462 = vmatprep.mubr.f32.mxu0 0.0
        %v5463 = vand.u32 %v5047, 4294901760
        %5464 = vmatmul.mubr.f32.gmra.mxu0 %v5463
        %v5465 = vpop.f32.mrf.mxu0
        %v5466 = vadd.f32 %v5381, %v5465
        %v5467 = vpop.f32.mrf.mxu0
        %5468 = vmatprep.mubr.f32.mxu0 0.0
        %v5469 = vand.u32 %v5050, 4294901760
        %5470 = vmatmul.mubr.f32.gmra.mxu0 %v5469
        %v5471 = vpop.f32.mrf.mxu0
        %v5472 = vadd.f32 %v5389, %v5471
        %v5473 = vpop.f32.mrf.mxu0
        %5474 = vdwg.mxu0
        %5475 = vmatprep.subr.mxu0 0.0
        %5476 = vmatpush1.msra.mxu0 0.0
        %5477 = vmatprep.subr.mxu0 0.0
        %5478 = vmatpush1.msra.mxu0 0.0
        %5479 = vmatprep.subr.mxu0 0.0
        %5480 = vmatpush1.msra.mxu0 0.0
        %5481 = vmatprep.subr.mxu0 0.0
        %5482 = vmatpush1.msra.mxu0 0.0
        %5483 = vmatprep.subr.mxu0 0.0
        %5484 = vmatpush1.msra.mxu0 0.0
        %5485 = vmatprep.subr.mxu0 0.0
        %5486 = vmatpush1.msra.mxu0 0.0
        %5487 = vmatprep.subr.mxu0 0.0
        %5488 = vmatpush1.msra.mxu0 0.0
        %5489 = vmatprep.subr.mxu0 0.0
        %5490 = vmatpush1.msra.mxu0 0.0
        %5491 = vmatprep.subr.mxu0 0.0
        %5492 = vmatpush1.msra.mxu0 0.0
        %5493 = vmatprep.subr.mxu0 0.0
        %5494 = vmatpush1.msra.mxu0 0.0
        %5495 = vmatprep.subr.mxu0 0.0
        %5496 = vmatpush1.msra.mxu0 0.0
        %5497 = vmatprep.subr.mxu0 0.0
        %5498 = vmatpush1.msra.mxu0 0.0
        %5499 = vmatprep.subr.mxu0 0.0
        %5500 = vmatpush1.msra.mxu0 0.0
        %5501 = vmatprep.subr.mxu0 0.0
        %5502 = vmatpush1.msra.mxu0 0.0
        %5503 = vmatprep.subr.mxu0 0.0
        %v5504 = vand.u32 %v168, 4294901760
        %5505 = vmatpush1.msra.mxu0 %v5504
        %5506 = vmatprep.subr.mxu0 0.0
        %v5507 = vand.u32 %v167, 4294901760
        %5508 = vmatpush1.msra.mxu0 %v5507
        %5509 = vmatprep.subr.mxu0 0.0
        %5510 = vmatpush2.msra.mxu0 0.0
        %5511 = vmatprep.subr.mxu0 0.0
        %5512 = vmatpush2.msra.mxu0 0.0
        %5513 = vmatprep.subr.mxu0 0.0
        %5514 = vmatpush2.msra.mxu0 0.0
        %5515 = vmatprep.subr.mxu0 0.0
        %5516 = vmatpush2.msra.mxu0 0.0
        %5517 = vmatprep.subr.mxu0 0.0
        %5518 = vmatpush2.msra.mxu0 0.0
        %5519 = vmatprep.subr.mxu0 0.0
        %5520 = vmatpush2.msra.mxu0 0.0
        %5521 = vmatprep.subr.mxu0 0.0
        %5522 = vmatpush2.msra.mxu0 0.0
        %5523 = vmatprep.subr.mxu0 0.0
        %5524 = vmatpush2.msra.mxu0 0.0
        %5525 = vmatprep.subr.mxu0 0.0
        %5526 = vmatpush2.msra.mxu0 0.0
        %5527 = vmatprep.subr.mxu0 0.0
        %5528 = vmatpush2.msra.mxu0 0.0
        %5529 = vmatprep.subr.mxu0 0.0
        %5530 = vmatpush2.msra.mxu0 0.0
        %5531 = vmatprep.subr.mxu0 0.0
        %5532 = vmatpush2.msra.mxu0 0.0
        %5533 = vmatprep.subr.mxu0 0.0
        %5534 = vmatpush2.msra.mxu0 0.0
        %5535 = vmatprep.subr.mxu0 0.0
        %5536 = vmatpush2.msra.mxu0 0.0
        %5537 = vmatprep.subr.mxu0 0.0
        %5538 = vmatpush2.msra.mxu0 0.0
        %5539 = vmatprep.subr.mxu0 0.0
        %5540 = vmatpush2.msra.mxu0 0.0
        %5541 = vmatprep.mubr.f32.mxu0 0.0
        %v5542 = vand.u32 %v5047, 4294901760
        %5543 = vmatmul.mubr.f32.gmra.mxu0 %v5542
        %v5544 = vpop.f32.mrf.mxu0
        %v5545 = vadd.f32 %v5466, %v5544
        %v5546 = vpop.f32.mrf.mxu0
        %5547 = vmatprep.mubr.f32.mxu0 0.0
        %v5548 = vand.u32 %v5050, 4294901760
        %5549 = vmatmul.mubr.f32.gmra.mxu0 %v5548
        %v5550 = vpop.f32.mrf.mxu0
        %v5551 = vadd.f32 %v5472, %v5550
        %v5552 = vpop.f32.mrf.mxu0
        %5553 = vdwg.mxu0
        %5554 = vmatprep.subr.mxu0 0.0
        %5555 = vmatpush1.msra.mxu0 0.0
        %5556 = vmatprep.subr.mxu0 0.0
        %5557 = vmatpush1.msra.mxu0 0.0
        %5558 = vmatprep.subr.mxu0 0.0
        %5559 = vmatpush1.msra.mxu0 0.0
        %5560 = vmatprep.subr.mxu0 0.0
        %5561 = vmatpush1.msra.mxu0 0.0
        %5562 = vmatprep.subr.mxu0 0.0
        %5563 = vmatpush1.msra.mxu0 0.0
        %5564 = vmatprep.subr.mxu0 0.0
        %5565 = vmatpush1.msra.mxu0 0.0
        %5566 = vmatprep.subr.mxu0 0.0
        %5567 = vmatpush1.msra.mxu0 0.0
        %5568 = vmatprep.subr.mxu0 0.0
        %5569 = vmatpush1.msra.mxu0 0.0
        %5570 = vmatprep.subr.mxu0 0.0
        %5571 = vmatpush1.msra.mxu0 0.0
        %5572 = vmatprep.subr.mxu0 0.0
        %5573 = vmatpush1.msra.mxu0 0.0
        %5574 = vmatprep.subr.mxu0 0.0
        %5575 = vmatpush1.msra.mxu0 0.0
        %5576 = vmatprep.subr.mxu0 0.0
        %5577 = vmatpush1.msra.mxu0 0.0
        %5578 = vmatprep.subr.mxu0 0.0
        %5579 = vmatpush1.msra.mxu0 0.0
        %5580 = vmatprep.subr.mxu0 0.0
        %5581 = vmatpush1.msra.mxu0 0.0
        %5582 = vmatprep.subr.mxu0 0.0
        %v5583 = vand.u32 %v5551, 4294901760
        %5584 = vmatpush1.msra.mxu0 %v5583
        %5585 = vmatprep.subr.mxu0 0.0
        %v5586 = vand.u32 %v5545, 4294901760
        %5587 = vmatpush1.msra.mxu0 %v5586
        %5588 = vmatprep.subr.mxu0 0.0
        %5589 = vmatpush2.msra.mxu0 0.0
        %5590 = vmatprep.subr.mxu0 0.0
        %5591 = vmatpush2.msra.mxu0 0.0
        %5592 = vmatprep.subr.mxu0 0.0
        %5593 = vmatpush2.msra.mxu0 0.0
        %5594 = vmatprep.subr.mxu0 0.0
        %5595 = vmatpush2.msra.mxu0 0.0
        %5596 = vmatprep.subr.mxu0 0.0
        %5597 = vmatpush2.msra.mxu0 0.0
        %5598 = vmatprep.subr.mxu0 0.0
        %5599 = vmatpush2.msra.mxu0 0.0
        %5600 = vmatprep.subr.mxu0 0.0
        %5601 = vmatpush2.msra.mxu0 0.0
        %5602 = vmatprep.subr.mxu0 0.0
        %5603 = vmatpush2.msra.mxu0 0.0
        %5604 = vmatprep.subr.mxu0 0.0
        %5605 = vmatpush2.msra.mxu0 0.0
        %5606 = vmatprep.subr.mxu0 0.0
        %5607 = vmatpush2.msra.mxu0 0.0
        %5608 = vmatprep.subr.mxu0 0.0
        %5609 = vmatpush2.msra.mxu0 0.0
        %5610 = vmatprep.subr.mxu0 0.0
        %5611 = vmatpush2.msra.mxu0 0.0
        %5612 = vmatprep.subr.mxu0 0.0
        %5613 = vmatpush2.msra.mxu0 0.0
        %5614 = vmatprep.subr.mxu0 0.0
        %5615 = vmatpush2.msra.mxu0 0.0
        %5616 = vmatprep.subr.mxu0 0.0
        %5617 = vmatpush2.msra.mxu0 0.0
        %5618 = vmatprep.subr.mxu0 0.0
        %5619 = vmatpush2.msra.mxu0 0.0
        %5620 = vmatprep.mubr.f32.mxu0 0.0
        %v5621 = vand.u32 %v2278, 4294901760
        %v5622 = vsub.f32 %v2278, %v5621
        %v5623 = vand.u32 %v5622, 4294901760
        %v5624 = vsub.f32 %v5622, %v5623
        %v5625 = vand.u32 %v5624, 4294901760
        %5626 = vmatmul.mubr.f32.gmra.mxu0 %v5625
        %v5627 = vpop.f32.mrf.mxu0
        %v5628 = vadd.f32 0.0, %v5627
        %v5629 = vpop.f32.mrf.mxu0
        %5630 = vmatprep.mubr.f32.mxu0 0.0
        %v5631 = vand.u32 %v2281, 4294901760
        %v5632 = vsub.f32 %v2281, %v5631
        %v5633 = vand.u32 %v5632, 4294901760
        %v5634 = vsub.f32 %v5632, %v5633
        %v5635 = vand.u32 %v5634, 4294901760
        %5636 = vmatmul.mubr.f32.gmra.mxu0 %v5635
        %v5637 = vpop.f32.mrf.mxu0
        %v5638 = vadd.f32 0.0, %v5637
        %v5639 = vpop.f32.mrf.mxu0
        %5640 = vmatprep.mubr.f32.mxu0 0.0
        %v5641 = vand.u32 %v2284, 4294901760
        %v5642 = vsub.f32 %v2284, %v5641
        %v5643 = vand.u32 %v5642, 4294901760
        %v5644 = vsub.f32 %v5642, %v5643
        %v5645 = vand.u32 %v5644, 4294901760
        %5646 = vmatmul.mubr.f32.gmra.mxu0 %v5645
        %v5647 = vpop.f32.mrf.mxu0
        %v5648 = vadd.f32 0.0, %v5647
        %v5649 = vpop.f32.mrf.mxu0
        %5650 = vmatprep.mubr.f32.mxu0 0.0
        %v5651 = vand.u32 %v2287, 4294901760
        %v5652 = vsub.f32 %v2287, %v5651
        %v5653 = vand.u32 %v5652, 4294901760
        %v5654 = vsub.f32 %v5652, %v5653
        %v5655 = vand.u32 %v5654, 4294901760
        %5656 = vmatmul.mubr.f32.gmra.mxu0 %v5655
        %v5657 = vpop.f32.mrf.mxu0
        %v5658 = vadd.f32 0.0, %v5657
        %v5659 = vpop.f32.mrf.mxu0
        %5660 = vdwg.mxu0
        %5661 = vmatprep.subr.mxu0 0.0
        %5662 = vmatpush1.msra.mxu0 0.0
        %5663 = vmatprep.subr.mxu0 0.0
        %5664 = vmatpush1.msra.mxu0 0.0
        %5665 = vmatprep.subr.mxu0 0.0
        %5666 = vmatpush1.msra.mxu0 0.0
        %5667 = vmatprep.subr.mxu0 0.0
        %5668 = vmatpush1.msra.mxu0 0.0
        %5669 = vmatprep.subr.mxu0 0.0
        %5670 = vmatpush1.msra.mxu0 0.0
        %5671 = vmatprep.subr.mxu0 0.0
        %5672 = vmatpush1.msra.mxu0 0.0
        %5673 = vmatprep.subr.mxu0 0.0
        %5674 = vmatpush1.msra.mxu0 0.0
        %5675 = vmatprep.subr.mxu0 0.0
        %5676 = vmatpush1.msra.mxu0 0.0
        %5677 = vmatprep.subr.mxu0 0.0
        %5678 = vmatpush1.msra.mxu0 0.0
        %5679 = vmatprep.subr.mxu0 0.0
        %5680 = vmatpush1.msra.mxu0 0.0
        %5681 = vmatprep.subr.mxu0 0.0
        %5682 = vmatpush1.msra.mxu0 0.0
        %5683 = vmatprep.subr.mxu0 0.0
        %5684 = vmatpush1.msra.mxu0 0.0
        %5685 = vmatprep.subr.mxu0 0.0
        %5686 = vmatpush1.msra.mxu0 0.0
        %5687 = vmatprep.subr.mxu0 0.0
        %5688 = vmatpush1.msra.mxu0 0.0
        %5689 = vmatprep.subr.mxu0 0.0
        %v5690 = vand.u32 %v5551, 4294901760
        %v5691 = vsub.f32 %v5551, %v5690
        %v5692 = vand.u32 %v5691, 4294901760
        %v5693 = vsub.f32 %v5691, %v5692
        %v5694 = vand.u32 %v5693, 4294901760
        %5695 = vmatpush1.msra.mxu0 %v5694
        %5696 = vmatprep.subr.mxu0 0.0
        %v5697 = vand.u32 %v5545, 4294901760
        %v5698 = vsub.f32 %v5545, %v5697
        %v5699 = vand.u32 %v5698, 4294901760
        %v5700 = vsub.f32 %v5698, %v5699
        %v5701 = vand.u32 %v5700, 4294901760
        %5702 = vmatpush1.msra.mxu0 %v5701
        %5703 = vmatprep.subr.mxu0 0.0
        %5704 = vmatpush2.msra.mxu0 0.0
        %5705 = vmatprep.subr.mxu0 0.0
        %5706 = vmatpush2.msra.mxu0 0.0
        %5707 = vmatprep.subr.mxu0 0.0
        %5708 = vmatpush2.msra.mxu0 0.0
        %5709 = vmatprep.subr.mxu0 0.0
        %5710 = vmatpush2.msra.mxu0 0.0
        %5711 = vmatprep.subr.mxu0 0.0
        %5712 = vmatpush2.msra.mxu0 0.0
        %5713 = vmatprep.subr.mxu0 0.0
        %5714 = vmatpush2.msra.mxu0 0.0
        %5715 = vmatprep.subr.mxu0 0.0
        %5716 = vmatpush2.msra.mxu0 0.0
        %5717 = vmatprep.subr.mxu0 0.0
        %5718 = vmatpush2.msra.mxu0 0.0
        %5719 = vmatprep.subr.mxu0 0.0
        %5720 = vmatpush2.msra.mxu0 0.0
        %5721 = vmatprep.subr.mxu0 0.0
        %5722 = vmatpush2.msra.mxu0 0.0
        %5723 = vmatprep.subr.mxu0 0.0
        %5724 = vmatpush2.msra.mxu0 0.0
        %5725 = vmatprep.subr.mxu0 0.0
        %5726 = vmatpush2.msra.mxu0 0.0
        %5727 = vmatprep.subr.mxu0 0.0
        %5728 = vmatpush2.msra.mxu0 0.0
        %5729 = vmatprep.subr.mxu0 0.0
        %5730 = vmatpush2.msra.mxu0 0.0
        %5731 = vmatprep.subr.mxu0 0.0
        %5732 = vmatpush2.msra.mxu0 0.0
        %5733 = vmatprep.subr.mxu0 0.0
        %5734 = vmatpush2.msra.mxu0 0.0
        %5735 = vmatprep.mubr.f32.mxu0 0.0
        %v5736 = vand.u32 %v2278, 4294901760
        %5737 = vmatmul.mubr.f32.gmra.mxu0 %v5736
        %v5738 = vpop.f32.mrf.mxu0
        %v5739 = vadd.f32 %v5628, %v5738
        %v5740 = vpop.f32.mrf.mxu0
        %5741 = vmatprep.mubr.f32.mxu0 0.0
        %v5742 = vand.u32 %v2281, 4294901760
        %5743 = vmatmul.mubr.f32.gmra.mxu0 %v5742
        %v5744 = vpop.f32.mrf.mxu0
        %v5745 = vadd.f32 %v5638, %v5744
        %v5746 = vpop.f32.mrf.mxu0
        %5747 = vmatprep.mubr.f32.mxu0 0.0
        %v5748 = vand.u32 %v2284, 4294901760
        %5749 = vmatmul.mubr.f32.gmra.mxu0 %v5748
        %v5750 = vpop.f32.mrf.mxu0
        %v5751 = vadd.f32 %v5648, %v5750
        %v5752 = vpop.f32.mrf.mxu0
        %5753 = vmatprep.mubr.f32.mxu0 0.0
        %v5754 = vand.u32 %v2287, 4294901760
        %5755 = vmatmul.mubr.f32.gmra.mxu0 %v5754
        %v5756 = vpop.f32.mrf.mxu0
        %v5757 = vadd.f32 %v5658, %v5756
        %v5758 = vpop.f32.mrf.mxu0
        %5759 = vdwg.mxu0
        %5760 = vmatprep.subr.mxu0 0.0
        %5761 = vmatpush1.msra.mxu0 0.0
        %5762 = vmatprep.subr.mxu0 0.0
        %5763 = vmatpush1.msra.mxu0 0.0
        %5764 = vmatprep.subr.mxu0 0.0
        %5765 = vmatpush1.msra.mxu0 0.0
        %5766 = vmatprep.subr.mxu0 0.0
        %5767 = vmatpush1.msra.mxu0 0.0
        %5768 = vmatprep.subr.mxu0 0.0
        %5769 = vmatpush1.msra.mxu0 0.0
        %5770 = vmatprep.subr.mxu0 0.0
        %5771 = vmatpush1.msra.mxu0 0.0
        %5772 = vmatprep.subr.mxu0 0.0
        %5773 = vmatpush1.msra.mxu0 0.0
        %5774 = vmatprep.subr.mxu0 0.0
        %5775 = vmatpush1.msra.mxu0 0.0
        %5776 = vmatprep.subr.mxu0 0.0
        %5777 = vmatpush1.msra.mxu0 0.0
        %5778 = vmatprep.subr.mxu0 0.0
        %5779 = vmatpush1.msra.mxu0 0.0
        %5780 = vmatprep.subr.mxu0 0.0
        %5781 = vmatpush1.msra.mxu0 0.0
        %5782 = vmatprep.subr.mxu0 0.0
        %5783 = vmatpush1.msra.mxu0 0.0
        %5784 = vmatprep.subr.mxu0 0.0
        %5785 = vmatpush1.msra.mxu0 0.0
        %5786 = vmatprep.subr.mxu0 0.0
        %5787 = vmatpush1.msra.mxu0 0.0
        %5788 = vmatprep.subr.mxu0 0.0
        %v5789 = vand.u32 %v5551, 4294901760
        %v5790 = vsub.f32 %v5551, %v5789
        %5791 = vmatpush1.msra.mxu0 %v5790
        %5792 = vmatprep.subr.mxu0 0.0
        %v5793 = vand.u32 %v5545, 4294901760
        %v5794 = vsub.f32 %v5545, %v5793
        %5795 = vmatpush1.msra.mxu0 %v5794
        %5796 = vmatprep.subr.mxu0 0.0
        %5797 = vmatpush2.msra.mxu0 0.0
        %5798 = vmatprep.subr.mxu0 0.0
        %5799 = vmatpush2.msra.mxu0 0.0
        %5800 = vmatprep.subr.mxu0 0.0
        %5801 = vmatpush2.msra.mxu0 0.0
        %5802 = vmatprep.subr.mxu0 0.0
        %5803 = vmatpush2.msra.mxu0 0.0
        %5804 = vmatprep.subr.mxu0 0.0
        %5805 = vmatpush2.msra.mxu0 0.0
        %5806 = vmatprep.subr.mxu0 0.0
        %5807 = vmatpush2.msra.mxu0 0.0
        %5808 = vmatprep.subr.mxu0 0.0
        %5809 = vmatpush2.msra.mxu0 0.0
        %5810 = vmatprep.subr.mxu0 0.0
        %5811 = vmatpush2.msra.mxu0 0.0
        %5812 = vmatprep.subr.mxu0 0.0
        %5813 = vmatpush2.msra.mxu0 0.0
        %5814 = vmatprep.subr.mxu0 0.0
        %5815 = vmatpush2.msra.mxu0 0.0
        %5816 = vmatprep.subr.mxu0 0.0
        %5817 = vmatpush2.msra.mxu0 0.0
        %5818 = vmatprep.subr.mxu0 0.0
        %5819 = vmatpush2.msra.mxu0 0.0
        %5820 = vmatprep.subr.mxu0 0.0
        %5821 = vmatpush2.msra.mxu0 0.0
        %5822 = vmatprep.subr.mxu0 0.0
        %5823 = vmatpush2.msra.mxu0 0.0
        %5824 = vmatprep.subr.mxu0 0.0
        %5825 = vmatpush2.msra.mxu0 0.0
        %5826 = vmatprep.subr.mxu0 0.0
        %5827 = vmatpush2.msra.mxu0 0.0
        %5828 = vmatprep.mubr.f32.mxu0 0.0
        %v5829 = vand.u32 %v2278, 4294901760
        %v5830 = vsub.f32 %v2278, %v5829
        %5831 = vmatmul.mubr.f32.gmra.mxu0 %v5830
        %v5832 = vpop.f32.mrf.mxu0
        %v5833 = vadd.f32 %v5739, %v5832
        %v5834 = vpop.f32.mrf.mxu0
        %5835 = vmatprep.mubr.f32.mxu0 0.0
        %v5836 = vand.u32 %v2281, 4294901760
        %v5837 = vsub.f32 %v2281, %v5836
        %5838 = vmatmul.mubr.f32.gmra.mxu0 %v5837
        %v5839 = vpop.f32.mrf.mxu0
        %v5840 = vadd.f32 %v5745, %v5839
        %v5841 = vpop.f32.mrf.mxu0
        %5842 = vmatprep.mubr.f32.mxu0 0.0
        %v5843 = vand.u32 %v2284, 4294901760
        %v5844 = vsub.f32 %v2284, %v5843
        %5845 = vmatmul.mubr.f32.gmra.mxu0 %v5844
        %v5846 = vpop.f32.mrf.mxu0
        %v5847 = vadd.f32 %v5751, %v5846
        %v5848 = vpop.f32.mrf.mxu0
        %5849 = vmatprep.mubr.f32.mxu0 0.0
        %v5850 = vand.u32 %v2287, 4294901760
        %v5851 = vsub.f32 %v2287, %v5850
        %5852 = vmatmul.mubr.f32.gmra.mxu0 %v5851
        %v5853 = vpop.f32.mrf.mxu0
        %v5854 = vadd.f32 %v5757, %v5853
        %v5855 = vpop.f32.mrf.mxu0
        %5856 = vdwg.mxu0
        %5857 = vmatprep.subr.mxu0 0.0
        %5858 = vmatpush1.msra.mxu0 0.0
        %5859 = vmatprep.subr.mxu0 0.0
        %5860 = vmatpush1.msra.mxu0 0.0
        %5861 = vmatprep.subr.mxu0 0.0
        %5862 = vmatpush1.msra.mxu0 0.0
        %5863 = vmatprep.subr.mxu0 0.0
        %5864 = vmatpush1.msra.mxu0 0.0
        %5865 = vmatprep.subr.mxu0 0.0
        %5866 = vmatpush1.msra.mxu0 0.0
        %5867 = vmatprep.subr.mxu0 0.0
        %5868 = vmatpush1.msra.mxu0 0.0
        %5869 = vmatprep.subr.mxu0 0.0
        %5870 = vmatpush1.msra.mxu0 0.0
        %5871 = vmatprep.subr.mxu0 0.0
        %5872 = vmatpush1.msra.mxu0 0.0
        %5873 = vmatprep.subr.mxu0 0.0
        %5874 = vmatpush1.msra.mxu0 0.0
        %5875 = vmatprep.subr.mxu0 0.0
        %5876 = vmatpush1.msra.mxu0 0.0
        %5877 = vmatprep.subr.mxu0 0.0
        %5878 = vmatpush1.msra.mxu0 0.0
        %5879 = vmatprep.subr.mxu0 0.0
        %5880 = vmatpush1.msra.mxu0 0.0
        %5881 = vmatprep.subr.mxu0 0.0
        %5882 = vmatpush1.msra.mxu0 0.0
        %5883 = vmatprep.subr.mxu0 0.0
        %5884 = vmatpush1.msra.mxu0 0.0
        %5885 = vmatprep.subr.mxu0 0.0
        %v5886 = vand.u32 %v5551, 4294901760
        %5887 = vmatpush1.msra.mxu0 %v5886
        %5888 = vmatprep.subr.mxu0 0.0
        %v5889 = vand.u32 %v5545, 4294901760
        %5890 = vmatpush1.msra.mxu0 %v5889
        %5891 = vmatprep.subr.mxu0 0.0
        %5892 = vmatpush2.msra.mxu0 0.0
        %5893 = vmatprep.subr.mxu0 0.0
        %5894 = vmatpush2.msra.mxu0 0.0
        %5895 = vmatprep.subr.mxu0 0.0
        %5896 = vmatpush2.msra.mxu0 0.0
        %5897 = vmatprep.subr.mxu0 0.0
        %5898 = vmatpush2.msra.mxu0 0.0
        %5899 = vmatprep.subr.mxu0 0.0
        %5900 = vmatpush2.msra.mxu0 0.0
        %5901 = vmatprep.subr.mxu0 0.0
        %5902 = vmatpush2.msra.mxu0 0.0
        %5903 = vmatprep.subr.mxu0 0.0
        %5904 = vmatpush2.msra.mxu0 0.0
        %5905 = vmatprep.subr.mxu0 0.0
        %5906 = vmatpush2.msra.mxu0 0.0
        %5907 = vmatprep.subr.mxu0 0.0
        %5908 = vmatpush2.msra.mxu0 0.0
        %5909 = vmatprep.subr.mxu0 0.0
        %5910 = vmatpush2.msra.mxu0 0.0
        %5911 = vmatprep.subr.mxu0 0.0
        %5912 = vmatpush2.msra.mxu0 0.0
        %5913 = vmatprep.subr.mxu0 0.0
        %5914 = vmatpush2.msra.mxu0 0.0
        %5915 = vmatprep.subr.mxu0 0.0
        %5916 = vmatpush2.msra.mxu0 0.0
        %5917 = vmatprep.subr.mxu0 0.0
        %5918 = vmatpush2.msra.mxu0 0.0
        %5919 = vmatprep.subr.mxu0 0.0
        %5920 = vmatpush2.msra.mxu0 0.0
        %5921 = vmatprep.subr.mxu0 0.0
        %5922 = vmatpush2.msra.mxu0 0.0
        %5923 = vmatprep.mubr.f32.mxu0 0.0
        %v5924 = vand.u32 %v2278, 4294901760
        %v5925 = vsub.f32 %v2278, %v5924
        %v5926 = vand.u32 %v5925, 4294901760
        %5927 = vmatmul.mubr.f32.gmra.mxu0 %v5926
        %v5928 = vpop.f32.mrf.mxu0
        %v5929 = vadd.f32 %v5833, %v5928
        %v5930 = vpop.f32.mrf.mxu0
        %5931 = vmatprep.mubr.f32.mxu0 0.0
        %v5932 = vand.u32 %v2281, 4294901760
        %v5933 = vsub.f32 %v2281, %v5932
        %v5934 = vand.u32 %v5933, 4294901760
        %5935 = vmatmul.mubr.f32.gmra.mxu0 %v5934
        %v5936 = vpop.f32.mrf.mxu0
        %v5937 = vadd.f32 %v5840, %v5936
        %v5938 = vpop.f32.mrf.mxu0
        %5939 = vmatprep.mubr.f32.mxu0 0.0
        %v5940 = vand.u32 %v2284, 4294901760
        %v5941 = vsub.f32 %v2284, %v5940
        %v5942 = vand.u32 %v5941, 4294901760
        %5943 = vmatmul.mubr.f32.gmra.mxu0 %v5942
        %v5944 = vpop.f32.mrf.mxu0
        %v5945 = vadd.f32 %v5847, %v5944
        %v5946 = vpop.f32.mrf.mxu0
        %5947 = vmatprep.mubr.f32.mxu0 0.0
        %v5948 = vand.u32 %v2287, 4294901760
        %v5949 = vsub.f32 %v2287, %v5948
        %v5950 = vand.u32 %v5949, 4294901760
        %5951 = vmatmul.mubr.f32.gmra.mxu0 %v5950
        %v5952 = vpop.f32.mrf.mxu0
        %v5953 = vadd.f32 %v5854, %v5952
        %v5954 = vpop.f32.mrf.mxu0
        %5955 = vdwg.mxu0
        %5956 = vmatprep.subr.mxu0 0.0
        %5957 = vmatpush1.msra.mxu0 0.0
        %5958 = vmatprep.subr.mxu0 0.0
        %5959 = vmatpush1.msra.mxu0 0.0
        %5960 = vmatprep.subr.mxu0 0.0
        %5961 = vmatpush1.msra.mxu0 0.0
        %5962 = vmatprep.subr.mxu0 0.0
        %5963 = vmatpush1.msra.mxu0 0.0
        %5964 = vmatprep.subr.mxu0 0.0
        %5965 = vmatpush1.msra.mxu0 0.0
        %5966 = vmatprep.subr.mxu0 0.0
        %5967 = vmatpush1.msra.mxu0 0.0
        %5968 = vmatprep.subr.mxu0 0.0
        %5969 = vmatpush1.msra.mxu0 0.0
        %5970 = vmatprep.subr.mxu0 0.0
        %5971 = vmatpush1.msra.mxu0 0.0
        %5972 = vmatprep.subr.mxu0 0.0
        %5973 = vmatpush1.msra.mxu0 0.0
        %5974 = vmatprep.subr.mxu0 0.0
        %5975 = vmatpush1.msra.mxu0 0.0
        %5976 = vmatprep.subr.mxu0 0.0
        %5977 = vmatpush1.msra.mxu0 0.0
        %5978 = vmatprep.subr.mxu0 0.0
        %5979 = vmatpush1.msra.mxu0 0.0
        %5980 = vmatprep.subr.mxu0 0.0
        %5981 = vmatpush1.msra.mxu0 0.0
        %5982 = vmatprep.subr.mxu0 0.0
        %5983 = vmatpush1.msra.mxu0 0.0
        %5984 = vmatprep.subr.mxu0 0.0
        %v5985 = vand.u32 %v5551, 4294901760
        %v5986 = vsub.f32 %v5551, %v5985
        %v5987 = vand.u32 %v5986, 4294901760
        %5988 = vmatpush1.msra.mxu0 %v5987
        %5989 = vmatprep.subr.mxu0 0.0
        %v5990 = vand.u32 %v5545, 4294901760
        %v5991 = vsub.f32 %v5545, %v5990
        %v5992 = vand.u32 %v5991, 4294901760
        %5993 = vmatpush1.msra.mxu0 %v5992
        %5994 = vmatprep.subr.mxu0 0.0
        %5995 = vmatpush2.msra.mxu0 0.0
        %5996 = vmatprep.subr.mxu0 0.0
        %5997 = vmatpush2.msra.mxu0 0.0
        %5998 = vmatprep.subr.mxu0 0.0
        %5999 = vmatpush2.msra.mxu0 0.0
        %6000 = vmatprep.subr.mxu0 0.0
        %6001 = vmatpush2.msra.mxu0 0.0
        %6002 = vmatprep.subr.mxu0 0.0
        %6003 = vmatpush2.msra.mxu0 0.0
        %6004 = vmatprep.subr.mxu0 0.0
        %6005 = vmatpush2.msra.mxu0 0.0
        %6006 = vmatprep.subr.mxu0 0.0
        %6007 = vmatpush2.msra.mxu0 0.0
        %6008 = vmatprep.subr.mxu0 0.0
        %6009 = vmatpush2.msra.mxu0 0.0
        %6010 = vmatprep.subr.mxu0 0.0
        %6011 = vmatpush2.msra.mxu0 0.0
        %6012 = vmatprep.subr.mxu0 0.0
        %6013 = vmatpush2.msra.mxu0 0.0
        %6014 = vmatprep.subr.mxu0 0.0
        %6015 = vmatpush2.msra.mxu0 0.0
        %6016 = vmatprep.subr.mxu0 0.0
        %6017 = vmatpush2.msra.mxu0 0.0
        %6018 = vmatprep.subr.mxu0 0.0
        %6019 = vmatpush2.msra.mxu0 0.0
        %6020 = vmatprep.subr.mxu0 0.0
        %6021 = vmatpush2.msra.mxu0 0.0
        %6022 = vmatprep.subr.mxu0 0.0
        %6023 = vmatpush2.msra.mxu0 0.0
        %6024 = vmatprep.subr.mxu0 0.0
        %6025 = vmatpush2.msra.mxu0 0.0
        %6026 = vmatprep.mubr.f32.mxu0 0.0
        %v6027 = vand.u32 %v2278, 4294901760
        %6028 = vmatmul.mubr.f32.gmra.mxu0 %v6027
        %v6029 = vpop.f32.mrf.mxu0
        %v6030 = vadd.f32 %v5929, %v6029
        %v6031 = vpop.f32.mrf.mxu0
        %6032 = vmatprep.mubr.f32.mxu0 0.0
        %v6033 = vand.u32 %v2281, 4294901760
        %6034 = vmatmul.mubr.f32.gmra.mxu0 %v6033
        %v6035 = vpop.f32.mrf.mxu0
        %v6036 = vadd.f32 %v5937, %v6035
        %v6037 = vpop.f32.mrf.mxu0
        %6038 = vmatprep.mubr.f32.mxu0 0.0
        %v6039 = vand.u32 %v2284, 4294901760
        %6040 = vmatmul.mubr.f32.gmra.mxu0 %v6039
        %v6041 = vpop.f32.mrf.mxu0
        %v6042 = vadd.f32 %v5945, %v6041
        %v6043 = vpop.f32.mrf.mxu0
        %6044 = vmatprep.mubr.f32.mxu0 0.0
        %v6045 = vand.u32 %v2287, 4294901760
        %6046 = vmatmul.mubr.f32.gmra.mxu0 %v6045
        %v6047 = vpop.f32.mrf.mxu0
        %v6048 = vadd.f32 %v5953, %v6047
        %v6049 = vpop.f32.mrf.mxu0
        %6050 = vdwg.mxu0
        %6051 = vmatprep.subr.mxu0 0.0
        %6052 = vmatpush1.msra.mxu0 0.0
        %6053 = vmatprep.subr.mxu0 0.0
        %6054 = vmatpush1.msra.mxu0 0.0
        %6055 = vmatprep.subr.mxu0 0.0
        %6056 = vmatpush1.msra.mxu0 0.0
        %6057 = vmatprep.subr.mxu0 0.0
        %6058 = vmatpush1.msra.mxu0 0.0
        %6059 = vmatprep.subr.mxu0 0.0
        %6060 = vmatpush1.msra.mxu0 0.0
        %6061 = vmatprep.subr.mxu0 0.0
        %6062 = vmatpush1.msra.mxu0 0.0
        %6063 = vmatprep.subr.mxu0 0.0
        %6064 = vmatpush1.msra.mxu0 0.0
        %6065 = vmatprep.subr.mxu0 0.0
        %6066 = vmatpush1.msra.mxu0 0.0
        %6067 = vmatprep.subr.mxu0 0.0
        %6068 = vmatpush1.msra.mxu0 0.0
        %6069 = vmatprep.subr.mxu0 0.0
        %6070 = vmatpush1.msra.mxu0 0.0
        %6071 = vmatprep.subr.mxu0 0.0
        %6072 = vmatpush1.msra.mxu0 0.0
        %6073 = vmatprep.subr.mxu0 0.0
        %6074 = vmatpush1.msra.mxu0 0.0
        %6075 = vmatprep.subr.mxu0 0.0
        %6076 = vmatpush1.msra.mxu0 0.0
        %6077 = vmatprep.subr.mxu0 0.0
        %6078 = vmatpush1.msra.mxu0 0.0
        %6079 = vmatprep.subr.mxu0 0.0
        %v6080 = vand.u32 %v5551, 4294901760
        %6081 = vmatpush1.msra.mxu0 %v6080
        %6082 = vmatprep.subr.mxu0 0.0
        %v6083 = vand.u32 %v5545, 4294901760
        %6084 = vmatpush1.msra.mxu0 %v6083
        %6085 = vmatprep.subr.mxu0 0.0
        %6086 = vmatpush2.msra.mxu0 0.0
        %6087 = vmatprep.subr.mxu0 0.0
        %6088 = vmatpush2.msra.mxu0 0.0
        %6089 = vmatprep.subr.mxu0 0.0
        %6090 = vmatpush2.msra.mxu0 0.0
        %6091 = vmatprep.subr.mxu0 0.0
        %6092 = vmatpush2.msra.mxu0 0.0
        %6093 = vmatprep.subr.mxu0 0.0
        %6094 = vmatpush2.msra.mxu0 0.0
        %6095 = vmatprep.subr.mxu0 0.0
        %6096 = vmatpush2.msra.mxu0 0.0
        %6097 = vmatprep.subr.mxu0 0.0
        %6098 = vmatpush2.msra.mxu0 0.0
        %6099 = vmatprep.subr.mxu0 0.0
        %6100 = vmatpush2.msra.mxu0 0.0
        %6101 = vmatprep.subr.mxu0 0.0
        %6102 = vmatpush2.msra.mxu0 0.0
        %6103 = vmatprep.subr.mxu0 0.0
        %6104 = vmatpush2.msra.mxu0 0.0
        %6105 = vmatprep.subr.mxu0 0.0
        %6106 = vmatpush2.msra.mxu0 0.0
        %6107 = vmatprep.subr.mxu0 0.0
        %6108 = vmatpush2.msra.mxu0 0.0
        %6109 = vmatprep.subr.mxu0 0.0
        %6110 = vmatpush2.msra.mxu0 0.0
        %6111 = vmatprep.subr.mxu0 0.0
        %6112 = vmatpush2.msra.mxu0 0.0
        %6113 = vmatprep.subr.mxu0 0.0
        %6114 = vmatpush2.msra.mxu0 0.0
        %6115 = vmatprep.subr.mxu0 0.0
        %6116 = vmatpush2.msra.mxu0 0.0
        %6117 = vmatprep.mubr.f32.mxu0 0.0
        %v6118 = vand.u32 %v2278, 4294901760
        %6119 = vmatmul.mubr.f32.gmra.mxu0 %v6118
        %v6120 = vpop.f32.mrf.mxu0
        %v6121 = vadd.f32 %v6030, %v6120
        %v6122 = vpop.f32.mrf.mxu0
        %6123 = vmatprep.mubr.f32.mxu0 0.0
        %v6124 = vand.u32 %v2281, 4294901760
        %6125 = vmatmul.mubr.f32.gmra.mxu0 %v6124
        %v6126 = vpop.f32.mrf.mxu0
        %v6127 = vadd.f32 %v6036, %v6126
        %v6128 = vpop.f32.mrf.mxu0
        %6129 = vmatprep.mubr.f32.mxu0 0.0
        %v6130 = vand.u32 %v2284, 4294901760
        %6131 = vmatmul.mubr.f32.gmra.mxu0 %v6130
        %v6132 = vpop.f32.mrf.mxu0
        %v6133 = vadd.f32 %v6042, %v6132
        %v6134 = vpop.f32.mrf.mxu0
        %6135 = vmatprep.mubr.f32.mxu0 0.0
        %v6136 = vand.u32 %v2287, 4294901760
        %6137 = vmatmul.mubr.f32.gmra.mxu0 %v6136
        %v6138 = vpop.f32.mrf.mxu0
        %v6139 = vadd.f32 %v6048, %v6138
        %v6140 = vpop.f32.mrf.mxu0
        %6141 = vdwg.mxu0
        %6142 = vmatprep.subr.mxu0 0.0
        %6143 = vmatpush1.msra.mxu0 0.0
        %6144 = vmatprep.subr.mxu0 0.0
        %6145 = vmatpush1.msra.mxu0 0.0
        %6146 = vmatprep.subr.mxu0 0.0
        %6147 = vmatpush1.msra.mxu0 0.0
        %6148 = vmatprep.subr.mxu0 0.0
        %6149 = vmatpush1.msra.mxu0 0.0
        %6150 = vmatprep.subr.mxu0 0.0
        %6151 = vmatpush1.msra.mxu0 0.0
        %6152 = vmatprep.subr.mxu0 0.0
        %6153 = vmatpush1.msra.mxu0 0.0
        %6154 = vmatprep.subr.mxu0 0.0
        %6155 = vmatpush1.msra.mxu0 0.0
        %6156 = vmatprep.subr.mxu0 0.0
        %6157 = vmatpush1.msra.mxu0 0.0
        %6158 = vmatprep.subr.mxu0 0.0
        %6159 = vmatpush1.msra.mxu0 0.0
        %6160 = vmatprep.subr.mxu0 0.0
        %6161 = vmatpush1.msra.mxu0 0.0
        %6162 = vmatprep.subr.mxu0 0.0
        %6163 = vmatpush1.msra.mxu0 0.0
        %6164 = vmatprep.subr.mxu0 0.0
        %6165 = vmatpush1.msra.mxu0 0.0
        %6166 = vmatprep.subr.mxu0 0.0
        %6167 = vmatpush1.msra.mxu0 0.0
        %6168 = vmatprep.subr.mxu0 0.0
        %6169 = vmatpush1.msra.mxu0 0.0
        %6170 = vmatprep.subr.mxu0 0.0
        %v6171 = vand.u32 %v4535, 4294901760
        %6172 = vmatpush1.msra.mxu0 %v6171
        %6173 = vmatprep.subr.mxu0 0.0
        %v6174 = vand.u32 %v4529, 4294901760
        %6175 = vmatpush1.msra.mxu0 %v6174
        %6176 = vmatprep.subr.mxu0 0.0
        %6177 = vmatpush2.msra.mxu0 0.0
        %6178 = vmatprep.subr.mxu0 0.0
        %6179 = vmatpush2.msra.mxu0 0.0
        %6180 = vmatprep.subr.mxu0 0.0
        %6181 = vmatpush2.msra.mxu0 0.0
        %6182 = vmatprep.subr.mxu0 0.0
        %6183 = vmatpush2.msra.mxu0 0.0
        %6184 = vmatprep.subr.mxu0 0.0
        %6185 = vmatpush2.msra.mxu0 0.0
        %6186 = vmatprep.subr.mxu0 0.0
        %6187 = vmatpush2.msra.mxu0 0.0
        %6188 = vmatprep.subr.mxu0 0.0
        %6189 = vmatpush2.msra.mxu0 0.0
        %6190 = vmatprep.subr.mxu0 0.0
        %6191 = vmatpush2.msra.mxu0 0.0
        %6192 = vmatprep.subr.mxu0 0.0
        %6193 = vmatpush2.msra.mxu0 0.0
        %6194 = vmatprep.subr.mxu0 0.0
        %6195 = vmatpush2.msra.mxu0 0.0
        %6196 = vmatprep.subr.mxu0 0.0
        %6197 = vmatpush2.msra.mxu0 0.0
        %6198 = vmatprep.subr.mxu0 0.0
        %6199 = vmatpush2.msra.mxu0 0.0
        %6200 = vmatprep.subr.mxu0 0.0
        %6201 = vmatpush2.msra.mxu0 0.0
        %6202 = vmatprep.subr.mxu0 0.0
        %6203 = vmatpush2.msra.mxu0 0.0
        %6204 = vmatprep.subr.mxu0 0.0
        %6205 = vmatpush2.msra.mxu0 0.0
        %6206 = vmatprep.subr.mxu0 0.0
        %6207 = vmatpush2.msra.mxu0 0.0
        %6208 = vmatprep.mubr.f32.mxu0 0.0
        %v6209 = vand.u32 %v2878, 4294901760
        %v6210 = vsub.f32 %v2878, %v6209
        %v6211 = vand.u32 %v6210, 4294901760
        %v6212 = vsub.f32 %v6210, %v6211
        %v6213 = vand.u32 %v6212, 4294901760
        %6214 = vmatmul.mubr.f32.gmra.mxu0 %v6213
        %v6215 = vpop.f32.mrf.mxu0
        %v6216 = vadd.f32 %v6121, %v6215
        %v6217 = vpop.f32.mrf.mxu0
        %6218 = vmatprep.mubr.f32.mxu0 0.0
        %v6219 = vand.u32 %v2881, 4294901760
        %v6220 = vsub.f32 %v2881, %v6219
        %v6221 = vand.u32 %v6220, 4294901760
        %v6222 = vsub.f32 %v6220, %v6221
        %v6223 = vand.u32 %v6222, 4294901760
        %6224 = vmatmul.mubr.f32.gmra.mxu0 %v6223
        %v6225 = vpop.f32.mrf.mxu0
        %v6226 = vadd.f32 %v6127, %v6225
        %v6227 = vpop.f32.mrf.mxu0
        %6228 = vmatprep.mubr.f32.mxu0 0.0
        %v6229 = vand.u32 %v2884, 4294901760
        %v6230 = vsub.f32 %v2884, %v6229
        %v6231 = vand.u32 %v6230, 4294901760
        %v6232 = vsub.f32 %v6230, %v6231
        %v6233 = vand.u32 %v6232, 4294901760
        %6234 = vmatmul.mubr.f32.gmra.mxu0 %v6233
        %v6235 = vpop.f32.mrf.mxu0
        %v6236 = vadd.f32 %v6133, %v6235
        %v6237 = vpop.f32.mrf.mxu0
        %6238 = vmatprep.mubr.f32.mxu0 0.0
        %v6239 = vand.u32 %v2887, 4294901760
        %v6240 = vsub.f32 %v2887, %v6239
        %v6241 = vand.u32 %v6240, 4294901760
        %v6242 = vsub.f32 %v6240, %v6241
        %v6243 = vand.u32 %v6242, 4294901760
        %6244 = vmatmul.mubr.f32.gmra.mxu0 %v6243
        %v6245 = vpop.f32.mrf.mxu0
        %v6246 = vadd.f32 %v6139, %v6245
        %v6247 = vpop.f32.mrf.mxu0
        %6248 = vdwg.mxu0
        %6249 = vmatprep.subr.mxu0 0.0
        %6250 = vmatpush1.msra.mxu0 0.0
        %6251 = vmatprep.subr.mxu0 0.0
        %6252 = vmatpush1.msra.mxu0 0.0
        %6253 = vmatprep.subr.mxu0 0.0
        %6254 = vmatpush1.msra.mxu0 0.0
        %6255 = vmatprep.subr.mxu0 0.0
        %6256 = vmatpush1.msra.mxu0 0.0
        %6257 = vmatprep.subr.mxu0 0.0
        %6258 = vmatpush1.msra.mxu0 0.0
        %6259 = vmatprep.subr.mxu0 0.0
        %6260 = vmatpush1.msra.mxu0 0.0
        %6261 = vmatprep.subr.mxu0 0.0
        %6262 = vmatpush1.msra.mxu0 0.0
        %6263 = vmatprep.subr.mxu0 0.0
        %6264 = vmatpush1.msra.mxu0 0.0
        %6265 = vmatprep.subr.mxu0 0.0
        %6266 = vmatpush1.msra.mxu0 0.0
        %6267 = vmatprep.subr.mxu0 0.0
        %6268 = vmatpush1.msra.mxu0 0.0
        %6269 = vmatprep.subr.mxu0 0.0
        %6270 = vmatpush1.msra.mxu0 0.0
        %6271 = vmatprep.subr.mxu0 0.0
        %6272 = vmatpush1.msra.mxu0 0.0
        %6273 = vmatprep.subr.mxu0 0.0
        %6274 = vmatpush1.msra.mxu0 0.0
        %6275 = vmatprep.subr.mxu0 0.0
        %6276 = vmatpush1.msra.mxu0 0.0
        %6277 = vmatprep.subr.mxu0 0.0
        %v6278 = vand.u32 %v4535, 4294901760
        %v6279 = vsub.f32 %v4535, %v6278
        %v6280 = vand.u32 %v6279, 4294901760
        %v6281 = vsub.f32 %v6279, %v6280
        %v6282 = vand.u32 %v6281, 4294901760
        %6283 = vmatpush1.msra.mxu0 %v6282
        %6284 = vmatprep.subr.mxu0 0.0
        %v6285 = vand.u32 %v4529, 4294901760
        %v6286 = vsub.f32 %v4529, %v6285
        %v6287 = vand.u32 %v6286, 4294901760
        %v6288 = vsub.f32 %v6286, %v6287
        %v6289 = vand.u32 %v6288, 4294901760
        %6290 = vmatpush1.msra.mxu0 %v6289
        %6291 = vmatprep.subr.mxu0 0.0
        %6292 = vmatpush2.msra.mxu0 0.0
        %6293 = vmatprep.subr.mxu0 0.0
        %6294 = vmatpush2.msra.mxu0 0.0
        %6295 = vmatprep.subr.mxu0 0.0
        %6296 = vmatpush2.msra.mxu0 0.0
        %6297 = vmatprep.subr.mxu0 0.0
        %6298 = vmatpush2.msra.mxu0 0.0
        %6299 = vmatprep.subr.mxu0 0.0
        %6300 = vmatpush2.msra.mxu0 0.0
        %6301 = vmatprep.subr.mxu0 0.0
        %6302 = vmatpush2.msra.mxu0 0.0
        %6303 = vmatprep.subr.mxu0 0.0
        %6304 = vmatpush2.msra.mxu0 0.0
        %6305 = vmatprep.subr.mxu0 0.0
        %6306 = vmatpush2.msra.mxu0 0.0
        %6307 = vmatprep.subr.mxu0 0.0
        %6308 = vmatpush2.msra.mxu0 0.0
        %6309 = vmatprep.subr.mxu0 0.0
        %6310 = vmatpush2.msra.mxu0 0.0
        %6311 = vmatprep.subr.mxu0 0.0
        %6312 = vmatpush2.msra.mxu0 0.0
        %6313 = vmatprep.subr.mxu0 0.0
        %6314 = vmatpush2.msra.mxu0 0.0
        %6315 = vmatprep.subr.mxu0 0.0
        %6316 = vmatpush2.msra.mxu0 0.0
        %6317 = vmatprep.subr.mxu0 0.0
        %6318 = vmatpush2.msra.mxu0 0.0
        %6319 = vmatprep.subr.mxu0 0.0
        %6320 = vmatpush2.msra.mxu0 0.0
        %6321 = vmatprep.subr.mxu0 0.0
        %6322 = vmatpush2.msra.mxu0 0.0
        %6323 = vmatprep.mubr.f32.mxu0 0.0
        %v6324 = vand.u32 %v2878, 4294901760
        %6325 = vmatmul.mubr.f32.gmra.mxu0 %v6324
        %v6326 = vpop.f32.mrf.mxu0
        %v6327 = vadd.f32 %v6216, %v6326
        %v6328 = vpop.f32.mrf.mxu0
        %6329 = vmatprep.mubr.f32.mxu0 0.0
        %v6330 = vand.u32 %v2881, 4294901760
        %6331 = vmatmul.mubr.f32.gmra.mxu0 %v6330
        %v6332 = vpop.f32.mrf.mxu0
        %v6333 = vadd.f32 %v6226, %v6332
        %v6334 = vpop.f32.mrf.mxu0
        %6335 = vmatprep.mubr.f32.mxu0 0.0
        %v6336 = vand.u32 %v2884, 4294901760
        %6337 = vmatmul.mubr.f32.gmra.mxu0 %v6336
        %v6338 = vpop.f32.mrf.mxu0
        %v6339 = vadd.f32 %v6236, %v6338
        %v6340 = vpop.f32.mrf.mxu0
        %6341 = vmatprep.mubr.f32.mxu0 0.0
        %v6342 = vand.u32 %v2887, 4294901760
        %6343 = vmatmul.mubr.f32.gmra.mxu0 %v6342
        %v6344 = vpop.f32.mrf.mxu0
        %v6345 = vadd.f32 %v6246, %v6344
        %v6346 = vpop.f32.mrf.mxu0
        %6347 = vdwg.mxu0
        %6348 = vmatprep.subr.mxu0 0.0
        %6349 = vmatpush1.msra.mxu0 0.0
        %6350 = vmatprep.subr.mxu0 0.0
        %6351 = vmatpush1.msra.mxu0 0.0
        %6352 = vmatprep.subr.mxu0 0.0
        %6353 = vmatpush1.msra.mxu0 0.0
        %6354 = vmatprep.subr.mxu0 0.0
        %6355 = vmatpush1.msra.mxu0 0.0
        %6356 = vmatprep.subr.mxu0 0.0
        %6357 = vmatpush1.msra.mxu0 0.0
        %6358 = vmatprep.subr.mxu0 0.0
        %6359 = vmatpush1.msra.mxu0 0.0
        %6360 = vmatprep.subr.mxu0 0.0
        %6361 = vmatpush1.msra.mxu0 0.0
        %6362 = vmatprep.subr.mxu0 0.0
        %6363 = vmatpush1.msra.mxu0 0.0
        %6364 = vmatprep.subr.mxu0 0.0
        %6365 = vmatpush1.msra.mxu0 0.0
        %6366 = vmatprep.subr.mxu0 0.0
        %6367 = vmatpush1.msra.mxu0 0.0
        %6368 = vmatprep.subr.mxu0 0.0
        %6369 = vmatpush1.msra.mxu0 0.0
        %6370 = vmatprep.subr.mxu0 0.0
        %6371 = vmatpush1.msra.mxu0 0.0
        %6372 = vmatprep.subr.mxu0 0.0
        %6373 = vmatpush1.msra.mxu0 0.0
        %6374 = vmatprep.subr.mxu0 0.0
        %6375 = vmatpush1.msra.mxu0 0.0
        %6376 = vmatprep.subr.mxu0 0.0
        %v6377 = vand.u32 %v4535, 4294901760
        %v6378 = vsub.f32 %v4535, %v6377
        %6379 = vmatpush1.msra.mxu0 %v6378
        %6380 = vmatprep.subr.mxu0 0.0
        %v6381 = vand.u32 %v4529, 4294901760
        %v6382 = vsub.f32 %v4529, %v6381
        %6383 = vmatpush1.msra.mxu0 %v6382
        %6384 = vmatprep.subr.mxu0 0.0
        %6385 = vmatpush2.msra.mxu0 0.0
        %6386 = vmatprep.subr.mxu0 0.0
        %6387 = vmatpush2.msra.mxu0 0.0
        %6388 = vmatprep.subr.mxu0 0.0
        %6389 = vmatpush2.msra.mxu0 0.0
        %6390 = vmatprep.subr.mxu0 0.0
        %6391 = vmatpush2.msra.mxu0 0.0
        %6392 = vmatprep.subr.mxu0 0.0
        %6393 = vmatpush2.msra.mxu0 0.0
        %6394 = vmatprep.subr.mxu0 0.0
        %6395 = vmatpush2.msra.mxu0 0.0
        %6396 = vmatprep.subr.mxu0 0.0
        %6397 = vmatpush2.msra.mxu0 0.0
        %6398 = vmatprep.subr.mxu0 0.0
        %6399 = vmatpush2.msra.mxu0 0.0
        %6400 = vmatprep.subr.mxu0 0.0
        %6401 = vmatpush2.msra.mxu0 0.0
        %6402 = vmatprep.subr.mxu0 0.0
        %6403 = vmatpush2.msra.mxu0 0.0
        %6404 = vmatprep.subr.mxu0 0.0
        %6405 = vmatpush2.msra.mxu0 0.0
        %6406 = vmatprep.subr.mxu0 0.0
        %6407 = vmatpush2.msra.mxu0 0.0
        %6408 = vmatprep.subr.mxu0 0.0
        %6409 = vmatpush2.msra.mxu0 0.0
        %6410 = vmatprep.subr.mxu0 0.0
        %6411 = vmatpush2.msra.mxu0 0.0
        %6412 = vmatprep.subr.mxu0 0.0
        %6413 = vmatpush2.msra.mxu0 0.0
        %6414 = vmatprep.subr.mxu0 0.0
        %6415 = vmatpush2.msra.mxu0 0.0
        %6416 = vmatprep.mubr.f32.mxu0 0.0
        %v6417 = vand.u32 %v2878, 4294901760
        %v6418 = vsub.f32 %v2878, %v6417
        %6419 = vmatmul.mubr.f32.gmra.mxu0 %v6418
        %v6420 = vpop.f32.mrf.mxu0
        %v6421 = vadd.f32 %v6327, %v6420
        %v6422 = vpop.f32.mrf.mxu0
        %6423 = vmatprep.mubr.f32.mxu0 0.0
        %v6424 = vand.u32 %v2881, 4294901760
        %v6425 = vsub.f32 %v2881, %v6424
        %6426 = vmatmul.mubr.f32.gmra.mxu0 %v6425
        %v6427 = vpop.f32.mrf.mxu0
        %v6428 = vadd.f32 %v6333, %v6427
        %v6429 = vpop.f32.mrf.mxu0
        %6430 = vmatprep.mubr.f32.mxu0 0.0
        %v6431 = vand.u32 %v2884, 4294901760
        %v6432 = vsub.f32 %v2884, %v6431
        %6433 = vmatmul.mubr.f32.gmra.mxu0 %v6432
        %v6434 = vpop.f32.mrf.mxu0
        %v6435 = vadd.f32 %v6339, %v6434
        %v6436 = vpop.f32.mrf.mxu0
        %6437 = vmatprep.mubr.f32.mxu0 0.0
        %v6438 = vand.u32 %v2887, 4294901760
        %v6439 = vsub.f32 %v2887, %v6438
        %6440 = vmatmul.mubr.f32.gmra.mxu0 %v6439
        %v6441 = vpop.f32.mrf.mxu0
        %v6442 = vadd.f32 %v6345, %v6441
        %v6443 = vpop.f32.mrf.mxu0
        %6444 = vdwg.mxu0
        %6445 = vmatprep.subr.mxu0 0.0
        %6446 = vmatpush1.msra.mxu0 0.0
        %6447 = vmatprep.subr.mxu0 0.0
        %6448 = vmatpush1.msra.mxu0 0.0
        %6449 = vmatprep.subr.mxu0 0.0
        %6450 = vmatpush1.msra.mxu0 0.0
        %6451 = vmatprep.subr.mxu0 0.0
        %6452 = vmatpush1.msra.mxu0 0.0
        %6453 = vmatprep.subr.mxu0 0.0
        %6454 = vmatpush1.msra.mxu0 0.0
        %6455 = vmatprep.subr.mxu0 0.0
        %6456 = vmatpush1.msra.mxu0 0.0
        %6457 = vmatprep.subr.mxu0 0.0
        %6458 = vmatpush1.msra.mxu0 0.0
        %6459 = vmatprep.subr.mxu0 0.0
        %6460 = vmatpush1.msra.mxu0 0.0
        %6461 = vmatprep.subr.mxu0 0.0
        %6462 = vmatpush1.msra.mxu0 0.0
        %6463 = vmatprep.subr.mxu0 0.0
        %6464 = vmatpush1.msra.mxu0 0.0
        %6465 = vmatprep.subr.mxu0 0.0
        %6466 = vmatpush1.msra.mxu0 0.0
        %6467 = vmatprep.subr.mxu0 0.0
        %6468 = vmatpush1.msra.mxu0 0.0
        %6469 = vmatprep.subr.mxu0 0.0
        %6470 = vmatpush1.msra.mxu0 0.0
        %6471 = vmatprep.subr.mxu0 0.0
        %6472 = vmatpush1.msra.mxu0 0.0
        %6473 = vmatprep.subr.mxu0 0.0
        %v6474 = vand.u32 %v4535, 4294901760
        %6475 = vmatpush1.msra.mxu0 %v6474
        %6476 = vmatprep.subr.mxu0 0.0
        %v6477 = vand.u32 %v4529, 4294901760
        %6478 = vmatpush1.msra.mxu0 %v6477
        %6479 = vmatprep.subr.mxu0 0.0
        %6480 = vmatpush2.msra.mxu0 0.0
        %6481 = vmatprep.subr.mxu0 0.0
        %6482 = vmatpush2.msra.mxu0 0.0
        %6483 = vmatprep.subr.mxu0 0.0
        %6484 = vmatpush2.msra.mxu0 0.0
        %6485 = vmatprep.subr.mxu0 0.0
        %6486 = vmatpush2.msra.mxu0 0.0
        %6487 = vmatprep.subr.mxu0 0.0
        %6488 = vmatpush2.msra.mxu0 0.0
        %6489 = vmatprep.subr.mxu0 0.0
        %6490 = vmatpush2.msra.mxu0 0.0
        %6491 = vmatprep.subr.mxu0 0.0
        %6492 = vmatpush2.msra.mxu0 0.0
        %6493 = vmatprep.subr.mxu0 0.0
        %6494 = vmatpush2.msra.mxu0 0.0
        %6495 = vmatprep.subr.mxu0 0.0
        %6496 = vmatpush2.msra.mxu0 0.0
        %6497 = vmatprep.subr.mxu0 0.0
        %6498 = vmatpush2.msra.mxu0 0.0
        %6499 = vmatprep.subr.mxu0 0.0
        %6500 = vmatpush2.msra.mxu0 0.0
        %6501 = vmatprep.subr.mxu0 0.0
        %6502 = vmatpush2.msra.mxu0 0.0
        %6503 = vmatprep.subr.mxu0 0.0
        %6504 = vmatpush2.msra.mxu0 0.0
        %6505 = vmatprep.subr.mxu0 0.0
        %6506 = vmatpush2.msra.mxu0 0.0
        %6507 = vmatprep.subr.mxu0 0.0
        %6508 = vmatpush2.msra.mxu0 0.0
        %6509 = vmatprep.subr.mxu0 0.0
        %6510 = vmatpush2.msra.mxu0 0.0
        %6511 = vmatprep.mubr.f32.mxu0 0.0
        %v6512 = vand.u32 %v2878, 4294901760
        %v6513 = vsub.f32 %v2878, %v6512
        %v6514 = vand.u32 %v6513, 4294901760
        %6515 = vmatmul.mubr.f32.gmra.mxu0 %v6514
        %v6516 = vpop.f32.mrf.mxu0
        %v6517 = vadd.f32 %v6421, %v6516
        %v6518 = vpop.f32.mrf.mxu0
        %6519 = vmatprep.mubr.f32.mxu0 0.0
        %v6520 = vand.u32 %v2881, 4294901760
        %v6521 = vsub.f32 %v2881, %v6520
        %v6522 = vand.u32 %v6521, 4294901760
        %6523 = vmatmul.mubr.f32.gmra.mxu0 %v6522
        %v6524 = vpop.f32.mrf.mxu0
        %v6525 = vadd.f32 %v6428, %v6524
        %v6526 = vpop.f32.mrf.mxu0
        %6527 = vmatprep.mubr.f32.mxu0 0.0
        %v6528 = vand.u32 %v2884, 4294901760
        %v6529 = vsub.f32 %v2884, %v6528
        %v6530 = vand.u32 %v6529, 4294901760
        %6531 = vmatmul.mubr.f32.gmra.mxu0 %v6530
        %v6532 = vpop.f32.mrf.mxu0
        %v6533 = vadd.f32 %v6435, %v6532
        %v6534 = vpop.f32.mrf.mxu0
        %6535 = vmatprep.mubr.f32.mxu0 0.0
        %v6536 = vand.u32 %v2887, 4294901760
        %v6537 = vsub.f32 %v2887, %v6536
        %v6538 = vand.u32 %v6537, 4294901760
        %6539 = vmatmul.mubr.f32.gmra.mxu0 %v6538
        %v6540 = vpop.f32.mrf.mxu0
        %v6541 = vadd.f32 %v6442, %v6540
        %v6542 = vpop.f32.mrf.mxu0
        %6543 = vdwg.mxu0
        %6544 = vmatprep.subr.mxu0 0.0
        %6545 = vmatpush1.msra.mxu0 0.0
        %6546 = vmatprep.subr.mxu0 0.0
        %6547 = vmatpush1.msra.mxu0 0.0
        %6548 = vmatprep.subr.mxu0 0.0
        %6549 = vmatpush1.msra.mxu0 0.0
        %6550 = vmatprep.subr.mxu0 0.0
        %6551 = vmatpush1.msra.mxu0 0.0
        %6552 = vmatprep.subr.mxu0 0.0
        %6553 = vmatpush1.msra.mxu0 0.0
        %6554 = vmatprep.subr.mxu0 0.0
        %6555 = vmatpush1.msra.mxu0 0.0
        %6556 = vmatprep.subr.mxu0 0.0
        %6557 = vmatpush1.msra.mxu0 0.0
        %6558 = vmatprep.subr.mxu0 0.0
        %6559 = vmatpush1.msra.mxu0 0.0
        %6560 = vmatprep.subr.mxu0 0.0
        %6561 = vmatpush1.msra.mxu0 0.0
        %6562 = vmatprep.subr.mxu0 0.0
        %6563 = vmatpush1.msra.mxu0 0.0
        %6564 = vmatprep.subr.mxu0 0.0
        %6565 = vmatpush1.msra.mxu0 0.0
        %6566 = vmatprep.subr.mxu0 0.0
        %6567 = vmatpush1.msra.mxu0 0.0
        %6568 = vmatprep.subr.mxu0 0.0
        %6569 = vmatpush1.msra.mxu0 0.0
        %6570 = vmatprep.subr.mxu0 0.0
        %6571 = vmatpush1.msra.mxu0 0.0
        %6572 = vmatprep.subr.mxu0 0.0
        %v6573 = vand.u32 %v4535, 4294901760
        %v6574 = vsub.f32 %v4535, %v6573
        %v6575 = vand.u32 %v6574, 4294901760
        %6576 = vmatpush1.msra.mxu0 %v6575
        %6577 = vmatprep.subr.mxu0 0.0
        %v6578 = vand.u32 %v4529, 4294901760
        %v6579 = vsub.f32 %v4529, %v6578
        %v6580 = vand.u32 %v6579, 4294901760
        %6581 = vmatpush1.msra.mxu0 %v6580
        %6582 = vmatprep.subr.mxu0 0.0
        %6583 = vmatpush2.msra.mxu0 0.0
        %6584 = vmatprep.subr.mxu0 0.0
        %6585 = vmatpush2.msra.mxu0 0.0
        %6586 = vmatprep.subr.mxu0 0.0
        %6587 = vmatpush2.msra.mxu0 0.0
        %6588 = vmatprep.subr.mxu0 0.0
        %6589 = vmatpush2.msra.mxu0 0.0
        %6590 = vmatprep.subr.mxu0 0.0
        %6591 = vmatpush2.msra.mxu0 0.0
        %6592 = vmatprep.subr.mxu0 0.0
        %6593 = vmatpush2.msra.mxu0 0.0
        %6594 = vmatprep.subr.mxu0 0.0
        %6595 = vmatpush2.msra.mxu0 0.0
        %6596 = vmatprep.subr.mxu0 0.0
        %6597 = vmatpush2.msra.mxu0 0.0
        %6598 = vmatprep.subr.mxu0 0.0
        %6599 = vmatpush2.msra.mxu0 0.0
        %6600 = vmatprep.subr.mxu0 0.0
        %6601 = vmatpush2.msra.mxu0 0.0
        %6602 = vmatprep.subr.mxu0 0.0
        %6603 = vmatpush2.msra.mxu0 0.0
        %6604 = vmatprep.subr.mxu0 0.0
        %6605 = vmatpush2.msra.mxu0 0.0
        %6606 = vmatprep.subr.mxu0 0.0
        %6607 = vmatpush2.msra.mxu0 0.0
        %6608 = vmatprep.subr.mxu0 0.0
        %6609 = vmatpush2.msra.mxu0 0.0
        %6610 = vmatprep.subr.mxu0 0.0
        %6611 = vmatpush2.msra.mxu0 0.0
        %6612 = vmatprep.subr.mxu0 0.0
        %6613 = vmatpush2.msra.mxu0 0.0
        %6614 = vmatprep.mubr.f32.mxu0 0.0
        %v6615 = vand.u32 %v2878, 4294901760
        %6616 = vmatmul.mubr.f32.gmra.mxu0 %v6615
        %v6617 = vpop.f32.mrf.mxu0
        %v6618 = vadd.f32 %v6517, %v6617
        %v6619 = vpop.f32.mrf.mxu0
        %6620 = vmatprep.mubr.f32.mxu0 0.0
        %v6621 = vand.u32 %v2881, 4294901760
        %6622 = vmatmul.mubr.f32.gmra.mxu0 %v6621
        %v6623 = vpop.f32.mrf.mxu0
        %v6624 = vadd.f32 %v6525, %v6623
        %v6625 = vpop.f32.mrf.mxu0
        %6626 = vmatprep.mubr.f32.mxu0 0.0
        %v6627 = vand.u32 %v2884, 4294901760
        %6628 = vmatmul.mubr.f32.gmra.mxu0 %v6627
        %v6629 = vpop.f32.mrf.mxu0
        %v6630 = vadd.f32 %v6533, %v6629
        %v6631 = vpop.f32.mrf.mxu0
        %6632 = vmatprep.mubr.f32.mxu0 0.0
        %v6633 = vand.u32 %v2887, 4294901760
        %6634 = vmatmul.mubr.f32.gmra.mxu0 %v6633
        %v6635 = vpop.f32.mrf.mxu0
        %v6636 = vadd.f32 %v6541, %v6635
        %v6637 = vpop.f32.mrf.mxu0
        %6638 = vdwg.mxu0
        %6639 = vmatprep.subr.mxu0 0.0
        %6640 = vmatpush1.msra.mxu0 0.0
        %6641 = vmatprep.subr.mxu0 0.0
        %6642 = vmatpush1.msra.mxu0 0.0
        %6643 = vmatprep.subr.mxu0 0.0
        %6644 = vmatpush1.msra.mxu0 0.0
        %6645 = vmatprep.subr.mxu0 0.0
        %6646 = vmatpush1.msra.mxu0 0.0
        %6647 = vmatprep.subr.mxu0 0.0
        %6648 = vmatpush1.msra.mxu0 0.0
        %6649 = vmatprep.subr.mxu0 0.0
        %6650 = vmatpush1.msra.mxu0 0.0
        %6651 = vmatprep.subr.mxu0 0.0
        %6652 = vmatpush1.msra.mxu0 0.0
        %6653 = vmatprep.subr.mxu0 0.0
        %6654 = vmatpush1.msra.mxu0 0.0
        %6655 = vmatprep.subr.mxu0 0.0
        %6656 = vmatpush1.msra.mxu0 0.0
        %6657 = vmatprep.subr.mxu0 0.0
        %6658 = vmatpush1.msra.mxu0 0.0
        %6659 = vmatprep.subr.mxu0 0.0
        %6660 = vmatpush1.msra.mxu0 0.0
        %6661 = vmatprep.subr.mxu0 0.0
        %6662 = vmatpush1.msra.mxu0 0.0
        %6663 = vmatprep.subr.mxu0 0.0
        %6664 = vmatpush1.msra.mxu0 0.0
        %6665 = vmatprep.subr.mxu0 0.0
        %6666 = vmatpush1.msra.mxu0 0.0
        %6667 = vmatprep.subr.mxu0 0.0
        %v6668 = vand.u32 %v4535, 4294901760
        %6669 = vmatpush1.msra.mxu0 %v6668
        %6670 = vmatprep.subr.mxu0 0.0
        %v6671 = vand.u32 %v4529, 4294901760
        %6672 = vmatpush1.msra.mxu0 %v6671
        %6673 = vmatprep.subr.mxu0 0.0
        %6674 = vmatpush2.msra.mxu0 0.0
        %6675 = vmatprep.subr.mxu0 0.0
        %6676 = vmatpush2.msra.mxu0 0.0
        %6677 = vmatprep.subr.mxu0 0.0
        %6678 = vmatpush2.msra.mxu0 0.0
        %6679 = vmatprep.subr.mxu0 0.0
        %6680 = vmatpush2.msra.mxu0 0.0
        %6681 = vmatprep.subr.mxu0 0.0
        %6682 = vmatpush2.msra.mxu0 0.0
        %6683 = vmatprep.subr.mxu0 0.0
        %6684 = vmatpush2.msra.mxu0 0.0
        %6685 = vmatprep.subr.mxu0 0.0
        %6686 = vmatpush2.msra.mxu0 0.0
        %6687 = vmatprep.subr.mxu0 0.0
        %6688 = vmatpush2.msra.mxu0 0.0
        %6689 = vmatprep.subr.mxu0 0.0
        %6690 = vmatpush2.msra.mxu0 0.0
        %6691 = vmatprep.subr.mxu0 0.0
        %6692 = vmatpush2.msra.mxu0 0.0
        %6693 = vmatprep.subr.mxu0 0.0
        %6694 = vmatpush2.msra.mxu0 0.0
        %6695 = vmatprep.subr.mxu0 0.0
        %6696 = vmatpush2.msra.mxu0 0.0
        %6697 = vmatprep.subr.mxu0 0.0
        %6698 = vmatpush2.msra.mxu0 0.0
        %6699 = vmatprep.subr.mxu0 0.0
        %6700 = vmatpush2.msra.mxu0 0.0
        %6701 = vmatprep.subr.mxu0 0.0
        %6702 = vmatpush2.msra.mxu0 0.0
        %6703 = vmatprep.subr.mxu0 0.0
        %6704 = vmatpush2.msra.mxu0 0.0
        %6705 = vmatprep.mubr.f32.mxu0 0.0
        %v6706 = vand.u32 %v2878, 4294901760
        %6707 = vmatmul.mubr.f32.gmra.mxu0 %v6706
        %v6708 = vpop.f32.mrf.mxu0
        %v6709 = vadd.f32 %v6618, %v6708
        %v6710 = vpop.f32.mrf.mxu0
        %6711 = vmatprep.mubr.f32.mxu0 0.0
        %v6712 = vand.u32 %v2881, 4294901760
        %6713 = vmatmul.mubr.f32.gmra.mxu0 %v6712
        %v6714 = vpop.f32.mrf.mxu0
        %v6715 = vadd.f32 %v6624, %v6714
        %v6716 = vpop.f32.mrf.mxu0
        %6717 = vmatprep.mubr.f32.mxu0 0.0
        %v6718 = vand.u32 %v2884, 4294901760
        %6719 = vmatmul.mubr.f32.gmra.mxu0 %v6718
        %v6720 = vpop.f32.mrf.mxu0
        %v6721 = vadd.f32 %v6630, %v6720
        %v6722 = vpop.f32.mrf.mxu0
        %6723 = vmatprep.mubr.f32.mxu0 0.0
        %v6724 = vand.u32 %v2887, 4294901760
        %6725 = vmatmul.mubr.f32.gmra.mxu0 %v6724
        %v6726 = vpop.f32.mrf.mxu0
        %v6727 = vadd.f32 %v6636, %v6726
        %v6728 = vpop.f32.mrf.mxu0
        %6729 = vdwg.mxu0
        %s6730 = scalar_lea.vmem %s153, 32 [#allocation5]
        %6731 = vst.msk [vmem:[%s6730] sm:$0xff] %vm3477, %v6709
        %6732 = vst.msk [vmem:[%s6730 + $0x8] sm:$0xff] %vm3477, %v6715
        %6733 = vst.msk [vmem:[%s6730 + $0x10] sm:$0xff] %vm3477, %v6721
        %6734 = vst.msk [vmem:[%s6730 + $0x18] sm:$0xff] %vm3477, %v6727
        %s6735 = sand.u32 %s68, 1
        %s6736 = scalar_lea.sflag [#allocation4], %s6735
        %s6737 = sand.u32 %s68, 1
        %s6738 = smul.addr %s6737, 64
        %s6739 = scalar_lea.vmem [#allocation5], %s6738
        // Predicated region
        $region29: #{iwt.1} parent=23 // pred_check
          %p6740 = pneg %p78
        $region30: #{iwt.1} parent=23 // pred_check_branch
          %6742 = sbr.rel (%p6740) target = $region32
        $region31: #{iwt.1} parent=23 // pred_region
          %s6743 = smul.u32 2, %s23
          %s6745 = ssub.s32 1024, 1024
          %6746 = vsyncadd %s6736, %s6745
          %s6747 = smul.addr %s6743, 4
          %s6748 = smul.addr %s22, 8
          %s6749 = sadd.s32 %s6747, %s6748
          %s6750 = smul.addr %s6749, 128
          %s6751 = scalar_lea.hbm %s1, %s6750
          %s6752 = sshll.u32 %s6739, 4
          %s6753 = int_to_ptr.vmem [resolvable:$true] %s6752
          %6758 = dma.vmem_to_hbm [thread:$0]  %s6753, 1024, %s6751, %s6736, 128, 128, 8
        $region32: #{iwt.1} parent=23 // pred_fallthru
          _
      $region24: #{iwt.1} parent=5 // pred_fallthru
        _
      %p6759 = scmp.le.s32.totalorder 2, %s13
      // Predicated region
      $region33: #{iwt.1} parent=5 // pred_check
        %p6760 = pneg %p6759
      $region34: #{iwt.1} parent=5 // pred_check_branch
        %6762 = sbr.rel (%p6760) target = $region36
      $region35: #{iwt.1} parent=5 // pred_region
        %s6763 = ssub.s32 %s13, 2
        // Predicated region
        $region37: #{iwt.1} parent=35 // pred_check
          %p6764 = pneg %p84
        $region38: #{iwt.1} parent=35 // pred_check_branch
          %6766 = sbr.rel (%p6764) target = $region40
        $region39: #{iwt.1} parent=35 // pred_region
          %s6767 = sand.u32 %s69, 1
          %s6768 = scalar_lea.sflag [#allocation4], %s6767
          %s6769 = sand.u32 %s69, 1
          %s6770 = smul.addr %s6769, 64
          %s6771 = scalar_lea.vmem [#allocation5], %s6770
          %6772 = dma.done %s6768, 1024
        $region40: #{iwt.1} parent=35 // pred_fallthru
          _
      $region36: #{iwt.1} parent=5 // pred_fallthru
        _
    $region6: #{iwt.1} parent=1 // loop_footer
      %s17 = sadd.s32 1, %s13
    $region7: #{iwt.1} parent=1 // loop_footer_branch
      %12 = sbr.rel target = $region3
    $region8: #{iwt.1} parent=1 // loop_exit
      _
    %6773 = vsyncpa [#allocation3], 1
    %s6774 = scalar_lea.sflag [#allocation3], 1
    %6775 = vsyncpa %s6774, 1
    %6776 = vsyncpa [#allocation4], 1
    %s6777 = scalar_lea.sflag [#allocation4], 1
    %6778 = vsyncpa %s6777, 1

</llo_original>
